<compile_context>
chip_gen: v5e
topology: v5e:2x2
jax: 0.10.0
libtpu: 0.0.40
codegen_flags: <defaults>
</compile_context>

<pallas_src>
import functools

import jax
import jax.numpy as jnp
from jax import lax
from jax.experimental import pallas as pl
from jax.experimental.pallas import tpu as pltpu

EPS = 1e-5
LANES = 128
MATMUL_DTYPE = jnp.bfloat16      # MXU-native matmul input dtype (f32 accumulation)
MERGE_K_MAX = 1024               # merge (kh,kw) taps into the contraction while K stays modest


def _round_up(x, m):
    return (x + m - 1) // m * m


def _vmem_budget_bytes():
    """~3/4 of this chip's VMEM (v5e/v6e 128 MiB, v7x 64 MiB); safe fallback 48 MiB."""
    cap = 64 * 1024 * 1024
    try:
        cap = int(getattr(pltpu.get_tpu_info(), "vmem_capacity_bytes", cap))
    except Exception:
        pass
    return int(cap * 3 // 4)


def _largest_divisor_leq(n, cap):
    cap = max(1, min(n, int(cap)))
    for d in range(cap, 0, -1):
        if n % d == 0:
            return d
    return 1


# ----------------------------------------------------------------------------
# Pass 1: one (n, do) output depth-plane per grid step.
#   Input volume of batch n and the full weights are VMEM-resident; the KD
#   (and optionally KH*KW) taps are an in-kernel reduction into an f32 value.
# ----------------------------------------------------------------------------
def _conv_plane_kernel(KD, KH, KW, Ho, Wo, stride, merge_taps,
                       x_ref, w_ref, y_ref, part_ref):
    """x_ref:    (Dp, Hp, Wp, Cin)  bf16, all padded depth planes of batch n
       w_ref:    (KD, KH*KW*Cin, Coutp) or (KD*KH*KW, Cin, Coutp) bf16, resident
       y_ref:    (1, Ho*Wo, Coutp) bf16 conv output for this plane
       part_ref: (1, 2, Coutp) f32  row 0 = channel sum, row 1 = channel sumsq
    """
    do = pl.program_id(1)
    Coutp = w_ref.shape[-1]
    HoWo = Ho * Wo
    acc = jnp.zeros((HoWo, Coutp), jnp.float32)

    def window(d_idx, kh, kw):
        if stride == 1:
            win = x_ref[pl.ds(d_idx, 1), pl.ds(kh, Ho), pl.ds(kw, Wo), :]
        else:
            # TODO(synk): strided H/W windows hit XLU relayouts; real stride-2
            # 3x3x3 convs should pre-space-to-batch in the wrapper instead.
            win = x_ref[pl.ds(d_idx, 1), pl.ds(kh, Ho, stride=stride),
                        pl.ds(kw, Wo, stride=stride), :]
        return win.reshape(HoWo, win.shape[-1])          # (Ho*Wo, Cin)

    for kd in range(KD):
        d_idx = do * stride + kd
        if merge_taps:
            wins = [window(d_idx, kh, kw) for kh in range(KH) for kw in range(KW)]
            lhs = wins[0] if len(wins) == 1 else jnp.concatenate(wins, axis=-1)
            acc = acc + jnp.dot(lhs, w_ref[kd],
                                preferred_element_type=jnp.float32)
        else:
            for kh in range(KH):
                for kw in range(KW):
                    acc = acc + jnp.dot(window(d_idx, kh, kw),
                                        w_ref[kd * KH * KW + kh * KW + kw],
                                        preferred_element_type=jnp.float32)

    y_ref[0] = acc.astype(y_ref.dtype)
    # Exact f32 partials (the bf16 rounding above never touches BN statistics).
    part_ref[0, pl.ds(0, 1), :] = jnp.sum(acc, axis=0, keepdims=True)
    part_ref[0, pl.ds(1, 1), :] = jnp.sum(acc * acc, axis=0, keepdims=True)


# ----------------------------------------------------------------------------
# Pass 2: folded BatchNorm FMA + optional bf16 residual + optional ReLU
# ----------------------------------------------------------------------------
def _bn_act_kernel(do_relu, res_pad, y_ref, scale_ref, shift_ref, *rest):
    """res_pad: None -> no residual; int -> residual present, zero-extend by
    res_pad channels inside the kernel (identity shortcut is fed unpadded)."""
    has_res = res_pad is not None
    if has_res:
        res_ref, o_ref = rest
    else:
        (o_ref,) = rest
    y = y_ref[...].astype(jnp.float32) * scale_ref[...] + shift_ref[...]
    if has_res:
        r = res_ref[...].astype(jnp.float32)
        if res_pad > 0:
            r = jnp.concatenate(
                [r, jnp.zeros(r.shape[:-1] + (res_pad,), jnp.float32)], axis=-1)
        y = y + r
    if do_relu:
        y = jnp.maximum(y, 0.0)
    o_ref[...] = y.astype(o_ref.dtype)


# ----------------------------------------------------------------------------
# Fused Conv3d (no bias) + train-mode BatchNorm3d (+residual)(+ReLU)
# ----------------------------------------------------------------------------
def conv3d_bn_act(x, w, gamma, beta, *, stride=1, padding=0, relu=False,
                  residual=None, out_dtype=jnp.float32):
    """x: (N, D, H, W, Cin).  w: (KD, KH, KW, Cin, Cout).

    residual: optional (N*Do, Ho*Wo, Cres) tensor (Cres <= Coutp) added before
    ReLU (bf16 or f32).  Returns (out3d, (N, Do, Ho, Wo)) with out3d of shape
    (N*Do, Ho*Wo, Coutp), Coutp = Cout rounded up to 128 (lane-dense stores);
    channels >= Cout are zero.
    """
    N, D, H, W, Cin = x.shape
    KD, KH, KW, _, Cout = w.shape

    # 1x1x1 convs with stride: pre-stride in the wrapper so the kernel never
    # needs strided window slices.
    if stride != 1 and KD == KH == KW == 1 and padding == 0:
        x = x[:, ::stride, ::stride, ::stride, :]
        N, D, H, W, Cin = x.shape
        stride = 1

    Do = (D + 2 * padding - KD) // stride + 1
    Ho = (H + 2 * padding - KH) // stride + 1
    Wo = (W + 2 * padding - KW) // stride + 1
    Dp, Hp, Wp = D + 2 * padding, H + 2 * padding, W + 2 * padding
    NP, HoWo = N * Do, Ho * Wo
    M = NP * HoWo
    K = KH * KW * Cin
    Coutp = _round_up(Cout, LANES)
    vmem_budget = _vmem_budget_bytes()
    merge_taps = K <= MERGE_K_MAX

    # Layout plumbing (cheap single-pass XLA glue).
    x_pad = jnp.pad(x.astype(MATMUL_DTYPE),
                    ((0, 0), (padding, padding), (padding, padding),
                     (padding, padding), (0, 0)))
    x_pad = x_pad.reshape(N * Dp, Hp, Wp, Cin)
    w_k = jnp.pad(w, ((0, 0),) * 4 + ((0, Coutp - Cout),)).astype(MATMUL_DTYPE)
    w_k = w_k.reshape(KD, K, Coutp) if merge_taps else w_k.reshape(KD * KH * KW, Cin, Coutp)

    flops1 = 2 * M * KD * K * Coutp
    bytes1 = int(x_pad.size * 2 + w_k.size * 2 + M * Coutp * 2 + NP * 2 * Coutp * 4)

    y3d, part = pl.pallas_call(
        functools.partial(_conv_plane_kernel, KD, KH, KW, Ho, Wo, stride, merge_taps),
        grid=(N, Do),
        in_specs=[
            # whole padded volume of batch n, resident across the do axis
            pl.BlockSpec((Dp, Hp, Wp, Cin), lambda n, do: (n, 0, 0, 0)),
            # full weight tensor, resident across the whole grid
            pl.BlockSpec(w_k.shape, lambda n, do: (0, 0, 0)),
        ],
        out_specs=(
            pl.BlockSpec((1, HoWo, Coutp), lambda n, do: (n * Do + do, 0, 0)),
            pl.BlockSpec((1, 2, Coutp), lambda n, do: (n * Do + do, 0, 0)),
        ),
        out_shape=(jax.ShapeDtypeStruct((NP, HoWo, Coutp), jnp.bfloat16),
                   jax.ShapeDtypeStruct((NP, 2, Coutp), jnp.float32)),
        compiler_params=pltpu.CompilerParams(
            dimension_semantics=("parallel", "parallel"),
            vmem_limit_bytes=vmem_budget),
        cost_estimate=pl.CostEstimate(flops=flops1, transcendentals=0,
                                      bytes_accessed=bytes1),
    )(x_pad, w_k)

    # BatchNorm batch statistics over all M rows (exact f32 partials).
    # One-pass E[x^2]-mean^2 in f32: adequate for BN-scale activations.
    inv_m = 1.0 / float(M)
    mean = jnp.sum(part[:, 0, :], axis=0) * inv_m                # (Coutp,)
    var = jnp.maximum(jnp.sum(part[:, 1, :], axis=0) * inv_m - mean * mean, 0.0)
    g_p = jnp.pad(gamma, (0, Coutp - Cout)).astype(jnp.float32)
    b_p = jnp.pad(beta, (0, Coutp - Cout)).astype(jnp.float32)
    s = g_p * lax.rsqrt(var + EPS)
    scale = s.reshape(1, 1, Coutp)
    shift = (b_p - mean * s).reshape(1, 1, Coutp)

    has_res = residual is not None
    pad_res = None
    out_bytes = jnp.dtype(out_dtype).itemsize
    res_bytes = int(residual.dtype.itemsize) if has_res else 0
    per_plane = HoWo * Coutp * (2 + out_bytes + (res_bytes if has_res else 0))
    cap = max(1, vmem_budget // (4 * per_plane))          # double-buffer + headroom
    if NP >= 2:
        cap = min(cap, NP // 2)                            # >= 2 steps: feed both v7x TCs
    G = _largest_divisor_leq(NP, cap)

    args = [y3d, scale, shift]
    in_specs = [
        pl.BlockSpec((G, HoWo, Coutp), lambda i: (i, 0, 0)),
        pl.BlockSpec((1, 1, Coutp), lambda i: (0, 0, 0)),   # resident across grid
        pl.BlockSpec((1, 1, Coutp), lambda i: (0, 0, 0)),
    ]
    if has_res:
        Cres = residual.shape[-1]
        pad_res = Coutp - Cres
        args.append(residual)
        in_specs.append(pl.BlockSpec((G, HoWo, Cres), lambda i: (i, 0, 0)))

    bytes2 = int(M * Coutp * (2 + out_bytes)
                 + (M * residual.shape[-1] * res_bytes if has_res else 0)
                 + 2 * Coutp * 4)
    out3d = pl.pallas_call(
        functools.partial(_bn_act_kernel, relu, pad_res),
        grid=(NP // G,),
        in_specs=in_specs,
        out_specs=pl.BlockSpec((G, HoWo, Coutp), lambda i: (i, 0, 0)),
        out_shape=jax.ShapeDtypeStruct((NP, HoWo, Coutp), out_dtype),
        compiler_params=pltpu.CompilerParams(
            dimension_semantics=("parallel",),
            vmem_limit_bytes=vmem_budget),
        cost_estimate=pl.CostEstimate(flops=4 * M * Coutp, transcendentals=0,
                                      bytes_accessed=bytes2),
    )(*args)
    return out3d, (N, Do, Ho, Wo)


# ----------------------------------------------------------------------------
# BasicBlock3d forward (Pallas) and matched-precision JAX reference
# ----------------------------------------------------------------------------
def basic_block3d_pallas(x_ncdhw, params, stride=1):
    x = jnp.transpose(x_ncdhw, (0, 2, 3, 4, 1)).astype(jnp.float32)   # -> NDHWC
    N, D, H, W, Cin = x.shape
    planes = params["w1"].shape[-1]

    # conv1 -> bn1 -> relu   (intermediate activation stored bf16 in HBM)
    out1, (_, Do, Ho, Wo) = conv3d_bn_act(
        x, params["w1"], params["g1"], params["b1"],
        stride=stride, padding=1, relu=True, out_dtype=jnp.bfloat16)
    out1_act = out1[:, :, :planes].reshape(N, Do, Ho, Wo, planes)

    # shortcut (bf16 residual, added inside conv2's pass-2 kernel)
    if stride != 1 or Cin != planes:
        res, _ = conv3d_bn_act(
            x, params["w_sc"], params["g_sc"], params["b_sc"],
            stride=stride, padding=0, relu=False, out_dtype=jnp.bfloat16)
    else:
        # identity shortcut: rows (n, d, h, w) line up with conv2's output rows
        # because conv2 is k=3 / pad=1 / stride=1 and conv1 has stride==1 here.
        assert (Do, Ho, Wo) == (D, H, W)
        res = x.astype(jnp.bfloat16).reshape(N * D, H * W, Cin)   # unpadded bf16

    # conv2 -> bn2 -> (+shortcut) -> relu
    out2, _ = conv3d_bn_act(
        out1_act, params["w2"], params["g2"], params["b2"],
        stride=1, padding=1, relu=True, residual=res, out_dtype=jnp.float32)

    out = out2[:, :, :planes].reshape(N, Do, Ho, Wo, planes)
    return jnp.transpose(out, (0, 4, 1, 2, 3))                        # -> NCDHW


def _conv3d_ref(x, w, stride, padding):
    # Same deliberate precision choice as the kernel: bf16 inputs, f32 accum.
    return lax.conv_general_dilated(
        x.astype(MATMUL_DTYPE), w.astype(MATMUL_DTYPE),
        window_strides=(stride,) * 3, padding=[(padding, padding)] * 3,
        dimension_numbers=("NDHWC", "DHWIO", "NDHWC"),
        preferred_element_type=jnp.float32)


def _bn_ref(y, g, b):
    # Mirrors the kernel: batch stats from the f32 conv output, affine applied
    # to the bf16-rounded conv output (pass 1 stores y in bf16).
    mean = jnp.mean(y, axis=(0, 1, 2, 3))
    var = jnp.mean(jnp.square(y - mean), axis=(0, 1, 2, 3))
    scale = g * lax.rsqrt(var + EPS)
    shift = b - mean * scale
    y_b = y.astype(jnp.bfloat16).astype(jnp.float32)
    return y_b * scale + shift


def basic_block3d_ref(x_ncdhw, params, stride=1):
    x = jnp.transpose(x_ncdhw, (0, 2, 3, 4, 1)).astype(jnp.float32)
    Cin = x.shape[-1]
    planes = params["w1"].shape[-1]
    out1 = jax.nn.relu(_bn_ref(_conv3d_ref(x, params["w1"], stride, 1),
                               params["g1"], params["b1"]))
    out1 = out1.astype(jnp.bfloat16)        # matches bf16 HBM activation storage
    out2 = _bn_ref(_conv3d_ref(out1, params["w2"], 1, 1),
                   params["g2"], params["b2"])
    if stride != 1 or Cin != planes:
        sc = _bn_ref(_conv3d_ref(x, params["w_sc"], stride, 0),
                     params["g_sc"], params["b_sc"])
        sc = sc.astype(jnp.bfloat16).astype(jnp.float32)   # bf16 residual storage
    else:
        sc = x.astype(jnp.bfloat16).astype(jnp.float32)
    out = jax.nn.relu(out2 + sc)
    return jnp.transpose(out, (0, 4, 1, 2, 3))


# ----------------------------------------------------------------------------
# Deterministic parameter construction (shapes from BasicBlock3d.__init__)
# ----------------------------------------------------------------------------
def init_params(key, in_planes, planes, stride):
    ks = jax.random.split(key, 9)

    def conv_w(k, cin, cout, ksz):
        fan_in = cin * ksz ** 3
        w = jax.random.normal(k, (ksz, ksz, ksz, cin, cout), jnp.float32)
        return w * jnp.sqrt(2.0 / fan_in)

    params = {
        "w1": conv_w(ks[0], in_planes, planes, 3),
        "g1": 1.0 + 0.1 * jax.random.normal(ks[1], (planes,), jnp.float32),
        "b1": 0.1 * jax.random.normal(ks[2], (planes,), jnp.float32),
        "w2": conv_w(ks[3], planes, planes, 3),
        "g2": 1.0 + 0.1 * jax.random.normal(ks[4], (planes,), jnp.float32),
        "b2": 0.1 * jax.random.normal(ks[5], (planes,), jnp.float32),
    }
    if stride != 1 or in_planes != planes:
        params["w_sc"] = conv_w(ks[6], in_planes, planes, 1)
        params["g_sc"] = 1.0 + 0.1 * jax.random.normal(ks[7], (planes,), jnp.float32)
        params["b_sc"] = 0.1 * jax.random.normal(ks[8], (planes,), jnp.float32)
    return params


if __name__ == "__main__":
    key = jax.random.PRNGKey(0)
    N = 2
    D = H = W = 8
    # (in_planes, planes, stride): first config exercises the 1x1x1-conv
    # shortcut, second the identity shortcut (unpadded bf16 residual path).
    configs = [(4, 8, 1), (8, 8, 1)]

    fwd = jax.jit(basic_block3d_pallas, static_argnums=(2,))
    for idx, (in_planes, planes, stride) in enumerate(configs):
        k_x, k_p = jax.random.split(jax.random.fold_in(key, idx))
        x = jax.random.normal(k_x, (N, in_planes, D, H, W), jnp.float32)  # NCDHW
        params = init_params(k_p, in_planes, planes, stride)

        out = jax.block_until_ready(fwd(x, params, stride))
        ref = jax.block_until_ready(basic_block3d_ref(x, params, stride))
        assert out.shape == (N, planes, D, H, W), out.shape

        err = jnp.abs(out - ref)
        max_err = float(jnp.max(err))
        mean_err = float(jnp.mean(err))
        # Kernel and reference use matched precision (bf16 matmul inputs, f32
        # accumulation, bf16 storage of conv outputs / residual).  Differing f32
        # summation order can push a rare element across a bf16 rounding
        # boundary, giving an isolated ~1e-2-scale deviation while typical
        # elements agree to ~1e-5; hence the loose max / tight mean tolerance.
        assert max_err < 8e-2 and mean_err < 1e-3, (max_err, mean_err)

    print("KERNEL_OK")
</pallas_src>

<mosaic_0001>
module attributes {stable_mosaic.version = 11 : i64} {
  func.func @_conv_plane_kernel(%arg0: i32, %arg1: i32, %arg2: memref<10x10x10x4xbf16, #tpu.memory_space<vmem>>, %arg3: memref<3x36x128xbf16, #tpu.memory_space<vmem>>, %arg4: memref<1x64x128xbf16, #tpu.memory_space<vmem>>, %arg5: memref<1x2x128xf32, #tpu.memory_space<vmem>>) attributes {dimension_semantics = [#tpu.dimension_semantics<parallel>, #tpu.dimension_semantics<parallel>], iteration_bounds = array<i64: 2, 8>, scalar_prefetch = 0 : i64, scratch_operands = 0 : i64, tpu.core_type = #tpu.core_type<tc>, window_params = [{transform_indices = @transform_0, window_bounds = array<i64: 10, 10, 10, 4>}, {pipeline_mode = #tpu.pipeline_mode<synchronous>, transform_indices = @transform_1, window_bounds = array<i64: 3, 36, 128>}, {transform_indices = @transform_2, window_bounds = array<i64: 1, 64, 128>}, {transform_indices = @transform_3, window_bounds = array<i64: 1, 2, 128>}]} {
    %cst = arith.constant 0.000000e+00 : f32
    %0 = vector.broadcast %cst : f32 to vector<64x128xf32>
    %c1_i32 = arith.constant 1 : i32
    %1 = arith.muli %arg1, %c1_i32 : i32
    %c0_i32 = arith.constant 0 : i32
    %2 = arith.addi %1, %c0_i32 : i32
    %3 = arith.index_cast %2 : i32 to index
    %c0 = arith.constant 0 : index
    %c0_0 = arith.constant 0 : index
    %c0_1 = arith.constant 0 : index
    %4 = vector.load %arg2[%3, %c0, %c0_0, %c0_1] : memref<10x10x10x4xbf16, #tpu.memory_space<vmem>>, vector<1x8x8x4xbf16>
    %5 = vector.shape_cast %4 : vector<1x8x8x4xbf16> to vector<64x4xbf16>
    %6 = arith.index_cast %2 : i32 to index
    %c0_2 = arith.constant 0 : index
    %c1 = arith.constant 1 : index
    %c0_3 = arith.constant 0 : index
    %7 = vector.load %arg2[%6, %c0_2, %c1, %c0_3] : memref<10x10x10x4xbf16, #tpu.memory_space<vmem>>, vector<1x8x8x4xbf16>
    %8 = vector.shape_cast %7 : vector<1x8x8x4xbf16> to vector<64x4xbf16>
    %9 = arith.index_cast %2 : i32 to index
    %c0_4 = arith.constant 0 : index
    %c2 = arith.constant 2 : index
    %c0_5 = arith.constant 0 : index
    %10 = vector.load %arg2[%9, %c0_4, %c2, %c0_5] : memref<10x10x10x4xbf16, #tpu.memory_space<vmem>>, vector<1x8x8x4xbf16>
    %11 = vector.shape_cast %10 : vector<1x8x8x4xbf16> to vector<64x4xbf16>
    %12 = arith.index_cast %2 : i32 to index
    %c1_6 = arith.constant 1 : index
    %c0_7 = arith.constant 0 : index
    %c0_8 = arith.constant 0 : index
    %13 = vector.load %arg2[%12, %c1_6, %c0_7, %c0_8] : memref<10x10x10x4xbf16, #tpu.memory_space<vmem>>, vector<1x8x8x4xbf16>
    %14 = vector.shape_cast %13 : vector<1x8x8x4xbf16> to vector<64x4xbf16>
    %15 = arith.index_cast %2 : i32 to index
    %c1_9 = arith.constant 1 : index
    %c1_10 = arith.constant 1 : index
    %c0_11 = arith.constant 0 : index
    %16 = vector.load %arg2[%15, %c1_9, %c1_10, %c0_11] : memref<10x10x10x4xbf16, #tpu.memory_space<vmem>>, vector<1x8x8x4xbf16>
    %17 = vector.shape_cast %16 : vector<1x8x8x4xbf16> to vector<64x4xbf16>
    %18 = arith.index_cast %2 : i32 to index
    %c1_12 = arith.constant 1 : index
    %c2_13 = arith.constant 2 : index
    %c0_14 = arith.constant 0 : index
    %19 = vector.load %arg2[%18, %c1_12, %c2_13, %c0_14] : memref<10x10x10x4xbf16, #tpu.memory_space<vmem>>, vector<1x8x8x4xbf16>
    %20 = vector.shape_cast %19 : vector<1x8x8x4xbf16> to vector<64x4xbf16>
    %21 = arith.index_cast %2 : i32 to index
    %c2_15 = arith.constant 2 : index
    %c0_16 = arith.constant 0 : index
    %c0_17 = arith.constant 0 : index
    %22 = vector.load %arg2[%21, %c2_15, %c0_16, %c0_17] : memref<10x10x10x4xbf16, #tpu.memory_space<vmem>>, vector<1x8x8x4xbf16>
    %23 = vector.shape_cast %22 : vector<1x8x8x4xbf16> to vector<64x4xbf16>
    %24 = arith.index_cast %2 : i32 to index
    %c2_18 = arith.constant 2 : index
    %c1_19 = arith.constant 1 : index
    %c0_20 = arith.constant 0 : index
    %25 = vector.load %arg2[%24, %c2_18, %c1_19, %c0_20] : memref<10x10x10x4xbf16, #tpu.memory_space<vmem>>, vector<1x8x8x4xbf16>
    %26 = vector.shape_cast %25 : vector<1x8x8x4xbf16> to vector<64x4xbf16>
    %27 = arith.index_cast %2 : i32 to index
    %c2_21 = arith.constant 2 : index
    %c2_22 = arith.constant 2 : index
    %c0_23 = arith.constant 0 : index
    %28 = vector.load %arg2[%27, %c2_21, %c2_22, %c0_23] : memref<10x10x10x4xbf16, #tpu.memory_space<vmem>>, vector<1x8x8x4xbf16>
    %29 = vector.shape_cast %28 : vector<1x8x8x4xbf16> to vector<64x4xbf16>
    %30 = tpu.concatenate %5, %8, %11, %14, %17, %20, %23, %26, %29 in 1 : vector<64x4xbf16>, vector<64x4xbf16>, vector<64x4xbf16>, vector<64x4xbf16>, vector<64x4xbf16>, vector<64x4xbf16>, vector<64x4xbf16>, vector<64x4xbf16>, vector<64x4xbf16> -> vector<64x36xbf16>
    %c0_24 = arith.constant 0 : index
    %c0_25 = arith.constant 0 : index
    %c0_26 = arith.constant 0 : index
    %31 = vector.load %arg3[%c0_24, %c0_25, %c0_26] : memref<3x36x128xbf16, #tpu.memory_space<vmem>>, vector<1x36x128xbf16>
    %32 = vector.shape_cast %31 : vector<1x36x128xbf16> to vector<36x128xbf16>
    %cst_27 = arith.constant dense<0.000000e+00> : vector<64x128xf32>
    %33 = tpu.matmul %30, %32, %cst_27 {dimension_numbers = #tpu.dot_dimension_numbers<[1], [0], [0], [1], [0, 0, 1, 1], [], []>} : vector<64x36xbf16>, vector<36x128xbf16>, vector<64x128xf32> -> vector<64x128xf32>
    %34 = arith.addf %0, %33 : vector<64x128xf32>
    %c1_i32_28 = arith.constant 1 : i32
    %35 = arith.muli %arg1, %c1_i32_28 : i32
    %c1_i32_29 = arith.constant 1 : i32
    %36 = arith.addi %35, %c1_i32_29 : i32
    %37 = arith.index_cast %36 : i32 to index
    %c0_30 = arith.constant 0 : index
    %c0_31 = arith.constant 0 : index
    %c0_32 = arith.constant 0 : index
    %38 = vector.load %arg2[%37, %c0_30, %c0_31, %c0_32] : memref<10x10x10x4xbf16, #tpu.memory_space<vmem>>, vector<1x8x8x4xbf16>
    %39 = vector.shape_cast %38 : vector<1x8x8x4xbf16> to vector<64x4xbf16>
    %40 = arith.index_cast %36 : i32 to index
    %c0_33 = arith.constant 0 : index
    %c1_34 = arith.constant 1 : index
    %c0_35 = arith.constant 0 : index
    %41 = vector.load %arg2[%40, %c0_33, %c1_34, %c0_35] : memref<10x10x10x4xbf16, #tpu.memory_space<vmem>>, vector<1x8x8x4xbf16>
    %42 = vector.shape_cast %41 : vector<1x8x8x4xbf16> to vector<64x4xbf16>
    %43 = arith.index_cast %36 : i32 to index
    %c0_36 = arith.constant 0 : index
    %c2_37 = arith.constant 2 : index
    %c0_38 = arith.constant 0 : index
    %44 = vector.load %arg2[%43, %c0_36, %c2_37, %c0_38] : memref<10x10x10x4xbf16, #tpu.memory_space<vmem>>, vector<1x8x8x4xbf16>
    %45 = vector.shape_cast %44 : vector<1x8x8x4xbf16> to vector<64x4xbf16>
    %46 = arith.index_cast %36 : i32 to index
    %c1_39 = arith.constant 1 : index
    %c0_40 = arith.constant 0 : index
    %c0_41 = arith.constant 0 : index
    %47 = vector.load %arg2[%46, %c1_39, %c0_40, %c0_41] : memref<10x10x10x4xbf16, #tpu.memory_space<vmem>>, vector<1x8x8x4xbf16>
    %48 = vector.shape_cast %47 : vector<1x8x8x4xbf16> to vector<64x4xbf16>
    %49 = arith.index_cast %36 : i32 to index
    %c1_42 = arith.constant 1 : index
    %c1_43 = arith.constant 1 : index
    %c0_44 = arith.constant 0 : index
    %50 = vector.load %arg2[%49, %c1_42, %c1_43, %c0_44] : memref<10x10x10x4xbf16, #tpu.memory_space<vmem>>, vector<1x8x8x4xbf16>
    %51 = vector.shape_cast %50 : vector<1x8x8x4xbf16> to vector<64x4xbf16>
    %52 = arith.index_cast %36 : i32 to index
    %c1_45 = arith.constant 1 : index
    %c2_46 = arith.constant 2 : index
    %c0_47 = arith.constant 0 : index
    %53 = vector.load %arg2[%52, %c1_45, %c2_46, %c0_47] : memref<10x10x10x4xbf16, #tpu.memory_space<vmem>>, vector<1x8x8x4xbf16>
    %54 = vector.shape_cast %53 : vector<1x8x8x4xbf16> to vector<64x4xbf16>
    %55 = arith.index_cast %36 : i32 to index
    %c2_48 = arith.constant 2 : index
    %c0_49 = arith.constant 0 : index
    %c0_50 = arith.constant 0 : index
    %56 = vector.load %arg2[%55, %c2_48, %c0_49, %c0_50] : memref<10x10x10x4xbf16, #tpu.memory_space<vmem>>, vector<1x8x8x4xbf16>
    %57 = vector.shape_cast %56 : vector<1x8x8x4xbf16> to vector<64x4xbf16>
    %58 = arith.index_cast %36 : i32 to index
    %c2_51 = arith.constant 2 : index
    %c1_52 = arith.constant 1 : index
    %c0_53 = arith.constant 0 : index
    %59 = vector.load %arg2[%58, %c2_51, %c1_52, %c0_53] : memref<10x10x10x4xbf16, #tpu.memory_space<vmem>>, vector<1x8x8x4xbf16>
    %60 = vector.shape_cast %59 : vector<1x8x8x4xbf16> to vector<64x4xbf16>
    %61 = arith.index_cast %36 : i32 to index
    %c2_54 = arith.constant 2 : index
    %c2_55 = arith.constant 2 : index
    %c0_56 = arith.constant 0 : index
    %62 = vector.load %arg2[%61, %c2_54, %c2_55, %c0_56] : memref<10x10x10x4xbf16, #tpu.memory_space<vmem>>, vector<1x8x8x4xbf16>
    %63 = vector.shape_cast %62 : vector<1x8x8x4xbf16> to vector<64x4xbf16>
    %64 = tpu.concatenate %39, %42, %45, %48, %51, %54, %57, %60, %63 in 1 : vector<64x4xbf16>, vector<64x4xbf16>, vector<64x4xbf16>, vector<64x4xbf16>, vector<64x4xbf16>, vector<64x4xbf16>, vector<64x4xbf16>, vector<64x4xbf16>, vector<64x4xbf16> -> vector<64x36xbf16>
    %c1_57 = arith.constant 1 : index
    %c0_58 = arith.constant 0 : index
    %c0_59 = arith.constant 0 : index
    %65 = vector.load %arg3[%c1_57, %c0_58, %c0_59] : memref<3x36x128xbf16, #tpu.memory_space<vmem>>, vector<1x36x128xbf16>
    %66 = vector.shape_cast %65 : vector<1x36x128xbf16> to vector<36x128xbf16>
    %cst_60 = arith.constant dense<0.000000e+00> : vector<64x128xf32>
    %67 = tpu.matmul %64, %66, %cst_60 {dimension_numbers = #tpu.dot_dimension_numbers<[1], [0], [0], [1], [0, 0, 1, 1], [], []>} : vector<64x36xbf16>, vector<36x128xbf16>, vector<64x128xf32> -> vector<64x128xf32>
    %68 = arith.addf %34, %67 : vector<64x128xf32>
    %c1_i32_61 = arith.constant 1 : i32
    %69 = arith.muli %arg1, %c1_i32_61 : i32
    %c2_i32 = arith.constant 2 : i32
    %70 = arith.addi %69, %c2_i32 : i32
    %71 = arith.index_cast %70 : i32 to index
    %c0_62 = arith.constant 0 : index
    %c0_63 = arith.constant 0 : index
    %c0_64 = arith.constant 0 : index
    %72 = vector.load %arg2[%71, %c0_62, %c0_63, %c0_64] : memref<10x10x10x4xbf16, #tpu.memory_space<vmem>>, vector<1x8x8x4xbf16>
    %73 = vector.shape_cast %72 : vector<1x8x8x4xbf16> to vector<64x4xbf16>
    %74 = arith.index_cast %70 : i32 to index
    %c0_65 = arith.constant 0 : index
    %c1_66 = arith.constant 1 : index
    %c0_67 = arith.constant 0 : index
    %75 = vector.load %arg2[%74, %c0_65, %c1_66, %c0_67] : memref<10x10x10x4xbf16, #tpu.memory_space<vmem>>, vector<1x8x8x4xbf16>
    %76 = vector.shape_cast %75 : vector<1x8x8x4xbf16> to vector<64x4xbf16>
    %77 = arith.index_cast %70 : i32 to index
    %c0_68 = arith.constant 0 : index
    %c2_69 = arith.constant 2 : index
    %c0_70 = arith.constant 0 : index
    %78 = vector.load %arg2[%77, %c0_68, %c2_69, %c0_70] : memref<10x10x10x4xbf16, #tpu.memory_space<vmem>>, vector<1x8x8x4xbf16>
    %79 = vector.shape_cast %78 : vector<1x8x8x4xbf16> to vector<64x4xbf16>
    %80 = arith.index_cast %70 : i32 to index
    %c1_71 = arith.constant 1 : index
    %c0_72 = arith.constant 0 : index
    %c0_73 = arith.constant 0 : index
    %81 = vector.load %arg2[%80, %c1_71, %c0_72, %c0_73] : memref<10x10x10x4xbf16, #tpu.memory_space<vmem>>, vector<1x8x8x4xbf16>
    %82 = vector.shape_cast %81 : vector<1x8x8x4xbf16> to vector<64x4xbf16>
    %83 = arith.index_cast %70 : i32 to index
    %c1_74 = arith.constant 1 : index
    %c1_75 = arith.constant 1 : index
    %c0_76 = arith.constant 0 : index
    %84 = vector.load %arg2[%83, %c1_74, %c1_75, %c0_76] : memref<10x10x10x4xbf16, #tpu.memory_space<vmem>>, vector<1x8x8x4xbf16>
    %85 = vector.shape_cast %84 : vector<1x8x8x4xbf16> to vector<64x4xbf16>
    %86 = arith.index_cast %70 : i32 to index
    %c1_77 = arith.constant 1 : index
    %c2_78 = arith.constant 2 : index
    %c0_79 = arith.constant 0 : index
    %87 = vector.load %arg2[%86, %c1_77, %c2_78, %c0_79] : memref<10x10x10x4xbf16, #tpu.memory_space<vmem>>, vector<1x8x8x4xbf16>
    %88 = vector.shape_cast %87 : vector<1x8x8x4xbf16> to vector<64x4xbf16>
    %89 = arith.index_cast %70 : i32 to index
    %c2_80 = arith.constant 2 : index
    %c0_81 = arith.constant 0 : index
    %c0_82 = arith.constant 0 : index
    %90 = vector.load %arg2[%89, %c2_80, %c0_81, %c0_82] : memref<10x10x10x4xbf16, #tpu.memory_space<vmem>>, vector<1x8x8x4xbf16>
    %91 = vector.shape_cast %90 : vector<1x8x8x4xbf16> to vector<64x4xbf16>
    %92 = arith.index_cast %70 : i32 to index
    %c2_83 = arith.constant 2 : index
    %c1_84 = arith.constant 1 : index
    %c0_85 = arith.constant 0 : index
    %93 = vector.load %arg2[%92, %c2_83, %c1_84, %c0_85] : memref<10x10x10x4xbf16, #tpu.memory_space<vmem>>, vector<1x8x8x4xbf16>
    %94 = vector.shape_cast %93 : vector<1x8x8x4xbf16> to vector<64x4xbf16>
    %95 = arith.index_cast %70 : i32 to index
    %c2_86 = arith.constant 2 : index
    %c2_87 = arith.constant 2 : index
    %c0_88 = arith.constant 0 : index
    %96 = vector.load %arg2[%95, %c2_86, %c2_87, %c0_88] : memref<10x10x10x4xbf16, #tpu.memory_space<vmem>>, vector<1x8x8x4xbf16>
    %97 = vector.shape_cast %96 : vector<1x8x8x4xbf16> to vector<64x4xbf16>
    %98 = tpu.concatenate %73, %76, %79, %82, %85, %88, %91, %94, %97 in 1 : vector<64x4xbf16>, vector<64x4xbf16>, vector<64x4xbf16>, vector<64x4xbf16>, vector<64x4xbf16>, vector<64x4xbf16>, vector<64x4xbf16>, vector<64x4xbf16>, vector<64x4xbf16> -> vector<64x36xbf16>
    %c2_89 = arith.constant 2 : index
    %c0_90 = arith.constant 0 : index
    %c0_91 = arith.constant 0 : index
    %99 = vector.load %arg3[%c2_89, %c0_90, %c0_91] : memref<3x36x128xbf16, #tpu.memory_space<vmem>>, vector<1x36x128xbf16>
    %100 = vector.shape_cast %99 : vector<1x36x128xbf16> to vector<36x128xbf16>
    %cst_92 = arith.constant dense<0.000000e+00> : vector<64x128xf32>
    %101 = tpu.matmul %98, %100, %cst_92 {dimension_numbers = #tpu.dot_dimension_numbers<[1], [0], [0], [1], [0, 0, 1, 1], [], []>} : vector<64x36xbf16>, vector<36x128xbf16>, vector<64x128xf32> -> vector<64x128xf32>
    %102 = arith.addf %68, %101 : vector<64x128xf32>
    %103 = arith.truncf %102 : vector<64x128xf32> to vector<64x128xbf16>
    %c0_93 = arith.constant 0 : index
    %c0_94 = arith.constant 0 : index
    %c0_95 = arith.constant 0 : index
    %104 = vector.load %arg4[%c0_93, %c0_94, %c0_95] : memref<1x64x128xbf16, #tpu.memory_space<vmem>>, vector<1x64x128xbf16>
    %105 = vector.shape_cast %104 : vector<1x64x128xbf16> to vector<64x128xbf16>
    %106 = vector.shape_cast %103 : vector<64x128xbf16> to vector<1x64x128xbf16>
    tpu.vector_store %arg4[%c0_93, %c0_94, %c0_95], %106 {strides = array<i32>} : memref<1x64x128xbf16, #tpu.memory_space<vmem>>, vector<1x64x128xbf16>,
    %cst_96 = arith.constant dense<0.000000e+00> : vector<128xf32>
    %107 = vector.multi_reduction <add>, %102, %cst_96 [0] : vector<64x128xf32> to vector<128xf32>
    %108 = vector.shape_cast %107 : vector<128xf32> to vector<1x128xf32>
    %c0_97 = arith.constant 0 : index
    %c0_98 = arith.constant 0 : index
    %c0_99 = arith.constant 0 : index
    %109 = vector.load %arg5[%c0_97, %c0_98, %c0_99] : memref<1x2x128xf32, #tpu.memory_space<vmem>>, vector<1x1x128xf32>
    %110 = vector.shape_cast %109 : vector<1x1x128xf32> to vector<1x128xf32>
    %111 = vector.shape_cast %108 : vector<1x128xf32> to vector<1x1x128xf32>
    tpu.vector_store %arg5[%c0_97, %c0_98, %c0_99], %111 {strides = array<i32>} : memref<1x2x128xf32, #tpu.memory_space<vmem>>, vector<1x1x128xf32>,
    %112 = arith.mulf %102, %102 : vector<64x128xf32>
    %cst_100 = arith.constant dense<0.000000e+00> : vector<128xf32>
    %113 = vector.multi_reduction <add>, %112, %cst_100 [0] : vector<64x128xf32> to vector<128xf32>
    %114 = vector.shape_cast %113 : vector<128xf32> to vector<1x128xf32>
    %c0_101 = arith.constant 0 : index
    %c1_102 = arith.constant 1 : index
    %c0_103 = arith.constant 0 : index
    %115 = vector.load %arg5[%c0_101, %c1_102, %c0_103] : memref<1x2x128xf32, #tpu.memory_space<vmem>>, vector<1x1x128xf32>
    %116 = vector.shape_cast %115 : vector<1x1x128xf32> to vector<1x128xf32>
    %117 = vector.shape_cast %114 : vector<1x128xf32> to vector<1x1x128xf32>
    tpu.vector_store %arg5[%c0_101, %c1_102, %c0_103], %117 {strides = array<i32>} : memref<1x2x128xf32, #tpu.memory_space<vmem>>, vector<1x1x128xf32>,
    return
  }
  func.func @transform_0(%arg0: i32, %arg1: i32) -> (i32, i32, i32, i32) {
    %c0_i32 = arith.constant 0 : i32
    %c0_i32_0 = arith.constant 0 : i32
    %c0_i32_1 = arith.constant 0 : i32
    %c0_i32_2 = arith.constant 0 : i32
    return %arg0, %c0_i32, %c0_i32_0, %c0_i32_1 : i32, i32, i32, i32
  }
  func.func @transform_1(%arg0: i32, %arg1: i32) -> (i32, i32, i32) {
    %c0_i32 = arith.constant 0 : i32
    %c0_i32_0 = arith.constant 0 : i32
    %c0_i32_1 = arith.constant 0 : i32
    %c0_i32_2 = arith.constant 0 : i32
    return %c0_i32, %c0_i32_0, %c0_i32_1 : i32, i32, i32
  }
  func.func @transform_2(%arg0: i32, %arg1: i32) -> (i32, i32, i32) {
    %c8_i32 = arith.constant 8 : i32
    %0 = arith.muli %arg0, %c8_i32 : i32
    %1 = arith.addi %0, %arg1 : i32
    %c0_i32 = arith.constant 0 : i32
    %c0_i32_0 = arith.constant 0 : i32
    %c0_i32_1 = arith.constant 0 : i32
    return %1, %c0_i32, %c0_i32_0 : i32, i32, i32
  }
  func.func @transform_3(%arg0: i32, %arg1: i32) -> (i32, i32, i32) {
    %c8_i32 = arith.constant 8 : i32
    %0 = arith.muli %arg0, %c8_i32 : i32
    %1 = arith.addi %0, %arg1 : i32
    %c0_i32 = arith.constant 0 : i32
    %c0_i32_0 = arith.constant 0 : i32
    %c0_i32_1 = arith.constant 0 : i32
    return %1, %c0_i32, %c0_i32_0 : i32, i32, i32
  }
}

module attributes {stable_mosaic.version = 11 : i64} {
  func.func @_bn_act_kernel(%arg0: i32, %arg1: memref<8x64x128xbf16, #tpu.memory_space<vmem>>, %arg2: memref<1x1x128xf32, #tpu.memory_space<vmem>>, %arg3: memref<1x1x128xf32, #tpu.memory_space<vmem>>, %arg4: memref<8x64x128xbf16, #tpu.memory_space<vmem>>) attributes {dimension_semantics = [#tpu.dimension_semantics<parallel>], iteration_bounds = array<i64: 2>, scalar_prefetch = 0 : i64, scratch_operands = 0 : i64, tpu.core_type = #tpu.core_type<tc>, window_params = [{transform_indices = @transform_0, window_bounds = array<i64: 8, 64, 128>}, {pipeline_mode = #tpu.pipeline_mode<synchronous>, transform_indices = @transform_1, window_bounds = array<i64: 1, 1, 128>}, {pipeline_mode = #tpu.pipeline_mode<synchronous>, transform_indices = @transform_2, window_bounds = array<i64: 1, 1, 128>}, {transform_indices = @transform_3, window_bounds = array<i64: 8, 64, 128>}]} {
    %c0 = arith.constant 0 : index
    %c0_0 = arith.constant 0 : index
    %c0_1 = arith.constant 0 : index
    %0 = vector.load %arg1[%c0, %c0_0, %c0_1] : memref<8x64x128xbf16, #tpu.memory_space<vmem>>, vector<8x64x128xbf16>
    %1 = arith.extf %0 : vector<8x64x128xbf16> to vector<8x64x128xf32>
    %c0_2 = arith.constant 0 : index
    %c0_3 = arith.constant 0 : index
    %c0_4 = arith.constant 0 : index
    %2 = vector.load %arg2[%c0_2, %c0_3, %c0_4] : memref<1x1x128xf32, #tpu.memory_space<vmem>>, vector<1x1x128xf32>
    %3 = vector.broadcast %2 : vector<1x1x128xf32> to vector<8x64x128xf32>
    %4 = arith.mulf %1, %3 : vector<8x64x128xf32>
    %c0_5 = arith.constant 0 : index
    %c0_6 = arith.constant 0 : index
    %c0_7 = arith.constant 0 : index
    %5 = vector.load %arg3[%c0_5, %c0_6, %c0_7] : memref<1x1x128xf32, #tpu.memory_space<vmem>>, vector<1x1x128xf32>
    %6 = vector.broadcast %5 : vector<1x1x128xf32> to vector<8x64x128xf32>
    %7 = arith.addf %4, %6 : vector<8x64x128xf32>
    %cst = arith.constant 0.000000e+00 : f32
    %8 = vector.broadcast %cst : f32 to vector<8x64x128xf32>
    %9 = arith.maximumf %7, %8 : vector<8x64x128xf32>
    %10 = arith.truncf %9 : vector<8x64x128xf32> to vector<8x64x128xbf16>
    %c0_8 = arith.constant 0 : index
    %c0_9 = arith.constant 0 : index
    %c0_10 = arith.constant 0 : index
    %11 = vector.load %arg4[%c0_8, %c0_9, %c0_10] : memref<8x64x128xbf16, #tpu.memory_space<vmem>>, vector<8x64x128xbf16>
    tpu.vector_store %arg4[%c0_8, %c0_9, %c0_10], %10 {strides = array<i32>} : memref<8x64x128xbf16, #tpu.memory_space<vmem>>, vector<8x64x128xbf16>,
    return
  }
  func.func @transform_0(%arg0: i32) -> (i32, i32, i32) {
    %c0_i32 = arith.constant 0 : i32
    %c0_i32_0 = arith.constant 0 : i32
    %c0_i32_1 = arith.constant 0 : i32
    return %arg0, %c0_i32, %c0_i32_0 : i32, i32, i32
  }
  func.func @transform_1(%arg0: i32) -> (i32, i32, i32) {
    %c0_i32 = arith.constant 0 : i32
    %c0_i32_0 = arith.constant 0 : i32
    %c0_i32_1 = arith.constant 0 : i32
    %c0_i32_2 = arith.constant 0 : i32
    return %c0_i32, %c0_i32_0, %c0_i32_1 : i32, i32, i32
  }
  func.func @transform_2(%arg0: i32) -> (i32, i32, i32) {
    %c0_i32 = arith.constant 0 : i32
    %c0_i32_0 = arith.constant 0 : i32
    %c0_i32_1 = arith.constant 0 : i32
    %c0_i32_2 = arith.constant 0 : i32
    return %c0_i32, %c0_i32_0, %c0_i32_1 : i32, i32, i32
  }
  func.func @transform_3(%arg0: i32) -> (i32, i32, i32) {
    %c0_i32 = arith.constant 0 : i32
    %c0_i32_0 = arith.constant 0 : i32
    %c0_i32_1 = arith.constant 0 : i32
    return %arg0, %c0_i32, %c0_i32_0 : i32, i32, i32
  }
}

module attributes {stable_mosaic.version = 11 : i64} {
  func.func @_conv_plane_kernel(%arg0: i32, %arg1: i32, %arg2: memref<10x10x10x8xbf16, #tpu.memory_space<vmem>>, %arg3: memref<3x72x128xbf16, #tpu.memory_space<vmem>>, %arg4: memref<1x64x128xbf16, #tpu.memory_space<vmem>>, %arg5: memref<1x2x128xf32, #tpu.memory_space<vmem>>) attributes {dimension_semantics = [#tpu.dimension_semantics<parallel>, #tpu.dimension_semantics<parallel>], iteration_bounds = array<i64: 2, 8>, scalar_prefetch = 0 : i64, scratch_operands = 0 : i64, tpu.core_type = #tpu.core_type<tc>, window_params = [{transform_indices = @transform_0, window_bounds = array<i64: 10, 10, 10, 8>}, {pipeline_mode = #tpu.pipeline_mode<synchronous>, transform_indices = @transform_1, window_bounds = array<i64: 3, 72, 128>}, {transform_indices = @transform_2, window_bounds = array<i64: 1, 64, 128>}, {transform_indices = @transform_3, window_bounds = array<i64: 1, 2, 128>}]} {
    %cst = arith.constant 0.000000e+00 : f32
    %0 = vector.broadcast %cst : f32 to vector<64x128xf32>
    %c1_i32 = arith.constant 1 : i32
    %1 = arith.muli %arg1, %c1_i32 : i32
    %c0_i32 = arith.constant 0 : i32
    %2 = arith.addi %1, %c0_i32 : i32
    %3 = arith.index_cast %2 : i32 to index
    %c0 = arith.constant 0 : index
    %c0_0 = arith.constant 0 : index
    %c0_1 = arith.constant 0 : index
    %4 = vector.load %arg2[%3, %c0, %c0_0, %c0_1] : memref<10x10x10x8xbf16, #tpu.memory_space<vmem>>, vector<1x8x8x8xbf16>
    %5 = vector.shape_cast %4 : vector<1x8x8x8xbf16> to vector<64x8xbf16>
    %6 = arith.index_cast %2 : i32 to index
    %c0_2 = arith.constant 0 : index
    %c1 = arith.constant 1 : index
    %c0_3 = arith.constant 0 : index
    %7 = vector.load %arg2[%6, %c0_2, %c1, %c0_3] : memref<10x10x10x8xbf16, #tpu.memory_space<vmem>>, vector<1x8x8x8xbf16>
    %8 = vector.shape_cast %7 : vector<1x8x8x8xbf16> to vector<64x8xbf16>
    %9 = arith.index_cast %2 : i32 to index
    %c0_4 = arith.constant 0 : index
    %c2 = arith.constant 2 : index
    %c0_5 = arith.constant 0 : index
    %10 = vector.load %arg2[%9, %c0_4, %c2, %c0_5] : memref<10x10x10x8xbf16, #tpu.memory_space<vmem>>, vector<1x8x8x8xbf16>
    %11 = vector.shape_cast %10 : vector<1x8x8x8xbf16> to vector<64x8xbf16>
    %12 = arith.index_cast %2 : i32 to index
    %c1_6 = arith.constant 1 : index
    %c0_7 = arith.constant 0 : index
    %c0_8 = arith.constant 0 : index
    %13 = vector.load %arg2[%12, %c1_6, %c0_7, %c0_8] : memref<10x10x10x8xbf16, #tpu.memory_space<vmem>>, vector<1x8x8x8xbf16>
    %14 = vector.shape_cast %13 : vector<1x8x8x8xbf16> to vector<64x8xbf16>
    %15 = arith.index_cast %2 : i32 to index
    %c1_9 = arith.constant 1 : index
    %c1_10 = arith.constant 1 : index
    %c0_11 = arith.constant 0 : index
    %16 = vector.load %arg2[%15, %c1_9, %c1_10, %c0_11] : memref<10x10x10x8xbf16, #tpu.memory_space<vmem>>, vector<1x8x8x8xbf16>
    %17 = vector.shape_cast %16 : vector<1x8x8x8xbf16> to vector<64x8xbf16>
    %18 = arith.index_cast %2 : i32 to index
    %c1_12 = arith.constant 1 : index
    %c2_13 = arith.constant 2 : index
    %c0_14 = arith.constant 0 : index
    %19 = vector.load %arg2[%18, %c1_12, %c2_13, %c0_14] : memref<10x10x10x8xbf16, #tpu.memory_space<vmem>>, vector<1x8x8x8xbf16>
    %20 = vector.shape_cast %19 : vector<1x8x8x8xbf16> to vector<64x8xbf16>
    %21 = arith.index_cast %2 : i32 to index
    %c2_15 = arith.constant 2 : index
    %c0_16 = arith.constant 0 : index
    %c0_17 = arith.constant 0 : index
    %22 = vector.load %arg2[%21, %c2_15, %c0_16, %c0_17] : memref<10x10x10x8xbf16, #tpu.memory_space<vmem>>, vector<1x8x8x8xbf16>
    %23 = vector.shape_cast %22 : vector<1x8x8x8xbf16> to vector<64x8xbf16>
    %24 = arith.index_cast %2 : i32 to index
    %c2_18 = arith.constant 2 : index
    %c1_19 = arith.constant 1 : index
    %c0_20 = arith.constant 0 : index
    %25 = vector.load %arg2[%24, %c2_18, %c1_19, %c0_20] : memref<10x10x10x8xbf16, #tpu.memory_space<vmem>>, vector<1x8x8x8xbf16>
    %26 = vector.shape_cast %25 : vector<1x8x8x8xbf16> to vector<64x8xbf16>
    %27 = arith.index_cast %2 : i32 to index
    %c2_21 = arith.constant 2 : index
    %c2_22 = arith.constant 2 : index
    %c0_23 = arith.constant 0 : index
    %28 = vector.load %arg2[%27, %c2_21, %c2_22, %c0_23] : memref<10x10x10x8xbf16, #tpu.memory_space<vmem>>, vector<1x8x8x8xbf16>
    %29 = vector.shape_cast %28 : vector<1x8x8x8xbf16> to vector<64x8xbf16>
    %30 = tpu.concatenate %5, %8, %11, %14, %17, %20, %23, %26, %29 in 1 : vector<64x8xbf16>, vector<64x8xbf16>, vector<64x8xbf16>, vector<64x8xbf16>, vector<64x8xbf16>, vector<64x8xbf16>, vector<64x8xbf16>, vector<64x8xbf16>, vector<64x8xbf16> -> vector<64x72xbf16>
    %c0_24 = arith.constant 0 : index
    %c0_25 = arith.constant 0 : index
    %c0_26 = arith.constant 0 : index
    %31 = vector.load %arg3[%c0_24, %c0_25, %c0_26] : memref<3x72x128xbf16, #tpu.memory_space<vmem>>, vector<1x72x128xbf16>
    %32 = vector.shape_cast %31 : vector<1x72x128xbf16> to vector<72x128xbf16>
    %cst_27 = arith.constant dense<0.000000e+00> : vector<64x128xf32>
    %33 = tpu.matmul %30, %32, %cst_27 {dimension_numbers = #tpu.dot_dimension_numbers<[1], [0], [0], [1], [0, 0, 1, 1], [], []>} : vector<64x72xbf16>, vector<72x128xbf16>, vector<64x128xf32> -> vector<64x128xf32>
    %34 = arith.addf %0, %33 : vector<64x128xf32>
    %c1_i32_28 = arith.constant 1 : i32
    %35 = arith.muli %arg1, %c1_i32_28 : i32
    %c1_i32_29 = arith.constant 1 : i32
    %36 = arith.addi %35, %c1_i32_29 : i32
    %37 = arith.index_cast %36 : i32 to index
    %c0_30 = arith.constant 0 : index
    %c0_31 = arith.constant 0 : index
    %c0_32 = arith.constant 0 : index
    %38 = vector.load %arg2[%37, %c0_30, %c0_31, %c0_32] : memref<10x10x10x8xbf16, #tpu.memory_space<vmem>>, vector<1x8x8x8xbf16>
    %39 = vector.shape_cast %38 : vector<1x8x8x8xbf16> to vector<64x8xbf16>
    %40 = arith.index_cast %36 : i32 to index
    %c0_33 = arith.constant 0 : index
    %c1_34 = arith.constant 1 : index
    %c0_35 = arith.constant 0 : index
    %41 = vector.load %arg2[%40, %c0_33, %c1_34, %c0_35] : memref<10x10x10x8xbf16, #tpu.memory_space<vmem>>, vector<1x8x8x8xbf16>
    %42 = vector.shape_cast %41 : vector<1x8x8x8xbf16> to vector<64x8xbf16>
    %43 = arith.index_cast %36 : i32 to index
    %c0_36 = arith.constant 0 : index
    %c2_37 = arith.constant 2 : index
    %c0_38 = arith.constant 0 : index
    %44 = vector.load %arg2[%43, %c0_36, %c2_37, %c0_38] : memref<10x10x10x8xbf16, #tpu.memory_space<vmem>>, vector<1x8x8x8xbf16>
    %45 = vector.shape_cast %44 : vector<1x8x8x8xbf16> to vector<64x8xbf16>
    %46 = arith.index_cast %36 : i32 to index
    %c1_39 = arith.constant 1 : index
    %c0_40 = arith.constant 0 : index
    %c0_41 = arith.constant 0 : index
    %47 = vector.load %arg2[%46, %c1_39, %c0_40, %c0_41] : memref<10x10x10x8xbf16, #tpu.memory_space<vmem>>, vector<1x8x8x8xbf16>
    %48 = vector.shape_cast %47 : vector<1x8x8x8xbf16> to vector<64x8xbf16>
    %49 = arith.index_cast %36 : i32 to index
    %c1_42 = arith.constant 1 : index
    %c1_43 = arith.constant 1 : index
    %c0_44 = arith.constant 0 : index
    %50 = vector.load %arg2[%49, %c1_42, %c1_43, %c0_44] : memref<10x10x10x8xbf16, #tpu.memory_space<vmem>>, vector<1x8x8x8xbf16>
    %51 = vector.shape_cast %50 : vector<1x8x8x8xbf16> to vector<64x8xbf16>
    %52 = arith.index_cast %36 : i32 to index
    %c1_45 = arith.constant 1 : index
    %c2_46 = arith.constant 2 : index
    %c0_47 = arith.constant 0 : index
    %53 = vector.load %arg2[%52, %c1_45, %c2_46, %c0_47] : memref<10x10x10x8xbf16, #tpu.memory_space<vmem>>, vector<1x8x8x8xbf16>
    %54 = vector.shape_cast %53 : vector<1x8x8x8xbf16> to vector<64x8xbf16>
    %55 = arith.index_cast %36 : i32 to index
    %c2_48 = arith.constant 2 : index
    %c0_49 = arith.constant 0 : index
    %c0_50 = arith.constant 0 : index
    %56 = vector.load %arg2[%55, %c2_48, %c0_49, %c0_50] : memref<10x10x10x8xbf16, #tpu.memory_space<vmem>>, vector<1x8x8x8xbf16>
    %57 = vector.shape_cast %56 : vector<1x8x8x8xbf16> to vector<64x8xbf16>
    %58 = arith.index_cast %36 : i32 to index
    %c2_51 = arith.constant 2 : index
    %c1_52 = arith.constant 1 : index
    %c0_53 = arith.constant 0 : index
    %59 = vector.load %arg2[%58, %c2_51, %c1_52, %c0_53] : memref<10x10x10x8xbf16, #tpu.memory_space<vmem>>, vector<1x8x8x8xbf16>
    %60 = vector.shape_cast %59 : vector<1x8x8x8xbf16> to vector<64x8xbf16>
    %61 = arith.index_cast %36 : i32 to index
    %c2_54 = arith.constant 2 : index
    %c2_55 = arith.constant 2 : index
    %c0_56 = arith.constant 0 : index
    %62 = vector.load %arg2[%61, %c2_54, %c2_55, %c0_56] : memref<10x10x10x8xbf16, #tpu.memory_space<vmem>>, vector<1x8x8x8xbf16>
    %63 = vector.shape_cast %62 : vector<1x8x8x8xbf16> to vector<64x8xbf16>
    %64 = tpu.concatenate %39, %42, %45, %48, %51, %54, %57, %60, %63 in 1 : vector<64x8xbf16>, vector<64x8xbf16>, vector<64x8xbf16>, vector<64x8xbf16>, vector<64x8xbf16>, vector<64x8xbf16>, vector<64x8xbf16>, vector<64x8xbf16>, vector<64x8xbf16> -> vector<64x72xbf16>
    %c1_57 = arith.constant 1 : index
    %c0_58 = arith.constant 0 : index
    %c0_59 = arith.constant 0 : index
    %65 = vector.load %arg3[%c1_57, %c0_58, %c0_59] : memref<3x72x128xbf16, #tpu.memory_space<vmem>>, vector<1x72x128xbf16>
    %66 = vector.shape_cast %65 : vector<1x72x128xbf16> to vector<72x128xbf16>
    %cst_60 = arith.constant dense<0.000000e+00> : vector<64x128xf32>
    %67 = tpu.matmul %64, %66, %cst_60 {dimension_numbers = #tpu.dot_dimension_numbers<[1], [0], [0], [1], [0, 0, 1, 1], [], []>} : vector<64x72xbf16>, vector<72x128xbf16>, vector<64x128xf32> -> vector<64x128xf32>
    %68 = arith.addf %34, %67 : vector<64x128xf32>
    %c1_i32_61 = arith.constant 1 : i32
    %69 = arith.muli %arg1, %c1_i32_61 : i32
    %c2_i32 = arith.constant 2 : i32
    %70 = arith.addi %69, %c2_i32 : i32
    %71 = arith.index_cast %70 : i32 to index
    %c0_62 = arith.constant 0 : index
    %c0_63 = arith.constant 0 : index
    %c0_64 = arith.constant 0 : index
    %72 = vector.load %arg2[%71, %c0_62, %c0_63, %c0_64] : memref<10x10x10x8xbf16, #tpu.memory_space<vmem>>, vector<1x8x8x8xbf16>
    %73 = vector.shape_cast %72 : vector<1x8x8x8xbf16> to vector<64x8xbf16>
    %74 = arith.index_cast %70 : i32 to index
    %c0_65 = arith.constant 0 : index
    %c1_66 = arith.constant 1 : index
    %c0_67 = arith.constant 0 : index
    %75 = vector.load %arg2[%74, %c0_65, %c1_66, %c0_67] : memref<10x10x10x8xbf16, #tpu.memory_space<vmem>>, vector<1x8x8x8xbf16>
    %76 = vector.shape_cast %75 : vector<1x8x8x8xbf16> to vector<64x8xbf16>
    %77 = arith.index_cast %70 : i32 to index
    %c0_68 = arith.constant 0 : index
    %c2_69 = arith.constant 2 : index
    %c0_70 = arith.constant 0 : index
    %78 = vector.load %arg2[%77, %c0_68, %c2_69, %c0_70] : memref<10x10x10x8xbf16, #tpu.memory_space<vmem>>, vector<1x8x8x8xbf16>
    %79 = vector.shape_cast %78 : vector<1x8x8x8xbf16> to vector<64x8xbf16>
    %80 = arith.index_cast %70 : i32 to index
    %c1_71 = arith.constant 1 : index
    %c0_72 = arith.constant 0 : index
    %c0_73 = arith.constant 0 : index
    %81 = vector.load %arg2[%80, %c1_71, %c0_72, %c0_73] : memref<10x10x10x8xbf16, #tpu.memory_space<vmem>>, vector<1x8x8x8xbf16>
    %82 = vector.shape_cast %81 : vector<1x8x8x8xbf16> to vector<64x8xbf16>
    %83 = arith.index_cast %70 : i32 to index
    %c1_74 = arith.constant 1 : index
    %c1_75 = arith.constant 1 : index
    %c0_76 = arith.constant 0 : index
    %84 = vector.load %arg2[%83, %c1_74, %c1_75, %c0_76] : memref<10x10x10x8xbf16, #tpu.memory_space<vmem>>, vector<1x8x8x8xbf16>
    %85 = vector.shape_cast %84 : vector<1x8x8x8xbf16> to vector<64x8xbf16>
    %86 = arith.index_cast %70 : i32 to index
    %c1_77 = arith.constant 1 : index
    %c2_78 = arith.constant 2 : index
    %c0_79 = arith.constant 0 : index
    %87 = vector.load %arg2[%86, %c1_77, %c2_78, %c0_79] : memref<10x10x10x8xbf16, #tpu.memory_space<vmem>>, vector<1x8x8x8xbf16>
    %88 = vector.shape_cast %87 : vector<1x8x8x8xbf16> to vector<64x8xbf16>
    %89 = arith.index_cast %70 : i32 to index
    %c2_80 = arith.constant 2 : index
    %c0_81 = arith.constant 0 : index
    %c0_82 = arith.constant 0 : index
    %90 = vector.load %arg2[%89, %c2_80, %c0_81, %c0_82] : memref<10x10x10x8xbf16, #tpu.memory_space<vmem>>, vector<1x8x8x8xbf16>
    %91 = vector.shape_cast %90 : vector<1x8x8x8xbf16> to vector<64x8xbf16>
    %92 = arith.index_cast %70 : i32 to index
    %c2_83 = arith.constant 2 : index
    %c1_84 = arith.constant 1 : index
    %c0_85 = arith.constant 0 : index
    %93 = vector.load %arg2[%92, %c2_83, %c1_84, %c0_85] : memref<10x10x10x8xbf16, #tpu.memory_space<vmem>>, vector<1x8x8x8xbf16>
    %94 = vector.shape_cast %93 : vector<1x8x8x8xbf16> to vector<64x8xbf16>
    %95 = arith.index_cast %70 : i32 to index
    %c2_86 = arith.constant 2 : index
    %c2_87 = arith.constant 2 : index
    %c0_88 = arith.constant 0 : index
    %96 = vector.load %arg2[%95, %c2_86, %c2_87, %c0_88] : memref<10x10x10x8xbf16, #tpu.memory_space<vmem>>, vector<1x8x8x8xbf16>
    %97 = vector.shape_cast %96 : vector<1x8x8x8xbf16> to vector<64x8xbf16>
    %98 = tpu.concatenate %73, %76, %79, %82, %85, %88, %91, %94, %97 in 1 : vector<64x8xbf16>, vector<64x8xbf16>, vector<64x8xbf16>, vector<64x8xbf16>, vector<64x8xbf16>, vector<64x8xbf16>, vector<64x8xbf16>, vector<64x8xbf16>, vector<64x8xbf16> -> vector<64x72xbf16>
    %c2_89 = arith.constant 2 : index
    %c0_90 = arith.constant 0 : index
    %c0_91 = arith.constant 0 : index
    %99 = vector.load %arg3[%c2_89, %c0_90, %c0_91] : memref<3x72x128xbf16, #tpu.memory_space<vmem>>, vector<1x72x128xbf16>
    %100 = vector.shape_cast %99 : vector<1x72x128xbf16> to vector<72x128xbf16>
    %cst_92 = arith.constant dense<0.000000e+00> : vector<64x128xf32>
    %101 = tpu.matmul %98, %100, %cst_92 {dimension_numbers = #tpu.dot_dimension_numbers<[1], [0], [0], [1], [0, 0, 1, 1], [], []>} : vector<64x72xbf16>, vector<72x128xbf16>, vector<64x128xf32> -> vector<64x128xf32>
    %102 = arith.addf %68, %101 : vector<64x128xf32>
    %103 = arith.truncf %102 : vector<64x128xf32> to vector<64x128xbf16>
    %c0_93 = arith.constant 0 : index
    %c0_94 = arith.constant 0 : index
    %c0_95 = arith.constant 0 : index
    %104 = vector.load %arg4[%c0_93, %c0_94, %c0_95] : memref<1x64x128xbf16, #tpu.memory_space<vmem>>, vector<1x64x128xbf16>
    %105 = vector.shape_cast %104 : vector<1x64x128xbf16> to vector<64x128xbf16>
    %106 = vector.shape_cast %103 : vector<64x128xbf16> to vector<1x64x128xbf16>
    tpu.vector_store %arg4[%c0_93, %c0_94, %c0_95], %106 {strides = array<i32>} : memref<1x64x128xbf16, #tpu.memory_space<vmem>>, vector<1x64x128xbf16>,
    %cst_96 = arith.constant dense<0.000000e+00> : vector<128xf32>
    %107 = vector.multi_reduction <add>, %102, %cst_96 [0] : vector<64x128xf32> to vector<128xf32>
    %108 = vector.shape_cast %107 : vector<128xf32> to vector<1x128xf32>
    %c0_97 = arith.constant 0 : index
    %c0_98 = arith.constant 0 : index
    %c0_99 = arith.constant 0 : index
    %109 = vector.load %arg5[%c0_97, %c0_98, %c0_99] : memref<1x2x128xf32, #tpu.memory_space<vmem>>, vector<1x1x128xf32>
    %110 = vector.shape_cast %109 : vector<1x1x128xf32> to vector<1x128xf32>
    %111 = vector.shape_cast %108 : vector<1x128xf32> to vector<1x1x128xf32>
    tpu.vector_store %arg5[%c0_97, %c0_98, %c0_99], %111 {strides = array<i32>} : memref<1x2x128xf32, #tpu.memory_space<vmem>>, vector<1x1x128xf32>,
    %112 = arith.mulf %102, %102 : vector<64x128xf32>
    %cst_100 = arith.constant dense<0.000000e+00> : vector<128xf32>
    %113 = vector.multi_reduction <add>, %112, %cst_100 [0] : vector<64x128xf32> to vector<128xf32>
    %114 = vector.shape_cast %113 : vector<128xf32> to vector<1x128xf32>
    %c0_101 = arith.constant 0 : index
    %c1_102 = arith.constant 1 : index
    %c0_103 = arith.constant 0 : index
    %115 = vector.load %arg5[%c0_101, %c1_102, %c0_103] : memref<1x2x128xf32, #tpu.memory_space<vmem>>, vector<1x1x128xf32>
    %116 = vector.shape_cast %115 : vector<1x1x128xf32> to vector<1x128xf32>
    %117 = vector.shape_cast %114 : vector<1x128xf32> to vector<1x1x128xf32>
    tpu.vector_store %arg5[%c0_101, %c1_102, %c0_103], %117 {strides = array<i32>} : memref<1x2x128xf32, #tpu.memory_space<vmem>>, vector<1x1x128xf32>,
    return
  }
  func.func @transform_0(%arg0: i32, %arg1: i32) -> (i32, i32, i32, i32) {
    %c0_i32 = arith.constant 0 : i32
    %c0_i32_0 = arith.constant 0 : i32
    %c0_i32_1 = arith.constant 0 : i32
    %c0_i32_2 = arith.constant 0 : i32
    return %arg0, %c0_i32, %c0_i32_0, %c0_i32_1 : i32, i32, i32, i32
  }
  func.func @transform_1(%arg0: i32, %arg1: i32) -> (i32, i32, i32) {
    %c0_i32 = arith.constant 0 : i32
    %c0_i32_0 = arith.constant 0 : i32
    %c0_i32_1 = arith.constant 0 : i32
    %c0_i32_2 = arith.constant 0 : i32
    return %c0_i32, %c0_i32_0, %c0_i32_1 : i32, i32, i32
  }
  func.func @transform_2(%arg0: i32, %arg1: i32) -> (i32, i32, i32) {
    %c8_i32 = arith.constant 8 : i32
    %0 = arith.muli %arg0, %c8_i32 : i32
    %1 = arith.addi %0, %arg1 : i32
    %c0_i32 = arith.constant 0 : i32
    %c0_i32_0 = arith.constant 0 : i32
    %c0_i32_1 = arith.constant 0 : i32
    return %1, %c0_i32, %c0_i32_0 : i32, i32, i32
  }
  func.func @transform_3(%arg0: i32, %arg1: i32) -> (i32, i32, i32) {
    %c8_i32 = arith.constant 8 : i32
    %0 = arith.muli %arg0, %c8_i32 : i32
    %1 = arith.addi %0, %arg1 : i32
    %c0_i32 = arith.constant 0 : i32
    %c0_i32_0 = arith.constant 0 : i32
    %c0_i32_1 = arith.constant 0 : i32
    return %1, %c0_i32, %c0_i32_0 : i32, i32, i32
  }
}

module attributes {stable_mosaic.version = 11 : i64} {
  func.func @_bn_act_kernel(%arg0: i32, %arg1: memref<8x64x128xbf16, #tpu.memory_space<vmem>>, %arg2: memref<1x1x128xf32, #tpu.memory_space<vmem>>, %arg3: memref<1x1x128xf32, #tpu.memory_space<vmem>>, %arg4: memref<8x64x128xbf16, #tpu.memory_space<vmem>>) attributes {dimension_semantics = [#tpu.dimension_semantics<parallel>], iteration_bounds = array<i64: 2>, scalar_prefetch = 0 : i64, scratch_operands = 0 : i64, tpu.core_type = #tpu.core_type<tc>, window_params = [{transform_indices = @transform_0, window_bounds = array<i64: 8, 64, 128>}, {pipeline_mode = #tpu.pipeline_mode<synchronous>, transform_indices = @transform_1, window_bounds = array<i64: 1, 1, 128>}, {pipeline_mode = #tpu.pipeline_mode<synchronous>, transform_indices = @transform_2, window_bounds = array<i64: 1, 1, 128>}, {transform_indices = @transform_3, window_bounds = array<i64: 8, 64, 128>}]} {
    %c0 = arith.constant 0 : index
    %c0_0 = arith.constant 0 : index
    %c0_1 = arith.constant 0 : index
    %0 = vector.load %arg1[%c0, %c0_0, %c0_1] : memref<8x64x128xbf16, #tpu.memory_space<vmem>>, vector<8x64x128xbf16>
    %1 = arith.extf %0 : vector<8x64x128xbf16> to vector<8x64x128xf32>
    %c0_2 = arith.constant 0 : index
    %c0_3 = arith.constant 0 : index
    %c0_4 = arith.constant 0 : index
    %2 = vector.load %arg2[%c0_2, %c0_3, %c0_4] : memref<1x1x128xf32, #tpu.memory_space<vmem>>, vector<1x1x128xf32>
    %3 = vector.broadcast %2 : vector<1x1x128xf32> to vector<8x64x128xf32>
    %4 = arith.mulf %1, %3 : vector<8x64x128xf32>
    %c0_5 = arith.constant 0 : index
    %c0_6 = arith.constant 0 : index
    %c0_7 = arith.constant 0 : index
    %5 = vector.load %arg3[%c0_5, %c0_6, %c0_7] : memref<1x1x128xf32, #tpu.memory_space<vmem>>, vector<1x1x128xf32>
    %6 = vector.broadcast %5 : vector<1x1x128xf32> to vector<8x64x128xf32>
    %7 = arith.addf %4, %6 : vector<8x64x128xf32>
    %8 = arith.truncf %7 : vector<8x64x128xf32> to vector<8x64x128xbf16>
    %c0_8 = arith.constant 0 : index
    %c0_9 = arith.constant 0 : index
    %c0_10 = arith.constant 0 : index
    %9 = vector.load %arg4[%c0_8, %c0_9, %c0_10] : memref<8x64x128xbf16, #tpu.memory_space<vmem>>, vector<8x64x128xbf16>
    tpu.vector_store %arg4[%c0_8, %c0_9, %c0_10], %8 {strides = array<i32>} : memref<8x64x128xbf16, #tpu.memory_space<vmem>>, vector<8x64x128xbf16>,
    return
  }
  func.func @transform_0(%arg0: i32) -> (i32, i32, i32) {
    %c0_i32 = arith.constant 0 : i32
    %c0_i32_0 = arith.constant 0 : i32
    %c0_i32_1 = arith.constant 0 : i32
    return %arg0, %c0_i32, %c0_i32_0 : i32, i32, i32
  }
  func.func @transform_1(%arg0: i32) -> (i32, i32, i32) {
    %c0_i32 = arith.constant 0 : i32
    %c0_i32_0 = arith.constant 0 : i32
    %c0_i32_1 = arith.constant 0 : i32
    %c0_i32_2 = arith.constant 0 : i32
    return %c0_i32, %c0_i32_0, %c0_i32_1 : i32, i32, i32
  }
  func.func @transform_2(%arg0: i32) -> (i32, i32, i32) {
    %c0_i32 = arith.constant 0 : i32
    %c0_i32_0 = arith.constant 0 : i32
    %c0_i32_1 = arith.constant 0 : i32
    %c0_i32_2 = arith.constant 0 : i32
    return %c0_i32, %c0_i32_0, %c0_i32_1 : i32, i32, i32
  }
  func.func @transform_3(%arg0: i32) -> (i32, i32, i32) {
    %c0_i32 = arith.constant 0 : i32
    %c0_i32_0 = arith.constant 0 : i32
    %c0_i32_1 = arith.constant 0 : i32
    return %arg0, %c0_i32, %c0_i32_0 : i32, i32, i32
  }
}

module attributes {stable_mosaic.version = 11 : i64} {
  func.func @_conv_plane_kernel(%arg0: i32, %arg1: i32, %arg2: memref<8x8x8x4xbf16, #tpu.memory_space<vmem>>, %arg3: memref<1x4x128xbf16, #tpu.memory_space<vmem>>, %arg4: memref<1x64x128xbf16, #tpu.memory_space<vmem>>, %arg5: memref<1x2x128xf32, #tpu.memory_space<vmem>>) attributes {dimension_semantics = [#tpu.dimension_semantics<parallel>, #tpu.dimension_semantics<parallel>], iteration_bounds = array<i64: 2, 8>, scalar_prefetch = 0 : i64, scratch_operands = 0 : i64, tpu.core_type = #tpu.core_type<tc>, window_params = [{transform_indices = @transform_0, window_bounds = array<i64: 8, 8, 8, 4>}, {pipeline_mode = #tpu.pipeline_mode<synchronous>, transform_indices = @transform_1, window_bounds = array<i64: 1, 4, 128>}, {transform_indices = @transform_2, window_bounds = array<i64: 1, 64, 128>}, {transform_indices = @transform_3, window_bounds = array<i64: 1, 2, 128>}]} {
    %cst = arith.constant 0.000000e+00 : f32
    %0 = vector.broadcast %cst : f32 to vector<64x128xf32>
    %c1_i32 = arith.constant 1 : i32
    %1 = arith.muli %arg1, %c1_i32 : i32
    %c0_i32 = arith.constant 0 : i32
    %2 = arith.addi %1, %c0_i32 : i32
    %3 = arith.index_cast %2 : i32 to index
    %c0 = arith.constant 0 : index
    %c0_0 = arith.constant 0 : index
    %c0_1 = arith.constant 0 : index
    %4 = vector.load %arg2[%3, %c0, %c0_0, %c0_1] : memref<8x8x8x4xbf16, #tpu.memory_space<vmem>>, vector<1x8x8x4xbf16>
    %5 = vector.shape_cast %4 : vector<1x8x8x4xbf16> to vector<64x4xbf16>
    %c0_2 = arith.constant 0 : index
    %c0_3 = arith.constant 0 : index
    %c0_4 = arith.constant 0 : index
    %6 = vector.load %arg3[%c0_2, %c0_3, %c0_4] : memref<1x4x128xbf16, #tpu.memory_space<vmem>>, vector<1x4x128xbf16>
    %7 = vector.shape_cast %6 : vector<1x4x128xbf16> to vector<4x128xbf16>
    %cst_5 = arith.constant dense<0.000000e+00> : vector<64x128xf32>
    %8 = tpu.matmul %5, %7, %cst_5 {dimension_numbers = #tpu.dot_dimension_numbers<[1], [0], [0], [1], [0, 0, 1, 1], [], []>} : vector<64x4xbf16>, vector<4x128xbf16>, vector<64x128xf32> -> vector<64x128xf32>
    %9 = arith.addf %0, %8 : vector<64x128xf32>
    %10 = arith.truncf %9 : vector<64x128xf32> to vector<64x128xbf16>
    %c0_6 = arith.constant 0 : index
    %c0_7 = arith.constant 0 : index
    %c0_8 = arith.constant 0 : index
    %11 = vector.load %arg4[%c0_6, %c0_7, %c0_8] : memref<1x64x128xbf16, #tpu.memory_space<vmem>>, vector<1x64x128xbf16>
    %12 = vector.shape_cast %11 : vector<1x64x128xbf16> to vector<64x128xbf16>
    %13 = vector.shape_cast %10 : vector<64x128xbf16> to vector<1x64x128xbf16>
    tpu.vector_store %arg4[%c0_6, %c0_7, %c0_8], %13 {strides = array<i32>} : memref<1x64x128xbf16, #tpu.memory_space<vmem>>, vector<1x64x128xbf16>,
    %cst_9 = arith.constant dense<0.000000e+00> : vector<128xf32>
    %14 = vector.multi_reduction <add>, %9, %cst_9 [0] : vector<64x128xf32> to vector<128xf32>
    %15 = vector.shape_cast %14 : vector<128xf32> to vector<1x128xf32>
    %c0_10 = arith.constant 0 : index
    %c0_11 = arith.constant 0 : index
    %c0_12 = arith.constant 0 : index
    %16 = vector.load %arg5[%c0_10, %c0_11, %c0_12] : memref<1x2x128xf32, #tpu.memory_space<vmem>>, vector<1x1x128xf32>
    %17 = vector.shape_cast %16 : vector<1x1x128xf32> to vector<1x128xf32>
    %18 = vector.shape_cast %15 : vector<1x128xf32> to vector<1x1x128xf32>
    tpu.vector_store %arg5[%c0_10, %c0_11, %c0_12], %18 {strides = array<i32>} : memref<1x2x128xf32, #tpu.memory_space<vmem>>, vector<1x1x128xf32>,
    %19 = arith.mulf %9, %9 : vector<64x128xf32>
    %cst_13 = arith.constant dense<0.000000e+00> : vector<128xf32>
    %20 = vector.multi_reduction <add>, %19, %cst_13 [0] : vector<64x128xf32> to vector<128xf32>
    %21 = vector.shape_cast %20 : vector<128xf32> to vector<1x128xf32>
    %c0_14 = arith.constant 0 : index
    %c1 = arith.constant 1 : index
    %c0_15 = arith.constant 0 : index
    %22 = vector.load %arg5[%c0_14, %c1, %c0_15] : memref<1x2x128xf32, #tpu.memory_space<vmem>>, vector<1x1x128xf32>
    %23 = vector.shape_cast %22 : vector<1x1x128xf32> to vector<1x128xf32>
    %24 = vector.shape_cast %21 : vector<1x128xf32> to vector<1x1x128xf32>
    tpu.vector_store %arg5[%c0_14, %c1, %c0_15], %24 {strides = array<i32>} : memref<1x2x128xf32, #tpu.memory_space<vmem>>, vector<1x1x128xf32>,
    return
  }
  func.func @transform_0(%arg0: i32, %arg1: i32) -> (i32, i32, i32, i32) {
    %c0_i32 = arith.constant 0 : i32
    %c0_i32_0 = arith.constant 0 : i32
    %c0_i32_1 = arith.constant 0 : i32
    %c0_i32_2 = arith.constant 0 : i32
    return %arg0, %c0_i32, %c0_i32_0, %c0_i32_1 : i32, i32, i32, i32
  }
  func.func @transform_1(%arg0: i32, %arg1: i32) -> (i32, i32, i32) {
    %c0_i32 = arith.constant 0 : i32
    %c0_i32_0 = arith.constant 0 : i32
    %c0_i32_1 = arith.constant 0 : i32
    %c0_i32_2 = arith.constant 0 : i32
    return %c0_i32, %c0_i32_0, %c0_i32_1 : i32, i32, i32
  }
  func.func @transform_2(%arg0: i32, %arg1: i32) -> (i32, i32, i32) {
    %c8_i32 = arith.constant 8 : i32
    %0 = arith.muli %arg0, %c8_i32 : i32
    %1 = arith.addi %0, %arg1 : i32
    %c0_i32 = arith.constant 0 : i32
    %c0_i32_0 = arith.constant 0 : i32
    %c0_i32_1 = arith.constant 0 : i32
    return %1, %c0_i32, %c0_i32_0 : i32, i32, i32
  }
  func.func @transform_3(%arg0: i32, %arg1: i32) -> (i32, i32, i32) {
    %c8_i32 = arith.constant 8 : i32
    %0 = arith.muli %arg0, %c8_i32 : i32
    %1 = arith.addi %0, %arg1 : i32
    %c0_i32 = arith.constant 0 : i32
    %c0_i32_0 = arith.constant 0 : i32
    %c0_i32_1 = arith.constant 0 : i32
    return %1, %c0_i32, %c0_i32_0 : i32, i32, i32
  }
}

module attributes {stable_mosaic.version = 11 : i64} {
  func.func @_bn_act_kernel(%arg0: i32, %arg1: memref<8x64x128xbf16, #tpu.memory_space<vmem>>, %arg2: memref<1x1x128xf32, #tpu.memory_space<vmem>>, %arg3: memref<1x1x128xf32, #tpu.memory_space<vmem>>, %arg4: memref<8x64x128xbf16, #tpu.memory_space<vmem>>, %arg5: memref<8x64x128xf32, #tpu.memory_space<vmem>>) attributes {dimension_semantics = [#tpu.dimension_semantics<parallel>], iteration_bounds = array<i64: 2>, scalar_prefetch = 0 : i64, scratch_operands = 0 : i64, tpu.core_type = #tpu.core_type<tc>, window_params = [{transform_indices = @transform_0, window_bounds = array<i64: 8, 64, 128>}, {pipeline_mode = #tpu.pipeline_mode<synchronous>, transform_indices = @transform_1, window_bounds = array<i64: 1, 1, 128>}, {pipeline_mode = #tpu.pipeline_mode<synchronous>, transform_indices = @transform_2, window_bounds = array<i64: 1, 1, 128>}, {transform_indices = @transform_3, window_bounds = array<i64: 8, 64, 128>}, {transform_indices = @transform_4, window_bounds = array<i64: 8, 64, 128>}]} {
    %c0 = arith.constant 0 : index
    %c0_0 = arith.constant 0 : index
    %c0_1 = arith.constant 0 : index
    %0 = vector.load %arg1[%c0, %c0_0, %c0_1] : memref<8x64x128xbf16, #tpu.memory_space<vmem>>, vector<8x64x128xbf16>
    %1 = arith.extf %0 : vector<8x64x128xbf16> to vector<8x64x128xf32>
    %c0_2 = arith.constant 0 : index
    %c0_3 = arith.constant 0 : index
    %c0_4 = arith.constant 0 : index
    %2 = vector.load %arg2[%c0_2, %c0_3, %c0_4] : memref<1x1x128xf32, #tpu.memory_space<vmem>>, vector<1x1x128xf32>
    %3 = vector.broadcast %2 : vector<1x1x128xf32> to vector<8x64x128xf32>
    %4 = arith.mulf %1, %3 : vector<8x64x128xf32>
    %c0_5 = arith.constant 0 : index
    %c0_6 = arith.constant 0 : index
    %c0_7 = arith.constant 0 : index
    %5 = vector.load %arg3[%c0_5, %c0_6, %c0_7] : memref<1x1x128xf32, #tpu.memory_space<vmem>>, vector<1x1x128xf32>
    %6 = vector.broadcast %5 : vector<1x1x128xf32> to vector<8x64x128xf32>
    %7 = arith.addf %4, %6 : vector<8x64x128xf32>
    %c0_8 = arith.constant 0 : index
    %c0_9 = arith.constant 0 : index
    %c0_10 = arith.constant 0 : index
    %8 = vector.load %arg4[%c0_8, %c0_9, %c0_10] : memref<8x64x128xbf16, #tpu.memory_space<vmem>>, vector<8x64x128xbf16>
    %9 = arith.extf %8 : vector<8x64x128xbf16> to vector<8x64x128xf32>
    %10 = arith.addf %7, %9 : vector<8x64x128xf32>
    %cst = arith.constant 0.000000e+00 : f32
    %11 = vector.broadcast %cst : f32 to vector<8x64x128xf32>
    %12 = arith.maximumf %10, %11 : vector<8x64x128xf32>
    %c0_11 = arith.constant 0 : index
    %c0_12 = arith.constant 0 : index
    %c0_13 = arith.constant 0 : index
    %13 = vector.load %arg5[%c0_11, %c0_12, %c0_13] : memref<8x64x128xf32, #tpu.memory_space<vmem>>, vector<8x64x128xf32>
    tpu.vector_store %arg5[%c0_11, %c0_12, %c0_13], %12 {strides = array<i32>} : memref<8x64x128xf32, #tpu.memory_space<vmem>>, vector<8x64x128xf32>,
    return
  }
  func.func @transform_0(%arg0: i32) -> (i32, i32, i32) {
    %c0_i32 = arith.constant 0 : i32
    %c0_i32_0 = arith.constant 0 : i32
    %c0_i32_1 = arith.constant 0 : i32
    return %arg0, %c0_i32, %c0_i32_0 : i32, i32, i32
  }
  func.func @transform_1(%arg0: i32) -> (i32, i32, i32) {
    %c0_i32 = arith.constant 0 : i32
    %c0_i32_0 = arith.constant 0 : i32
    %c0_i32_1 = arith.constant 0 : i32
    %c0_i32_2 = arith.constant 0 : i32
    return %c0_i32, %c0_i32_0, %c0_i32_1 : i32, i32, i32
  }
  func.func @transform_2(%arg0: i32) -> (i32, i32, i32) {
    %c0_i32 = arith.constant 0 : i32
    %c0_i32_0 = arith.constant 0 : i32
    %c0_i32_1 = arith.constant 0 : i32
    %c0_i32_2 = arith.constant 0 : i32
    return %c0_i32, %c0_i32_0, %c0_i32_1 : i32, i32, i32
  }
  func.func @transform_3(%arg0: i32) -> (i32, i32, i32) {
    %c0_i32 = arith.constant 0 : i32
    %c0_i32_0 = arith.constant 0 : i32
    %c0_i32_1 = arith.constant 0 : i32
    return %arg0, %c0_i32, %c0_i32_0 : i32, i32, i32
  }
  func.func @transform_4(%arg0: i32) -> (i32, i32, i32) {
    %c0_i32 = arith.constant 0 : i32
    %c0_i32_0 = arith.constant 0 : i32
    %c0_i32_1 = arith.constant 0 : i32
    return %arg0, %c0_i32, %c0_i32_0 : i32, i32, i32
  }
}

</mosaic_0001>

<llo_original>
// kernel: basic_block3d_pallas.7
$region0: #{basic_block3d_pallas.7}
  #allocation0 [shape = 'u32[]', space=smem, size = 0x4, offset = 0x4, fixed_abs, tag = 'smem constant byte address 0x4 - core index']
  #allocation1 [shape = 'u32[72,128]{1,0:T(1,128)}', space=vmem, size = 0x9000, scoped, tag = 'internal scratch']
  %s0 = inlined_call_operand.vmem [shape: bf16[16,64,128], index: 0, kind: input, shape index: {}]
  %s1 = inlined_call_operand.vmem [shape: f32[1,1,128], index: 1, kind: input, shape index: {}]
  %s2 = inlined_call_operand.vmem [shape: f32[1,1,128], index: 2, kind: input, shape index: {}]
  %s3 = inlined_call_operand.vmem [shape: bf16[16,64,128], index: 3, kind: output, shape index: {}]
  %s4 = sld [smem:[#allocation0]]
  $region45: #{basic_block3d_pallas.7} parent=0
    _
  %s6 = ssub.s32 1, %s4
  %s7 = scalar_select 0, %s6, %s4
  loop: start=0, step=1, limit=4
  $region2: #{basic_block3d_pallas.7} parent=0 // loop_pre_header
    _
  $region3: #{basic_block3d_pallas.7} parent=0 // loop_header
    %s9 = sphi 0, %s13
    %p10 = scmp.ge.s32.totalorder %s9, 4
    %s19 = sphi 0, %s21
    %s22 = sphi 0, %s19
    %s23 = sphi 0, %s22
    %s39 = sphi 0, %s23
    %s43 = sphi 0, %s43
    %s45 = sphi 0, %s43
    %s46 = sphi 0, %s45
    %s60 = sphi 0, %s46
    %s64 = sphi 0, %s64
    %s66 = sphi 0, %s64
    %s67 = sphi 0, %s66
    %s81 = sphi 0, %s67
    %s87 = sphi 0, %s89
    %s90 = sphi 0, %s87
    %s91 = sphi 0, %s90
    %s107 = sphi 0, %s91
  $region4: #{basic_block3d_pallas.7} parent=0 // loop_header_branch
    %12 = sbr.rel (%p10) target = $region8
  $region5: #{basic_block3d_pallas.7} parent=0 // loop_body
    %s14 = ssub.s32 %s9, 1
    %s15 = ssub.s32 %s9, 2
    %s16 = sadd.s32 %s9, 1
    %s17 = ssub.s32 %s9, %s16
    %p18 = scmp.eq.s32.totalorder %s17, 0
    %s20 = sadd.s32 %s19, 1
    %s21 = scalar_select %p18, %s19, %s20
    %p24 = pneg %p18
    %p25 = scmp.eq.s32.totalorder %s9, 1
    %p26 = por %p24, %p25
    %p27 = scmp.ne.s32.totalorder %s19, %s22
    %p28 = scmp.eq.s32.totalorder %s9, 0
    %p29 = por %p27, %p28
    %p30 = scmp.ne.s32.totalorder %s19, %s22
    %p31 = scmp.eq.s32.totalorder %s14, 1
    %p32 = por %p30, %p31
    %p33 = scmp.ne.s32.totalorder %s22, %s23
    %p34 = scmp.eq.s32.totalorder %s14, 0
    %p35 = por %p33, %p34
    %p36 = scmp.ne.s32.totalorder %s22, %s23
    %p37 = scmp.eq.s32.totalorder %s15, 1
    %p38 = por %p36, %p37
    %p40 = scmp.ne.s32.totalorder %s23, %s39
    %p41 = scmp.eq.s32.totalorder %s15, 0
    %p42 = por %p40, %p41
    %s44 = sadd.s32 %s43, 1
    %p47 = scmp.eq.s32.totalorder %s9, 1
    %p48 = scmp.ne.s32.totalorder %s43, %s45
    %p49 = scmp.eq.s32.totalorder %s9, 0
    %p50 = por %p48, %p49
    %p51 = scmp.ne.s32.totalorder %s43, %s45
    %p52 = scmp.eq.s32.totalorder %s14, 1
    %p53 = por %p51, %p52
    %p54 = scmp.ne.s32.totalorder %s45, %s46
    %p55 = scmp.eq.s32.totalorder %s14, 0
    %p56 = por %p54, %p55
    %p57 = scmp.ne.s32.totalorder %s45, %s46
    %p58 = scmp.eq.s32.totalorder %s15, 1
    %p59 = por %p57, %p58
    %p61 = scmp.ne.s32.totalorder %s46, %s60
    %p62 = scmp.eq.s32.totalorder %s15, 0
    %p63 = por %p61, %p62
    %s65 = sadd.s32 %s64, 1
    %p68 = scmp.eq.s32.totalorder %s9, 1
    %p69 = scmp.ne.s32.totalorder %s64, %s66
    %p70 = scmp.eq.s32.totalorder %s9, 0
    %p71 = por %p69, %p70
    %p72 = scmp.ne.s32.totalorder %s64, %s66
    %p73 = scmp.eq.s32.totalorder %s14, 1
    %p74 = por %p72, %p73
    %p75 = scmp.ne.s32.totalorder %s66, %s67
    %p76 = scmp.eq.s32.totalorder %s14, 0
    %p77 = por %p75, %p76
    %p78 = scmp.ne.s32.totalorder %s66, %s67
    %p79 = scmp.eq.s32.totalorder %s15, 1
    %p80 = por %p78, %p79
    %p82 = scmp.ne.s32.totalorder %s67, %s81
    %p83 = scmp.eq.s32.totalorder %s15, 0
    %p84 = por %p82, %p83
    %s85 = ssub.s32 %s9, %s16
    %p86 = scmp.eq.s32.totalorder %s85, 0
    %s88 = sadd.s32 %s87, 1
    %s89 = scalar_select %p86, %s87, %s88
    %p92 = pneg %p86
    %p93 = scmp.eq.s32.totalorder %s9, 1
    %p94 = por %p92, %p93
    %p95 = scmp.ne.s32.totalorder %s87, %s90
    %p96 = scmp.eq.s32.totalorder %s9, 0
    %p97 = por %p95, %p96
    %p98 = scmp.ne.s32.totalorder %s87, %s90
    %p99 = scmp.eq.s32.totalorder %s14, 1
    %p100 = por %p98, %p99
    %p101 = scmp.ne.s32.totalorder %s90, %s91
    %p102 = scmp.eq.s32.totalorder %s14, 0
    %p103 = por %p101, %p102
    %p104 = scmp.ne.s32.totalorder %s90, %s91
    %p105 = scmp.eq.s32.totalorder %s15, 1
    %p106 = por %p104, %p105
    %p108 = scmp.ne.s32.totalorder %s91, %s107
    %p109 = scmp.eq.s32.totalorder %s15, 0
    %p110 = por %p108, %p109
    %p111 = scmp.le.s32.totalorder 1, %s9
    %p112 = scmp.lt.s32.totalorder %s9, 3
    %p113 = pnand %p111, %p112
    %p114 = pneg %p113
    // Predicated region
    $region9: #{basic_block3d_pallas.7} parent=5 // pred_check
      _
    $region10: #{basic_block3d_pallas.7} parent=5 // pred_check_branch
      %116 = sbr.rel (%p113) target = $region12
    $region11: #{basic_block3d_pallas.7} parent=5 // pred_region
      %s117 = ssub.s32 %s9, 1
      // Predicated region
      $region13: #{basic_block3d_pallas.7} parent=11 // pred_check
        %p118 = pneg %p56
      $region14: #{basic_block3d_pallas.7} parent=11 // pred_check_branch
        %120 = sbr.rel (%p118) target = $region16
      $region15: #{basic_block3d_pallas.7} parent=11 // pred_region
        _
      $region16: #{basic_block3d_pallas.7} parent=11 // pred_fallthru
        _
      // Predicated region
      $region17: #{basic_block3d_pallas.7} parent=11 // pred_check
        %p121 = pneg %p77
      $region18: #{basic_block3d_pallas.7} parent=11 // pred_check_branch
        %123 = sbr.rel (%p121) target = $region20
      $region19: #{basic_block3d_pallas.7} parent=11 // pred_region
        _
      $region20: #{basic_block3d_pallas.7} parent=11 // pred_fallthru
        _
    $region12: #{basic_block3d_pallas.7} parent=5 // pred_fallthru
      _
    %p124 = scmp.lt.s32.totalorder %s9, 2
    // Predicated region
    $region21: #{basic_block3d_pallas.7} parent=5 // pred_check
      %p125 = pneg %p124
    $region22: #{basic_block3d_pallas.7} parent=5 // pred_check_branch
      %127 = sbr.rel (%p125) target = $region24
    $region23: #{basic_block3d_pallas.7} parent=5 // pred_region
      // Predicated region
      $region25: #{basic_block3d_pallas.7} parent=23 // pred_check
        %p128 = pneg %p29
      $region26: #{basic_block3d_pallas.7} parent=23 // pred_check_branch
        %130 = sbr.rel (%p128) target = $region28
      $region27: #{basic_block3d_pallas.7} parent=23 // pred_region
        %s131 = smul.u32 8, %s9
        %p132 = scmp.lt.s32.totalorder %s131, 15
        %s133 = scalar_select %p132, %s131, 15
        %s134 = smul.addr %s133, 8
        %s135 = smul.addr %s134, 4
        %s136 = scalar_lea.vmem %s0, %s135
        %s137 = smul.u32 8, %s9
      $region28: #{basic_block3d_pallas.7} parent=23 // pred_fallthru
        _
    $region24: #{basic_block3d_pallas.7} parent=5 // pred_fallthru
      _
    %p138 = scmp.le.s32.totalorder 1, %s9
    %p139 = scmp.lt.s32.totalorder %s9, 3
    %p140 = pnand %p138, %p139
    %p141 = pneg %p140
    // Predicated region
    $region29: #{basic_block3d_pallas.7} parent=5 // pred_check
      _
    $region30: #{basic_block3d_pallas.7} parent=5 // pred_check_branch
      %143 = sbr.rel (%p140) target = $region32
    $region31: #{basic_block3d_pallas.7} parent=5 // pred_region
      %s144 = ssub.s32 %s9, 1
      %s145 = smul.u32 8, %s14
      %p146 = scmp.lt.s32.totalorder %s145, 15
      %s147 = scalar_select %p146, %s145, 15
      %s148 = smul.addr %s147, 8
      %s149 = smul.addr %s148, 4
      %s150 = scalar_lea.vmem %s0, %s149
      %p151 = pneg %p35
      %p152 = pneg %p32
      %p153 = pneg %p56
      %p154 = pneg %p53
      %p155 = pneg %p77
      %p156 = pneg %p74
      %p157 = pneg %p103
      %p158 = pneg %p100
      %s159 = smul.u32 8, %s14
      %p160 = scmp.lt.s32.totalorder %s159, 15
      %s161 = scalar_select %p160, %s159, 15
      %s162 = smul.addr %s161, 8
      %s163 = smul.addr %s162, 4
      %s164 = scalar_lea.vmem %s3, %s163
      %s165 = smul.u32 8, %s14
      %p166 = scmp.lt.s32.totalorder %s165, 15
      %s167 = scalar_select %p166, %s165, 15
      %s168 = smul.addr %s167, 8
      %s169 = smul.addr %s168, 4
      %s170 = scalar_lea.vmem %s0, %s169
      %s171 = smul.u32 8, %s14
      %s172 = smul.u32 8, %s14
      %p173 = scmp.lt.s32.totalorder %s172, 15
      %s174 = scalar_select %p173, %s172, 15
      %s175 = smul.addr %s174, 8
      %s176 = smul.addr %s175, 4
      %s177 = scalar_lea.vmem %s3, %s176
      %s178 = smul.u32 8, %s14
      %v179 = vld [vmem:[%s170] sm:$0xf]
      %v180 = vld [vmem:[%s170 + $0x4] sm:$0xf]
      %v181 = vld [vmem:[%s170 + $0x8] sm:$0xf]
      %v182 = vld [vmem:[%s170 + $0xc] sm:$0xf]
      %v183 = vld [vmem:[%s170 + $0x10] sm:$0xf]
      %v184 = vld [vmem:[%s170 + $0x14] sm:$0xf]
      %v185 = vld [vmem:[%s170 + $0x18] sm:$0xf]
      %v186 = vld [vmem:[%s170 + $0x1c] sm:$0xf]
      %v187 = vld [vmem:[%s170 + $0x20] sm:$0xf]
      %v188 = vld [vmem:[%s170 + $0x24] sm:$0xf]
      %v189 = vld [vmem:[%s170 + $0x28] sm:$0xf]
      %v190 = vld [vmem:[%s170 + $0x2c] sm:$0xf]
      %v191 = vld [vmem:[%s170 + $0x30] sm:$0xf]
      %v192 = vld [vmem:[%s170 + $0x34] sm:$0xf]
      %v193 = vld [vmem:[%s170 + $0x38] sm:$0xf]
      %v194 = vld [vmem:[%s170 + $0x3c] sm:$0xf]
      %v195 = vld [vmem:[%s170 + $0x40] sm:$0xf]
      %v196 = vld [vmem:[%s170 + $0x44] sm:$0xf]
      %v197 = vld [vmem:[%s170 + $0x48] sm:$0xf]
      %v198 = vld [vmem:[%s170 + $0x4c] sm:$0xf]
      %v199 = vld [vmem:[%s170 + $0x50] sm:$0xf]
      %v200 = vld [vmem:[%s170 + $0x54] sm:$0xf]
      %v201 = vld [vmem:[%s170 + $0x58] sm:$0xf]
      %v202 = vld [vmem:[%s170 + $0x5c] sm:$0xf]
      %v203 = vld [vmem:[%s170 + $0x60] sm:$0xf]
      %v204 = vld [vmem:[%s170 + $0x64] sm:$0xf]
      %v205 = vld [vmem:[%s170 + $0x68] sm:$0xf]
      %v206 = vld [vmem:[%s170 + $0x6c] sm:$0xf]
      %v207 = vld [vmem:[%s170 + $0x70] sm:$0xf]
      %v208 = vld [vmem:[%s170 + $0x74] sm:$0xf]
      %v209 = vld [vmem:[%s170 + $0x78] sm:$0xf]
      %v210 = vld [vmem:[%s170 + $0x7c] sm:$0xf]
      %v211 = vld [vmem:[%s170 + $0x80] sm:$0xf]
      %v212 = vld [vmem:[%s170 + $0x84] sm:$0xf]
      %v213 = vld [vmem:[%s170 + $0x88] sm:$0xf]
      %v214 = vld [vmem:[%s170 + $0x8c] sm:$0xf]
      %v215 = vld [vmem:[%s170 + $0x90] sm:$0xf]
      %v216 = vld [vmem:[%s170 + $0x94] sm:$0xf]
      %v217 = vld [vmem:[%s170 + $0x98] sm:$0xf]
      %v218 = vld [vmem:[%s170 + $0x9c] sm:$0xf]
      %v219 = vld [vmem:[%s170 + $0xa0] sm:$0xf]
      %v220 = vld [vmem:[%s170 + $0xa4] sm:$0xf]
      %v221 = vld [vmem:[%s170 + $0xa8] sm:$0xf]
      %v222 = vld [vmem:[%s170 + $0xac] sm:$0xf]
      %v223 = vld [vmem:[%s170 + $0xb0] sm:$0xf]
      %v224 = vld [vmem:[%s170 + $0xb4] sm:$0xf]
      %v225 = vld [vmem:[%s170 + $0xb8] sm:$0xf]
      %v226 = vld [vmem:[%s170 + $0xbc] sm:$0xf]
      %v227 = vld [vmem:[%s170 + $0xc0] sm:$0xf]
      %v228 = vld [vmem:[%s170 + $0xc4] sm:$0xf]
      %v229 = vld [vmem:[%s170 + $0xc8] sm:$0xf]
      %v230 = vld [vmem:[%s170 + $0xcc] sm:$0xf]
      %v231 = vld [vmem:[%s170 + $0xd0] sm:$0xf]
      %v232 = vld [vmem:[%s170 + $0xd4] sm:$0xf]
      %v233 = vld [vmem:[%s170 + $0xd8] sm:$0xf]
      %v234 = vld [vmem:[%s170 + $0xdc] sm:$0xf]
      %v235 = vld [vmem:[%s170 + $0xe0] sm:$0xf]
      %v236 = vld [vmem:[%s170 + $0xe4] sm:$0xf]
      %v237 = vld [vmem:[%s170 + $0xe8] sm:$0xf]
      %v238 = vld [vmem:[%s170 + $0xec] sm:$0xf]
      %v239 = vld [vmem:[%s170 + $0xf0] sm:$0xf]
      %v240 = vld [vmem:[%s170 + $0xf4] sm:$0xf]
      %v241 = vld [vmem:[%s170 + $0xf8] sm:$0xf]
      %v242 = vld [vmem:[%s170 + $0xfc] sm:$0xf]
      %v243 = vunpack.c.l.bf16 %v179
      %v244 = vunpack.c.l.bf16 %v180
      %v245 = vunpack.c.l.bf16 %v181
      %v246 = vunpack.c.l.bf16 %v182
      %v247 = vunpack.c.l.bf16 %v183
      %v248 = vunpack.c.l.bf16 %v184
      %v249 = vunpack.c.l.bf16 %v185
      %v250 = vunpack.c.l.bf16 %v186
      %v251 = vunpack.c.l.bf16 %v187
      %v252 = vunpack.c.l.bf16 %v188
      %v253 = vunpack.c.l.bf16 %v189
      %v254 = vunpack.c.l.bf16 %v190
      %v255 = vunpack.c.l.bf16 %v191
      %v256 = vunpack.c.l.bf16 %v192
      %v257 = vunpack.c.l.bf16 %v193
      %v258 = vunpack.c.l.bf16 %v194
      %v259 = vunpack.c.l.bf16 %v195
      %v260 = vunpack.c.l.bf16 %v196
      %v261 = vunpack.c.l.bf16 %v197
      %v262 = vunpack.c.l.bf16 %v198
      %v263 = vunpack.c.l.bf16 %v199
      %v264 = vunpack.c.l.bf16 %v200
      %v265 = vunpack.c.l.bf16 %v201
      %v266 = vunpack.c.l.bf16 %v202
      %v267 = vunpack.c.l.bf16 %v203
      %v268 = vunpack.c.l.bf16 %v204
      %v269 = vunpack.c.l.bf16 %v205
      %v270 = vunpack.c.l.bf16 %v206
      %v271 = vunpack.c.l.bf16 %v207
      %v272 = vunpack.c.l.bf16 %v208
      %v273 = vunpack.c.l.bf16 %v209
      %v274 = vunpack.c.l.bf16 %v210
      %v275 = vunpack.c.l.bf16 %v211
      %v276 = vunpack.c.l.bf16 %v212
      %v277 = vunpack.c.l.bf16 %v213
      %v278 = vunpack.c.l.bf16 %v214
      %v279 = vunpack.c.l.bf16 %v215
      %v280 = vunpack.c.l.bf16 %v216
      %v281 = vunpack.c.l.bf16 %v217
      %v282 = vunpack.c.l.bf16 %v218
      %v283 = vunpack.c.l.bf16 %v219
      %v284 = vunpack.c.l.bf16 %v220
      %v285 = vunpack.c.l.bf16 %v221
      %v286 = vunpack.c.l.bf16 %v222
      %v287 = vunpack.c.l.bf16 %v223
      %v288 = vunpack.c.l.bf16 %v224
      %v289 = vunpack.c.l.bf16 %v225
      %v290 = vunpack.c.l.bf16 %v226
      %v291 = vunpack.c.l.bf16 %v227
      %v292 = vunpack.c.l.bf16 %v228
      %v293 = vunpack.c.l.bf16 %v229
      %v294 = vunpack.c.l.bf16 %v230
      %v295 = vunpack.c.l.bf16 %v231
      %v296 = vunpack.c.l.bf16 %v232
      %v297 = vunpack.c.l.bf16 %v233
      %v298 = vunpack.c.l.bf16 %v234
      %v299 = vunpack.c.l.bf16 %v235
      %v300 = vunpack.c.l.bf16 %v236
      %v301 = vunpack.c.l.bf16 %v237
      %v302 = vunpack.c.l.bf16 %v238
      %v303 = vunpack.c.l.bf16 %v239
      %v304 = vunpack.c.l.bf16 %v240
      %v305 = vunpack.c.l.bf16 %v241
      %v306 = vunpack.c.l.bf16 %v242
      %v307 = vld [vmem:[%s1] sm:$0x1]
      %v309 = vperm.slane %v307, 0
      %v311 = vmul.f32 %v243, %v309
      %v312 = vmul.f32 %v244, %v309
      %v313 = vmul.f32 %v245, %v309
      %v314 = vmul.f32 %v246, %v309
      %v315 = vmul.f32 %v247, %v309
      %v316 = vmul.f32 %v248, %v309
      %v317 = vmul.f32 %v249, %v309
      %v318 = vmul.f32 %v250, %v309
      %v319 = vmul.f32 %v251, %v309
      %v320 = vmul.f32 %v252, %v309
      %v321 = vmul.f32 %v253, %v309
      %v322 = vmul.f32 %v254, %v309
      %v323 = vmul.f32 %v255, %v309
      %v324 = vmul.f32 %v256, %v309
      %v325 = vmul.f32 %v257, %v309
      %v326 = vmul.f32 %v258, %v309
      %v327 = vmul.f32 %v259, %v309
      %v328 = vmul.f32 %v260, %v309
      %v329 = vmul.f32 %v261, %v309
      %v330 = vmul.f32 %v262, %v309
      %v331 = vmul.f32 %v263, %v309
      %v332 = vmul.f32 %v264, %v309
      %v333 = vmul.f32 %v265, %v309
      %v334 = vmul.f32 %v266, %v309
      %v335 = vmul.f32 %v267, %v309
      %v336 = vmul.f32 %v268, %v309
      %v337 = vmul.f32 %v269, %v309
      %v338 = vmul.f32 %v270, %v309
      %v339 = vmul.f32 %v271, %v309
      %v340 = vmul.f32 %v272, %v309
      %v341 = vmul.f32 %v273, %v309
      %v342 = vmul.f32 %v274, %v309
      %v343 = vmul.f32 %v275, %v309
      %v344 = vmul.f32 %v276, %v309
      %v345 = vmul.f32 %v277, %v309
      %v346 = vmul.f32 %v278, %v309
      %v347 = vmul.f32 %v279, %v309
      %v348 = vmul.f32 %v280, %v309
      %v349 = vmul.f32 %v281, %v309
      %v350 = vmul.f32 %v282, %v309
      %v351 = vmul.f32 %v283, %v309
      %v352 = vmul.f32 %v284, %v309
      %v353 = vmul.f32 %v285, %v309
      %v354 = vmul.f32 %v286, %v309
      %v355 = vmul.f32 %v287, %v309
      %v356 = vmul.f32 %v288, %v309
      %v357 = vmul.f32 %v289, %v309
      %v358 = vmul.f32 %v290, %v309
      %v359 = vmul.f32 %v291, %v309
      %v360 = vmul.f32 %v292, %v309
      %v361 = vmul.f32 %v293, %v309
      %v362 = vmul.f32 %v294, %v309
      %v363 = vmul.f32 %v295, %v309
      %v364 = vmul.f32 %v296, %v309
      %v365 = vmul.f32 %v297, %v309
      %v366 = vmul.f32 %v298, %v309
      %v367 = vmul.f32 %v299, %v309
      %v368 = vmul.f32 %v300, %v309
      %v369 = vmul.f32 %v301, %v309
      %v370 = vmul.f32 %v302, %v309
      %v371 = vmul.f32 %v303, %v309
      %v372 = vmul.f32 %v304, %v309
      %v373 = vmul.f32 %v305, %v309
      %v374 = vmul.f32 %v306, %v309
      %v375 = vld [vmem:[%s2] sm:$0x1]
      %v377 = vperm.slane %v375, 0
      %v379 = vadd.f32 %v311, %v377
      %v380 = vadd.f32 %v312, %v377
      %v381 = vadd.f32 %v313, %v377
      %v382 = vadd.f32 %v314, %v377
      %v383 = vadd.f32 %v315, %v377
      %v384 = vadd.f32 %v316, %v377
      %v385 = vadd.f32 %v317, %v377
      %v386 = vadd.f32 %v318, %v377
      %v387 = vadd.f32 %v319, %v377
      %v388 = vadd.f32 %v320, %v377
      %v389 = vadd.f32 %v321, %v377
      %v390 = vadd.f32 %v322, %v377
      %v391 = vadd.f32 %v323, %v377
      %v392 = vadd.f32 %v324, %v377
      %v393 = vadd.f32 %v325, %v377
      %v394 = vadd.f32 %v326, %v377
      %v395 = vadd.f32 %v327, %v377
      %v396 = vadd.f32 %v328, %v377
      %v397 = vadd.f32 %v329, %v377
      %v398 = vadd.f32 %v330, %v377
      %v399 = vadd.f32 %v331, %v377
      %v400 = vadd.f32 %v332, %v377
      %v401 = vadd.f32 %v333, %v377
      %v402 = vadd.f32 %v334, %v377
      %v403 = vadd.f32 %v335, %v377
      %v404 = vadd.f32 %v336, %v377
      %v405 = vadd.f32 %v337, %v377
      %v406 = vadd.f32 %v338, %v377
      %v407 = vadd.f32 %v339, %v377
      %v408 = vadd.f32 %v340, %v377
      %v409 = vadd.f32 %v341, %v377
      %v410 = vadd.f32 %v342, %v377
      %v411 = vadd.f32 %v343, %v377
      %v412 = vadd.f32 %v344, %v377
      %v413 = vadd.f32 %v345, %v377
      %v414 = vadd.f32 %v346, %v377
      %v415 = vadd.f32 %v347, %v377
      %v416 = vadd.f32 %v348, %v377
      %v417 = vadd.f32 %v349, %v377
      %v418 = vadd.f32 %v350, %v377
      %v419 = vadd.f32 %v351, %v377
      %v420 = vadd.f32 %v352, %v377
      %v421 = vadd.f32 %v353, %v377
      %v422 = vadd.f32 %v354, %v377
      %v423 = vadd.f32 %v355, %v377
      %v424 = vadd.f32 %v356, %v377
      %v425 = vadd.f32 %v357, %v377
      %v426 = vadd.f32 %v358, %v377
      %v427 = vadd.f32 %v359, %v377
      %v428 = vadd.f32 %v360, %v377
      %v429 = vadd.f32 %v361, %v377
      %v430 = vadd.f32 %v362, %v377
      %v431 = vadd.f32 %v363, %v377
      %v432 = vadd.f32 %v364, %v377
      %v433 = vadd.f32 %v365, %v377
      %v434 = vadd.f32 %v366, %v377
      %v435 = vadd.f32 %v367, %v377
      %v436 = vadd.f32 %v368, %v377
      %v437 = vadd.f32 %v369, %v377
      %v438 = vadd.f32 %v370, %v377
      %v439 = vadd.f32 %v371, %v377
      %v440 = vadd.f32 %v372, %v377
      %v441 = vadd.f32 %v373, %v377
      %v442 = vadd.f32 %v374, %v377
      %v443 = vmax.f32 %v379, 0.0
      %v444 = vmax.f32 %v380, 0.0
      %v445 = vmax.f32 %v381, 0.0
      %v446 = vmax.f32 %v382, 0.0
      %v447 = vmax.f32 %v383, 0.0
      %v448 = vmax.f32 %v384, 0.0
      %v449 = vmax.f32 %v385, 0.0
      %v450 = vmax.f32 %v386, 0.0
      %v451 = vmax.f32 %v387, 0.0
      %v452 = vmax.f32 %v388, 0.0
      %v453 = vmax.f32 %v389, 0.0
      %v454 = vmax.f32 %v390, 0.0
      %v455 = vmax.f32 %v391, 0.0
      %v456 = vmax.f32 %v392, 0.0
      %v457 = vmax.f32 %v393, 0.0
      %v458 = vmax.f32 %v394, 0.0
      %v459 = vmax.f32 %v395, 0.0
      %v460 = vmax.f32 %v396, 0.0
      %v461 = vmax.f32 %v397, 0.0
      %v462 = vmax.f32 %v398, 0.0
      %v463 = vmax.f32 %v399, 0.0
      %v464 = vmax.f32 %v400, 0.0
      %v465 = vmax.f32 %v401, 0.0
      %v466 = vmax.f32 %v402, 0.0
      %v467 = vmax.f32 %v403, 0.0
      %v468 = vmax.f32 %v404, 0.0
      %v469 = vmax.f32 %v405, 0.0
      %v470 = vmax.f32 %v406, 0.0
      %v471 = vmax.f32 %v407, 0.0
      %v472 = vmax.f32 %v408, 0.0
      %v473 = vmax.f32 %v409, 0.0
      %v474 = vmax.f32 %v410, 0.0
      %v475 = vmax.f32 %v411, 0.0
      %v476 = vmax.f32 %v412, 0.0
      %v477 = vmax.f32 %v413, 0.0
      %v478 = vmax.f32 %v414, 0.0
      %v479 = vmax.f32 %v415, 0.0
      %v480 = vmax.f32 %v416, 0.0
      %v481 = vmax.f32 %v417, 0.0
      %v482 = vmax.f32 %v418, 0.0
      %v483 = vmax.f32 %v419, 0.0
      %v484 = vmax.f32 %v420, 0.0
      %v485 = vmax.f32 %v421, 0.0
      %v486 = vmax.f32 %v422, 0.0
      %v487 = vmax.f32 %v423, 0.0
      %v488 = vmax.f32 %v424, 0.0
      %v489 = vmax.f32 %v425, 0.0
      %v490 = vmax.f32 %v426, 0.0
      %v491 = vmax.f32 %v427, 0.0
      %v492 = vmax.f32 %v428, 0.0
      %v493 = vmax.f32 %v429, 0.0
      %v494 = vmax.f32 %v430, 0.0
      %v495 = vmax.f32 %v431, 0.0
      %v496 = vmax.f32 %v432, 0.0
      %v497 = vmax.f32 %v433, 0.0
      %v498 = vmax.f32 %v434, 0.0
      %v499 = vmax.f32 %v435, 0.0
      %v500 = vmax.f32 %v436, 0.0
      %v501 = vmax.f32 %v437, 0.0
      %v502 = vmax.f32 %v438, 0.0
      %v503 = vmax.f32 %v439, 0.0
      %v504 = vmax.f32 %v440, 0.0
      %v505 = vmax.f32 %v441, 0.0
      %v506 = vmax.f32 %v442, 0.0
      %v507 = vpack.c.bf16 %v443, %v443
      %v508 = vpack.c.bf16 %v444, %v444
      %v509 = vpack.c.bf16 %v445, %v445
      %v510 = vpack.c.bf16 %v446, %v446
      %v511 = vpack.c.bf16 %v447, %v447
      %v512 = vpack.c.bf16 %v448, %v448
      %v513 = vpack.c.bf16 %v449, %v449
      %v514 = vpack.c.bf16 %v450, %v450
      %v515 = vpack.c.bf16 %v451, %v451
      %v516 = vpack.c.bf16 %v452, %v452
      %v517 = vpack.c.bf16 %v453, %v453
      %v518 = vpack.c.bf16 %v454, %v454
      %v519 = vpack.c.bf16 %v455, %v455
      %v520 = vpack.c.bf16 %v456, %v456
      %v521 = vpack.c.bf16 %v457, %v457
      %v522 = vpack.c.bf16 %v458, %v458
      %v523 = vpack.c.bf16 %v459, %v459
      %v524 = vpack.c.bf16 %v460, %v460
      %v525 = vpack.c.bf16 %v461, %v461
      %v526 = vpack.c.bf16 %v462, %v462
      %v527 = vpack.c.bf16 %v463, %v463
      %v528 = vpack.c.bf16 %v464, %v464
      %v529 = vpack.c.bf16 %v465, %v465
      %v530 = vpack.c.bf16 %v466, %v466
      %v531 = vpack.c.bf16 %v467, %v467
      %v532 = vpack.c.bf16 %v468, %v468
      %v533 = vpack.c.bf16 %v469, %v469
      %v534 = vpack.c.bf16 %v470, %v470
      %v535 = vpack.c.bf16 %v471, %v471
      %v536 = vpack.c.bf16 %v472, %v472
      %v537 = vpack.c.bf16 %v473, %v473
      %v538 = vpack.c.bf16 %v474, %v474
      %v539 = vpack.c.bf16 %v475, %v475
      %v540 = vpack.c.bf16 %v476, %v476
      %v541 = vpack.c.bf16 %v477, %v477
      %v542 = vpack.c.bf16 %v478, %v478
      %v543 = vpack.c.bf16 %v479, %v479
      %v544 = vpack.c.bf16 %v480, %v480
      %v545 = vpack.c.bf16 %v481, %v481
      %v546 = vpack.c.bf16 %v482, %v482
      %v547 = vpack.c.bf16 %v483, %v483
      %v548 = vpack.c.bf16 %v484, %v484
      %v549 = vpack.c.bf16 %v485, %v485
      %v550 = vpack.c.bf16 %v486, %v486
      %v551 = vpack.c.bf16 %v487, %v487
      %v552 = vpack.c.bf16 %v488, %v488
      %v553 = vpack.c.bf16 %v489, %v489
      %v554 = vpack.c.bf16 %v490, %v490
      %v555 = vpack.c.bf16 %v491, %v491
      %v556 = vpack.c.bf16 %v492, %v492
      %v557 = vpack.c.bf16 %v493, %v493
      %v558 = vpack.c.bf16 %v494, %v494
      %v559 = vpack.c.bf16 %v495, %v495
      %v560 = vpack.c.bf16 %v496, %v496
      %v561 = vpack.c.bf16 %v497, %v497
      %v562 = vpack.c.bf16 %v498, %v498
      %v563 = vpack.c.bf16 %v499, %v499
      %v564 = vpack.c.bf16 %v500, %v500
      %v565 = vpack.c.bf16 %v501, %v501
      %v566 = vpack.c.bf16 %v502, %v502
      %v567 = vpack.c.bf16 %v503, %v503
      %v568 = vpack.c.bf16 %v504, %v504
      %v569 = vpack.c.bf16 %v505, %v505
      %v570 = vpack.c.bf16 %v506, %v506
      %571 = vst [vmem:[%s177] sm:$0xf] %v507
      %572 = vst [vmem:[%s177 + $0x4] sm:$0xf] %v508
      %573 = vst [vmem:[%s177 + $0x8] sm:$0xf] %v509
      %574 = vst [vmem:[%s177 + $0xc] sm:$0xf] %v510
      %575 = vst [vmem:[%s177 + $0x10] sm:$0xf] %v511
      %576 = vst [vmem:[%s177 + $0x14] sm:$0xf] %v512
      %577 = vst [vmem:[%s177 + $0x18] sm:$0xf] %v513
      %578 = vst [vmem:[%s177 + $0x1c] sm:$0xf] %v514
      %579 = vst [vmem:[%s177 + $0x20] sm:$0xf] %v515
      %580 = vst [vmem:[%s177 + $0x24] sm:$0xf] %v516
      %581 = vst [vmem:[%s177 + $0x28] sm:$0xf] %v517
      %582 = vst [vmem:[%s177 + $0x2c] sm:$0xf] %v518
      %583 = vst [vmem:[%s177 + $0x30] sm:$0xf] %v519
      %584 = vst [vmem:[%s177 + $0x34] sm:$0xf] %v520
      %585 = vst [vmem:[%s177 + $0x38] sm:$0xf] %v521
      %586 = vst [vmem:[%s177 + $0x3c] sm:$0xf] %v522
      %587 = vst [vmem:[%s177 + $0x40] sm:$0xf] %v523
      %588 = vst [vmem:[%s177 + $0x44] sm:$0xf] %v524
      %589 = vst [vmem:[%s177 + $0x48] sm:$0xf] %v525
      %590 = vst [vmem:[%s177 + $0x4c] sm:$0xf] %v526
      %591 = vst [vmem:[%s177 + $0x50] sm:$0xf] %v527
      %592 = vst [vmem:[%s177 + $0x54] sm:$0xf] %v528
      %593 = vst [vmem:[%s177 + $0x58] sm:$0xf] %v529
      %594 = vst [vmem:[%s177 + $0x5c] sm:$0xf] %v530
      %595 = vst [vmem:[%s177 + $0x60] sm:$0xf] %v531
      %596 = vst [vmem:[%s177 + $0x64] sm:$0xf] %v532
      %597 = vst [vmem:[%s177 + $0x68] sm:$0xf] %v533
      %598 = vst [vmem:[%s177 + $0x6c] sm:$0xf] %v534
      %599 = vst [vmem:[%s177 + $0x70] sm:$0xf] %v535
      %600 = vst [vmem:[%s177 + $0x74] sm:$0xf] %v536
      %601 = vst [vmem:[%s177 + $0x78] sm:$0xf] %v537
      %602 = vst [vmem:[%s177 + $0x7c] sm:$0xf] %v538
      %603 = vst [vmem:[%s177 + $0x80] sm:$0xf] %v539
      %604 = vst [vmem:[%s177 + $0x84] sm:$0xf] %v540
      %605 = vst [vmem:[%s177 + $0x88] sm:$0xf] %v541
      %606 = vst [vmem:[%s177 + $0x8c] sm:$0xf] %v542
      %607 = vst [vmem:[%s177 + $0x90] sm:$0xf] %v543
      %608 = vst [vmem:[%s177 + $0x94] sm:$0xf] %v544
      %609 = vst [vmem:[%s177 + $0x98] sm:$0xf] %v545
      %610 = vst [vmem:[%s177 + $0x9c] sm:$0xf] %v546
      %611 = vst [vmem:[%s177 + $0xa0] sm:$0xf] %v547
      %612 = vst [vmem:[%s177 + $0xa4] sm:$0xf] %v548
      %613 = vst [vmem:[%s177 + $0xa8] sm:$0xf] %v549
      %614 = vst [vmem:[%s177 + $0xac] sm:$0xf] %v550
      %615 = vst [vmem:[%s177 + $0xb0] sm:$0xf] %v551
      %616 = vst [vmem:[%s177 + $0xb4] sm:$0xf] %v552
      %617 = vst [vmem:[%s177 + $0xb8] sm:$0xf] %v553
      %618 = vst [vmem:[%s177 + $0xbc] sm:$0xf] %v554
      %619 = vst [vmem:[%s177 + $0xc0] sm:$0xf] %v555
      %620 = vst [vmem:[%s177 + $0xc4] sm:$0xf] %v556
      %621 = vst [vmem:[%s177 + $0xc8] sm:$0xf] %v557
      %622 = vst [vmem:[%s177 + $0xcc] sm:$0xf] %v558
      %623 = vst [vmem:[%s177 + $0xd0] sm:$0xf] %v559
      %624 = vst [vmem:[%s177 + $0xd4] sm:$0xf] %v560
      %625 = vst [vmem:[%s177 + $0xd8] sm:$0xf] %v561
      %626 = vst [vmem:[%s177 + $0xdc] sm:$0xf] %v562
      %627 = vst [vmem:[%s177 + $0xe0] sm:$0xf] %v563
      %628 = vst [vmem:[%s177 + $0xe4] sm:$0xf] %v564
      %629 = vst [vmem:[%s177 + $0xe8] sm:$0xf] %v565
      %630 = vst [vmem:[%s177 + $0xec] sm:$0xf] %v566
      %631 = vst [vmem:[%s177 + $0xf0] sm:$0xf] %v567
      %632 = vst [vmem:[%s177 + $0xf4] sm:$0xf] %v568
      %633 = vst [vmem:[%s177 + $0xf8] sm:$0xf] %v569
      %634 = vst [vmem:[%s177 + $0xfc] sm:$0xf] %v570
      %s635 = smul.u32 8, %s14
      %p636 = scmp.lt.s32.totalorder %s635, 15
      %s637 = scalar_select %p636, %s635, 15
      %s638 = smul.addr %s637, 8
      %s639 = smul.addr %s638, 4
      %s640 = scalar_lea.vmem %s3, %s639
      // Predicated region
      $region33: #{basic_block3d_pallas.7} parent=31 // pred_check
        %p641 = pneg %p100
      $region34: #{basic_block3d_pallas.7} parent=31 // pred_check_branch
        %643 = sbr.rel (%p641) target = $region36
      $region35: #{basic_block3d_pallas.7} parent=31 // pred_region
        %s644 = smul.u32 8, %s14
      $region36: #{basic_block3d_pallas.7} parent=31 // pred_fallthru
        _
    $region32: #{basic_block3d_pallas.7} parent=5 // pred_fallthru
      _
    %p645 = scmp.le.s32.totalorder 2, %s9
    // Predicated region
    $region37: #{basic_block3d_pallas.7} parent=5 // pred_check
      %p646 = pneg %p645
    $region38: #{basic_block3d_pallas.7} parent=5 // pred_check_branch
      %648 = sbr.rel (%p646) target = $region40
    $region39: #{basic_block3d_pallas.7} parent=5 // pred_region
      %s649 = ssub.s32 %s9, 2
      // Predicated region
      $region41: #{basic_block3d_pallas.7} parent=39 // pred_check
        %p650 = pneg %p106
      $region42: #{basic_block3d_pallas.7} parent=39 // pred_check_branch
        %652 = sbr.rel (%p650) target = $region44
      $region43: #{basic_block3d_pallas.7} parent=39 // pred_region
        %s653 = smul.u32 8, %s15
        %p654 = scmp.lt.s32.totalorder %s653, 15
        %s655 = scalar_select %p654, %s653, 15
        %s656 = smul.addr %s655, 8
        %s657 = smul.addr %s656, 4
        %s658 = scalar_lea.vmem %s3, %s657
      $region44: #{basic_block3d_pallas.7} parent=39 // pred_fallthru
        _
    $region40: #{basic_block3d_pallas.7} parent=5 // pred_fallthru
      _
  $region6: #{basic_block3d_pallas.7} parent=0 // loop_footer
    %s13 = sadd.s32 1, %s9
  $region7: #{basic_block3d_pallas.7} parent=0 // loop_footer_branch
    %8 = sbr.rel target = $region3
  $region8: #{basic_block3d_pallas.7} parent=0 // loop_exit
    _

// kernel: basic_block3d_pallas.8
$region0: #{basic_block3d_pallas.8}
  #allocation0 [shape = 'u32[]', space=smem, size = 0x4, offset = 0x4, fixed_abs, tag = 'smem constant byte address 0x4 - core index']
  #allocation1 [shape = 'u32[72,128]{1,0:T(1,128)}', space=vmem, size = 0x9000, scoped, tag = 'internal scratch']
  %s0 = inlined_call_operand.vmem [shape: bf16[16,8,8,4], index: 0, kind: input, shape index: {}]
  %s1 = inlined_call_operand.vmem [shape: bf16[1,4,128], index: 1, kind: input, shape index: {}]
  %s2 = inlined_call_operand.vmem [shape: bf16[16,64,128], index: 2, kind: output, shape index: {0}]
  %s3 = inlined_call_operand.vmem [shape: f32[16,2,128], index: 3, kind: output, shape index: {1}]
  %4 = xla_tuple %s2, %s3
  %s5 = sld [smem:[#allocation0]]
  $region49: #{basic_block3d_pallas.8} parent=0
    _
  %s7 = ssub.s32 1, %s5
  %s8 = scalar_select 0, %s7, %s5
  loop: start=0, step=1, limit=18
  $region2: #{basic_block3d_pallas.8} parent=0 // loop_pre_header
    _
  $region3: #{basic_block3d_pallas.8} parent=0 // loop_header
    %s10 = sphi 0, %s14
    %p11 = scmp.ge.s32.totalorder %s10, 18
    %s17 = sphi 0, %s29
    %s18 = sphi 0, %s25
    %s19 = sphi 0, %s17
    %s20 = sphi 0, %s18
    %s21 = sphi 0, %s19
    %s22 = sphi 0, %s20
    %s32 = sphi 0, %s34
    %s35 = sphi 0, %s32
    %s36 = sphi 0, %s35
    %s52 = sphi 0, %s36
    %s56 = sphi 0, %s56
    %s58 = sphi 0, %s56
    %s59 = sphi 0, %s58
    %s73 = sphi 0, %s59
    %s83 = sphi 0, %s85
    %s86 = sphi 0, %s83
    %s87 = sphi 0, %s86
    %s103 = sphi 0, %s87
    %s113 = sphi 0, %s115
    %s116 = sphi 0, %s113
    %s117 = sphi 0, %s116
    %s133 = sphi 0, %s117
  $region4: #{basic_block3d_pallas.8} parent=0 // loop_header_branch
    %13 = sbr.rel (%p11) target = $region8
  $region5: #{basic_block3d_pallas.8} parent=0 // loop_body
    %s15 = ssub.s32 %s10, 1
    %s16 = ssub.s32 %s10, 2
    %s23 = sadd.s32 1, %s18
    %p24 = scmp.ge.s32.totalorder %s23, 8
    %s25 = scalar_select %p24, 0, %s23
    %s26 = sadd.s32 1, %s17
    %s27 = scalar_select %p24, %s26, %s17
    %p28 = scmp.ge.s32.totalorder %s27, 2
    %s29 = scalar_select %p28, 0, %s27
    %s30 = ssub.s32 %s17, %s29
    %p31 = scmp.eq.s32.totalorder %s30, 0
    %s33 = sadd.s32 %s32, 1
    %s34 = scalar_select %p31, %s32, %s33
    %p37 = pneg %p31
    %p38 = scmp.eq.s32.totalorder %s10, 15
    %p39 = por %p37, %p38
    %p40 = scmp.ne.s32.totalorder %s32, %s35
    %p41 = scmp.eq.s32.totalorder %s10, 0
    %p42 = por %p40, %p41
    %p43 = scmp.ne.s32.totalorder %s32, %s35
    %p44 = scmp.eq.s32.totalorder %s15, 15
    %p45 = por %p43, %p44
    %p46 = scmp.ne.s32.totalorder %s35, %s36
    %p47 = scmp.eq.s32.totalorder %s15, 0
    %p48 = por %p46, %p47
    %p49 = scmp.ne.s32.totalorder %s35, %s36
    %p50 = scmp.eq.s32.totalorder %s16, 15
    %p51 = por %p49, %p50
    %p53 = scmp.ne.s32.totalorder %s36, %s52
    %p54 = scmp.eq.s32.totalorder %s16, 0
    %p55 = por %p53, %p54
    %s57 = sadd.s32 %s56, 1
    %p60 = scmp.eq.s32.totalorder %s10, 15
    %p61 = scmp.ne.s32.totalorder %s56, %s58
    %p62 = scmp.eq.s32.totalorder %s10, 0
    %p63 = por %p61, %p62
    %p64 = scmp.ne.s32.totalorder %s56, %s58
    %p65 = scmp.eq.s32.totalorder %s15, 15
    %p66 = por %p64, %p65
    %p67 = scmp.ne.s32.totalorder %s58, %s59
    %p68 = scmp.eq.s32.totalorder %s15, 0
    %p69 = por %p67, %p68
    %p70 = scmp.ne.s32.totalorder %s58, %s59
    %p71 = scmp.eq.s32.totalorder %s16, 15
    %p72 = por %p70, %p71
    %p74 = scmp.ne.s32.totalorder %s59, %s73
    %p75 = scmp.eq.s32.totalorder %s16, 0
    %p76 = por %p74, %p75
    %s77 = smul.u32 %s17, 8
    %s78 = sadd.s32 %s77, %s18
    %s79 = smul.u32 %s29, 8
    %s80 = sadd.s32 %s79, %s25
    %s81 = ssub.s32 %s78, %s80
    %p82 = scmp.eq.s32.totalorder %s81, 0
    %s84 = sadd.s32 %s83, 1
    %s85 = scalar_select %p82, %s83, %s84
    %p88 = pneg %p82
    %p89 = scmp.eq.s32.totalorder %s10, 15
    %p90 = por %p88, %p89
    %p91 = scmp.ne.s32.totalorder %s83, %s86
    %p92 = scmp.eq.s32.totalorder %s10, 0
    %p93 = por %p91, %p92
    %p94 = scmp.ne.s32.totalorder %s83, %s86
    %p95 = scmp.eq.s32.totalorder %s15, 15
    %p96 = por %p94, %p95
    %p97 = scmp.ne.s32.totalorder %s86, %s87
    %p98 = scmp.eq.s32.totalorder %s15, 0
    %p99 = por %p97, %p98
    %p100 = scmp.ne.s32.totalorder %s86, %s87
    %p101 = scmp.eq.s32.totalorder %s16, 15
    %p102 = por %p100, %p101
    %p104 = scmp.ne.s32.totalorder %s87, %s103
    %p105 = scmp.eq.s32.totalorder %s16, 0
    %p106 = por %p104, %p105
    %s107 = smul.u32 %s17, 8
    %s108 = sadd.s32 %s107, %s18
    %s109 = smul.u32 %s29, 8
    %s110 = sadd.s32 %s109, %s25
    %s111 = ssub.s32 %s108, %s110
    %p112 = scmp.eq.s32.totalorder %s111, 0
    %s114 = sadd.s32 %s113, 1
    %s115 = scalar_select %p112, %s113, %s114
    %p118 = pneg %p112
    %p119 = scmp.eq.s32.totalorder %s10, 15
    %p120 = por %p118, %p119
    %p121 = scmp.ne.s32.totalorder %s113, %s116
    %p122 = scmp.eq.s32.totalorder %s10, 0
    %p123 = por %p121, %p122
    %p124 = scmp.ne.s32.totalorder %s113, %s116
    %p125 = scmp.eq.s32.totalorder %s15, 15
    %p126 = por %p124, %p125
    %p127 = scmp.ne.s32.totalorder %s116, %s117
    %p128 = scmp.eq.s32.totalorder %s15, 0
    %p129 = por %p127, %p128
    %p130 = scmp.ne.s32.totalorder %s116, %s117
    %p131 = scmp.eq.s32.totalorder %s16, 15
    %p132 = por %p130, %p131
    %p134 = scmp.ne.s32.totalorder %s117, %s133
    %p135 = scmp.eq.s32.totalorder %s16, 0
    %p136 = por %p134, %p135
    %p137 = scmp.le.s32.totalorder 1, %s10
    %p138 = scmp.lt.s32.totalorder %s10, 17
    %p139 = pnand %p137, %p138
    %p140 = pneg %p139
    // Predicated region
    $region9: #{basic_block3d_pallas.8} parent=5 // pred_check
      _
    $region10: #{basic_block3d_pallas.8} parent=5 // pred_check_branch
      %142 = sbr.rel (%p139) target = $region12
    $region11: #{basic_block3d_pallas.8} parent=5 // pred_region
      %s143 = ssub.s32 %s10, 1
      // Predicated region
      $region13: #{basic_block3d_pallas.8} parent=11 // pred_check
        %p144 = pneg %p69
      $region14: #{basic_block3d_pallas.8} parent=11 // pred_check_branch
        %146 = sbr.rel (%p144) target = $region16
      $region15: #{basic_block3d_pallas.8} parent=11 // pred_region
        _
      $region16: #{basic_block3d_pallas.8} parent=11 // pred_fallthru
        _
    $region12: #{basic_block3d_pallas.8} parent=5 // pred_fallthru
      _
    %p147 = scmp.lt.s32.totalorder %s10, 16
    // Predicated region
    $region17: #{basic_block3d_pallas.8} parent=5 // pred_check
      %p148 = pneg %p147
    $region18: #{basic_block3d_pallas.8} parent=5 // pred_check_branch
      %150 = sbr.rel (%p148) target = $region20
    $region19: #{basic_block3d_pallas.8} parent=5 // pred_region
      // Predicated region
      $region21: #{basic_block3d_pallas.8} parent=19 // pred_check
        %p151 = pneg %p42
      $region22: #{basic_block3d_pallas.8} parent=19 // pred_check_branch
        %153 = sbr.rel (%p151) target = $region24
      $region23: #{basic_block3d_pallas.8} parent=19 // pred_region
        %s154 = smul.u32 8, %s17
        %p155 = scmp.lt.s32.totalorder %s154, 15
        %s156 = scalar_select %p155, %s154, 15
        %s157 = smul.addr %s156, 8
        %s158 = smul.addr %s157, 4
        %s159 = scalar_lea.vmem %s0, %s158
        %s160 = smul.u32 8, %s17
      $region24: #{basic_block3d_pallas.8} parent=19 // pred_fallthru
        _
    $region20: #{basic_block3d_pallas.8} parent=5 // pred_fallthru
      _
    %p161 = scmp.le.s32.totalorder 1, %s10
    %p162 = scmp.lt.s32.totalorder %s10, 17
    %p163 = pnand %p161, %p162
    %p164 = pneg %p163
    // Predicated region
    $region25: #{basic_block3d_pallas.8} parent=5 // pred_check
      _
    $region26: #{basic_block3d_pallas.8} parent=5 // pred_check_branch
      %166 = sbr.rel (%p163) target = $region28
    $region27: #{basic_block3d_pallas.8} parent=5 // pred_region
      %s167 = ssub.s32 %s10, 1
      %s168 = smul.u32 8, %s19
      %p169 = scmp.lt.s32.totalorder %s168, 15
      %s170 = scalar_select %p169, %s168, 15
      %s171 = smul.addr %s170, 8
      %s172 = smul.addr %s171, 4
      %s173 = scalar_lea.vmem %s0, %s172
      %p174 = pneg %p48
      %p175 = pneg %p45
      %p176 = pneg %p69
      %p177 = pneg %p66
      %p178 = pneg %p99
      %p179 = pneg %p96
      %s180 = smul.u32 %s19, 8
      %s181 = sadd.s32 %s180, %s20
      %p182 = scmp.lt.s32.totalorder %s181, 15
      %s183 = scalar_select %p182, %s181, 15
      %s184 = smul.addr %s183, 8
      %s185 = smul.addr %s184, 4
      %s186 = scalar_lea.vmem %s2, %s185
      %p187 = pneg %p129
      %p188 = pneg %p126
      %s189 = smul.u32 %s19, 8
      %s190 = sadd.s32 %s189, %s20
      %p191 = scmp.lt.s32.totalorder %s190, 15
      %s192 = scalar_select %p191, %s190, 15
      %s193 = smul.addr %s192, 2
      %s194 = scalar_lea.vmem %s3, %s193
      %s195 = smul.u32 8, %s19
      %p196 = scmp.lt.s32.totalorder %s195, 15
      %s197 = scalar_select %p196, %s195, 15
      %s198 = smul.addr %s197, 8
      %s199 = smul.addr %s198, 4
      %s200 = scalar_lea.vmem %s0, %s199
      %s201 = smul.u32 8, %s19
      %s202 = smul.u32 %s19, 8
      %s203 = sadd.s32 %s202, %s20
      %p204 = scmp.lt.s32.totalorder %s203, 15
      %s205 = scalar_select %p204, %s203, 15
      %s206 = smul.addr %s205, 8
      %s207 = smul.addr %s206, 4
      %s208 = scalar_lea.vmem %s2, %s207
      %s209 = smul.u32 %s19, 8
      %s210 = sadd.s32 %s209, %s20
      %s211 = smul.u32 %s19, 8
      %s212 = sadd.s32 %s211, %s20
      %p213 = scmp.lt.s32.totalorder %s212, 15
      %s214 = scalar_select %p213, %s212, 15
      %s215 = smul.addr %s214, 2
      %s216 = scalar_lea.vmem %s3, %s215
      %s217 = smul.u32 %s19, 8
      %s218 = sadd.s32 %s217, %s20
      %s220 = smul.u32 %s20, 8
      %s221 = smul.addr %s220, 4
      %s222 = scalar_lea.vmem %s200, %s221
      %v223 = vld [vmem:[%s222] sm:$0xf]
      %v224 = vld [vmem:[%s222 + $0x4] sm:$0xf]
      %v225 = vld [vmem:[%s222 + $0x8] sm:$0xf]
      %v226 = vld [vmem:[%s222 + $0xc] sm:$0xf]
      %v227 = vld [vmem:[%s222 + $0x10] sm:$0xf]
      %v228 = vld [vmem:[%s222 + $0x14] sm:$0xf]
      %v229 = vld [vmem:[%s222 + $0x18] sm:$0xf]
      %v230 = vld [vmem:[%s222 + $0x1c] sm:$0xf]
      %v231 = vld [vmem:[%s1] sm:$0x3]
      %v240 = vunpack.c.l.b16 %v223
      %v241 = vunpack.c.l.b16 %v224
      %v242 = vunpack.c.l.b16 %v225
      %v243 = vunpack.c.l.b16 %v226
      %v244 = vunpack.c.l.b16 %v227
      %v245 = vunpack.c.l.b16 %v228
      %v246 = vunpack.c.l.b16 %v229
      %v247 = vunpack.c.l.b16 %v230
      %v248 = vpack.c.b16 %v241, %v240
      %v249 = vpack.c.b16 %v243, %v242
      %v250 = vpack.c.b16 %v245, %v244
      %v251 = vpack.c.b16 %v247, %v246
      %vm252 = vcmask 31744
      %v254 = vsel %vm252, %v248, 0
      %v257 = vsel %vm252, %v249, 0
      %v260 = vsel %vm252, %v250, 0
      %v263 = vsel %vm252, %v251, 0
      %vm265 = vcmask 1041408
      %v267 = vsel %vm265, %v231, 0
      %269 = vmatpush.bf16.msra.mxu0 0
      %270 = vmatpush.bf16.msra.mxu0 0
      %271 = vmatpush.bf16.msra.mxu0 0
      %272 = vmatpush.bf16.msra.mxu0 0
      %273 = vmatpush.bf16.msra.mxu0 0
      %274 = vmatpush.bf16.msra.mxu0 0
      %275 = vmatpush.bf16.msra.mxu0 0
      %276 = vmatpush.bf16.msra.mxu0 %v267
      %277 = vmatmul.bf16.gmra.mxu0 %v254
      %v278 = vpop.f32.mrf.mxu0
      %v279 = vadd.f32 0.0, %v278
      %v280 = vpop.f32.mrf.mxu0
      %v281 = vadd.f32 0.0, %v280
      %282 = vmatmul.bf16.gmra.mxu0 %v257
      %v283 = vpop.f32.mrf.mxu0
      %v284 = vadd.f32 0.0, %v283
      %v285 = vpop.f32.mrf.mxu0
      %v286 = vadd.f32 0.0, %v285
      %287 = vmatmul.bf16.gmra.mxu0 %v260
      %v288 = vpop.f32.mrf.mxu0
      %v289 = vadd.f32 0.0, %v288
      %v290 = vpop.f32.mrf.mxu0
      %v291 = vadd.f32 0.0, %v290
      %292 = vmatmul.bf16.gmra.mxu0 %v263
      %v293 = vpop.f32.mrf.mxu0
      %v294 = vadd.f32 0.0, %v293
      %v295 = vpop.f32.mrf.mxu0
      %v296 = vadd.f32 0.0, %v295
      %297 = vdwg.mxu0
      %v298 = vpack.c.bf16 %v279, %v279
      %v299 = vpack.c.bf16 %v281, %v281
      %v300 = vpack.c.bf16 %v284, %v284
      %v301 = vpack.c.bf16 %v286, %v286
      %v302 = vpack.c.bf16 %v289, %v289
      %v303 = vpack.c.bf16 %v291, %v291
      %v304 = vpack.c.bf16 %v294, %v294
      %v305 = vpack.c.bf16 %v296, %v296
      %306 = vst [vmem:[%s208] sm:$0xf] %v298
      %307 = vst [vmem:[%s208 + $0x4] sm:$0xf] %v299
      %308 = vst [vmem:[%s208 + $0x8] sm:$0xf] %v300
      %309 = vst [vmem:[%s208 + $0xc] sm:$0xf] %v301
      %310 = vst [vmem:[%s208 + $0x10] sm:$0xf] %v302
      %311 = vst [vmem:[%s208 + $0x14] sm:$0xf] %v303
      %312 = vst [vmem:[%s208 + $0x18] sm:$0xf] %v304
      %313 = vst [vmem:[%s208 + $0x1c] sm:$0xf] %v305
      %v314 = vadd.f32 %v279, %v281
      %v315 = vadd.f32 %v314, %v284
      %v316 = vadd.f32 %v315, %v286
      %v317 = vadd.f32 %v316, %v289
      %v318 = vadd.f32 %v317, %v291
      %v319 = vadd.f32 %v318, %v294
      %v320 = vadd.f32 %v319, %v296
      %v321 = vrot.slane %v320, 4
      %v322 = vadd.f32 %v320, %v321
      %v323 = vrot.slane %v322, 2
      %v324 = vadd.f32 %v322, %v323
      %v325 = vrot.slane %v324, 1
      %v326 = vadd.f32 %v324, %v325
      %327 = vst [vmem:[%s216] sm:$0x1] %v326
      %v328 = vmul.f32 %v279, %v279
      %v329 = vmul.f32 %v281, %v281
      %v330 = vmul.f32 %v284, %v284
      %v331 = vmul.f32 %v286, %v286
      %v332 = vmul.f32 %v289, %v289
      %v333 = vmul.f32 %v291, %v291
      %v334 = vmul.f32 %v294, %v294
      %v335 = vmul.f32 %v296, %v296
      %v336 = vadd.f32 %v328, %v329
      %v337 = vadd.f32 %v336, %v330
      %v338 = vadd.f32 %v337, %v331
      %v339 = vadd.f32 %v338, %v332
      %v340 = vadd.f32 %v339, %v333
      %v341 = vadd.f32 %v340, %v334
      %v342 = vadd.f32 %v341, %v335
      %v343 = vrot.slane %v342, 4
      %v344 = vadd.f32 %v342, %v343
      %v345 = vrot.slane %v344, 2
      %v346 = vadd.f32 %v344, %v345
      %v347 = vrot.slane %v346, 1
      %v348 = vadd.f32 %v346, %v347
      %349 = vst [vmem:[%s216 + $0x1] sm:$0x1] %v348
      %s350 = smul.u32 %s19, 8
      %s351 = sadd.s32 %s350, %s20
      %p352 = scmp.lt.s32.totalorder %s351, 15
      %s353 = scalar_select %p352, %s351, 15
      %s354 = smul.addr %s353, 8
      %s355 = smul.addr %s354, 4
      %s356 = scalar_lea.vmem %s2, %s355
      %s357 = smul.u32 %s19, 8
      %s358 = sadd.s32 %s357, %s20
      %p359 = scmp.lt.s32.totalorder %s358, 15
      %s360 = scalar_select %p359, %s358, 15
      %s361 = smul.addr %s360, 2
      %s362 = scalar_lea.vmem %s3, %s361
      // Predicated region
      $region29: #{basic_block3d_pallas.8} parent=27 // pred_check
        %p363 = pneg %p96
      $region30: #{basic_block3d_pallas.8} parent=27 // pred_check_branch
        %365 = sbr.rel (%p363) target = $region32
      $region31: #{basic_block3d_pallas.8} parent=27 // pred_region
        %s366 = smul.u32 %s19, 8
        %s367 = sadd.s32 %s366, %s20
      $region32: #{basic_block3d_pallas.8} parent=27 // pred_fallthru
        _
      // Predicated region
      $region33: #{basic_block3d_pallas.8} parent=27 // pred_check
        %p368 = pneg %p126
      $region34: #{basic_block3d_pallas.8} parent=27 // pred_check_branch
        %370 = sbr.rel (%p368) target = $region36
      $region35: #{basic_block3d_pallas.8} parent=27 // pred_region
        %s371 = smul.u32 %s19, 8
        %s372 = sadd.s32 %s371, %s20
      $region36: #{basic_block3d_pallas.8} parent=27 // pred_fallthru
        _
    $region28: #{basic_block3d_pallas.8} parent=5 // pred_fallthru
      _
    %p373 = scmp.le.s32.totalorder 2, %s10
    // Predicated region
    $region37: #{basic_block3d_pallas.8} parent=5 // pred_check
      %p374 = pneg %p373
    $region38: #{basic_block3d_pallas.8} parent=5 // pred_check_branch
      %376 = sbr.rel (%p374) target = $region40
    $region39: #{basic_block3d_pallas.8} parent=5 // pred_region
      %s377 = ssub.s32 %s10, 2
      // Predicated region
      $region41: #{basic_block3d_pallas.8} parent=39 // pred_check
        %p378 = pneg %p102
      $region42: #{basic_block3d_pallas.8} parent=39 // pred_check_branch
        %380 = sbr.rel (%p378) target = $region44
      $region43: #{basic_block3d_pallas.8} parent=39 // pred_region
        %s381 = smul.u32 %s21, 8
        %s382 = sadd.s32 %s381, %s22
        %p383 = scmp.lt.s32.totalorder %s382, 15
        %s384 = scalar_select %p383, %s382, 15
        %s385 = smul.addr %s384, 8
        %s386 = smul.addr %s385, 4
        %s387 = scalar_lea.vmem %s2, %s386
      $region44: #{basic_block3d_pallas.8} parent=39 // pred_fallthru
        _
      // Predicated region
      $region45: #{basic_block3d_pallas.8} parent=39 // pred_check
        %p388 = pneg %p132
      $region46: #{basic_block3d_pallas.8} parent=39 // pred_check_branch
        %390 = sbr.rel (%p388) target = $region48
      $region47: #{basic_block3d_pallas.8} parent=39 // pred_region
        %s391 = smul.u32 %s21, 8
        %s392 = sadd.s32 %s391, %s22
        %p393 = scmp.lt.s32.totalorder %s392, 15
        %s394 = scalar_select %p393, %s392, 15
        %s395 = smul.addr %s394, 2
        %s396 = scalar_lea.vmem %s3, %s395
      $region48: #{basic_block3d_pallas.8} parent=39 // pred_fallthru
        _
    $region40: #{basic_block3d_pallas.8} parent=5 // pred_fallthru
      _
  $region6: #{basic_block3d_pallas.8} parent=0 // loop_footer
    %s14 = sadd.s32 1, %s10
  $region7: #{basic_block3d_pallas.8} parent=0 // loop_footer_branch
    %9 = sbr.rel target = $region3
  $region8: #{basic_block3d_pallas.8} parent=0 // loop_exit
    _

// kernel: basic_block3d_pallas.9
$region0: #{basic_block3d_pallas.9}
  #allocation0 [shape = 'u32[]', space=smem, size = 0x4, offset = 0x4, fixed_abs, tag = 'smem constant byte address 0x4 - core index']
  #allocation1 [shape = 'u32[72,128]{1,0:T(1,128)}', space=vmem, size = 0x9000, scoped, tag = 'internal scratch']
  %s0 = inlined_call_operand.vmem [shape: bf16[16,64,128], index: 0, kind: input, shape index: {}]
  %s1 = inlined_call_operand.vmem [shape: f32[1,1,128], index: 1, kind: input, shape index: {}]
  %s2 = inlined_call_operand.vmem [shape: f32[1,1,128], index: 2, kind: input, shape index: {}]
  %s3 = inlined_call_operand.vmem [shape: bf16[16,64,128], index: 3, kind: output, shape index: {}]
  %s4 = sld [smem:[#allocation0]]
  $region45: #{basic_block3d_pallas.9} parent=0
    _
  %s6 = ssub.s32 1, %s4
  %s7 = scalar_select 0, %s6, %s4
  loop: start=0, step=1, limit=4
  $region2: #{basic_block3d_pallas.9} parent=0 // loop_pre_header
    _
  $region3: #{basic_block3d_pallas.9} parent=0 // loop_header
    %s9 = sphi 0, %s13
    %p10 = scmp.ge.s32.totalorder %s9, 4
    %s19 = sphi 0, %s21
    %s22 = sphi 0, %s19
    %s23 = sphi 0, %s22
    %s39 = sphi 0, %s23
    %s43 = sphi 0, %s43
    %s45 = sphi 0, %s43
    %s46 = sphi 0, %s45
    %s60 = sphi 0, %s46
    %s64 = sphi 0, %s64
    %s66 = sphi 0, %s64
    %s67 = sphi 0, %s66
    %s81 = sphi 0, %s67
    %s87 = sphi 0, %s89
    %s90 = sphi 0, %s87
    %s91 = sphi 0, %s90
    %s107 = sphi 0, %s91
  $region4: #{basic_block3d_pallas.9} parent=0 // loop_header_branch
    %12 = sbr.rel (%p10) target = $region8
  $region5: #{basic_block3d_pallas.9} parent=0 // loop_body
    %s14 = ssub.s32 %s9, 1
    %s15 = ssub.s32 %s9, 2
    %s16 = sadd.s32 %s9, 1
    %s17 = ssub.s32 %s9, %s16
    %p18 = scmp.eq.s32.totalorder %s17, 0
    %s20 = sadd.s32 %s19, 1
    %s21 = scalar_select %p18, %s19, %s20
    %p24 = pneg %p18
    %p25 = scmp.eq.s32.totalorder %s9, 1
    %p26 = por %p24, %p25
    %p27 = scmp.ne.s32.totalorder %s19, %s22
    %p28 = scmp.eq.s32.totalorder %s9, 0
    %p29 = por %p27, %p28
    %p30 = scmp.ne.s32.totalorder %s19, %s22
    %p31 = scmp.eq.s32.totalorder %s14, 1
    %p32 = por %p30, %p31
    %p33 = scmp.ne.s32.totalorder %s22, %s23
    %p34 = scmp.eq.s32.totalorder %s14, 0
    %p35 = por %p33, %p34
    %p36 = scmp.ne.s32.totalorder %s22, %s23
    %p37 = scmp.eq.s32.totalorder %s15, 1
    %p38 = por %p36, %p37
    %p40 = scmp.ne.s32.totalorder %s23, %s39
    %p41 = scmp.eq.s32.totalorder %s15, 0
    %p42 = por %p40, %p41
    %s44 = sadd.s32 %s43, 1
    %p47 = scmp.eq.s32.totalorder %s9, 1
    %p48 = scmp.ne.s32.totalorder %s43, %s45
    %p49 = scmp.eq.s32.totalorder %s9, 0
    %p50 = por %p48, %p49
    %p51 = scmp.ne.s32.totalorder %s43, %s45
    %p52 = scmp.eq.s32.totalorder %s14, 1
    %p53 = por %p51, %p52
    %p54 = scmp.ne.s32.totalorder %s45, %s46
    %p55 = scmp.eq.s32.totalorder %s14, 0
    %p56 = por %p54, %p55
    %p57 = scmp.ne.s32.totalorder %s45, %s46
    %p58 = scmp.eq.s32.totalorder %s15, 1
    %p59 = por %p57, %p58
    %p61 = scmp.ne.s32.totalorder %s46, %s60
    %p62 = scmp.eq.s32.totalorder %s15, 0
    %p63 = por %p61, %p62
    %s65 = sadd.s32 %s64, 1
    %p68 = scmp.eq.s32.totalorder %s9, 1
    %p69 = scmp.ne.s32.totalorder %s64, %s66
    %p70 = scmp.eq.s32.totalorder %s9, 0
    %p71 = por %p69, %p70
    %p72 = scmp.ne.s32.totalorder %s64, %s66
    %p73 = scmp.eq.s32.totalorder %s14, 1
    %p74 = por %p72, %p73
    %p75 = scmp.ne.s32.totalorder %s66, %s67
    %p76 = scmp.eq.s32.totalorder %s14, 0
    %p77 = por %p75, %p76
    %p78 = scmp.ne.s32.totalorder %s66, %s67
    %p79 = scmp.eq.s32.totalorder %s15, 1
    %p80 = por %p78, %p79
    %p82 = scmp.ne.s32.totalorder %s67, %s81
    %p83 = scmp.eq.s32.totalorder %s15, 0
    %p84 = por %p82, %p83
    %s85 = ssub.s32 %s9, %s16
    %p86 = scmp.eq.s32.totalorder %s85, 0
    %s88 = sadd.s32 %s87, 1
    %s89 = scalar_select %p86, %s87, %s88
    %p92 = pneg %p86
    %p93 = scmp.eq.s32.totalorder %s9, 1
    %p94 = por %p92, %p93
    %p95 = scmp.ne.s32.totalorder %s87, %s90
    %p96 = scmp.eq.s32.totalorder %s9, 0
    %p97 = por %p95, %p96
    %p98 = scmp.ne.s32.totalorder %s87, %s90
    %p99 = scmp.eq.s32.totalorder %s14, 1
    %p100 = por %p98, %p99
    %p101 = scmp.ne.s32.totalorder %s90, %s91
    %p102 = scmp.eq.s32.totalorder %s14, 0
    %p103 = por %p101, %p102
    %p104 = scmp.ne.s32.totalorder %s90, %s91
    %p105 = scmp.eq.s32.totalorder %s15, 1
    %p106 = por %p104, %p105
    %p108 = scmp.ne.s32.totalorder %s91, %s107
    %p109 = scmp.eq.s32.totalorder %s15, 0
    %p110 = por %p108, %p109
    %p111 = scmp.le.s32.totalorder 1, %s9
    %p112 = scmp.lt.s32.totalorder %s9, 3
    %p113 = pnand %p111, %p112
    %p114 = pneg %p113
    // Predicated region
    $region9: #{basic_block3d_pallas.9} parent=5 // pred_check
      _
    $region10: #{basic_block3d_pallas.9} parent=5 // pred_check_branch
      %116 = sbr.rel (%p113) target = $region12
    $region11: #{basic_block3d_pallas.9} parent=5 // pred_region
      %s117 = ssub.s32 %s9, 1
      // Predicated region
      $region13: #{basic_block3d_pallas.9} parent=11 // pred_check
        %p118 = pneg %p56
      $region14: #{basic_block3d_pallas.9} parent=11 // pred_check_branch
        %120 = sbr.rel (%p118) target = $region16
      $region15: #{basic_block3d_pallas.9} parent=11 // pred_region
        _
      $region16: #{basic_block3d_pallas.9} parent=11 // pred_fallthru
        _
      // Predicated region
      $region17: #{basic_block3d_pallas.9} parent=11 // pred_check
        %p121 = pneg %p77
      $region18: #{basic_block3d_pallas.9} parent=11 // pred_check_branch
        %123 = sbr.rel (%p121) target = $region20
      $region19: #{basic_block3d_pallas.9} parent=11 // pred_region
        _
      $region20: #{basic_block3d_pallas.9} parent=11 // pred_fallthru
        _
    $region12: #{basic_block3d_pallas.9} parent=5 // pred_fallthru
      _
    %p124 = scmp.lt.s32.totalorder %s9, 2
    // Predicated region
    $region21: #{basic_block3d_pallas.9} parent=5 // pred_check
      %p125 = pneg %p124
    $region22: #{basic_block3d_pallas.9} parent=5 // pred_check_branch
      %127 = sbr.rel (%p125) target = $region24
    $region23: #{basic_block3d_pallas.9} parent=5 // pred_region
      // Predicated region
      $region25: #{basic_block3d_pallas.9} parent=23 // pred_check
        %p128 = pneg %p29
      $region26: #{basic_block3d_pallas.9} parent=23 // pred_check_branch
        %130 = sbr.rel (%p128) target = $region28
      $region27: #{basic_block3d_pallas.9} parent=23 // pred_region
        %s131 = smul.u32 8, %s9
        %p132 = scmp.lt.s32.totalorder %s131, 15
        %s133 = scalar_select %p132, %s131, 15
        %s134 = smul.addr %s133, 8
        %s135 = smul.addr %s134, 4
        %s136 = scalar_lea.vmem %s0, %s135
        %s137 = smul.u32 8, %s9
      $region28: #{basic_block3d_pallas.9} parent=23 // pred_fallthru
        _
    $region24: #{basic_block3d_pallas.9} parent=5 // pred_fallthru
      _
    %p138 = scmp.le.s32.totalorder 1, %s9
    %p139 = scmp.lt.s32.totalorder %s9, 3
    %p140 = pnand %p138, %p139
    %p141 = pneg %p140
    // Predicated region
    $region29: #{basic_block3d_pallas.9} parent=5 // pred_check
      _
    $region30: #{basic_block3d_pallas.9} parent=5 // pred_check_branch
      %143 = sbr.rel (%p140) target = $region32
    $region31: #{basic_block3d_pallas.9} parent=5 // pred_region
      %s144 = ssub.s32 %s9, 1
      %s145 = smul.u32 8, %s14
      %p146 = scmp.lt.s32.totalorder %s145, 15
      %s147 = scalar_select %p146, %s145, 15
      %s148 = smul.addr %s147, 8
      %s149 = smul.addr %s148, 4
      %s150 = scalar_lea.vmem %s0, %s149
      %p151 = pneg %p35
      %p152 = pneg %p32
      %p153 = pneg %p56
      %p154 = pneg %p53
      %p155 = pneg %p77
      %p156 = pneg %p74
      %p157 = pneg %p103
      %p158 = pneg %p100
      %s159 = smul.u32 8, %s14
      %p160 = scmp.lt.s32.totalorder %s159, 15
      %s161 = scalar_select %p160, %s159, 15
      %s162 = smul.addr %s161, 8
      %s163 = smul.addr %s162, 4
      %s164 = scalar_lea.vmem %s3, %s163
      %s165 = smul.u32 8, %s14
      %p166 = scmp.lt.s32.totalorder %s165, 15
      %s167 = scalar_select %p166, %s165, 15
      %s168 = smul.addr %s167, 8
      %s169 = smul.addr %s168, 4
      %s170 = scalar_lea.vmem %s0, %s169
      %s171 = smul.u32 8, %s14
      %s172 = smul.u32 8, %s14
      %p173 = scmp.lt.s32.totalorder %s172, 15
      %s174 = scalar_select %p173, %s172, 15
      %s175 = smul.addr %s174, 8
      %s176 = smul.addr %s175, 4
      %s177 = scalar_lea.vmem %s3, %s176
      %s178 = smul.u32 8, %s14
      %v179 = vld [vmem:[%s170] sm:$0xf]
      %v180 = vld [vmem:[%s170 + $0x4] sm:$0xf]
      %v181 = vld [vmem:[%s170 + $0x8] sm:$0xf]
      %v182 = vld [vmem:[%s170 + $0xc] sm:$0xf]
      %v183 = vld [vmem:[%s170 + $0x10] sm:$0xf]
      %v184 = vld [vmem:[%s170 + $0x14] sm:$0xf]
      %v185 = vld [vmem:[%s170 + $0x18] sm:$0xf]
      %v186 = vld [vmem:[%s170 + $0x1c] sm:$0xf]
      %v187 = vld [vmem:[%s170 + $0x20] sm:$0xf]
      %v188 = vld [vmem:[%s170 + $0x24] sm:$0xf]
      %v189 = vld [vmem:[%s170 + $0x28] sm:$0xf]
      %v190 = vld [vmem:[%s170 + $0x2c] sm:$0xf]
      %v191 = vld [vmem:[%s170 + $0x30] sm:$0xf]
      %v192 = vld [vmem:[%s170 + $0x34] sm:$0xf]
      %v193 = vld [vmem:[%s170 + $0x38] sm:$0xf]
      %v194 = vld [vmem:[%s170 + $0x3c] sm:$0xf]
      %v195 = vld [vmem:[%s170 + $0x40] sm:$0xf]
      %v196 = vld [vmem:[%s170 + $0x44] sm:$0xf]
      %v197 = vld [vmem:[%s170 + $0x48] sm:$0xf]
      %v198 = vld [vmem:[%s170 + $0x4c] sm:$0xf]
      %v199 = vld [vmem:[%s170 + $0x50] sm:$0xf]
      %v200 = vld [vmem:[%s170 + $0x54] sm:$0xf]
      %v201 = vld [vmem:[%s170 + $0x58] sm:$0xf]
      %v202 = vld [vmem:[%s170 + $0x5c] sm:$0xf]
      %v203 = vld [vmem:[%s170 + $0x60] sm:$0xf]
      %v204 = vld [vmem:[%s170 + $0x64] sm:$0xf]
      %v205 = vld [vmem:[%s170 + $0x68] sm:$0xf]
      %v206 = vld [vmem:[%s170 + $0x6c] sm:$0xf]
      %v207 = vld [vmem:[%s170 + $0x70] sm:$0xf]
      %v208 = vld [vmem:[%s170 + $0x74] sm:$0xf]
      %v209 = vld [vmem:[%s170 + $0x78] sm:$0xf]
      %v210 = vld [vmem:[%s170 + $0x7c] sm:$0xf]
      %v211 = vld [vmem:[%s170 + $0x80] sm:$0xf]
      %v212 = vld [vmem:[%s170 + $0x84] sm:$0xf]
      %v213 = vld [vmem:[%s170 + $0x88] sm:$0xf]
      %v214 = vld [vmem:[%s170 + $0x8c] sm:$0xf]
      %v215 = vld [vmem:[%s170 + $0x90] sm:$0xf]
      %v216 = vld [vmem:[%s170 + $0x94] sm:$0xf]
      %v217 = vld [vmem:[%s170 + $0x98] sm:$0xf]
      %v218 = vld [vmem:[%s170 + $0x9c] sm:$0xf]
      %v219 = vld [vmem:[%s170 + $0xa0] sm:$0xf]
      %v220 = vld [vmem:[%s170 + $0xa4] sm:$0xf]
      %v221 = vld [vmem:[%s170 + $0xa8] sm:$0xf]
      %v222 = vld [vmem:[%s170 + $0xac] sm:$0xf]
      %v223 = vld [vmem:[%s170 + $0xb0] sm:$0xf]
      %v224 = vld [vmem:[%s170 + $0xb4] sm:$0xf]
      %v225 = vld [vmem:[%s170 + $0xb8] sm:$0xf]
      %v226 = vld [vmem:[%s170 + $0xbc] sm:$0xf]
      %v227 = vld [vmem:[%s170 + $0xc0] sm:$0xf]
      %v228 = vld [vmem:[%s170 + $0xc4] sm:$0xf]
      %v229 = vld [vmem:[%s170 + $0xc8] sm:$0xf]
      %v230 = vld [vmem:[%s170 + $0xcc] sm:$0xf]
      %v231 = vld [vmem:[%s170 + $0xd0] sm:$0xf]
      %v232 = vld [vmem:[%s170 + $0xd4] sm:$0xf]
      %v233 = vld [vmem:[%s170 + $0xd8] sm:$0xf]
      %v234 = vld [vmem:[%s170 + $0xdc] sm:$0xf]
      %v235 = vld [vmem:[%s170 + $0xe0] sm:$0xf]
      %v236 = vld [vmem:[%s170 + $0xe4] sm:$0xf]
      %v237 = vld [vmem:[%s170 + $0xe8] sm:$0xf]
      %v238 = vld [vmem:[%s170 + $0xec] sm:$0xf]
      %v239 = vld [vmem:[%s170 + $0xf0] sm:$0xf]
      %v240 = vld [vmem:[%s170 + $0xf4] sm:$0xf]
      %v241 = vld [vmem:[%s170 + $0xf8] sm:$0xf]
      %v242 = vld [vmem:[%s170 + $0xfc] sm:$0xf]
      %v243 = vunpack.c.l.bf16 %v179
      %v244 = vunpack.c.l.bf16 %v180
      %v245 = vunpack.c.l.bf16 %v181
      %v246 = vunpack.c.l.bf16 %v182
      %v247 = vunpack.c.l.bf16 %v183
      %v248 = vunpack.c.l.bf16 %v184
      %v249 = vunpack.c.l.bf16 %v185
      %v250 = vunpack.c.l.bf16 %v186
      %v251 = vunpack.c.l.bf16 %v187
      %v252 = vunpack.c.l.bf16 %v188
      %v253 = vunpack.c.l.bf16 %v189
      %v254 = vunpack.c.l.bf16 %v190
      %v255 = vunpack.c.l.bf16 %v191
      %v256 = vunpack.c.l.bf16 %v192
      %v257 = vunpack.c.l.bf16 %v193
      %v258 = vunpack.c.l.bf16 %v194
      %v259 = vunpack.c.l.bf16 %v195
      %v260 = vunpack.c.l.bf16 %v196
      %v261 = vunpack.c.l.bf16 %v197
      %v262 = vunpack.c.l.bf16 %v198
      %v263 = vunpack.c.l.bf16 %v199
      %v264 = vunpack.c.l.bf16 %v200
      %v265 = vunpack.c.l.bf16 %v201
      %v266 = vunpack.c.l.bf16 %v202
      %v267 = vunpack.c.l.bf16 %v203
      %v268 = vunpack.c.l.bf16 %v204
      %v269 = vunpack.c.l.bf16 %v205
      %v270 = vunpack.c.l.bf16 %v206
      %v271 = vunpack.c.l.bf16 %v207
      %v272 = vunpack.c.l.bf16 %v208
      %v273 = vunpack.c.l.bf16 %v209
      %v274 = vunpack.c.l.bf16 %v210
      %v275 = vunpack.c.l.bf16 %v211
      %v276 = vunpack.c.l.bf16 %v212
      %v277 = vunpack.c.l.bf16 %v213
      %v278 = vunpack.c.l.bf16 %v214
      %v279 = vunpack.c.l.bf16 %v215
      %v280 = vunpack.c.l.bf16 %v216
      %v281 = vunpack.c.l.bf16 %v217
      %v282 = vunpack.c.l.bf16 %v218
      %v283 = vunpack.c.l.bf16 %v219
      %v284 = vunpack.c.l.bf16 %v220
      %v285 = vunpack.c.l.bf16 %v221
      %v286 = vunpack.c.l.bf16 %v222
      %v287 = vunpack.c.l.bf16 %v223
      %v288 = vunpack.c.l.bf16 %v224
      %v289 = vunpack.c.l.bf16 %v225
      %v290 = vunpack.c.l.bf16 %v226
      %v291 = vunpack.c.l.bf16 %v227
      %v292 = vunpack.c.l.bf16 %v228
      %v293 = vunpack.c.l.bf16 %v229
      %v294 = vunpack.c.l.bf16 %v230
      %v295 = vunpack.c.l.bf16 %v231
      %v296 = vunpack.c.l.bf16 %v232
      %v297 = vunpack.c.l.bf16 %v233
      %v298 = vunpack.c.l.bf16 %v234
      %v299 = vunpack.c.l.bf16 %v235
      %v300 = vunpack.c.l.bf16 %v236
      %v301 = vunpack.c.l.bf16 %v237
      %v302 = vunpack.c.l.bf16 %v238
      %v303 = vunpack.c.l.bf16 %v239
      %v304 = vunpack.c.l.bf16 %v240
      %v305 = vunpack.c.l.bf16 %v241
      %v306 = vunpack.c.l.bf16 %v242
      %v307 = vld [vmem:[%s1] sm:$0x1]
      %v309 = vperm.slane %v307, 0
      %v311 = vmul.f32 %v243, %v309
      %v312 = vmul.f32 %v244, %v309
      %v313 = vmul.f32 %v245, %v309
      %v314 = vmul.f32 %v246, %v309
      %v315 = vmul.f32 %v247, %v309
      %v316 = vmul.f32 %v248, %v309
      %v317 = vmul.f32 %v249, %v309
      %v318 = vmul.f32 %v250, %v309
      %v319 = vmul.f32 %v251, %v309
      %v320 = vmul.f32 %v252, %v309
      %v321 = vmul.f32 %v253, %v309
      %v322 = vmul.f32 %v254, %v309
      %v323 = vmul.f32 %v255, %v309
      %v324 = vmul.f32 %v256, %v309
      %v325 = vmul.f32 %v257, %v309
      %v326 = vmul.f32 %v258, %v309
      %v327 = vmul.f32 %v259, %v309
      %v328 = vmul.f32 %v260, %v309
      %v329 = vmul.f32 %v261, %v309
      %v330 = vmul.f32 %v262, %v309
      %v331 = vmul.f32 %v263, %v309
      %v332 = vmul.f32 %v264, %v309
      %v333 = vmul.f32 %v265, %v309
      %v334 = vmul.f32 %v266, %v309
      %v335 = vmul.f32 %v267, %v309
      %v336 = vmul.f32 %v268, %v309
      %v337 = vmul.f32 %v269, %v309
      %v338 = vmul.f32 %v270, %v309
      %v339 = vmul.f32 %v271, %v309
      %v340 = vmul.f32 %v272, %v309
      %v341 = vmul.f32 %v273, %v309
      %v342 = vmul.f32 %v274, %v309
      %v343 = vmul.f32 %v275, %v309
      %v344 = vmul.f32 %v276, %v309
      %v345 = vmul.f32 %v277, %v309
      %v346 = vmul.f32 %v278, %v309
      %v347 = vmul.f32 %v279, %v309
      %v348 = vmul.f32 %v280, %v309
      %v349 = vmul.f32 %v281, %v309
      %v350 = vmul.f32 %v282, %v309
      %v351 = vmul.f32 %v283, %v309
      %v352 = vmul.f32 %v284, %v309
      %v353 = vmul.f32 %v285, %v309
      %v354 = vmul.f32 %v286, %v309
      %v355 = vmul.f32 %v287, %v309
      %v356 = vmul.f32 %v288, %v309
      %v357 = vmul.f32 %v289, %v309
      %v358 = vmul.f32 %v290, %v309
      %v359 = vmul.f32 %v291, %v309
      %v360 = vmul.f32 %v292, %v309
      %v361 = vmul.f32 %v293, %v309
      %v362 = vmul.f32 %v294, %v309
      %v363 = vmul.f32 %v295, %v309
      %v364 = vmul.f32 %v296, %v309
      %v365 = vmul.f32 %v297, %v309
      %v366 = vmul.f32 %v298, %v309
      %v367 = vmul.f32 %v299, %v309
      %v368 = vmul.f32 %v300, %v309
      %v369 = vmul.f32 %v301, %v309
      %v370 = vmul.f32 %v302, %v309
      %v371 = vmul.f32 %v303, %v309
      %v372 = vmul.f32 %v304, %v309
      %v373 = vmul.f32 %v305, %v309
      %v374 = vmul.f32 %v306, %v309
      %v375 = vld [vmem:[%s2] sm:$0x1]
      %v377 = vperm.slane %v375, 0
      %v379 = vadd.f32 %v311, %v377
      %v380 = vadd.f32 %v312, %v377
      %v381 = vadd.f32 %v313, %v377
      %v382 = vadd.f32 %v314, %v377
      %v383 = vadd.f32 %v315, %v377
      %v384 = vadd.f32 %v316, %v377
      %v385 = vadd.f32 %v317, %v377
      %v386 = vadd.f32 %v318, %v377
      %v387 = vadd.f32 %v319, %v377
      %v388 = vadd.f32 %v320, %v377
      %v389 = vadd.f32 %v321, %v377
      %v390 = vadd.f32 %v322, %v377
      %v391 = vadd.f32 %v323, %v377
      %v392 = vadd.f32 %v324, %v377
      %v393 = vadd.f32 %v325, %v377
      %v394 = vadd.f32 %v326, %v377
      %v395 = vadd.f32 %v327, %v377
      %v396 = vadd.f32 %v328, %v377
      %v397 = vadd.f32 %v329, %v377
      %v398 = vadd.f32 %v330, %v377
      %v399 = vadd.f32 %v331, %v377
      %v400 = vadd.f32 %v332, %v377
      %v401 = vadd.f32 %v333, %v377
      %v402 = vadd.f32 %v334, %v377
      %v403 = vadd.f32 %v335, %v377
      %v404 = vadd.f32 %v336, %v377
      %v405 = vadd.f32 %v337, %v377
      %v406 = vadd.f32 %v338, %v377
      %v407 = vadd.f32 %v339, %v377
      %v408 = vadd.f32 %v340, %v377
      %v409 = vadd.f32 %v341, %v377
      %v410 = vadd.f32 %v342, %v377
      %v411 = vadd.f32 %v343, %v377
      %v412 = vadd.f32 %v344, %v377
      %v413 = vadd.f32 %v345, %v377
      %v414 = vadd.f32 %v346, %v377
      %v415 = vadd.f32 %v347, %v377
      %v416 = vadd.f32 %v348, %v377
      %v417 = vadd.f32 %v349, %v377
      %v418 = vadd.f32 %v350, %v377
      %v419 = vadd.f32 %v351, %v377
      %v420 = vadd.f32 %v352, %v377
      %v421 = vadd.f32 %v353, %v377
      %v422 = vadd.f32 %v354, %v377
      %v423 = vadd.f32 %v355, %v377
      %v424 = vadd.f32 %v356, %v377
      %v425 = vadd.f32 %v357, %v377
      %v426 = vadd.f32 %v358, %v377
      %v427 = vadd.f32 %v359, %v377
      %v428 = vadd.f32 %v360, %v377
      %v429 = vadd.f32 %v361, %v377
      %v430 = vadd.f32 %v362, %v377
      %v431 = vadd.f32 %v363, %v377
      %v432 = vadd.f32 %v364, %v377
      %v433 = vadd.f32 %v365, %v377
      %v434 = vadd.f32 %v366, %v377
      %v435 = vadd.f32 %v367, %v377
      %v436 = vadd.f32 %v368, %v377
      %v437 = vadd.f32 %v369, %v377
      %v438 = vadd.f32 %v370, %v377
      %v439 = vadd.f32 %v371, %v377
      %v440 = vadd.f32 %v372, %v377
      %v441 = vadd.f32 %v373, %v377
      %v442 = vadd.f32 %v374, %v377
      %v443 = vpack.c.bf16 %v379, %v379
      %v444 = vpack.c.bf16 %v380, %v380
      %v445 = vpack.c.bf16 %v381, %v381
      %v446 = vpack.c.bf16 %v382, %v382
      %v447 = vpack.c.bf16 %v383, %v383
      %v448 = vpack.c.bf16 %v384, %v384
      %v449 = vpack.c.bf16 %v385, %v385
      %v450 = vpack.c.bf16 %v386, %v386
      %v451 = vpack.c.bf16 %v387, %v387
      %v452 = vpack.c.bf16 %v388, %v388
      %v453 = vpack.c.bf16 %v389, %v389
      %v454 = vpack.c.bf16 %v390, %v390
      %v455 = vpack.c.bf16 %v391, %v391
      %v456 = vpack.c.bf16 %v392, %v392
      %v457 = vpack.c.bf16 %v393, %v393
      %v458 = vpack.c.bf16 %v394, %v394
      %v459 = vpack.c.bf16 %v395, %v395
      %v460 = vpack.c.bf16 %v396, %v396
      %v461 = vpack.c.bf16 %v397, %v397
      %v462 = vpack.c.bf16 %v398, %v398
      %v463 = vpack.c.bf16 %v399, %v399
      %v464 = vpack.c.bf16 %v400, %v400
      %v465 = vpack.c.bf16 %v401, %v401
      %v466 = vpack.c.bf16 %v402, %v402
      %v467 = vpack.c.bf16 %v403, %v403
      %v468 = vpack.c.bf16 %v404, %v404
      %v469 = vpack.c.bf16 %v405, %v405
      %v470 = vpack.c.bf16 %v406, %v406
      %v471 = vpack.c.bf16 %v407, %v407
      %v472 = vpack.c.bf16 %v408, %v408
      %v473 = vpack.c.bf16 %v409, %v409
      %v474 = vpack.c.bf16 %v410, %v410
      %v475 = vpack.c.bf16 %v411, %v411
      %v476 = vpack.c.bf16 %v412, %v412
      %v477 = vpack.c.bf16 %v413, %v413
      %v478 = vpack.c.bf16 %v414, %v414
      %v479 = vpack.c.bf16 %v415, %v415
      %v480 = vpack.c.bf16 %v416, %v416
      %v481 = vpack.c.bf16 %v417, %v417
      %v482 = vpack.c.bf16 %v418, %v418
      %v483 = vpack.c.bf16 %v419, %v419
      %v484 = vpack.c.bf16 %v420, %v420
      %v485 = vpack.c.bf16 %v421, %v421
      %v486 = vpack.c.bf16 %v422, %v422
      %v487 = vpack.c.bf16 %v423, %v423
      %v488 = vpack.c.bf16 %v424, %v424
      %v489 = vpack.c.bf16 %v425, %v425
      %v490 = vpack.c.bf16 %v426, %v426
      %v491 = vpack.c.bf16 %v427, %v427
      %v492 = vpack.c.bf16 %v428, %v428
      %v493 = vpack.c.bf16 %v429, %v429
      %v494 = vpack.c.bf16 %v430, %v430
      %v495 = vpack.c.bf16 %v431, %v431
      %v496 = vpack.c.bf16 %v432, %v432
      %v497 = vpack.c.bf16 %v433, %v433
      %v498 = vpack.c.bf16 %v434, %v434
      %v499 = vpack.c.bf16 %v435, %v435
      %v500 = vpack.c.bf16 %v436, %v436
      %v501 = vpack.c.bf16 %v437, %v437
      %v502 = vpack.c.bf16 %v438, %v438
      %v503 = vpack.c.bf16 %v439, %v439
      %v504 = vpack.c.bf16 %v440, %v440
      %v505 = vpack.c.bf16 %v441, %v441
      %v506 = vpack.c.bf16 %v442, %v442
      %507 = vst [vmem:[%s177] sm:$0xf] %v443
      %508 = vst [vmem:[%s177 + $0x4] sm:$0xf] %v444
      %509 = vst [vmem:[%s177 + $0x8] sm:$0xf] %v445
      %510 = vst [vmem:[%s177 + $0xc] sm:$0xf] %v446
      %511 = vst [vmem:[%s177 + $0x10] sm:$0xf] %v447
      %512 = vst [vmem:[%s177 + $0x14] sm:$0xf] %v448
      %513 = vst [vmem:[%s177 + $0x18] sm:$0xf] %v449
      %514 = vst [vmem:[%s177 + $0x1c] sm:$0xf] %v450
      %515 = vst [vmem:[%s177 + $0x20] sm:$0xf] %v451
      %516 = vst [vmem:[%s177 + $0x24] sm:$0xf] %v452
      %517 = vst [vmem:[%s177 + $0x28] sm:$0xf] %v453
      %518 = vst [vmem:[%s177 + $0x2c] sm:$0xf] %v454
      %519 = vst [vmem:[%s177 + $0x30] sm:$0xf] %v455
      %520 = vst [vmem:[%s177 + $0x34] sm:$0xf] %v456
      %521 = vst [vmem:[%s177 + $0x38] sm:$0xf] %v457
      %522 = vst [vmem:[%s177 + $0x3c] sm:$0xf] %v458
      %523 = vst [vmem:[%s177 + $0x40] sm:$0xf] %v459
      %524 = vst [vmem:[%s177 + $0x44] sm:$0xf] %v460
      %525 = vst [vmem:[%s177 + $0x48] sm:$0xf] %v461
      %526 = vst [vmem:[%s177 + $0x4c] sm:$0xf] %v462
      %527 = vst [vmem:[%s177 + $0x50] sm:$0xf] %v463
      %528 = vst [vmem:[%s177 + $0x54] sm:$0xf] %v464
      %529 = vst [vmem:[%s177 + $0x58] sm:$0xf] %v465
      %530 = vst [vmem:[%s177 + $0x5c] sm:$0xf] %v466
      %531 = vst [vmem:[%s177 + $0x60] sm:$0xf] %v467
      %532 = vst [vmem:[%s177 + $0x64] sm:$0xf] %v468
      %533 = vst [vmem:[%s177 + $0x68] sm:$0xf] %v469
      %534 = vst [vmem:[%s177 + $0x6c] sm:$0xf] %v470
      %535 = vst [vmem:[%s177 + $0x70] sm:$0xf] %v471
      %536 = vst [vmem:[%s177 + $0x74] sm:$0xf] %v472
      %537 = vst [vmem:[%s177 + $0x78] sm:$0xf] %v473
      %538 = vst [vmem:[%s177 + $0x7c] sm:$0xf] %v474
      %539 = vst [vmem:[%s177 + $0x80] sm:$0xf] %v475
      %540 = vst [vmem:[%s177 + $0x84] sm:$0xf] %v476
      %541 = vst [vmem:[%s177 + $0x88] sm:$0xf] %v477
      %542 = vst [vmem:[%s177 + $0x8c] sm:$0xf] %v478
      %543 = vst [vmem:[%s177 + $0x90] sm:$0xf] %v479
      %544 = vst [vmem:[%s177 + $0x94] sm:$0xf] %v480
      %545 = vst [vmem:[%s177 + $0x98] sm:$0xf] %v481
      %546 = vst [vmem:[%s177 + $0x9c] sm:$0xf] %v482
      %547 = vst [vmem:[%s177 + $0xa0] sm:$0xf] %v483
      %548 = vst [vmem:[%s177 + $0xa4] sm:$0xf] %v484
      %549 = vst [vmem:[%s177 + $0xa8] sm:$0xf] %v485
      %550 = vst [vmem:[%s177 + $0xac] sm:$0xf] %v486
      %551 = vst [vmem:[%s177 + $0xb0] sm:$0xf] %v487
      %552 = vst [vmem:[%s177 + $0xb4] sm:$0xf] %v488
      %553 = vst [vmem:[%s177 + $0xb8] sm:$0xf] %v489
      %554 = vst [vmem:[%s177 + $0xbc] sm:$0xf] %v490
      %555 = vst [vmem:[%s177 + $0xc0] sm:$0xf] %v491
      %556 = vst [vmem:[%s177 + $0xc4] sm:$0xf] %v492
      %557 = vst [vmem:[%s177 + $0xc8] sm:$0xf] %v493
      %558 = vst [vmem:[%s177 + $0xcc] sm:$0xf] %v494
      %559 = vst [vmem:[%s177 + $0xd0] sm:$0xf] %v495
      %560 = vst [vmem:[%s177 + $0xd4] sm:$0xf] %v496
      %561 = vst [vmem:[%s177 + $0xd8] sm:$0xf] %v497
      %562 = vst [vmem:[%s177 + $0xdc] sm:$0xf] %v498
      %563 = vst [vmem:[%s177 + $0xe0] sm:$0xf] %v499
      %564 = vst [vmem:[%s177 + $0xe4] sm:$0xf] %v500
      %565 = vst [vmem:[%s177 + $0xe8] sm:$0xf] %v501
      %566 = vst [vmem:[%s177 + $0xec] sm:$0xf] %v502
      %567 = vst [vmem:[%s177 + $0xf0] sm:$0xf] %v503
      %568 = vst [vmem:[%s177 + $0xf4] sm:$0xf] %v504
      %569 = vst [vmem:[%s177 + $0xf8] sm:$0xf] %v505
      %570 = vst [vmem:[%s177 + $0xfc] sm:$0xf] %v506
      %s571 = smul.u32 8, %s14
      %p572 = scmp.lt.s32.totalorder %s571, 15
      %s573 = scalar_select %p572, %s571, 15
      %s574 = smul.addr %s573, 8
      %s575 = smul.addr %s574, 4
      %s576 = scalar_lea.vmem %s3, %s575
      // Predicated region
      $region33: #{basic_block3d_pallas.9} parent=31 // pred_check
        %p577 = pneg %p100
      $region34: #{basic_block3d_pallas.9} parent=31 // pred_check_branch
        %579 = sbr.rel (%p577) target = $region36
      $region35: #{basic_block3d_pallas.9} parent=31 // pred_region
        %s580 = smul.u32 8, %s14
      $region36: #{basic_block3d_pallas.9} parent=31 // pred_fallthru
        _
    $region32: #{basic_block3d_pallas.9} parent=5 // pred_fallthru
      _
    %p581 = scmp.le.s32.totalorder 2, %s9
    // Predicated region
    $region37: #{basic_block3d_pallas.9} parent=5 // pred_check
      %p582 = pneg %p581
    $region38: #{basic_block3d_pallas.9} parent=5 // pred_check_branch
      %584 = sbr.rel (%p582) target = $region40
    $region39: #{basic_block3d_pallas.9} parent=5 // pred_region
      %s585 = ssub.s32 %s9, 2
      // Predicated region
      $region41: #{basic_block3d_pallas.9} parent=39 // pred_check
        %p586 = pneg %p106
      $region42: #{basic_block3d_pallas.9} parent=39 // pred_check_branch
        %588 = sbr.rel (%p586) target = $region44
      $region43: #{basic_block3d_pallas.9} parent=39 // pred_region
        %s589 = smul.u32 8, %s15
        %p590 = scmp.lt.s32.totalorder %s589, 15
        %s591 = scalar_select %p590, %s589, 15
        %s592 = smul.addr %s591, 8
        %s593 = smul.addr %s592, 4
        %s594 = scalar_lea.vmem %s3, %s593
      $region44: #{basic_block3d_pallas.9} parent=39 // pred_fallthru
        _
    $region40: #{basic_block3d_pallas.9} parent=5 // pred_fallthru
      _
  $region6: #{basic_block3d_pallas.9} parent=0 // loop_footer
    %s13 = sadd.s32 1, %s9
  $region7: #{basic_block3d_pallas.9} parent=0 // loop_footer_branch
    %8 = sbr.rel target = $region3
  $region8: #{basic_block3d_pallas.9} parent=0 // loop_exit
    _

// kernel: basic_block3d_pallas.6
$region0: #{basic_block3d_pallas.6}
  #allocation0 [shape = 'u32[]', space=smem, size = 0x4, offset = 0x4, fixed_abs, tag = 'smem constant byte address 0x4 - core index']
  #allocation1 [shape = 'u32[72,128]{1,0:T(1,128)}', space=vmem, size = 0x9000, scoped, tag = 'internal scratch']
  %s0 = inlined_call_operand.vmem [shape: bf16[20,10,10,4], index: 0, kind: input, shape index: {}]
  %s1 = inlined_call_operand.vmem [shape: bf16[3,36,128], index: 1, kind: input, shape index: {}]
  %s2 = inlined_call_operand.vmem [shape: bf16[16,64,128], index: 2, kind: output, shape index: {0}]
  %s3 = inlined_call_operand.vmem [shape: f32[16,2,128], index: 3, kind: output, shape index: {1}]
  %4 = xla_tuple %s2, %s3
  %s5 = sld [smem:[#allocation0]]
  $region49: #{basic_block3d_pallas.6} parent=0
    _
  %s7 = ssub.s32 1, %s5
  %s8 = scalar_select 0, %s7, %s5
  loop: start=0, step=1, limit=18
  $region2: #{basic_block3d_pallas.6} parent=0 // loop_pre_header
    _
  $region3: #{basic_block3d_pallas.6} parent=0 // loop_header
    %s10 = sphi 0, %s14
    %p11 = scmp.ge.s32.totalorder %s10, 18
    %s17 = sphi 0, %s29
    %s18 = sphi 0, %s25
    %s19 = sphi 0, %s17
    %s20 = sphi 0, %s18
    %s21 = sphi 0, %s19
    %s22 = sphi 0, %s20
    %s32 = sphi 0, %s34
    %s35 = sphi 0, %s32
    %s36 = sphi 0, %s35
    %s52 = sphi 0, %s36
    %s56 = sphi 0, %s56
    %s58 = sphi 0, %s56
    %s59 = sphi 0, %s58
    %s73 = sphi 0, %s59
    %s83 = sphi 0, %s85
    %s86 = sphi 0, %s83
    %s87 = sphi 0, %s86
    %s103 = sphi 0, %s87
    %s113 = sphi 0, %s115
    %s116 = sphi 0, %s113
    %s117 = sphi 0, %s116
    %s133 = sphi 0, %s117
  $region4: #{basic_block3d_pallas.6} parent=0 // loop_header_branch
    %13 = sbr.rel (%p11) target = $region8
  $region5: #{basic_block3d_pallas.6} parent=0 // loop_body
    %s15 = ssub.s32 %s10, 1
    %s16 = ssub.s32 %s10, 2
    %s23 = sadd.s32 1, %s18
    %p24 = scmp.ge.s32.totalorder %s23, 8
    %s25 = scalar_select %p24, 0, %s23
    %s26 = sadd.s32 1, %s17
    %s27 = scalar_select %p24, %s26, %s17
    %p28 = scmp.ge.s32.totalorder %s27, 2
    %s29 = scalar_select %p28, 0, %s27
    %s30 = ssub.s32 %s17, %s29
    %p31 = scmp.eq.s32.totalorder %s30, 0
    %s33 = sadd.s32 %s32, 1
    %s34 = scalar_select %p31, %s32, %s33
    %p37 = pneg %p31
    %p38 = scmp.eq.s32.totalorder %s10, 15
    %p39 = por %p37, %p38
    %p40 = scmp.ne.s32.totalorder %s32, %s35
    %p41 = scmp.eq.s32.totalorder %s10, 0
    %p42 = por %p40, %p41
    %p43 = scmp.ne.s32.totalorder %s32, %s35
    %p44 = scmp.eq.s32.totalorder %s15, 15
    %p45 = por %p43, %p44
    %p46 = scmp.ne.s32.totalorder %s35, %s36
    %p47 = scmp.eq.s32.totalorder %s15, 0
    %p48 = por %p46, %p47
    %p49 = scmp.ne.s32.totalorder %s35, %s36
    %p50 = scmp.eq.s32.totalorder %s16, 15
    %p51 = por %p49, %p50
    %p53 = scmp.ne.s32.totalorder %s36, %s52
    %p54 = scmp.eq.s32.totalorder %s16, 0
    %p55 = por %p53, %p54
    %s57 = sadd.s32 %s56, 1
    %p60 = scmp.eq.s32.totalorder %s10, 15
    %p61 = scmp.ne.s32.totalorder %s56, %s58
    %p62 = scmp.eq.s32.totalorder %s10, 0
    %p63 = por %p61, %p62
    %p64 = scmp.ne.s32.totalorder %s56, %s58
    %p65 = scmp.eq.s32.totalorder %s15, 15
    %p66 = por %p64, %p65
    %p67 = scmp.ne.s32.totalorder %s58, %s59
    %p68 = scmp.eq.s32.totalorder %s15, 0
    %p69 = por %p67, %p68
    %p70 = scmp.ne.s32.totalorder %s58, %s59
    %p71 = scmp.eq.s32.totalorder %s16, 15
    %p72 = por %p70, %p71
    %p74 = scmp.ne.s32.totalorder %s59, %s73
    %p75 = scmp.eq.s32.totalorder %s16, 0
    %p76 = por %p74, %p75
    %s77 = smul.u32 %s17, 8
    %s78 = sadd.s32 %s77, %s18
    %s79 = smul.u32 %s29, 8
    %s80 = sadd.s32 %s79, %s25
    %s81 = ssub.s32 %s78, %s80
    %p82 = scmp.eq.s32.totalorder %s81, 0
    %s84 = sadd.s32 %s83, 1
    %s85 = scalar_select %p82, %s83, %s84
    %p88 = pneg %p82
    %p89 = scmp.eq.s32.totalorder %s10, 15
    %p90 = por %p88, %p89
    %p91 = scmp.ne.s32.totalorder %s83, %s86
    %p92 = scmp.eq.s32.totalorder %s10, 0
    %p93 = por %p91, %p92
    %p94 = scmp.ne.s32.totalorder %s83, %s86
    %p95 = scmp.eq.s32.totalorder %s15, 15
    %p96 = por %p94, %p95
    %p97 = scmp.ne.s32.totalorder %s86, %s87
    %p98 = scmp.eq.s32.totalorder %s15, 0
    %p99 = por %p97, %p98
    %p100 = scmp.ne.s32.totalorder %s86, %s87
    %p101 = scmp.eq.s32.totalorder %s16, 15
    %p102 = por %p100, %p101
    %p104 = scmp.ne.s32.totalorder %s87, %s103
    %p105 = scmp.eq.s32.totalorder %s16, 0
    %p106 = por %p104, %p105
    %s107 = smul.u32 %s17, 8
    %s108 = sadd.s32 %s107, %s18
    %s109 = smul.u32 %s29, 8
    %s110 = sadd.s32 %s109, %s25
    %s111 = ssub.s32 %s108, %s110
    %p112 = scmp.eq.s32.totalorder %s111, 0
    %s114 = sadd.s32 %s113, 1
    %s115 = scalar_select %p112, %s113, %s114
    %p118 = pneg %p112
    %p119 = scmp.eq.s32.totalorder %s10, 15
    %p120 = por %p118, %p119
    %p121 = scmp.ne.s32.totalorder %s113, %s116
    %p122 = scmp.eq.s32.totalorder %s10, 0
    %p123 = por %p121, %p122
    %p124 = scmp.ne.s32.totalorder %s113, %s116
    %p125 = scmp.eq.s32.totalorder %s15, 15
    %p126 = por %p124, %p125
    %p127 = scmp.ne.s32.totalorder %s116, %s117
    %p128 = scmp.eq.s32.totalorder %s15, 0
    %p129 = por %p127, %p128
    %p130 = scmp.ne.s32.totalorder %s116, %s117
    %p131 = scmp.eq.s32.totalorder %s16, 15
    %p132 = por %p130, %p131
    %p134 = scmp.ne.s32.totalorder %s117, %s133
    %p135 = scmp.eq.s32.totalorder %s16, 0
    %p136 = por %p134, %p135
    %p137 = scmp.le.s32.totalorder 1, %s10
    %p138 = scmp.lt.s32.totalorder %s10, 17
    %p139 = pnand %p137, %p138
    %p140 = pneg %p139
    // Predicated region
    $region9: #{basic_block3d_pallas.6} parent=5 // pred_check
      _
    $region10: #{basic_block3d_pallas.6} parent=5 // pred_check_branch
      %142 = sbr.rel (%p139) target = $region12
    $region11: #{basic_block3d_pallas.6} parent=5 // pred_region
      %s143 = ssub.s32 %s10, 1
      // Predicated region
      $region13: #{basic_block3d_pallas.6} parent=11 // pred_check
        %p144 = pneg %p69
      $region14: #{basic_block3d_pallas.6} parent=11 // pred_check_branch
        %146 = sbr.rel (%p144) target = $region16
      $region15: #{basic_block3d_pallas.6} parent=11 // pred_region
        _
      $region16: #{basic_block3d_pallas.6} parent=11 // pred_fallthru
        _
    $region12: #{basic_block3d_pallas.6} parent=5 // pred_fallthru
      _
    %p147 = scmp.lt.s32.totalorder %s10, 16
    // Predicated region
    $region17: #{basic_block3d_pallas.6} parent=5 // pred_check
      %p148 = pneg %p147
    $region18: #{basic_block3d_pallas.6} parent=5 // pred_check_branch
      %150 = sbr.rel (%p148) target = $region20
    $region19: #{basic_block3d_pallas.6} parent=5 // pred_region
      // Predicated region
      $region21: #{basic_block3d_pallas.6} parent=19 // pred_check
        %p151 = pneg %p42
      $region22: #{basic_block3d_pallas.6} parent=19 // pred_check_branch
        %153 = sbr.rel (%p151) target = $region24
      $region23: #{basic_block3d_pallas.6} parent=19 // pred_region
        %s154 = smul.u32 10, %s17
        %p155 = scmp.lt.s32.totalorder %s154, 19
        %s156 = scalar_select %p155, %s154, 19
        %s157 = smul.addr %s156, 20
        %s158 = smul.addr %s157, 4
        %s159 = scalar_lea.vmem %s0, %s158
        %s160 = smul.u32 10, %s17
      $region24: #{basic_block3d_pallas.6} parent=19 // pred_fallthru
        _
    $region20: #{basic_block3d_pallas.6} parent=5 // pred_fallthru
      _
    %p161 = scmp.le.s32.totalorder 1, %s10
    %p162 = scmp.lt.s32.totalorder %s10, 17
    %p163 = pnand %p161, %p162
    %p164 = pneg %p163
    // Predicated region
    $region25: #{basic_block3d_pallas.6} parent=5 // pred_check
      _
    $region26: #{basic_block3d_pallas.6} parent=5 // pred_check_branch
      %166 = sbr.rel (%p163) target = $region28
    $region27: #{basic_block3d_pallas.6} parent=5 // pred_region
      %s167 = ssub.s32 %s10, 1
      %s168 = smul.u32 10, %s19
      %p169 = scmp.lt.s32.totalorder %s168, 19
      %s170 = scalar_select %p169, %s168, 19
      %s171 = smul.addr %s170, 20
      %s172 = smul.addr %s171, 4
      %s173 = scalar_lea.vmem %s0, %s172
      %p174 = pneg %p48
      %p175 = pneg %p45
      %p176 = pneg %p69
      %p177 = pneg %p66
      %p178 = pneg %p99
      %p179 = pneg %p96
      %s180 = smul.u32 %s19, 8
      %s181 = sadd.s32 %s180, %s20
      %p182 = scmp.lt.s32.totalorder %s181, 15
      %s183 = scalar_select %p182, %s181, 15
      %s184 = smul.addr %s183, 8
      %s185 = smul.addr %s184, 4
      %s186 = scalar_lea.vmem %s2, %s185
      %p187 = pneg %p129
      %p188 = pneg %p126
      %s189 = smul.u32 %s19, 8
      %s190 = sadd.s32 %s189, %s20
      %p191 = scmp.lt.s32.totalorder %s190, 15
      %s192 = scalar_select %p191, %s190, 15
      %s193 = smul.addr %s192, 2
      %s194 = scalar_lea.vmem %s3, %s193
      %s195 = smul.u32 10, %s19
      %p196 = scmp.lt.s32.totalorder %s195, 19
      %s197 = scalar_select %p196, %s195, 19
      %s198 = smul.addr %s197, 20
      %s199 = smul.addr %s198, 4
      %s200 = scalar_lea.vmem %s0, %s199
      %s201 = smul.u32 10, %s19
      %s202 = smul.u32 %s19, 8
      %s203 = sadd.s32 %s202, %s20
      %p204 = scmp.lt.s32.totalorder %s203, 15
      %s205 = scalar_select %p204, %s203, 15
      %s206 = smul.addr %s205, 8
      %s207 = smul.addr %s206, 4
      %s208 = scalar_lea.vmem %s2, %s207
      %s209 = smul.u32 %s19, 8
      %s210 = sadd.s32 %s209, %s20
      %s211 = smul.u32 %s19, 8
      %s212 = sadd.s32 %s211, %s20
      %p213 = scmp.lt.s32.totalorder %s212, 15
      %s214 = scalar_select %p213, %s212, 15
      %s215 = smul.addr %s214, 2
      %s216 = scalar_lea.vmem %s3, %s215
      %s217 = smul.u32 %s19, 8
      %s218 = sadd.s32 %s217, %s20
      %s220 = smul.u32 %s20, 20
      %s221 = smul.addr %s220, 4
      %s222 = scalar_lea.vmem %s200, %s221
      %v223 = vld [vmem:[%s222] sm:$0xf]
      %v224 = vld [vmem:[%s222 + $0x8] sm:$0xf]
      %v225 = vld [vmem:[%s222 + $0x10] sm:$0xf]
      %v226 = vld [vmem:[%s222 + $0x18] sm:$0xf]
      %v227 = vld [vmem:[%s222 + $0x20] sm:$0xf]
      %v228 = vld [vmem:[%s222 + $0x28] sm:$0xf]
      %v229 = vld [vmem:[%s222 + $0x30] sm:$0xf]
      %v230 = vld [vmem:[%s222 + $0x38] sm:$0xf]
      %v231 = vld [vmem:[%s222 + $0x4] sm:$0x1]
      %v232 = vld [vmem:[%s222 + $0xc] sm:$0x1]
      %v233 = vld [vmem:[%s222 + $0x14] sm:$0x1]
      %v234 = vld [vmem:[%s222 + $0x1c] sm:$0x1]
      %v235 = vld [vmem:[%s222 + $0x24] sm:$0x1]
      %v236 = vld [vmem:[%s222 + $0x2c] sm:$0x1]
      %v237 = vld [vmem:[%s222 + $0x34] sm:$0x1]
      %v238 = vld [vmem:[%s222 + $0x3c] sm:$0x1]
      %vm239 = vsmask.f32 3328
      %vm240 = vsmask.f32 7440
      %vm241 = vmor %vm239, %vm240
      %v243 = vshrl.u32 %v223, 16
      %v245 = vrot.slane %v243, 4
      %v246 = vshll.u32 %v223, 16
      %v248 = vrot.slane %v246, 5
      %v249 = vor.u32 %v245, %v248
      %v250 = vrot.slane %v249, 4
      %v252 = vshll.u32 %v231, 16
      %v254 = vrot.slane %v252, 5
      %v255 = vsel %vm241, %v250, %v254
      %v257 = vshrl.u32 %v224, 16
      %v259 = vrot.slane %v257, 4
      %v260 = vshll.u32 %v224, 16
      %v262 = vrot.slane %v260, 5
      %v263 = vor.u32 %v259, %v262
      %v264 = vrot.slane %v263, 4
      %v266 = vshll.u32 %v232, 16
      %v268 = vrot.slane %v266, 5
      %v269 = vsel %vm241, %v264, %v268
      %v271 = vshrl.u32 %v225, 16
      %v273 = vrot.slane %v271, 4
      %v274 = vshll.u32 %v225, 16
      %v276 = vrot.slane %v274, 5
      %v277 = vor.u32 %v273, %v276
      %v278 = vrot.slane %v277, 4
      %v280 = vshll.u32 %v233, 16
      %v282 = vrot.slane %v280, 5
      %v283 = vsel %vm241, %v278, %v282
      %v285 = vshrl.u32 %v226, 16
      %v287 = vrot.slane %v285, 4
      %v288 = vshll.u32 %v226, 16
      %v290 = vrot.slane %v288, 5
      %v291 = vor.u32 %v287, %v290
      %v292 = vrot.slane %v291, 4
      %v294 = vshll.u32 %v234, 16
      %v296 = vrot.slane %v294, 5
      %v297 = vsel %vm241, %v292, %v296
      %v299 = vshrl.u32 %v227, 16
      %v301 = vrot.slane %v299, 4
      %v302 = vshll.u32 %v227, 16
      %v304 = vrot.slane %v302, 5
      %v305 = vor.u32 %v301, %v304
      %v306 = vrot.slane %v305, 4
      %v308 = vshll.u32 %v235, 16
      %v310 = vrot.slane %v308, 5
      %v311 = vsel %vm241, %v306, %v310
      %v313 = vshrl.u32 %v228, 16
      %v315 = vrot.slane %v313, 4
      %v316 = vshll.u32 %v228, 16
      %v318 = vrot.slane %v316, 5
      %v319 = vor.u32 %v315, %v318
      %v320 = vrot.slane %v319, 4
      %v322 = vshll.u32 %v236, 16
      %v324 = vrot.slane %v322, 5
      %v325 = vsel %vm241, %v320, %v324
      %v327 = vshrl.u32 %v229, 16
      %v329 = vrot.slane %v327, 4
      %v330 = vshll.u32 %v229, 16
      %v332 = vrot.slane %v330, 5
      %v333 = vor.u32 %v329, %v332
      %v334 = vrot.slane %v333, 4
      %v336 = vshll.u32 %v237, 16
      %v338 = vrot.slane %v336, 5
      %v339 = vsel %vm241, %v334, %v338
      %v341 = vshrl.u32 %v230, 16
      %v343 = vrot.slane %v341, 4
      %v344 = vshll.u32 %v230, 16
      %v346 = vrot.slane %v344, 5
      %v347 = vor.u32 %v343, %v346
      %v348 = vrot.slane %v347, 4
      %v350 = vshll.u32 %v238, 16
      %v352 = vrot.slane %v350, 5
      %v353 = vsel %vm241, %v348, %v352
      %v354 = vld [vmem:[%s222] sm:$0xe]
      %v355 = vld [vmem:[%s222 + $0x8] sm:$0xe]
      %v356 = vld [vmem:[%s222 + $0x10] sm:$0xe]
      %v357 = vld [vmem:[%s222 + $0x18] sm:$0xe]
      %v358 = vld [vmem:[%s222 + $0x20] sm:$0xe]
      %v359 = vld [vmem:[%s222 + $0x28] sm:$0xe]
      %v360 = vld [vmem:[%s222 + $0x30] sm:$0xe]
      %v361 = vld [vmem:[%s222 + $0x38] sm:$0xe]
      %vm378 = vcmask 1042432
      %vm379 = vcmask 1046532
      %vm380 = vmor %vm378, %vm379
      %v381 = vrot.slane %v354, 5
      %v382 = vrot.slane %v381, 4
      %v383 = vrot.slane %v231, 5
      %v384 = vsel %vm380, %v382, %v383
      %v385 = vrot.slane %v355, 5
      %v386 = vrot.slane %v385, 4
      %v387 = vrot.slane %v232, 5
      %v388 = vsel %vm380, %v386, %v387
      %v389 = vrot.slane %v356, 5
      %v390 = vrot.slane %v389, 4
      %v391 = vrot.slane %v233, 5
      %v392 = vsel %vm380, %v390, %v391
      %v393 = vrot.slane %v357, 5
      %v394 = vrot.slane %v393, 4
      %v395 = vrot.slane %v234, 5
      %v396 = vsel %vm380, %v394, %v395
      %v397 = vrot.slane %v358, 5
      %v398 = vrot.slane %v397, 4
      %v399 = vrot.slane %v235, 5
      %v400 = vsel %vm380, %v398, %v399
      %v401 = vrot.slane %v359, 5
      %v402 = vrot.slane %v401, 4
      %v403 = vrot.slane %v236, 5
      %v404 = vsel %vm380, %v402, %v403
      %v405 = vrot.slane %v360, 5
      %v406 = vrot.slane %v405, 4
      %v407 = vrot.slane %v237, 5
      %v408 = vsel %vm380, %v406, %v407
      %v409 = vrot.slane %v361, 5
      %v410 = vrot.slane %v409, 4
      %v411 = vrot.slane %v238, 5
      %v412 = vsel %vm380, %v410, %v411
      %s413 = sadd.s32 2, %s220
      %s414 = smul.addr %s413, 4
      %s415 = scalar_lea.vmem %s200, %s414
      %v416 = vld [vmem:[%s415] sm:$0xf]
      %v417 = vld [vmem:[%s415 + $0x8] sm:$0xf]
      %v418 = vld [vmem:[%s415 + $0x10] sm:$0xf]
      %v419 = vld [vmem:[%s415 + $0x18] sm:$0xf]
      %v420 = vld [vmem:[%s415 + $0x20] sm:$0xf]
      %v421 = vld [vmem:[%s415 + $0x28] sm:$0xf]
      %v422 = vld [vmem:[%s415 + $0x30] sm:$0xf]
      %v423 = vld [vmem:[%s415 + $0x38] sm:$0xf]
      %v424 = vld [vmem:[%s415 + $0x4] sm:$0x1]
      %v425 = vld [vmem:[%s415 + $0xc] sm:$0x1]
      %v426 = vld [vmem:[%s415 + $0x14] sm:$0x1]
      %v427 = vld [vmem:[%s415 + $0x1c] sm:$0x1]
      %v428 = vld [vmem:[%s415 + $0x24] sm:$0x1]
      %v429 = vld [vmem:[%s415 + $0x2c] sm:$0x1]
      %v430 = vld [vmem:[%s415 + $0x34] sm:$0x1]
      %v431 = vld [vmem:[%s415 + $0x3c] sm:$0x1]
      %v433 = vshrl.u32 %v416, 16
      %v435 = vrot.slane %v433, 4
      %v436 = vshll.u32 %v416, 16
      %v438 = vrot.slane %v436, 5
      %v439 = vor.u32 %v435, %v438
      %v440 = vrot.slane %v439, 4
      %v442 = vshll.u32 %v424, 16
      %v444 = vrot.slane %v442, 5
      %v445 = vsel %vm241, %v440, %v444
      %v447 = vshrl.u32 %v417, 16
      %v449 = vrot.slane %v447, 4
      %v450 = vshll.u32 %v417, 16
      %v452 = vrot.slane %v450, 5
      %v453 = vor.u32 %v449, %v452
      %v454 = vrot.slane %v453, 4
      %v456 = vshll.u32 %v425, 16
      %v458 = vrot.slane %v456, 5
      %v459 = vsel %vm241, %v454, %v458
      %v461 = vshrl.u32 %v418, 16
      %v463 = vrot.slane %v461, 4
      %v464 = vshll.u32 %v418, 16
      %v466 = vrot.slane %v464, 5
      %v467 = vor.u32 %v463, %v466
      %v468 = vrot.slane %v467, 4
      %v470 = vshll.u32 %v426, 16
      %v472 = vrot.slane %v470, 5
      %v473 = vsel %vm241, %v468, %v472
      %v475 = vshrl.u32 %v419, 16
      %v477 = vrot.slane %v475, 4
      %v478 = vshll.u32 %v419, 16
      %v480 = vrot.slane %v478, 5
      %v481 = vor.u32 %v477, %v480
      %v482 = vrot.slane %v481, 4
      %v484 = vshll.u32 %v427, 16
      %v486 = vrot.slane %v484, 5
      %v487 = vsel %vm241, %v482, %v486
      %v489 = vshrl.u32 %v420, 16
      %v491 = vrot.slane %v489, 4
      %v492 = vshll.u32 %v420, 16
      %v494 = vrot.slane %v492, 5
      %v495 = vor.u32 %v491, %v494
      %v496 = vrot.slane %v495, 4
      %v498 = vshll.u32 %v428, 16
      %v500 = vrot.slane %v498, 5
      %v501 = vsel %vm241, %v496, %v500
      %v503 = vshrl.u32 %v421, 16
      %v505 = vrot.slane %v503, 4
      %v506 = vshll.u32 %v421, 16
      %v508 = vrot.slane %v506, 5
      %v509 = vor.u32 %v505, %v508
      %v510 = vrot.slane %v509, 4
      %v512 = vshll.u32 %v429, 16
      %v514 = vrot.slane %v512, 5
      %v515 = vsel %vm241, %v510, %v514
      %v517 = vshrl.u32 %v422, 16
      %v519 = vrot.slane %v517, 4
      %v520 = vshll.u32 %v422, 16
      %v522 = vrot.slane %v520, 5
      %v523 = vor.u32 %v519, %v522
      %v524 = vrot.slane %v523, 4
      %v526 = vshll.u32 %v430, 16
      %v528 = vrot.slane %v526, 5
      %v529 = vsel %vm241, %v524, %v528
      %v531 = vshrl.u32 %v423, 16
      %v533 = vrot.slane %v531, 4
      %v534 = vshll.u32 %v423, 16
      %v536 = vrot.slane %v534, 5
      %v537 = vor.u32 %v533, %v536
      %v538 = vrot.slane %v537, 4
      %v540 = vshll.u32 %v431, 16
      %v542 = vrot.slane %v540, 5
      %v543 = vsel %vm241, %v538, %v542
      %v544 = vld [vmem:[%s415] sm:$0xe]
      %v545 = vld [vmem:[%s415 + $0x8] sm:$0xe]
      %v546 = vld [vmem:[%s415 + $0x10] sm:$0xe]
      %v547 = vld [vmem:[%s415 + $0x18] sm:$0xe]
      %v548 = vld [vmem:[%s415 + $0x20] sm:$0xe]
      %v549 = vld [vmem:[%s415 + $0x28] sm:$0xe]
      %v550 = vld [vmem:[%s415 + $0x30] sm:$0xe]
      %v551 = vld [vmem:[%s415 + $0x38] sm:$0xe]
      %v568 = vrot.slane %v544, 5
      %v569 = vrot.slane %v568, 4
      %v570 = vrot.slane %v424, 5
      %v571 = vsel %vm380, %v569, %v570
      %v572 = vrot.slane %v545, 5
      %v573 = vrot.slane %v572, 4
      %v574 = vrot.slane %v425, 5
      %v575 = vsel %vm380, %v573, %v574
      %v576 = vrot.slane %v546, 5
      %v577 = vrot.slane %v576, 4
      %v578 = vrot.slane %v426, 5
      %v579 = vsel %vm380, %v577, %v578
      %v580 = vrot.slane %v547, 5
      %v581 = vrot.slane %v580, 4
      %v582 = vrot.slane %v427, 5
      %v583 = vsel %vm380, %v581, %v582
      %v584 = vrot.slane %v548, 5
      %v585 = vrot.slane %v584, 4
      %v586 = vrot.slane %v428, 5
      %v587 = vsel %vm380, %v585, %v586
      %v588 = vrot.slane %v549, 5
      %v589 = vrot.slane %v588, 4
      %v590 = vrot.slane %v429, 5
      %v591 = vsel %vm380, %v589, %v590
      %v592 = vrot.slane %v550, 5
      %v593 = vrot.slane %v592, 4
      %v594 = vrot.slane %v430, 5
      %v595 = vsel %vm380, %v593, %v594
      %v596 = vrot.slane %v551, 5
      %v597 = vrot.slane %v596, 4
      %v598 = vrot.slane %v431, 5
      %v599 = vsel %vm380, %v597, %v598
      %s600 = sadd.s32 4, %s220
      %s601 = smul.addr %s600, 4
      %s602 = scalar_lea.vmem %s200, %s601
      %v603 = vld [vmem:[%s602] sm:$0xf]
      %v604 = vld [vmem:[%s602 + $0x8] sm:$0xf]
      %v605 = vld [vmem:[%s602 + $0x10] sm:$0xf]
      %v606 = vld [vmem:[%s602 + $0x18] sm:$0xf]
      %v607 = vld [vmem:[%s602 + $0x20] sm:$0xf]
      %v608 = vld [vmem:[%s602 + $0x28] sm:$0xf]
      %v609 = vld [vmem:[%s602 + $0x30] sm:$0xf]
      %v610 = vld [vmem:[%s602 + $0x38] sm:$0xf]
      %v611 = vld [vmem:[%s602 + $0x4] sm:$0x1]
      %v612 = vld [vmem:[%s602 + $0xc] sm:$0x1]
      %v613 = vld [vmem:[%s602 + $0x14] sm:$0x1]
      %v614 = vld [vmem:[%s602 + $0x1c] sm:$0x1]
      %v615 = vld [vmem:[%s602 + $0x24] sm:$0x1]
      %v616 = vld [vmem:[%s602 + $0x2c] sm:$0x1]
      %v617 = vld [vmem:[%s602 + $0x34] sm:$0x1]
      %v618 = vld [vmem:[%s602 + $0x3c] sm:$0x1]
      %v620 = vshrl.u32 %v603, 16
      %v622 = vrot.slane %v620, 4
      %v623 = vshll.u32 %v603, 16
      %v625 = vrot.slane %v623, 5
      %v626 = vor.u32 %v622, %v625
      %v627 = vrot.slane %v626, 4
      %v629 = vshll.u32 %v611, 16
      %v631 = vrot.slane %v629, 5
      %v632 = vsel %vm241, %v627, %v631
      %v634 = vshrl.u32 %v604, 16
      %v636 = vrot.slane %v634, 4
      %v637 = vshll.u32 %v604, 16
      %v639 = vrot.slane %v637, 5
      %v640 = vor.u32 %v636, %v639
      %v641 = vrot.slane %v640, 4
      %v643 = vshll.u32 %v612, 16
      %v645 = vrot.slane %v643, 5
      %v646 = vsel %vm241, %v641, %v645
      %v648 = vshrl.u32 %v605, 16
      %v650 = vrot.slane %v648, 4
      %v651 = vshll.u32 %v605, 16
      %v653 = vrot.slane %v651, 5
      %v654 = vor.u32 %v650, %v653
      %v655 = vrot.slane %v654, 4
      %v657 = vshll.u32 %v613, 16
      %v659 = vrot.slane %v657, 5
      %v660 = vsel %vm241, %v655, %v659
      %v662 = vshrl.u32 %v606, 16
      %v664 = vrot.slane %v662, 4
      %v665 = vshll.u32 %v606, 16
      %v667 = vrot.slane %v665, 5
      %v668 = vor.u32 %v664, %v667
      %v669 = vrot.slane %v668, 4
      %v671 = vshll.u32 %v614, 16
      %v673 = vrot.slane %v671, 5
      %v674 = vsel %vm241, %v669, %v673
      %v676 = vshrl.u32 %v607, 16
      %v678 = vrot.slane %v676, 4
      %v679 = vshll.u32 %v607, 16
      %v681 = vrot.slane %v679, 5
      %v682 = vor.u32 %v678, %v681
      %v683 = vrot.slane %v682, 4
      %v685 = vshll.u32 %v615, 16
      %v687 = vrot.slane %v685, 5
      %v688 = vsel %vm241, %v683, %v687
      %v690 = vshrl.u32 %v608, 16
      %v692 = vrot.slane %v690, 4
      %v693 = vshll.u32 %v608, 16
      %v695 = vrot.slane %v693, 5
      %v696 = vor.u32 %v692, %v695
      %v697 = vrot.slane %v696, 4
      %v699 = vshll.u32 %v616, 16
      %v701 = vrot.slane %v699, 5
      %v702 = vsel %vm241, %v697, %v701
      %v704 = vshrl.u32 %v609, 16
      %v706 = vrot.slane %v704, 4
      %v707 = vshll.u32 %v609, 16
      %v709 = vrot.slane %v707, 5
      %v710 = vor.u32 %v706, %v709
      %v711 = vrot.slane %v710, 4
      %v713 = vshll.u32 %v617, 16
      %v715 = vrot.slane %v713, 5
      %v716 = vsel %vm241, %v711, %v715
      %v718 = vshrl.u32 %v610, 16
      %v720 = vrot.slane %v718, 4
      %v721 = vshll.u32 %v610, 16
      %v723 = vrot.slane %v721, 5
      %v724 = vor.u32 %v720, %v723
      %v725 = vrot.slane %v724, 4
      %v727 = vshll.u32 %v618, 16
      %v729 = vrot.slane %v727, 5
      %v730 = vsel %vm241, %v725, %v729
      %v731 = vld [vmem:[%s602] sm:$0xe]
      %v732 = vld [vmem:[%s602 + $0x8] sm:$0xe]
      %v733 = vld [vmem:[%s602 + $0x10] sm:$0xe]
      %v734 = vld [vmem:[%s602 + $0x18] sm:$0xe]
      %v735 = vld [vmem:[%s602 + $0x20] sm:$0xe]
      %v736 = vld [vmem:[%s602 + $0x28] sm:$0xe]
      %v737 = vld [vmem:[%s602 + $0x30] sm:$0xe]
      %v738 = vld [vmem:[%s602 + $0x38] sm:$0xe]
      %v755 = vrot.slane %v731, 5
      %v756 = vrot.slane %v755, 4
      %v757 = vrot.slane %v611, 5
      %v758 = vsel %vm380, %v756, %v757
      %v759 = vrot.slane %v732, 5
      %v760 = vrot.slane %v759, 4
      %v761 = vrot.slane %v612, 5
      %v762 = vsel %vm380, %v760, %v761
      %v763 = vrot.slane %v733, 5
      %v764 = vrot.slane %v763, 4
      %v765 = vrot.slane %v613, 5
      %v766 = vsel %vm380, %v764, %v765
      %v767 = vrot.slane %v734, 5
      %v768 = vrot.slane %v767, 4
      %v769 = vrot.slane %v614, 5
      %v770 = vsel %vm380, %v768, %v769
      %v771 = vrot.slane %v735, 5
      %v772 = vrot.slane %v771, 4
      %v773 = vrot.slane %v615, 5
      %v774 = vsel %vm380, %v772, %v773
      %v775 = vrot.slane %v736, 5
      %v776 = vrot.slane %v775, 4
      %v777 = vrot.slane %v616, 5
      %v778 = vsel %vm380, %v776, %v777
      %v779 = vrot.slane %v737, 5
      %v780 = vrot.slane %v779, 4
      %v781 = vrot.slane %v617, 5
      %v782 = vsel %vm380, %v780, %v781
      %v783 = vrot.slane %v738, 5
      %v784 = vrot.slane %v783, 4
      %v785 = vrot.slane %v618, 5
      %v786 = vsel %vm380, %v784, %v785
      %v795 = vunpack.c.l.b16 %v223
      %v796 = vunpack.c.l.b16 %v224
      %v797 = vunpack.c.l.b16 %v225
      %v798 = vunpack.c.l.b16 %v226
      %v799 = vunpack.c.l.b16 %v227
      %v800 = vunpack.c.l.b16 %v228
      %v801 = vunpack.c.l.b16 %v229
      %v802 = vunpack.c.l.b16 %v230
      %v803 = vpack.c.b16 %v796, %v795
      %v804 = vpack.c.b16 %v798, %v797
      %v805 = vpack.c.b16 %v800, %v799
      %v806 = vpack.c.b16 %v802, %v801
      %v807 = vunpack.c.l.b16 %v255
      %v808 = vunpack.c.l.b16 %v269
      %v809 = vunpack.c.l.b16 %v283
      %v810 = vunpack.c.l.b16 %v297
      %v811 = vunpack.c.l.b16 %v311
      %v812 = vunpack.c.l.b16 %v325
      %v813 = vunpack.c.l.b16 %v339
      %v814 = vunpack.c.l.b16 %v353
      %v815 = vpack.c.b16 %v808, %v807
      %v816 = vpack.c.b16 %v810, %v809
      %v817 = vpack.c.b16 %v812, %v811
      %v818 = vpack.c.b16 %v814, %v813
      %819 = vrot.lane.b32.xlu0 %v815, 4
      %v820 = vpop.permute.xlu0 %819
      %821 = vrot.lane.b32.xlu0 %v816, 4
      %v822 = vpop.permute.xlu0 %821
      %823 = vrot.lane.b32.xlu0 %v817, 4
      %v824 = vpop.permute.xlu0 %823
      %825 = vrot.lane.b32.xlu0 %v818, 4
      %v826 = vpop.permute.xlu0 %825
      %v827 = vunpack.c.l.b16 %v384
      %v828 = vunpack.c.l.b16 %v388
      %v829 = vunpack.c.l.b16 %v392
      %v830 = vunpack.c.l.b16 %v396
      %v831 = vunpack.c.l.b16 %v400
      %v832 = vunpack.c.l.b16 %v404
      %v833 = vunpack.c.l.b16 %v408
      %v834 = vunpack.c.l.b16 %v412
      %v835 = vpack.c.b16 %v828, %v827
      %v836 = vpack.c.b16 %v830, %v829
      %v837 = vpack.c.b16 %v832, %v831
      %v838 = vpack.c.b16 %v834, %v833
      %839 = vrot.lane.b32.xlu0 %v835, 8
      %v840 = vpop.permute.xlu0 %839
      %841 = vrot.lane.b32.xlu0 %v836, 8
      %v842 = vpop.permute.xlu0 %841
      %843 = vrot.lane.b32.xlu0 %v837, 8
      %v844 = vpop.permute.xlu0 %843
      %845 = vrot.lane.b32.xlu0 %v838, 8
      %v846 = vpop.permute.xlu0 %845
      %v855 = vunpack.c.l.b16 %v416
      %v856 = vunpack.c.l.b16 %v417
      %v857 = vunpack.c.l.b16 %v418
      %v858 = vunpack.c.l.b16 %v419
      %v859 = vunpack.c.l.b16 %v420
      %v860 = vunpack.c.l.b16 %v421
      %v861 = vunpack.c.l.b16 %v422
      %v862 = vunpack.c.l.b16 %v423
      %v863 = vpack.c.b16 %v856, %v855
      %v864 = vpack.c.b16 %v858, %v857
      %v865 = vpack.c.b16 %v860, %v859
      %v866 = vpack.c.b16 %v862, %v861
      %867 = vrot.lane.b32.xlu0 %v863, 12
      %v868 = vpop.permute.xlu0 %867
      %869 = vrot.lane.b32.xlu0 %v864, 12
      %v870 = vpop.permute.xlu0 %869
      %871 = vrot.lane.b32.xlu0 %v865, 12
      %v872 = vpop.permute.xlu0 %871
      %873 = vrot.lane.b32.xlu0 %v866, 12
      %v874 = vpop.permute.xlu0 %873
      %v875 = vunpack.c.l.b16 %v445
      %v876 = vunpack.c.l.b16 %v459
      %v877 = vunpack.c.l.b16 %v473
      %v878 = vunpack.c.l.b16 %v487
      %v879 = vunpack.c.l.b16 %v501
      %v880 = vunpack.c.l.b16 %v515
      %v881 = vunpack.c.l.b16 %v529
      %v882 = vunpack.c.l.b16 %v543
      %v883 = vpack.c.b16 %v876, %v875
      %v884 = vpack.c.b16 %v878, %v877
      %v885 = vpack.c.b16 %v880, %v879
      %v886 = vpack.c.b16 %v882, %v881
      %887 = vrot.lane.b32.xlu0 %v883, 16
      %v888 = vpop.permute.xlu0 %887
      %889 = vrot.lane.b32.xlu0 %v884, 16
      %v890 = vpop.permute.xlu0 %889
      %891 = vrot.lane.b32.xlu0 %v885, 16
      %v892 = vpop.permute.xlu0 %891
      %893 = vrot.lane.b32.xlu0 %v886, 16
      %v894 = vpop.permute.xlu0 %893
      %v895 = vunpack.c.l.b16 %v571
      %v896 = vunpack.c.l.b16 %v575
      %v897 = vunpack.c.l.b16 %v579
      %v898 = vunpack.c.l.b16 %v583
      %v899 = vunpack.c.l.b16 %v587
      %v900 = vunpack.c.l.b16 %v591
      %v901 = vunpack.c.l.b16 %v595
      %v902 = vunpack.c.l.b16 %v599
      %v903 = vpack.c.b16 %v896, %v895
      %v904 = vpack.c.b16 %v898, %v897
      %v905 = vpack.c.b16 %v900, %v899
      %v906 = vpack.c.b16 %v902, %v901
      %907 = vrot.lane.b32.xlu0 %v903, 20
      %v908 = vpop.permute.xlu0 %907
      %909 = vrot.lane.b32.xlu0 %v904, 20
      %v910 = vpop.permute.xlu0 %909
      %911 = vrot.lane.b32.xlu0 %v905, 20
      %v912 = vpop.permute.xlu0 %911
      %913 = vrot.lane.b32.xlu0 %v906, 20
      %v914 = vpop.permute.xlu0 %913
      %v923 = vunpack.c.l.b16 %v603
      %v924 = vunpack.c.l.b16 %v604
      %v925 = vunpack.c.l.b16 %v605
      %v926 = vunpack.c.l.b16 %v606
      %v927 = vunpack.c.l.b16 %v607
      %v928 = vunpack.c.l.b16 %v608
      %v929 = vunpack.c.l.b16 %v609
      %v930 = vunpack.c.l.b16 %v610
      %v931 = vpack.c.b16 %v924, %v923
      %v932 = vpack.c.b16 %v926, %v925
      %v933 = vpack.c.b16 %v928, %v927
      %v934 = vpack.c.b16 %v930, %v929
      %935 = vrot.lane.b32.xlu0 %v931, 24
      %v936 = vpop.permute.xlu0 %935
      %937 = vrot.lane.b32.xlu0 %v932, 24
      %v938 = vpop.permute.xlu0 %937
      %939 = vrot.lane.b32.xlu0 %v933, 24
      %v940 = vpop.permute.xlu0 %939
      %941 = vrot.lane.b32.xlu0 %v934, 24
      %v942 = vpop.permute.xlu0 %941
      %v943 = vunpack.c.l.b16 %v632
      %v944 = vunpack.c.l.b16 %v646
      %v945 = vunpack.c.l.b16 %v660
      %v946 = vunpack.c.l.b16 %v674
      %v947 = vunpack.c.l.b16 %v688
      %v948 = vunpack.c.l.b16 %v702
      %v949 = vunpack.c.l.b16 %v716
      %v950 = vunpack.c.l.b16 %v730
      %v951 = vpack.c.b16 %v944, %v943
      %v952 = vpack.c.b16 %v946, %v945
      %v953 = vpack.c.b16 %v948, %v947
      %v954 = vpack.c.b16 %v950, %v949
      %955 = vrot.lane.b32.xlu0 %v951, 28
      %v956 = vpop.permute.xlu0 %955
      %957 = vrot.lane.b32.xlu0 %v952, 28
      %v958 = vpop.permute.xlu0 %957
      %959 = vrot.lane.b32.xlu0 %v953, 28
      %v960 = vpop.permute.xlu0 %959
      %961 = vrot.lane.b32.xlu0 %v954, 28
      %v962 = vpop.permute.xlu0 %961
      %v963 = vunpack.c.l.b16 %v758
      %v964 = vunpack.c.l.b16 %v762
      %v965 = vunpack.c.l.b16 %v766
      %v966 = vunpack.c.l.b16 %v770
      %v967 = vunpack.c.l.b16 %v774
      %v968 = vunpack.c.l.b16 %v778
      %v969 = vunpack.c.l.b16 %v782
      %v970 = vunpack.c.l.b16 %v786
      %v971 = vpack.c.b16 %v964, %v963
      %v972 = vpack.c.b16 %v966, %v965
      %v973 = vpack.c.b16 %v968, %v967
      %v974 = vpack.c.b16 %v970, %v969
      %975 = vrot.lane.b32.xlu0 %v971, 32
      %v976 = vpop.permute.xlu0 %975
      %977 = vrot.lane.b32.xlu0 %v972, 32
      %v978 = vpop.permute.xlu0 %977
      %979 = vrot.lane.b32.xlu0 %v973, 32
      %v980 = vpop.permute.xlu0 %979
      %981 = vrot.lane.b32.xlu0 %v974, 32
      %v982 = vpop.permute.xlu0 %981
      %vm983 = vcmask 31744
      %v986 = vsel %vm983, %v803, %v820
      %v989 = vsel %vm983, %v804, %v822
      %v992 = vsel %vm983, %v805, %v824
      %v995 = vsel %vm983, %v806, %v826
      %vm996 = vcmask 64512
      %v998 = vsel %vm996, %v986, %v840
      %v1000 = vsel %vm996, %v989, %v842
      %v1002 = vsel %vm996, %v992, %v844
      %v1004 = vsel %vm996, %v995, %v846
      %vm1005 = vcmask 97280
      %v1007 = vsel %vm1005, %v998, %v868
      %v1009 = vsel %vm1005, %v1000, %v870
      %v1011 = vsel %vm1005, %v1002, %v872
      %v1013 = vsel %vm1005, %v1004, %v874
      %vm1014 = vcmask 130048
      %v1016 = vsel %vm1014, %v1007, %v888
      %v1018 = vsel %vm1014, %v1009, %v890
      %v1020 = vsel %vm1014, %v1011, %v892
      %v1022 = vsel %vm1014, %v1013, %v894
      %vm1023 = vcmask 162816
      %v1025 = vsel %vm1023, %v1016, %v908
      %v1027 = vsel %vm1023, %v1018, %v910
      %v1029 = vsel %vm1023, %v1020, %v912
      %v1031 = vsel %vm1023, %v1022, %v914
      %vm1032 = vcmask 195584
      %v1034 = vsel %vm1032, %v1025, %v936
      %v1036 = vsel %vm1032, %v1027, %v938
      %v1038 = vsel %vm1032, %v1029, %v940
      %v1040 = vsel %vm1032, %v1031, %v942
      %vm1041 = vcmask 228352
      %v1043 = vsel %vm1041, %v1034, %v956
      %v1045 = vsel %vm1041, %v1036, %v958
      %v1047 = vsel %vm1041, %v1038, %v960
      %v1049 = vsel %vm1041, %v1040, %v962
      %vm1050 = vcmask 261120
      %v1052 = vsel %vm1050, %v1043, %v976
      %v1054 = vsel %vm1050, %v1045, %v978
      %v1056 = vsel %vm1050, %v1047, %v980
      %v1058 = vsel %vm1050, %v1049, %v982
      %v1059 = vld [vmem:[%s1] sm:$0xf]
      %v1060 = vld [vmem:[%s1 + $0x4] sm:$0xf]
      %v1061 = vld [vmem:[%s1 + $0x8] sm:$0xf]
      %v1062 = vld [vmem:[%s1 + $0xc] sm:$0xf]
      %v1063 = vld [vmem:[%s1 + $0x10] sm:$0x3]
      %s1064 = sadd.s32 %s20, 1
      %s1065 = smul.u32 %s1064, 20
      %s1066 = smul.addr %s1065, 4
      %s1067 = scalar_lea.vmem %s200, %s1066
      %v1068 = vld [vmem:[%s1067] sm:$0xf]
      %v1069 = vld [vmem:[%s1067 + $0x8] sm:$0xf]
      %v1070 = vld [vmem:[%s1067 + $0x10] sm:$0xf]
      %v1071 = vld [vmem:[%s1067 + $0x18] sm:$0xf]
      %v1072 = vld [vmem:[%s1067 + $0x20] sm:$0xf]
      %v1073 = vld [vmem:[%s1067 + $0x28] sm:$0xf]
      %v1074 = vld [vmem:[%s1067 + $0x30] sm:$0xf]
      %v1075 = vld [vmem:[%s1067 + $0x38] sm:$0xf]
      %v1076 = vld [vmem:[%s1067 + $0x4] sm:$0x1]
      %v1077 = vld [vmem:[%s1067 + $0xc] sm:$0x1]
      %v1078 = vld [vmem:[%s1067 + $0x14] sm:$0x1]
      %v1079 = vld [vmem:[%s1067 + $0x1c] sm:$0x1]
      %v1080 = vld [vmem:[%s1067 + $0x24] sm:$0x1]
      %v1081 = vld [vmem:[%s1067 + $0x2c] sm:$0x1]
      %v1082 = vld [vmem:[%s1067 + $0x34] sm:$0x1]
      %v1083 = vld [vmem:[%s1067 + $0x3c] sm:$0x1]
      %v1085 = vshrl.u32 %v1068, 16
      %v1087 = vrot.slane %v1085, 4
      %v1088 = vshll.u32 %v1068, 16
      %v1090 = vrot.slane %v1088, 5
      %v1091 = vor.u32 %v1087, %v1090
      %v1092 = vrot.slane %v1091, 4
      %v1094 = vshll.u32 %v1076, 16
      %v1096 = vrot.slane %v1094, 5
      %v1097 = vsel %vm241, %v1092, %v1096
      %v1099 = vshrl.u32 %v1069, 16
      %v1101 = vrot.slane %v1099, 4
      %v1102 = vshll.u32 %v1069, 16
      %v1104 = vrot.slane %v1102, 5
      %v1105 = vor.u32 %v1101, %v1104
      %v1106 = vrot.slane %v1105, 4
      %v1108 = vshll.u32 %v1077, 16
      %v1110 = vrot.slane %v1108, 5
      %v1111 = vsel %vm241, %v1106, %v1110
      %v1113 = vshrl.u32 %v1070, 16
      %v1115 = vrot.slane %v1113, 4
      %v1116 = vshll.u32 %v1070, 16
      %v1118 = vrot.slane %v1116, 5
      %v1119 = vor.u32 %v1115, %v1118
      %v1120 = vrot.slane %v1119, 4
      %v1122 = vshll.u32 %v1078, 16
      %v1124 = vrot.slane %v1122, 5
      %v1125 = vsel %vm241, %v1120, %v1124
      %v1127 = vshrl.u32 %v1071, 16
      %v1129 = vrot.slane %v1127, 4
      %v1130 = vshll.u32 %v1071, 16
      %v1132 = vrot.slane %v1130, 5
      %v1133 = vor.u32 %v1129, %v1132
      %v1134 = vrot.slane %v1133, 4
      %v1136 = vshll.u32 %v1079, 16
      %v1138 = vrot.slane %v1136, 5
      %v1139 = vsel %vm241, %v1134, %v1138
      %v1141 = vshrl.u32 %v1072, 16
      %v1143 = vrot.slane %v1141, 4
      %v1144 = vshll.u32 %v1072, 16
      %v1146 = vrot.slane %v1144, 5
      %v1147 = vor.u32 %v1143, %v1146
      %v1148 = vrot.slane %v1147, 4
      %v1150 = vshll.u32 %v1080, 16
      %v1152 = vrot.slane %v1150, 5
      %v1153 = vsel %vm241, %v1148, %v1152
      %v1155 = vshrl.u32 %v1073, 16
      %v1157 = vrot.slane %v1155, 4
      %v1158 = vshll.u32 %v1073, 16
      %v1160 = vrot.slane %v1158, 5
      %v1161 = vor.u32 %v1157, %v1160
      %v1162 = vrot.slane %v1161, 4
      %v1164 = vshll.u32 %v1081, 16
      %v1166 = vrot.slane %v1164, 5
      %v1167 = vsel %vm241, %v1162, %v1166
      %v1169 = vshrl.u32 %v1074, 16
      %v1171 = vrot.slane %v1169, 4
      %v1172 = vshll.u32 %v1074, 16
      %v1174 = vrot.slane %v1172, 5
      %v1175 = vor.u32 %v1171, %v1174
      %v1176 = vrot.slane %v1175, 4
      %v1178 = vshll.u32 %v1082, 16
      %v1180 = vrot.slane %v1178, 5
      %v1181 = vsel %vm241, %v1176, %v1180
      %v1183 = vshrl.u32 %v1075, 16
      %v1185 = vrot.slane %v1183, 4
      %v1186 = vshll.u32 %v1075, 16
      %v1188 = vrot.slane %v1186, 5
      %v1189 = vor.u32 %v1185, %v1188
      %v1190 = vrot.slane %v1189, 4
      %v1192 = vshll.u32 %v1083, 16
      %v1194 = vrot.slane %v1192, 5
      %v1195 = vsel %vm241, %v1190, %v1194
      %v1196 = vld [vmem:[%s1067] sm:$0xe]
      %v1197 = vld [vmem:[%s1067 + $0x8] sm:$0xe]
      %v1198 = vld [vmem:[%s1067 + $0x10] sm:$0xe]
      %v1199 = vld [vmem:[%s1067 + $0x18] sm:$0xe]
      %v1200 = vld [vmem:[%s1067 + $0x20] sm:$0xe]
      %v1201 = vld [vmem:[%s1067 + $0x28] sm:$0xe]
      %v1202 = vld [vmem:[%s1067 + $0x30] sm:$0xe]
      %v1203 = vld [vmem:[%s1067 + $0x38] sm:$0xe]
      %v1220 = vrot.slane %v1196, 5
      %v1221 = vrot.slane %v1220, 4
      %v1222 = vrot.slane %v1076, 5
      %v1223 = vsel %vm380, %v1221, %v1222
      %v1224 = vrot.slane %v1197, 5
      %v1225 = vrot.slane %v1224, 4
      %v1226 = vrot.slane %v1077, 5
      %v1227 = vsel %vm380, %v1225, %v1226
      %v1228 = vrot.slane %v1198, 5
      %v1229 = vrot.slane %v1228, 4
      %v1230 = vrot.slane %v1078, 5
      %v1231 = vsel %vm380, %v1229, %v1230
      %v1232 = vrot.slane %v1199, 5
      %v1233 = vrot.slane %v1232, 4
      %v1234 = vrot.slane %v1079, 5
      %v1235 = vsel %vm380, %v1233, %v1234
      %v1236 = vrot.slane %v1200, 5
      %v1237 = vrot.slane %v1236, 4
      %v1238 = vrot.slane %v1080, 5
      %v1239 = vsel %vm380, %v1237, %v1238
      %v1240 = vrot.slane %v1201, 5
      %v1241 = vrot.slane %v1240, 4
      %v1242 = vrot.slane %v1081, 5
      %v1243 = vsel %vm380, %v1241, %v1242
      %v1244 = vrot.slane %v1202, 5
      %v1245 = vrot.slane %v1244, 4
      %v1246 = vrot.slane %v1082, 5
      %v1247 = vsel %vm380, %v1245, %v1246
      %v1248 = vrot.slane %v1203, 5
      %v1249 = vrot.slane %v1248, 4
      %v1250 = vrot.slane %v1083, 5
      %v1251 = vsel %vm380, %v1249, %v1250
      %s1252 = sadd.s32 2, %s1065
      %s1253 = smul.addr %s1252, 4
      %s1254 = scalar_lea.vmem %s200, %s1253
      %v1255 = vld [vmem:[%s1254] sm:$0xf]
      %v1256 = vld [vmem:[%s1254 + $0x8] sm:$0xf]
      %v1257 = vld [vmem:[%s1254 + $0x10] sm:$0xf]
      %v1258 = vld [vmem:[%s1254 + $0x18] sm:$0xf]
      %v1259 = vld [vmem:[%s1254 + $0x20] sm:$0xf]
      %v1260 = vld [vmem:[%s1254 + $0x28] sm:$0xf]
      %v1261 = vld [vmem:[%s1254 + $0x30] sm:$0xf]
      %v1262 = vld [vmem:[%s1254 + $0x38] sm:$0xf]
      %v1263 = vld [vmem:[%s1254 + $0x4] sm:$0x1]
      %v1264 = vld [vmem:[%s1254 + $0xc] sm:$0x1]
      %v1265 = vld [vmem:[%s1254 + $0x14] sm:$0x1]
      %v1266 = vld [vmem:[%s1254 + $0x1c] sm:$0x1]
      %v1267 = vld [vmem:[%s1254 + $0x24] sm:$0x1]
      %v1268 = vld [vmem:[%s1254 + $0x2c] sm:$0x1]
      %v1269 = vld [vmem:[%s1254 + $0x34] sm:$0x1]
      %v1270 = vld [vmem:[%s1254 + $0x3c] sm:$0x1]
      %v1272 = vshrl.u32 %v1255, 16
      %v1274 = vrot.slane %v1272, 4
      %v1275 = vshll.u32 %v1255, 16
      %v1277 = vrot.slane %v1275, 5
      %v1278 = vor.u32 %v1274, %v1277
      %v1279 = vrot.slane %v1278, 4
      %v1281 = vshll.u32 %v1263, 16
      %v1283 = vrot.slane %v1281, 5
      %v1284 = vsel %vm241, %v1279, %v1283
      %v1286 = vshrl.u32 %v1256, 16
      %v1288 = vrot.slane %v1286, 4
      %v1289 = vshll.u32 %v1256, 16
      %v1291 = vrot.slane %v1289, 5
      %v1292 = vor.u32 %v1288, %v1291
      %v1293 = vrot.slane %v1292, 4
      %v1295 = vshll.u32 %v1264, 16
      %v1297 = vrot.slane %v1295, 5
      %v1298 = vsel %vm241, %v1293, %v1297
      %v1300 = vshrl.u32 %v1257, 16
      %v1302 = vrot.slane %v1300, 4
      %v1303 = vshll.u32 %v1257, 16
      %v1305 = vrot.slane %v1303, 5
      %v1306 = vor.u32 %v1302, %v1305
      %v1307 = vrot.slane %v1306, 4
      %v1309 = vshll.u32 %v1265, 16
      %v1311 = vrot.slane %v1309, 5
      %v1312 = vsel %vm241, %v1307, %v1311
      %v1314 = vshrl.u32 %v1258, 16
      %v1316 = vrot.slane %v1314, 4
      %v1317 = vshll.u32 %v1258, 16
      %v1319 = vrot.slane %v1317, 5
      %v1320 = vor.u32 %v1316, %v1319
      %v1321 = vrot.slane %v1320, 4
      %v1323 = vshll.u32 %v1266, 16
      %v1325 = vrot.slane %v1323, 5
      %v1326 = vsel %vm241, %v1321, %v1325
      %v1328 = vshrl.u32 %v1259, 16
      %v1330 = vrot.slane %v1328, 4
      %v1331 = vshll.u32 %v1259, 16
      %v1333 = vrot.slane %v1331, 5
      %v1334 = vor.u32 %v1330, %v1333
      %v1335 = vrot.slane %v1334, 4
      %v1337 = vshll.u32 %v1267, 16
      %v1339 = vrot.slane %v1337, 5
      %v1340 = vsel %vm241, %v1335, %v1339
      %v1342 = vshrl.u32 %v1260, 16
      %v1344 = vrot.slane %v1342, 4
      %v1345 = vshll.u32 %v1260, 16
      %v1347 = vrot.slane %v1345, 5
      %v1348 = vor.u32 %v1344, %v1347
      %v1349 = vrot.slane %v1348, 4
      %v1351 = vshll.u32 %v1268, 16
      %v1353 = vrot.slane %v1351, 5
      %v1354 = vsel %vm241, %v1349, %v1353
      %v1356 = vshrl.u32 %v1261, 16
      %v1358 = vrot.slane %v1356, 4
      %v1359 = vshll.u32 %v1261, 16
      %v1361 = vrot.slane %v1359, 5
      %v1362 = vor.u32 %v1358, %v1361
      %v1363 = vrot.slane %v1362, 4
      %v1365 = vshll.u32 %v1269, 16
      %v1367 = vrot.slane %v1365, 5
      %v1368 = vsel %vm241, %v1363, %v1367
      %v1370 = vshrl.u32 %v1262, 16
      %v1372 = vrot.slane %v1370, 4
      %v1373 = vshll.u32 %v1262, 16
      %v1375 = vrot.slane %v1373, 5
      %v1376 = vor.u32 %v1372, %v1375
      %v1377 = vrot.slane %v1376, 4
      %v1379 = vshll.u32 %v1270, 16
      %v1381 = vrot.slane %v1379, 5
      %v1382 = vsel %vm241, %v1377, %v1381
      %v1383 = vld [vmem:[%s1254] sm:$0xe]
      %v1384 = vld [vmem:[%s1254 + $0x8] sm:$0xe]
      %v1385 = vld [vmem:[%s1254 + $0x10] sm:$0xe]
      %v1386 = vld [vmem:[%s1254 + $0x18] sm:$0xe]
      %v1387 = vld [vmem:[%s1254 + $0x20] sm:$0xe]
      %v1388 = vld [vmem:[%s1254 + $0x28] sm:$0xe]
      %v1389 = vld [vmem:[%s1254 + $0x30] sm:$0xe]
      %v1390 = vld [vmem:[%s1254 + $0x38] sm:$0xe]
      %v1407 = vrot.slane %v1383, 5
      %v1408 = vrot.slane %v1407, 4
      %v1409 = vrot.slane %v1263, 5
      %v1410 = vsel %vm380, %v1408, %v1409
      %v1411 = vrot.slane %v1384, 5
      %v1412 = vrot.slane %v1411, 4
      %v1413 = vrot.slane %v1264, 5
      %v1414 = vsel %vm380, %v1412, %v1413
      %v1415 = vrot.slane %v1385, 5
      %v1416 = vrot.slane %v1415, 4
      %v1417 = vrot.slane %v1265, 5
      %v1418 = vsel %vm380, %v1416, %v1417
      %v1419 = vrot.slane %v1386, 5
      %v1420 = vrot.slane %v1419, 4
      %v1421 = vrot.slane %v1266, 5
      %v1422 = vsel %vm380, %v1420, %v1421
      %v1423 = vrot.slane %v1387, 5
      %v1424 = vrot.slane %v1423, 4
      %v1425 = vrot.slane %v1267, 5
      %v1426 = vsel %vm380, %v1424, %v1425
      %v1427 = vrot.slane %v1388, 5
      %v1428 = vrot.slane %v1427, 4
      %v1429 = vrot.slane %v1268, 5
      %v1430 = vsel %vm380, %v1428, %v1429
      %v1431 = vrot.slane %v1389, 5
      %v1432 = vrot.slane %v1431, 4
      %v1433 = vrot.slane %v1269, 5
      %v1434 = vsel %vm380, %v1432, %v1433
      %v1435 = vrot.slane %v1390, 5
      %v1436 = vrot.slane %v1435, 4
      %v1437 = vrot.slane %v1270, 5
      %v1438 = vsel %vm380, %v1436, %v1437
      %s1439 = sadd.s32 4, %s1065
      %s1440 = smul.addr %s1439, 4
      %s1441 = scalar_lea.vmem %s200, %s1440
      %v1442 = vld [vmem:[%s1441] sm:$0xf]
      %v1443 = vld [vmem:[%s1441 + $0x8] sm:$0xf]
      %v1444 = vld [vmem:[%s1441 + $0x10] sm:$0xf]
      %v1445 = vld [vmem:[%s1441 + $0x18] sm:$0xf]
      %v1446 = vld [vmem:[%s1441 + $0x20] sm:$0xf]
      %v1447 = vld [vmem:[%s1441 + $0x28] sm:$0xf]
      %v1448 = vld [vmem:[%s1441 + $0x30] sm:$0xf]
      %v1449 = vld [vmem:[%s1441 + $0x38] sm:$0xf]
      %v1450 = vld [vmem:[%s1441 + $0x4] sm:$0x1]
      %v1451 = vld [vmem:[%s1441 + $0xc] sm:$0x1]
      %v1452 = vld [vmem:[%s1441 + $0x14] sm:$0x1]
      %v1453 = vld [vmem:[%s1441 + $0x1c] sm:$0x1]
      %v1454 = vld [vmem:[%s1441 + $0x24] sm:$0x1]
      %v1455 = vld [vmem:[%s1441 + $0x2c] sm:$0x1]
      %v1456 = vld [vmem:[%s1441 + $0x34] sm:$0x1]
      %v1457 = vld [vmem:[%s1441 + $0x3c] sm:$0x1]
      %v1459 = vshrl.u32 %v1442, 16
      %v1461 = vrot.slane %v1459, 4
      %v1462 = vshll.u32 %v1442, 16
      %v1464 = vrot.slane %v1462, 5
      %v1465 = vor.u32 %v1461, %v1464
      %v1466 = vrot.slane %v1465, 4
      %v1468 = vshll.u32 %v1450, 16
      %v1470 = vrot.slane %v1468, 5
      %v1471 = vsel %vm241, %v1466, %v1470
      %v1473 = vshrl.u32 %v1443, 16
      %v1475 = vrot.slane %v1473, 4
      %v1476 = vshll.u32 %v1443, 16
      %v1478 = vrot.slane %v1476, 5
      %v1479 = vor.u32 %v1475, %v1478
      %v1480 = vrot.slane %v1479, 4
      %v1482 = vshll.u32 %v1451, 16
      %v1484 = vrot.slane %v1482, 5
      %v1485 = vsel %vm241, %v1480, %v1484
      %v1487 = vshrl.u32 %v1444, 16
      %v1489 = vrot.slane %v1487, 4
      %v1490 = vshll.u32 %v1444, 16
      %v1492 = vrot.slane %v1490, 5
      %v1493 = vor.u32 %v1489, %v1492
      %v1494 = vrot.slane %v1493, 4
      %v1496 = vshll.u32 %v1452, 16
      %v1498 = vrot.slane %v1496, 5
      %v1499 = vsel %vm241, %v1494, %v1498
      %v1501 = vshrl.u32 %v1445, 16
      %v1503 = vrot.slane %v1501, 4
      %v1504 = vshll.u32 %v1445, 16
      %v1506 = vrot.slane %v1504, 5
      %v1507 = vor.u32 %v1503, %v1506
      %v1508 = vrot.slane %v1507, 4
      %v1510 = vshll.u32 %v1453, 16
      %v1512 = vrot.slane %v1510, 5
      %v1513 = vsel %vm241, %v1508, %v1512
      %v1515 = vshrl.u32 %v1446, 16
      %v1517 = vrot.slane %v1515, 4
      %v1518 = vshll.u32 %v1446, 16
      %v1520 = vrot.slane %v1518, 5
      %v1521 = vor.u32 %v1517, %v1520
      %v1522 = vrot.slane %v1521, 4
      %v1524 = vshll.u32 %v1454, 16
      %v1526 = vrot.slane %v1524, 5
      %v1527 = vsel %vm241, %v1522, %v1526
      %v1529 = vshrl.u32 %v1447, 16
      %v1531 = vrot.slane %v1529, 4
      %v1532 = vshll.u32 %v1447, 16
      %v1534 = vrot.slane %v1532, 5
      %v1535 = vor.u32 %v1531, %v1534
      %v1536 = vrot.slane %v1535, 4
      %v1538 = vshll.u32 %v1455, 16
      %v1540 = vrot.slane %v1538, 5
      %v1541 = vsel %vm241, %v1536, %v1540
      %v1543 = vshrl.u32 %v1448, 16
      %v1545 = vrot.slane %v1543, 4
      %v1546 = vshll.u32 %v1448, 16
      %v1548 = vrot.slane %v1546, 5
      %v1549 = vor.u32 %v1545, %v1548
      %v1550 = vrot.slane %v1549, 4
      %v1552 = vshll.u32 %v1456, 16
      %v1554 = vrot.slane %v1552, 5
      %v1555 = vsel %vm241, %v1550, %v1554
      %v1557 = vshrl.u32 %v1449, 16
      %v1559 = vrot.slane %v1557, 4
      %v1560 = vshll.u32 %v1449, 16
      %v1562 = vrot.slane %v1560, 5
      %v1563 = vor.u32 %v1559, %v1562
      %v1564 = vrot.slane %v1563, 4
      %v1566 = vshll.u32 %v1457, 16
      %v1568 = vrot.slane %v1566, 5
      %v1569 = vsel %vm241, %v1564, %v1568
      %v1570 = vld [vmem:[%s1441] sm:$0xe]
      %v1571 = vld [vmem:[%s1441 + $0x8] sm:$0xe]
      %v1572 = vld [vmem:[%s1441 + $0x10] sm:$0xe]
      %v1573 = vld [vmem:[%s1441 + $0x18] sm:$0xe]
      %v1574 = vld [vmem:[%s1441 + $0x20] sm:$0xe]
      %v1575 = vld [vmem:[%s1441 + $0x28] sm:$0xe]
      %v1576 = vld [vmem:[%s1441 + $0x30] sm:$0xe]
      %v1577 = vld [vmem:[%s1441 + $0x38] sm:$0xe]
      %v1594 = vrot.slane %v1570, 5
      %v1595 = vrot.slane %v1594, 4
      %v1596 = vrot.slane %v1450, 5
      %v1597 = vsel %vm380, %v1595, %v1596
      %v1598 = vrot.slane %v1571, 5
      %v1599 = vrot.slane %v1598, 4
      %v1600 = vrot.slane %v1451, 5
      %v1601 = vsel %vm380, %v1599, %v1600
      %v1602 = vrot.slane %v1572, 5
      %v1603 = vrot.slane %v1602, 4
      %v1604 = vrot.slane %v1452, 5
      %v1605 = vsel %vm380, %v1603, %v1604
      %v1606 = vrot.slane %v1573, 5
      %v1607 = vrot.slane %v1606, 4
      %v1608 = vrot.slane %v1453, 5
      %v1609 = vsel %vm380, %v1607, %v1608
      %v1610 = vrot.slane %v1574, 5
      %v1611 = vrot.slane %v1610, 4
      %v1612 = vrot.slane %v1454, 5
      %v1613 = vsel %vm380, %v1611, %v1612
      %v1614 = vrot.slane %v1575, 5
      %v1615 = vrot.slane %v1614, 4
      %v1616 = vrot.slane %v1455, 5
      %v1617 = vsel %vm380, %v1615, %v1616
      %v1618 = vrot.slane %v1576, 5
      %v1619 = vrot.slane %v1618, 4
      %v1620 = vrot.slane %v1456, 5
      %v1621 = vsel %vm380, %v1619, %v1620
      %v1622 = vrot.slane %v1577, 5
      %v1623 = vrot.slane %v1622, 4
      %v1624 = vrot.slane %v1457, 5
      %v1625 = vsel %vm380, %v1623, %v1624
      %v1634 = vunpack.c.l.b16 %v1068
      %v1635 = vunpack.c.l.b16 %v1069
      %v1636 = vunpack.c.l.b16 %v1070
      %v1637 = vunpack.c.l.b16 %v1071
      %v1638 = vunpack.c.l.b16 %v1072
      %v1639 = vunpack.c.l.b16 %v1073
      %v1640 = vunpack.c.l.b16 %v1074
      %v1641 = vunpack.c.l.b16 %v1075
      %v1642 = vpack.c.b16 %v1635, %v1634
      %v1643 = vpack.c.b16 %v1637, %v1636
      %v1644 = vpack.c.b16 %v1639, %v1638
      %v1645 = vpack.c.b16 %v1641, %v1640
      %v1646 = vunpack.c.l.b16 %v1097
      %v1647 = vunpack.c.l.b16 %v1111
      %v1648 = vunpack.c.l.b16 %v1125
      %v1649 = vunpack.c.l.b16 %v1139
      %v1650 = vunpack.c.l.b16 %v1153
      %v1651 = vunpack.c.l.b16 %v1167
      %v1652 = vunpack.c.l.b16 %v1181
      %v1653 = vunpack.c.l.b16 %v1195
      %v1654 = vpack.c.b16 %v1647, %v1646
      %v1655 = vpack.c.b16 %v1649, %v1648
      %v1656 = vpack.c.b16 %v1651, %v1650
      %v1657 = vpack.c.b16 %v1653, %v1652
      %1658 = vrot.lane.b32.xlu0 %v1654, 4
      %v1659 = vpop.permute.xlu0 %1658
      %1660 = vrot.lane.b32.xlu0 %v1655, 4
      %v1661 = vpop.permute.xlu0 %1660
      %1662 = vrot.lane.b32.xlu0 %v1656, 4
      %v1663 = vpop.permute.xlu0 %1662
      %1664 = vrot.lane.b32.xlu0 %v1657, 4
      %v1665 = vpop.permute.xlu0 %1664
      %v1666 = vunpack.c.l.b16 %v1223
      %v1667 = vunpack.c.l.b16 %v1227
      %v1668 = vunpack.c.l.b16 %v1231
      %v1669 = vunpack.c.l.b16 %v1235
      %v1670 = vunpack.c.l.b16 %v1239
      %v1671 = vunpack.c.l.b16 %v1243
      %v1672 = vunpack.c.l.b16 %v1247
      %v1673 = vunpack.c.l.b16 %v1251
      %v1674 = vpack.c.b16 %v1667, %v1666
      %v1675 = vpack.c.b16 %v1669, %v1668
      %v1676 = vpack.c.b16 %v1671, %v1670
      %v1677 = vpack.c.b16 %v1673, %v1672
      %1678 = vrot.lane.b32.xlu0 %v1674, 8
      %v1679 = vpop.permute.xlu0 %1678
      %1680 = vrot.lane.b32.xlu0 %v1675, 8
      %v1681 = vpop.permute.xlu0 %1680
      %1682 = vrot.lane.b32.xlu0 %v1676, 8
      %v1683 = vpop.permute.xlu0 %1682
      %1684 = vrot.lane.b32.xlu0 %v1677, 8
      %v1685 = vpop.permute.xlu0 %1684
      %v1694 = vunpack.c.l.b16 %v1255
      %v1695 = vunpack.c.l.b16 %v1256
      %v1696 = vunpack.c.l.b16 %v1257
      %v1697 = vunpack.c.l.b16 %v1258
      %v1698 = vunpack.c.l.b16 %v1259
      %v1699 = vunpack.c.l.b16 %v1260
      %v1700 = vunpack.c.l.b16 %v1261
      %v1701 = vunpack.c.l.b16 %v1262
      %v1702 = vpack.c.b16 %v1695, %v1694
      %v1703 = vpack.c.b16 %v1697, %v1696
      %v1704 = vpack.c.b16 %v1699, %v1698
      %v1705 = vpack.c.b16 %v1701, %v1700
      %1706 = vrot.lane.b32.xlu0 %v1702, 12
      %v1707 = vpop.permute.xlu0 %1706
      %1708 = vrot.lane.b32.xlu0 %v1703, 12
      %v1709 = vpop.permute.xlu0 %1708
      %1710 = vrot.lane.b32.xlu0 %v1704, 12
      %v1711 = vpop.permute.xlu0 %1710
      %1712 = vrot.lane.b32.xlu0 %v1705, 12
      %v1713 = vpop.permute.xlu0 %1712
      %v1714 = vunpack.c.l.b16 %v1284
      %v1715 = vunpack.c.l.b16 %v1298
      %v1716 = vunpack.c.l.b16 %v1312
      %v1717 = vunpack.c.l.b16 %v1326
      %v1718 = vunpack.c.l.b16 %v1340
      %v1719 = vunpack.c.l.b16 %v1354
      %v1720 = vunpack.c.l.b16 %v1368
      %v1721 = vunpack.c.l.b16 %v1382
      %v1722 = vpack.c.b16 %v1715, %v1714
      %v1723 = vpack.c.b16 %v1717, %v1716
      %v1724 = vpack.c.b16 %v1719, %v1718
      %v1725 = vpack.c.b16 %v1721, %v1720
      %1726 = vrot.lane.b32.xlu0 %v1722, 16
      %v1727 = vpop.permute.xlu0 %1726
      %1728 = vrot.lane.b32.xlu0 %v1723, 16
      %v1729 = vpop.permute.xlu0 %1728
      %1730 = vrot.lane.b32.xlu0 %v1724, 16
      %v1731 = vpop.permute.xlu0 %1730
      %1732 = vrot.lane.b32.xlu0 %v1725, 16
      %v1733 = vpop.permute.xlu0 %1732
      %v1734 = vunpack.c.l.b16 %v1410
      %v1735 = vunpack.c.l.b16 %v1414
      %v1736 = vunpack.c.l.b16 %v1418
      %v1737 = vunpack.c.l.b16 %v1422
      %v1738 = vunpack.c.l.b16 %v1426
      %v1739 = vunpack.c.l.b16 %v1430
      %v1740 = vunpack.c.l.b16 %v1434
      %v1741 = vunpack.c.l.b16 %v1438
      %v1742 = vpack.c.b16 %v1735, %v1734
      %v1743 = vpack.c.b16 %v1737, %v1736
      %v1744 = vpack.c.b16 %v1739, %v1738
      %v1745 = vpack.c.b16 %v1741, %v1740
      %1746 = vrot.lane.b32.xlu0 %v1742, 20
      %v1747 = vpop.permute.xlu0 %1746
      %1748 = vrot.lane.b32.xlu0 %v1743, 20
      %v1749 = vpop.permute.xlu0 %1748
      %1750 = vrot.lane.b32.xlu0 %v1744, 20
      %v1751 = vpop.permute.xlu0 %1750
      %1752 = vrot.lane.b32.xlu0 %v1745, 20
      %v1753 = vpop.permute.xlu0 %1752
      %v1762 = vunpack.c.l.b16 %v1442
      %v1763 = vunpack.c.l.b16 %v1443
      %v1764 = vunpack.c.l.b16 %v1444
      %v1765 = vunpack.c.l.b16 %v1445
      %v1766 = vunpack.c.l.b16 %v1446
      %v1767 = vunpack.c.l.b16 %v1447
      %v1768 = vunpack.c.l.b16 %v1448
      %v1769 = vunpack.c.l.b16 %v1449
      %v1770 = vpack.c.b16 %v1763, %v1762
      %v1771 = vpack.c.b16 %v1765, %v1764
      %v1772 = vpack.c.b16 %v1767, %v1766
      %v1773 = vpack.c.b16 %v1769, %v1768
      %1774 = vrot.lane.b32.xlu0 %v1770, 24
      %v1775 = vpop.permute.xlu0 %1774
      %1776 = vrot.lane.b32.xlu0 %v1771, 24
      %v1777 = vpop.permute.xlu0 %1776
      %1778 = vrot.lane.b32.xlu0 %v1772, 24
      %v1779 = vpop.permute.xlu0 %1778
      %1780 = vrot.lane.b32.xlu0 %v1773, 24
      %v1781 = vpop.permute.xlu0 %1780
      %v1782 = vunpack.c.l.b16 %v1471
      %v1783 = vunpack.c.l.b16 %v1485
      %v1784 = vunpack.c.l.b16 %v1499
      %v1785 = vunpack.c.l.b16 %v1513
      %v1786 = vunpack.c.l.b16 %v1527
      %v1787 = vunpack.c.l.b16 %v1541
      %v1788 = vunpack.c.l.b16 %v1555
      %v1789 = vunpack.c.l.b16 %v1569
      %v1790 = vpack.c.b16 %v1783, %v1782
      %v1791 = vpack.c.b16 %v1785, %v1784
      %v1792 = vpack.c.b16 %v1787, %v1786
      %v1793 = vpack.c.b16 %v1789, %v1788
      %1794 = vrot.lane.b32.xlu0 %v1790, 28
      %v1795 = vpop.permute.xlu0 %1794
      %1796 = vrot.lane.b32.xlu0 %v1791, 28
      %v1797 = vpop.permute.xlu0 %1796
      %1798 = vrot.lane.b32.xlu0 %v1792, 28
      %v1799 = vpop.permute.xlu0 %1798
      %1800 = vrot.lane.b32.xlu0 %v1793, 28
      %v1801 = vpop.permute.xlu0 %1800
      %v1802 = vunpack.c.l.b16 %v1597
      %v1803 = vunpack.c.l.b16 %v1601
      %v1804 = vunpack.c.l.b16 %v1605
      %v1805 = vunpack.c.l.b16 %v1609
      %v1806 = vunpack.c.l.b16 %v1613
      %v1807 = vunpack.c.l.b16 %v1617
      %v1808 = vunpack.c.l.b16 %v1621
      %v1809 = vunpack.c.l.b16 %v1625
      %v1810 = vpack.c.b16 %v1803, %v1802
      %v1811 = vpack.c.b16 %v1805, %v1804
      %v1812 = vpack.c.b16 %v1807, %v1806
      %v1813 = vpack.c.b16 %v1809, %v1808
      %1814 = vrot.lane.b32.xlu0 %v1810, 32
      %v1815 = vpop.permute.xlu0 %1814
      %1816 = vrot.lane.b32.xlu0 %v1811, 32
      %v1817 = vpop.permute.xlu0 %1816
      %1818 = vrot.lane.b32.xlu0 %v1812, 32
      %v1819 = vpop.permute.xlu0 %1818
      %1820 = vrot.lane.b32.xlu0 %v1813, 32
      %v1821 = vpop.permute.xlu0 %1820
      %v1824 = vsel %vm983, %v1642, %v1659
      %v1827 = vsel %vm983, %v1643, %v1661
      %v1830 = vsel %vm983, %v1644, %v1663
      %v1833 = vsel %vm983, %v1645, %v1665
      %v1835 = vsel %vm996, %v1824, %v1679
      %v1837 = vsel %vm996, %v1827, %v1681
      %v1839 = vsel %vm996, %v1830, %v1683
      %v1841 = vsel %vm996, %v1833, %v1685
      %v1843 = vsel %vm1005, %v1835, %v1707
      %v1845 = vsel %vm1005, %v1837, %v1709
      %v1847 = vsel %vm1005, %v1839, %v1711
      %v1849 = vsel %vm1005, %v1841, %v1713
      %v1851 = vsel %vm1014, %v1843, %v1727
      %v1853 = vsel %vm1014, %v1845, %v1729
      %v1855 = vsel %vm1014, %v1847, %v1731
      %v1857 = vsel %vm1014, %v1849, %v1733
      %v1859 = vsel %vm1023, %v1851, %v1747
      %v1861 = vsel %vm1023, %v1853, %v1749
      %v1863 = vsel %vm1023, %v1855, %v1751
      %v1865 = vsel %vm1023, %v1857, %v1753
      %v1867 = vsel %vm1032, %v1859, %v1775
      %v1869 = vsel %vm1032, %v1861, %v1777
      %v1871 = vsel %vm1032, %v1863, %v1779
      %v1873 = vsel %vm1032, %v1865, %v1781
      %v1875 = vsel %vm1041, %v1867, %v1795
      %v1877 = vsel %vm1041, %v1869, %v1797
      %v1879 = vsel %vm1041, %v1871, %v1799
      %v1881 = vsel %vm1041, %v1873, %v1801
      %v1883 = vsel %vm1050, %v1875, %v1815
      %v1885 = vsel %vm1050, %v1877, %v1817
      %v1887 = vsel %vm1050, %v1879, %v1819
      %v1889 = vsel %vm1050, %v1881, %v1821
      %s1890 = scalar_lea.vmem %s1, 20
      %v1891 = vld [vmem:[%s1890] sm:$0xf]
      %v1892 = vld [vmem:[%s1890 + $0x4] sm:$0xf]
      %v1893 = vld [vmem:[%s1890 + $0x8] sm:$0xf]
      %v1894 = vld [vmem:[%s1890 + $0xc] sm:$0xf]
      %v1895 = vld [vmem:[%s1890 + $0x10] sm:$0x3]
      %v1901 = vunpack.c.l.b16 %v1891
      %v1902 = vunpack.c.l.b16 %v1892
      %v1903 = vunpack.c.l.b16 %v1893
      %v1904 = vunpack.c.l.b16 %v1894
      %v1905 = vunpack.c.l.b16 %v1895
      %v1906 = vpack.c.b16 %v1902, %v1901
      %v1907 = vpack.c.b16 %v1904, %v1903
      %v1908 = vpack.c.b16 %v1905, %v1905
      %vm1911 = vcmask 293888
      %v1912 = vsel %vm1911, %v1883, 0
      %v1914 = vsel %vm1911, %v1885, 0
      %v1916 = vsel %vm1911, %v1887, 0
      %v1918 = vsel %vm1911, %v1889, 0
      %vm1920 = vcmask 1041408
      %v1922 = vsel %vm1920, %v1908, 0
      %1924 = vmatpush.bf16.msra.mxu0 0
      %1925 = vmatpush.bf16.msra.mxu0 0
      %1926 = vmatpush.bf16.msra.mxu0 0
      %1927 = vmatpush.bf16.msra.mxu0 0
      %1928 = vmatpush.bf16.msra.mxu0 0
      %1929 = vmatpush.bf16.msra.mxu0 %v1922
      %1930 = vmatpush.bf16.msra.mxu0 %v1907
      %1931 = vmatpush.bf16.msra.mxu0 %v1906
      %1932 = vmatmul.bf16.gmra.mxu0 %v1912
      %v1933 = vpop.f32.mrf.mxu0
      %v1934 = vadd.f32 0.0, %v1933
      %v1935 = vpop.f32.mrf.mxu0
      %v1936 = vadd.f32 0.0, %v1935
      %1937 = vmatmul.bf16.gmra.mxu0 %v1914
      %v1938 = vpop.f32.mrf.mxu0
      %v1939 = vadd.f32 0.0, %v1938
      %v1940 = vpop.f32.mrf.mxu0
      %v1941 = vadd.f32 0.0, %v1940
      %1942 = vmatmul.bf16.gmra.mxu0 %v1916
      %v1943 = vpop.f32.mrf.mxu0
      %v1944 = vadd.f32 0.0, %v1943
      %v1945 = vpop.f32.mrf.mxu0
      %v1946 = vadd.f32 0.0, %v1945
      %1947 = vmatmul.bf16.gmra.mxu0 %v1918
      %v1948 = vpop.f32.mrf.mxu0
      %v1949 = vadd.f32 0.0, %v1948
      %v1950 = vpop.f32.mrf.mxu0
      %v1951 = vadd.f32 0.0, %v1950
      %1952 = vdwg.mxu0
      %v1958 = vunpack.c.l.b16 %v1059
      %v1959 = vunpack.c.l.b16 %v1060
      %v1960 = vunpack.c.l.b16 %v1061
      %v1961 = vunpack.c.l.b16 %v1062
      %v1962 = vunpack.c.l.b16 %v1063
      %v1963 = vpack.c.b16 %v1959, %v1958
      %v1964 = vpack.c.b16 %v1961, %v1960
      %v1965 = vpack.c.b16 %v1962, %v1962
      %v1968 = vsel %vm1911, %v1052, 0
      %v1970 = vsel %vm1911, %v1054, 0
      %v1972 = vsel %vm1911, %v1056, 0
      %v1974 = vsel %vm1911, %v1058, 0
      %v1977 = vsel %vm1920, %v1965, 0
      %1979 = vmatpush.bf16.msra.mxu0 0
      %1980 = vmatpush.bf16.msra.mxu0 0
      %1981 = vmatpush.bf16.msra.mxu0 0
      %1982 = vmatpush.bf16.msra.mxu0 0
      %1983 = vmatpush.bf16.msra.mxu0 0
      %1984 = vmatpush.bf16.msra.mxu0 %v1977
      %1985 = vmatpush.bf16.msra.mxu0 %v1964
      %1986 = vmatpush.bf16.msra.mxu0 %v1963
      %1987 = vmatmul.bf16.gmra.mxu0 %v1968
      %v1988 = vpop.f32.mrf.mxu0
      %v1989 = vadd.f32 %v1934, %v1988
      %v1990 = vpop.f32.mrf.mxu0
      %v1991 = vadd.f32 %v1936, %v1990
      %1992 = vmatmul.bf16.gmra.mxu0 %v1970
      %v1993 = vpop.f32.mrf.mxu0
      %v1994 = vadd.f32 %v1939, %v1993
      %v1995 = vpop.f32.mrf.mxu0
      %v1996 = vadd.f32 %v1941, %v1995
      %1997 = vmatmul.bf16.gmra.mxu0 %v1972
      %v1998 = vpop.f32.mrf.mxu0
      %v1999 = vadd.f32 %v1944, %v1998
      %v2000 = vpop.f32.mrf.mxu0
      %v2001 = vadd.f32 %v1946, %v2000
      %2002 = vmatmul.bf16.gmra.mxu0 %v1974
      %v2003 = vpop.f32.mrf.mxu0
      %v2004 = vadd.f32 %v1949, %v2003
      %v2005 = vpop.f32.mrf.mxu0
      %v2006 = vadd.f32 %v1951, %v2005
      %2007 = vdwg.mxu0
      %s2008 = sadd.s32 %s20, 2
      %s2009 = smul.u32 %s2008, 20
      %s2010 = smul.addr %s2009, 4
      %s2011 = scalar_lea.vmem %s200, %s2010
      %v2012 = vld [vmem:[%s2011] sm:$0xf]
      %v2013 = vld [vmem:[%s2011 + $0x8] sm:$0xf]
      %v2014 = vld [vmem:[%s2011 + $0x10] sm:$0xf]
      %v2015 = vld [vmem:[%s2011 + $0x18] sm:$0xf]
      %v2016 = vld [vmem:[%s2011 + $0x20] sm:$0xf]
      %v2017 = vld [vmem:[%s2011 + $0x28] sm:$0xf]
      %v2018 = vld [vmem:[%s2011 + $0x30] sm:$0xf]
      %v2019 = vld [vmem:[%s2011 + $0x38] sm:$0xf]
      %v2020 = vld [vmem:[%s2011 + $0x4] sm:$0x1]
      %v2021 = vld [vmem:[%s2011 + $0xc] sm:$0x1]
      %v2022 = vld [vmem:[%s2011 + $0x14] sm:$0x1]
      %v2023 = vld [vmem:[%s2011 + $0x1c] sm:$0x1]
      %v2024 = vld [vmem:[%s2011 + $0x24] sm:$0x1]
      %v2025 = vld [vmem:[%s2011 + $0x2c] sm:$0x1]
      %v2026 = vld [vmem:[%s2011 + $0x34] sm:$0x1]
      %v2027 = vld [vmem:[%s2011 + $0x3c] sm:$0x1]
      %v2029 = vshrl.u32 %v2012, 16
      %v2031 = vrot.slane %v2029, 4
      %v2032 = vshll.u32 %v2012, 16
      %v2034 = vrot.slane %v2032, 5
      %v2035 = vor.u32 %v2031, %v2034
      %v2036 = vrot.slane %v2035, 4
      %v2038 = vshll.u32 %v2020, 16
      %v2040 = vrot.slane %v2038, 5
      %v2041 = vsel %vm241, %v2036, %v2040
      %v2043 = vshrl.u32 %v2013, 16
      %v2045 = vrot.slane %v2043, 4
      %v2046 = vshll.u32 %v2013, 16
      %v2048 = vrot.slane %v2046, 5
      %v2049 = vor.u32 %v2045, %v2048
      %v2050 = vrot.slane %v2049, 4
      %v2052 = vshll.u32 %v2021, 16
      %v2054 = vrot.slane %v2052, 5
      %v2055 = vsel %vm241, %v2050, %v2054
      %v2057 = vshrl.u32 %v2014, 16
      %v2059 = vrot.slane %v2057, 4
      %v2060 = vshll.u32 %v2014, 16
      %v2062 = vrot.slane %v2060, 5
      %v2063 = vor.u32 %v2059, %v2062
      %v2064 = vrot.slane %v2063, 4
      %v2066 = vshll.u32 %v2022, 16
      %v2068 = vrot.slane %v2066, 5
      %v2069 = vsel %vm241, %v2064, %v2068
      %v2071 = vshrl.u32 %v2015, 16
      %v2073 = vrot.slane %v2071, 4
      %v2074 = vshll.u32 %v2015, 16
      %v2076 = vrot.slane %v2074, 5
      %v2077 = vor.u32 %v2073, %v2076
      %v2078 = vrot.slane %v2077, 4
      %v2080 = vshll.u32 %v2023, 16
      %v2082 = vrot.slane %v2080, 5
      %v2083 = vsel %vm241, %v2078, %v2082
      %v2085 = vshrl.u32 %v2016, 16
      %v2087 = vrot.slane %v2085, 4
      %v2088 = vshll.u32 %v2016, 16
      %v2090 = vrot.slane %v2088, 5
      %v2091 = vor.u32 %v2087, %v2090
      %v2092 = vrot.slane %v2091, 4
      %v2094 = vshll.u32 %v2024, 16
      %v2096 = vrot.slane %v2094, 5
      %v2097 = vsel %vm241, %v2092, %v2096
      %v2099 = vshrl.u32 %v2017, 16
      %v2101 = vrot.slane %v2099, 4
      %v2102 = vshll.u32 %v2017, 16
      %v2104 = vrot.slane %v2102, 5
      %v2105 = vor.u32 %v2101, %v2104
      %v2106 = vrot.slane %v2105, 4
      %v2108 = vshll.u32 %v2025, 16
      %v2110 = vrot.slane %v2108, 5
      %v2111 = vsel %vm241, %v2106, %v2110
      %v2113 = vshrl.u32 %v2018, 16
      %v2115 = vrot.slane %v2113, 4
      %v2116 = vshll.u32 %v2018, 16
      %v2118 = vrot.slane %v2116, 5
      %v2119 = vor.u32 %v2115, %v2118
      %v2120 = vrot.slane %v2119, 4
      %v2122 = vshll.u32 %v2026, 16
      %v2124 = vrot.slane %v2122, 5
      %v2125 = vsel %vm241, %v2120, %v2124
      %v2127 = vshrl.u32 %v2019, 16
      %v2129 = vrot.slane %v2127, 4
      %v2130 = vshll.u32 %v2019, 16
      %v2132 = vrot.slane %v2130, 5
      %v2133 = vor.u32 %v2129, %v2132
      %v2134 = vrot.slane %v2133, 4
      %v2136 = vshll.u32 %v2027, 16
      %v2138 = vrot.slane %v2136, 5
      %v2139 = vsel %vm241, %v2134, %v2138
      %v2140 = vld [vmem:[%s2011] sm:$0xe]
      %v2141 = vld [vmem:[%s2011 + $0x8] sm:$0xe]
      %v2142 = vld [vmem:[%s2011 + $0x10] sm:$0xe]
      %v2143 = vld [vmem:[%s2011 + $0x18] sm:$0xe]
      %v2144 = vld [vmem:[%s2011 + $0x20] sm:$0xe]
      %v2145 = vld [vmem:[%s2011 + $0x28] sm:$0xe]
      %v2146 = vld [vmem:[%s2011 + $0x30] sm:$0xe]
      %v2147 = vld [vmem:[%s2011 + $0x38] sm:$0xe]
      %v2164 = vrot.slane %v2140, 5
      %v2165 = vrot.slane %v2164, 4
      %v2166 = vrot.slane %v2020, 5
      %v2167 = vsel %vm380, %v2165, %v2166
      %v2168 = vrot.slane %v2141, 5
      %v2169 = vrot.slane %v2168, 4
      %v2170 = vrot.slane %v2021, 5
      %v2171 = vsel %vm380, %v2169, %v2170
      %v2172 = vrot.slane %v2142, 5
      %v2173 = vrot.slane %v2172, 4
      %v2174 = vrot.slane %v2022, 5
      %v2175 = vsel %vm380, %v2173, %v2174
      %v2176 = vrot.slane %v2143, 5
      %v2177 = vrot.slane %v2176, 4
      %v2178 = vrot.slane %v2023, 5
      %v2179 = vsel %vm380, %v2177, %v2178
      %v2180 = vrot.slane %v2144, 5
      %v2181 = vrot.slane %v2180, 4
      %v2182 = vrot.slane %v2024, 5
      %v2183 = vsel %vm380, %v2181, %v2182
      %v2184 = vrot.slane %v2145, 5
      %v2185 = vrot.slane %v2184, 4
      %v2186 = vrot.slane %v2025, 5
      %v2187 = vsel %vm380, %v2185, %v2186
      %v2188 = vrot.slane %v2146, 5
      %v2189 = vrot.slane %v2188, 4
      %v2190 = vrot.slane %v2026, 5
      %v2191 = vsel %vm380, %v2189, %v2190
      %v2192 = vrot.slane %v2147, 5
      %v2193 = vrot.slane %v2192, 4
      %v2194 = vrot.slane %v2027, 5
      %v2195 = vsel %vm380, %v2193, %v2194
      %s2196 = sadd.s32 2, %s2009
      %s2197 = smul.addr %s2196, 4
      %s2198 = scalar_lea.vmem %s200, %s2197
      %v2199 = vld [vmem:[%s2198] sm:$0xf]
      %v2200 = vld [vmem:[%s2198 + $0x8] sm:$0xf]
      %v2201 = vld [vmem:[%s2198 + $0x10] sm:$0xf]
      %v2202 = vld [vmem:[%s2198 + $0x18] sm:$0xf]
      %v2203 = vld [vmem:[%s2198 + $0x20] sm:$0xf]
      %v2204 = vld [vmem:[%s2198 + $0x28] sm:$0xf]
      %v2205 = vld [vmem:[%s2198 + $0x30] sm:$0xf]
      %v2206 = vld [vmem:[%s2198 + $0x38] sm:$0xf]
      %v2207 = vld [vmem:[%s2198 + $0x4] sm:$0x1]
      %v2208 = vld [vmem:[%s2198 + $0xc] sm:$0x1]
      %v2209 = vld [vmem:[%s2198 + $0x14] sm:$0x1]
      %v2210 = vld [vmem:[%s2198 + $0x1c] sm:$0x1]
      %v2211 = vld [vmem:[%s2198 + $0x24] sm:$0x1]
      %v2212 = vld [vmem:[%s2198 + $0x2c] sm:$0x1]
      %v2213 = vld [vmem:[%s2198 + $0x34] sm:$0x1]
      %v2214 = vld [vmem:[%s2198 + $0x3c] sm:$0x1]
      %v2216 = vshrl.u32 %v2199, 16
      %v2218 = vrot.slane %v2216, 4
      %v2219 = vshll.u32 %v2199, 16
      %v2221 = vrot.slane %v2219, 5
      %v2222 = vor.u32 %v2218, %v2221
      %v2223 = vrot.slane %v2222, 4
      %v2225 = vshll.u32 %v2207, 16
      %v2227 = vrot.slane %v2225, 5
      %v2228 = vsel %vm241, %v2223, %v2227
      %v2230 = vshrl.u32 %v2200, 16
      %v2232 = vrot.slane %v2230, 4
      %v2233 = vshll.u32 %v2200, 16
      %v2235 = vrot.slane %v2233, 5
      %v2236 = vor.u32 %v2232, %v2235
      %v2237 = vrot.slane %v2236, 4
      %v2239 = vshll.u32 %v2208, 16
      %v2241 = vrot.slane %v2239, 5
      %v2242 = vsel %vm241, %v2237, %v2241
      %v2244 = vshrl.u32 %v2201, 16
      %v2246 = vrot.slane %v2244, 4
      %v2247 = vshll.u32 %v2201, 16
      %v2249 = vrot.slane %v2247, 5
      %v2250 = vor.u32 %v2246, %v2249
      %v2251 = vrot.slane %v2250, 4
      %v2253 = vshll.u32 %v2209, 16
      %v2255 = vrot.slane %v2253, 5
      %v2256 = vsel %vm241, %v2251, %v2255
      %v2258 = vshrl.u32 %v2202, 16
      %v2260 = vrot.slane %v2258, 4
      %v2261 = vshll.u32 %v2202, 16
      %v2263 = vrot.slane %v2261, 5
      %v2264 = vor.u32 %v2260, %v2263
      %v2265 = vrot.slane %v2264, 4
      %v2267 = vshll.u32 %v2210, 16
      %v2269 = vrot.slane %v2267, 5
      %v2270 = vsel %vm241, %v2265, %v2269
      %v2272 = vshrl.u32 %v2203, 16
      %v2274 = vrot.slane %v2272, 4
      %v2275 = vshll.u32 %v2203, 16
      %v2277 = vrot.slane %v2275, 5
      %v2278 = vor.u32 %v2274, %v2277
      %v2279 = vrot.slane %v2278, 4
      %v2281 = vshll.u32 %v2211, 16
      %v2283 = vrot.slane %v2281, 5
      %v2284 = vsel %vm241, %v2279, %v2283
      %v2286 = vshrl.u32 %v2204, 16
      %v2288 = vrot.slane %v2286, 4
      %v2289 = vshll.u32 %v2204, 16
      %v2291 = vrot.slane %v2289, 5
      %v2292 = vor.u32 %v2288, %v2291
      %v2293 = vrot.slane %v2292, 4
      %v2295 = vshll.u32 %v2212, 16
      %v2297 = vrot.slane %v2295, 5
      %v2298 = vsel %vm241, %v2293, %v2297
      %v2300 = vshrl.u32 %v2205, 16
      %v2302 = vrot.slane %v2300, 4
      %v2303 = vshll.u32 %v2205, 16
      %v2305 = vrot.slane %v2303, 5
      %v2306 = vor.u32 %v2302, %v2305
      %v2307 = vrot.slane %v2306, 4
      %v2309 = vshll.u32 %v2213, 16
      %v2311 = vrot.slane %v2309, 5
      %v2312 = vsel %vm241, %v2307, %v2311
      %v2314 = vshrl.u32 %v2206, 16
      %v2316 = vrot.slane %v2314, 4
      %v2317 = vshll.u32 %v2206, 16
      %v2319 = vrot.slane %v2317, 5
      %v2320 = vor.u32 %v2316, %v2319
      %v2321 = vrot.slane %v2320, 4
      %v2323 = vshll.u32 %v2214, 16
      %v2325 = vrot.slane %v2323, 5
      %v2326 = vsel %vm241, %v2321, %v2325
      %v2327 = vld [vmem:[%s2198] sm:$0xe]
      %v2328 = vld [vmem:[%s2198 + $0x8] sm:$0xe]
      %v2329 = vld [vmem:[%s2198 + $0x10] sm:$0xe]
      %v2330 = vld [vmem:[%s2198 + $0x18] sm:$0xe]
      %v2331 = vld [vmem:[%s2198 + $0x20] sm:$0xe]
      %v2332 = vld [vmem:[%s2198 + $0x28] sm:$0xe]
      %v2333 = vld [vmem:[%s2198 + $0x30] sm:$0xe]
      %v2334 = vld [vmem:[%s2198 + $0x38] sm:$0xe]
      %v2351 = vrot.slane %v2327, 5
      %v2352 = vrot.slane %v2351, 4
      %v2353 = vrot.slane %v2207, 5
      %v2354 = vsel %vm380, %v2352, %v2353
      %v2355 = vrot.slane %v2328, 5
      %v2356 = vrot.slane %v2355, 4
      %v2357 = vrot.slane %v2208, 5
      %v2358 = vsel %vm380, %v2356, %v2357
      %v2359 = vrot.slane %v2329, 5
      %v2360 = vrot.slane %v2359, 4
      %v2361 = vrot.slane %v2209, 5
      %v2362 = vsel %vm380, %v2360, %v2361
      %v2363 = vrot.slane %v2330, 5
      %v2364 = vrot.slane %v2363, 4
      %v2365 = vrot.slane %v2210, 5
      %v2366 = vsel %vm380, %v2364, %v2365
      %v2367 = vrot.slane %v2331, 5
      %v2368 = vrot.slane %v2367, 4
      %v2369 = vrot.slane %v2211, 5
      %v2370 = vsel %vm380, %v2368, %v2369
      %v2371 = vrot.slane %v2332, 5
      %v2372 = vrot.slane %v2371, 4
      %v2373 = vrot.slane %v2212, 5
      %v2374 = vsel %vm380, %v2372, %v2373
      %v2375 = vrot.slane %v2333, 5
      %v2376 = vrot.slane %v2375, 4
      %v2377 = vrot.slane %v2213, 5
      %v2378 = vsel %vm380, %v2376, %v2377
      %v2379 = vrot.slane %v2334, 5
      %v2380 = vrot.slane %v2379, 4
      %v2381 = vrot.slane %v2214, 5
      %v2382 = vsel %vm380, %v2380, %v2381
      %s2383 = sadd.s32 4, %s2009
      %s2384 = smul.addr %s2383, 4
      %s2385 = scalar_lea.vmem %s200, %s2384
      %v2386 = vld [vmem:[%s2385] sm:$0xf]
      %v2387 = vld [vmem:[%s2385 + $0x8] sm:$0xf]
      %v2388 = vld [vmem:[%s2385 + $0x10] sm:$0xf]
      %v2389 = vld [vmem:[%s2385 + $0x18] sm:$0xf]
      %v2390 = vld [vmem:[%s2385 + $0x20] sm:$0xf]
      %v2391 = vld [vmem:[%s2385 + $0x28] sm:$0xf]
      %v2392 = vld [vmem:[%s2385 + $0x30] sm:$0xf]
      %v2393 = vld [vmem:[%s2385 + $0x38] sm:$0xf]
      %v2394 = vld [vmem:[%s2385 + $0x4] sm:$0x1]
      %v2395 = vld [vmem:[%s2385 + $0xc] sm:$0x1]
      %v2396 = vld [vmem:[%s2385 + $0x14] sm:$0x1]
      %v2397 = vld [vmem:[%s2385 + $0x1c] sm:$0x1]
      %v2398 = vld [vmem:[%s2385 + $0x24] sm:$0x1]
      %v2399 = vld [vmem:[%s2385 + $0x2c] sm:$0x1]
      %v2400 = vld [vmem:[%s2385 + $0x34] sm:$0x1]
      %v2401 = vld [vmem:[%s2385 + $0x3c] sm:$0x1]
      %v2403 = vshrl.u32 %v2386, 16
      %v2405 = vrot.slane %v2403, 4
      %v2406 = vshll.u32 %v2386, 16
      %v2408 = vrot.slane %v2406, 5
      %v2409 = vor.u32 %v2405, %v2408
      %v2410 = vrot.slane %v2409, 4
      %v2412 = vshll.u32 %v2394, 16
      %v2414 = vrot.slane %v2412, 5
      %v2415 = vsel %vm241, %v2410, %v2414
      %v2417 = vshrl.u32 %v2387, 16
      %v2419 = vrot.slane %v2417, 4
      %v2420 = vshll.u32 %v2387, 16
      %v2422 = vrot.slane %v2420, 5
      %v2423 = vor.u32 %v2419, %v2422
      %v2424 = vrot.slane %v2423, 4
      %v2426 = vshll.u32 %v2395, 16
      %v2428 = vrot.slane %v2426, 5
      %v2429 = vsel %vm241, %v2424, %v2428
      %v2431 = vshrl.u32 %v2388, 16
      %v2433 = vrot.slane %v2431, 4
      %v2434 = vshll.u32 %v2388, 16
      %v2436 = vrot.slane %v2434, 5
      %v2437 = vor.u32 %v2433, %v2436
      %v2438 = vrot.slane %v2437, 4
      %v2440 = vshll.u32 %v2396, 16
      %v2442 = vrot.slane %v2440, 5
      %v2443 = vsel %vm241, %v2438, %v2442
      %v2445 = vshrl.u32 %v2389, 16
      %v2447 = vrot.slane %v2445, 4
      %v2448 = vshll.u32 %v2389, 16
      %v2450 = vrot.slane %v2448, 5
      %v2451 = vor.u32 %v2447, %v2450
      %v2452 = vrot.slane %v2451, 4
      %v2454 = vshll.u32 %v2397, 16
      %v2456 = vrot.slane %v2454, 5
      %v2457 = vsel %vm241, %v2452, %v2456
      %v2459 = vshrl.u32 %v2390, 16
      %v2461 = vrot.slane %v2459, 4
      %v2462 = vshll.u32 %v2390, 16
      %v2464 = vrot.slane %v2462, 5
      %v2465 = vor.u32 %v2461, %v2464
      %v2466 = vrot.slane %v2465, 4
      %v2468 = vshll.u32 %v2398, 16
      %v2470 = vrot.slane %v2468, 5
      %v2471 = vsel %vm241, %v2466, %v2470
      %v2473 = vshrl.u32 %v2391, 16
      %v2475 = vrot.slane %v2473, 4
      %v2476 = vshll.u32 %v2391, 16
      %v2478 = vrot.slane %v2476, 5
      %v2479 = vor.u32 %v2475, %v2478
      %v2480 = vrot.slane %v2479, 4
      %v2482 = vshll.u32 %v2399, 16
      %v2484 = vrot.slane %v2482, 5
      %v2485 = vsel %vm241, %v2480, %v2484
      %v2487 = vshrl.u32 %v2392, 16
      %v2489 = vrot.slane %v2487, 4
      %v2490 = vshll.u32 %v2392, 16
      %v2492 = vrot.slane %v2490, 5
      %v2493 = vor.u32 %v2489, %v2492
      %v2494 = vrot.slane %v2493, 4
      %v2496 = vshll.u32 %v2400, 16
      %v2498 = vrot.slane %v2496, 5
      %v2499 = vsel %vm241, %v2494, %v2498
      %v2501 = vshrl.u32 %v2393, 16
      %v2503 = vrot.slane %v2501, 4
      %v2504 = vshll.u32 %v2393, 16
      %v2506 = vrot.slane %v2504, 5
      %v2507 = vor.u32 %v2503, %v2506
      %v2508 = vrot.slane %v2507, 4
      %v2510 = vshll.u32 %v2401, 16
      %v2512 = vrot.slane %v2510, 5
      %v2513 = vsel %vm241, %v2508, %v2512
      %v2514 = vld [vmem:[%s2385] sm:$0xe]
      %v2515 = vld [vmem:[%s2385 + $0x8] sm:$0xe]
      %v2516 = vld [vmem:[%s2385 + $0x10] sm:$0xe]
      %v2517 = vld [vmem:[%s2385 + $0x18] sm:$0xe]
      %v2518 = vld [vmem:[%s2385 + $0x20] sm:$0xe]
      %v2519 = vld [vmem:[%s2385 + $0x28] sm:$0xe]
      %v2520 = vld [vmem:[%s2385 + $0x30] sm:$0xe]
      %v2521 = vld [vmem:[%s2385 + $0x38] sm:$0xe]
      %v2538 = vrot.slane %v2514, 5
      %v2539 = vrot.slane %v2538, 4
      %v2540 = vrot.slane %v2394, 5
      %v2541 = vsel %vm380, %v2539, %v2540
      %v2542 = vrot.slane %v2515, 5
      %v2543 = vrot.slane %v2542, 4
      %v2544 = vrot.slane %v2395, 5
      %v2545 = vsel %vm380, %v2543, %v2544
      %v2546 = vrot.slane %v2516, 5
      %v2547 = vrot.slane %v2546, 4
      %v2548 = vrot.slane %v2396, 5
      %v2549 = vsel %vm380, %v2547, %v2548
      %v2550 = vrot.slane %v2517, 5
      %v2551 = vrot.slane %v2550, 4
      %v2552 = vrot.slane %v2397, 5
      %v2553 = vsel %vm380, %v2551, %v2552
      %v2554 = vrot.slane %v2518, 5
      %v2555 = vrot.slane %v2554, 4
      %v2556 = vrot.slane %v2398, 5
      %v2557 = vsel %vm380, %v2555, %v2556
      %v2558 = vrot.slane %v2519, 5
      %v2559 = vrot.slane %v2558, 4
      %v2560 = vrot.slane %v2399, 5
      %v2561 = vsel %vm380, %v2559, %v2560
      %v2562 = vrot.slane %v2520, 5
      %v2563 = vrot.slane %v2562, 4
      %v2564 = vrot.slane %v2400, 5
      %v2565 = vsel %vm380, %v2563, %v2564
      %v2566 = vrot.slane %v2521, 5
      %v2567 = vrot.slane %v2566, 4
      %v2568 = vrot.slane %v2401, 5
      %v2569 = vsel %vm380, %v2567, %v2568
      %v2578 = vunpack.c.l.b16 %v2012
      %v2579 = vunpack.c.l.b16 %v2013
      %v2580 = vunpack.c.l.b16 %v2014
      %v2581 = vunpack.c.l.b16 %v2015
      %v2582 = vunpack.c.l.b16 %v2016
      %v2583 = vunpack.c.l.b16 %v2017
      %v2584 = vunpack.c.l.b16 %v2018
      %v2585 = vunpack.c.l.b16 %v2019
      %v2586 = vpack.c.b16 %v2579, %v2578
      %v2587 = vpack.c.b16 %v2581, %v2580
      %v2588 = vpack.c.b16 %v2583, %v2582
      %v2589 = vpack.c.b16 %v2585, %v2584
      %v2590 = vunpack.c.l.b16 %v2041
      %v2591 = vunpack.c.l.b16 %v2055
      %v2592 = vunpack.c.l.b16 %v2069
      %v2593 = vunpack.c.l.b16 %v2083
      %v2594 = vunpack.c.l.b16 %v2097
      %v2595 = vunpack.c.l.b16 %v2111
      %v2596 = vunpack.c.l.b16 %v2125
      %v2597 = vunpack.c.l.b16 %v2139
      %v2598 = vpack.c.b16 %v2591, %v2590
      %v2599 = vpack.c.b16 %v2593, %v2592
      %v2600 = vpack.c.b16 %v2595, %v2594
      %v2601 = vpack.c.b16 %v2597, %v2596
      %2602 = vrot.lane.b32.xlu0 %v2598, 4
      %v2603 = vpop.permute.xlu0 %2602
      %2604 = vrot.lane.b32.xlu0 %v2599, 4
      %v2605 = vpop.permute.xlu0 %2604
      %2606 = vrot.lane.b32.xlu0 %v2600, 4
      %v2607 = vpop.permute.xlu0 %2606
      %2608 = vrot.lane.b32.xlu0 %v2601, 4
      %v2609 = vpop.permute.xlu0 %2608
      %v2610 = vunpack.c.l.b16 %v2167
      %v2611 = vunpack.c.l.b16 %v2171
      %v2612 = vunpack.c.l.b16 %v2175
      %v2613 = vunpack.c.l.b16 %v2179
      %v2614 = vunpack.c.l.b16 %v2183
      %v2615 = vunpack.c.l.b16 %v2187
      %v2616 = vunpack.c.l.b16 %v2191
      %v2617 = vunpack.c.l.b16 %v2195
      %v2618 = vpack.c.b16 %v2611, %v2610
      %v2619 = vpack.c.b16 %v2613, %v2612
      %v2620 = vpack.c.b16 %v2615, %v2614
      %v2621 = vpack.c.b16 %v2617, %v2616
      %2622 = vrot.lane.b32.xlu0 %v2618, 8
      %v2623 = vpop.permute.xlu0 %2622
      %2624 = vrot.lane.b32.xlu0 %v2619, 8
      %v2625 = vpop.permute.xlu0 %2624
      %2626 = vrot.lane.b32.xlu0 %v2620, 8
      %v2627 = vpop.permute.xlu0 %2626
      %2628 = vrot.lane.b32.xlu0 %v2621, 8
      %v2629 = vpop.permute.xlu0 %2628
      %v2638 = vunpack.c.l.b16 %v2199
      %v2639 = vunpack.c.l.b16 %v2200
      %v2640 = vunpack.c.l.b16 %v2201
      %v2641 = vunpack.c.l.b16 %v2202
      %v2642 = vunpack.c.l.b16 %v2203
      %v2643 = vunpack.c.l.b16 %v2204
      %v2644 = vunpack.c.l.b16 %v2205
      %v2645 = vunpack.c.l.b16 %v2206
      %v2646 = vpack.c.b16 %v2639, %v2638
      %v2647 = vpack.c.b16 %v2641, %v2640
      %v2648 = vpack.c.b16 %v2643, %v2642
      %v2649 = vpack.c.b16 %v2645, %v2644
      %2650 = vrot.lane.b32.xlu0 %v2646, 12
      %v2651 = vpop.permute.xlu0 %2650
      %2652 = vrot.lane.b32.xlu0 %v2647, 12
      %v2653 = vpop.permute.xlu0 %2652
      %2654 = vrot.lane.b32.xlu0 %v2648, 12
      %v2655 = vpop.permute.xlu0 %2654
      %2656 = vrot.lane.b32.xlu0 %v2649, 12
      %v2657 = vpop.permute.xlu0 %2656
      %v2658 = vunpack.c.l.b16 %v2228
      %v2659 = vunpack.c.l.b16 %v2242
      %v2660 = vunpack.c.l.b16 %v2256
      %v2661 = vunpack.c.l.b16 %v2270
      %v2662 = vunpack.c.l.b16 %v2284
      %v2663 = vunpack.c.l.b16 %v2298
      %v2664 = vunpack.c.l.b16 %v2312
      %v2665 = vunpack.c.l.b16 %v2326
      %v2666 = vpack.c.b16 %v2659, %v2658
      %v2667 = vpack.c.b16 %v2661, %v2660
      %v2668 = vpack.c.b16 %v2663, %v2662
      %v2669 = vpack.c.b16 %v2665, %v2664
      %2670 = vrot.lane.b32.xlu0 %v2666, 16
      %v2671 = vpop.permute.xlu0 %2670
      %2672 = vrot.lane.b32.xlu0 %v2667, 16
      %v2673 = vpop.permute.xlu0 %2672
      %2674 = vrot.lane.b32.xlu0 %v2668, 16
      %v2675 = vpop.permute.xlu0 %2674
      %2676 = vrot.lane.b32.xlu0 %v2669, 16
      %v2677 = vpop.permute.xlu0 %2676
      %v2678 = vunpack.c.l.b16 %v2354
      %v2679 = vunpack.c.l.b16 %v2358
      %v2680 = vunpack.c.l.b16 %v2362
      %v2681 = vunpack.c.l.b16 %v2366
      %v2682 = vunpack.c.l.b16 %v2370
      %v2683 = vunpack.c.l.b16 %v2374
      %v2684 = vunpack.c.l.b16 %v2378
      %v2685 = vunpack.c.l.b16 %v2382
      %v2686 = vpack.c.b16 %v2679, %v2678
      %v2687 = vpack.c.b16 %v2681, %v2680
      %v2688 = vpack.c.b16 %v2683, %v2682
      %v2689 = vpack.c.b16 %v2685, %v2684
      %2690 = vrot.lane.b32.xlu0 %v2686, 20
      %v2691 = vpop.permute.xlu0 %2690
      %2692 = vrot.lane.b32.xlu0 %v2687, 20
      %v2693 = vpop.permute.xlu0 %2692
      %2694 = vrot.lane.b32.xlu0 %v2688, 20
      %v2695 = vpop.permute.xlu0 %2694
      %2696 = vrot.lane.b32.xlu0 %v2689, 20
      %v2697 = vpop.permute.xlu0 %2696
      %v2706 = vunpack.c.l.b16 %v2386
      %v2707 = vunpack.c.l.b16 %v2387
      %v2708 = vunpack.c.l.b16 %v2388
      %v2709 = vunpack.c.l.b16 %v2389
      %v2710 = vunpack.c.l.b16 %v2390
      %v2711 = vunpack.c.l.b16 %v2391
      %v2712 = vunpack.c.l.b16 %v2392
      %v2713 = vunpack.c.l.b16 %v2393
      %v2714 = vpack.c.b16 %v2707, %v2706
      %v2715 = vpack.c.b16 %v2709, %v2708
      %v2716 = vpack.c.b16 %v2711, %v2710
      %v2717 = vpack.c.b16 %v2713, %v2712
      %2718 = vrot.lane.b32.xlu0 %v2714, 24
      %v2719 = vpop.permute.xlu0 %2718
      %2720 = vrot.lane.b32.xlu0 %v2715, 24
      %v2721 = vpop.permute.xlu0 %2720
      %2722 = vrot.lane.b32.xlu0 %v2716, 24
      %v2723 = vpop.permute.xlu0 %2722
      %2724 = vrot.lane.b32.xlu0 %v2717, 24
      %v2725 = vpop.permute.xlu0 %2724
      %v2726 = vunpack.c.l.b16 %v2415
      %v2727 = vunpack.c.l.b16 %v2429
      %v2728 = vunpack.c.l.b16 %v2443
      %v2729 = vunpack.c.l.b16 %v2457
      %v2730 = vunpack.c.l.b16 %v2471
      %v2731 = vunpack.c.l.b16 %v2485
      %v2732 = vunpack.c.l.b16 %v2499
      %v2733 = vunpack.c.l.b16 %v2513
      %v2734 = vpack.c.b16 %v2727, %v2726
      %v2735 = vpack.c.b16 %v2729, %v2728
      %v2736 = vpack.c.b16 %v2731, %v2730
      %v2737 = vpack.c.b16 %v2733, %v2732
      %2738 = vrot.lane.b32.xlu0 %v2734, 28
      %v2739 = vpop.permute.xlu0 %2738
      %2740 = vrot.lane.b32.xlu0 %v2735, 28
      %v2741 = vpop.permute.xlu0 %2740
      %2742 = vrot.lane.b32.xlu0 %v2736, 28
      %v2743 = vpop.permute.xlu0 %2742
      %2744 = vrot.lane.b32.xlu0 %v2737, 28
      %v2745 = vpop.permute.xlu0 %2744
      %v2746 = vunpack.c.l.b16 %v2541
      %v2747 = vunpack.c.l.b16 %v2545
      %v2748 = vunpack.c.l.b16 %v2549
      %v2749 = vunpack.c.l.b16 %v2553
      %v2750 = vunpack.c.l.b16 %v2557
      %v2751 = vunpack.c.l.b16 %v2561
      %v2752 = vunpack.c.l.b16 %v2565
      %v2753 = vunpack.c.l.b16 %v2569
      %v2754 = vpack.c.b16 %v2747, %v2746
      %v2755 = vpack.c.b16 %v2749, %v2748
      %v2756 = vpack.c.b16 %v2751, %v2750
      %v2757 = vpack.c.b16 %v2753, %v2752
      %2758 = vrot.lane.b32.xlu0 %v2754, 32
      %v2759 = vpop.permute.xlu0 %2758
      %2760 = vrot.lane.b32.xlu0 %v2755, 32
      %v2761 = vpop.permute.xlu0 %2760
      %2762 = vrot.lane.b32.xlu0 %v2756, 32
      %v2763 = vpop.permute.xlu0 %2762
      %2764 = vrot.lane.b32.xlu0 %v2757, 32
      %v2765 = vpop.permute.xlu0 %2764
      %v2768 = vsel %vm983, %v2586, %v2603
      %v2771 = vsel %vm983, %v2587, %v2605
      %v2774 = vsel %vm983, %v2588, %v2607
      %v2777 = vsel %vm983, %v2589, %v2609
      %v2779 = vsel %vm996, %v2768, %v2623
      %v2781 = vsel %vm996, %v2771, %v2625
      %v2783 = vsel %vm996, %v2774, %v2627
      %v2785 = vsel %vm996, %v2777, %v2629
      %v2787 = vsel %vm1005, %v2779, %v2651
      %v2789 = vsel %vm1005, %v2781, %v2653
      %v2791 = vsel %vm1005, %v2783, %v2655
      %v2793 = vsel %vm1005, %v2785, %v2657
      %v2795 = vsel %vm1014, %v2787, %v2671
      %v2797 = vsel %vm1014, %v2789, %v2673
      %v2799 = vsel %vm1014, %v2791, %v2675
      %v2801 = vsel %vm1014, %v2793, %v2677
      %v2803 = vsel %vm1023, %v2795, %v2691
      %v2805 = vsel %vm1023, %v2797, %v2693
      %v2807 = vsel %vm1023, %v2799, %v2695
      %v2809 = vsel %vm1023, %v2801, %v2697
      %v2811 = vsel %vm1032, %v2803, %v2719
      %v2813 = vsel %vm1032, %v2805, %v2721
      %v2815 = vsel %vm1032, %v2807, %v2723
      %v2817 = vsel %vm1032, %v2809, %v2725
      %v2819 = vsel %vm1041, %v2811, %v2739
      %v2821 = vsel %vm1041, %v2813, %v2741
      %v2823 = vsel %vm1041, %v2815, %v2743
      %v2825 = vsel %vm1041, %v2817, %v2745
      %v2827 = vsel %vm1050, %v2819, %v2759
      %v2829 = vsel %vm1050, %v2821, %v2761
      %v2831 = vsel %vm1050, %v2823, %v2763
      %v2833 = vsel %vm1050, %v2825, %v2765
      %s2834 = scalar_lea.vmem %s1, 40
      %v2835 = vld [vmem:[%s2834] sm:$0xf]
      %v2836 = vld [vmem:[%s2834 + $0x4] sm:$0xf]
      %v2837 = vld [vmem:[%s2834 + $0x8] sm:$0xf]
      %v2838 = vld [vmem:[%s2834 + $0xc] sm:$0xf]
      %v2839 = vld [vmem:[%s2834 + $0x10] sm:$0x3]
      %v2845 = vunpack.c.l.b16 %v2835
      %v2846 = vunpack.c.l.b16 %v2836
      %v2847 = vunpack.c.l.b16 %v2837
      %v2848 = vunpack.c.l.b16 %v2838
      %v2849 = vunpack.c.l.b16 %v2839
      %v2850 = vpack.c.b16 %v2846, %v2845
      %v2851 = vpack.c.b16 %v2848, %v2847
      %v2852 = vpack.c.b16 %v2849, %v2849
      %v2855 = vsel %vm1911, %v2827, 0
      %v2857 = vsel %vm1911, %v2829, 0
      %v2859 = vsel %vm1911, %v2831, 0
      %v2861 = vsel %vm1911, %v2833, 0
      %v2864 = vsel %vm1920, %v2852, 0
      %2866 = vmatpush.bf16.msra.mxu0 0
      %2867 = vmatpush.bf16.msra.mxu0 0
      %2868 = vmatpush.bf16.msra.mxu0 0
      %2869 = vmatpush.bf16.msra.mxu0 0
      %2870 = vmatpush.bf16.msra.mxu0 0
      %2871 = vmatpush.bf16.msra.mxu0 %v2864
      %2872 = vmatpush.bf16.msra.mxu0 %v2851
      %2873 = vmatpush.bf16.msra.mxu0 %v2850
      %2874 = vmatmul.bf16.gmra.mxu0 %v2855
      %v2875 = vpop.f32.mrf.mxu0
      %v2876 = vadd.f32 0.0, %v2875
      %v2877 = vpop.f32.mrf.mxu0
      %v2878 = vadd.f32 0.0, %v2877
      %2879 = vmatmul.bf16.gmra.mxu0 %v2857
      %v2880 = vpop.f32.mrf.mxu0
      %v2881 = vadd.f32 0.0, %v2880
      %v2882 = vpop.f32.mrf.mxu0
      %v2883 = vadd.f32 0.0, %v2882
      %2884 = vmatmul.bf16.gmra.mxu0 %v2859
      %v2885 = vpop.f32.mrf.mxu0
      %v2886 = vadd.f32 0.0, %v2885
      %v2887 = vpop.f32.mrf.mxu0
      %v2888 = vadd.f32 0.0, %v2887
      %2889 = vmatmul.bf16.gmra.mxu0 %v2861
      %v2890 = vpop.f32.mrf.mxu0
      %v2891 = vadd.f32 0.0, %v2890
      %v2892 = vpop.f32.mrf.mxu0
      %v2893 = vadd.f32 0.0, %v2892
      %2894 = vdwg.mxu0
      %v2895 = vadd.f32 %v1989, %v2876
      %v2896 = vadd.f32 %v1991, %v2878
      %v2897 = vadd.f32 %v1994, %v2881
      %v2898 = vadd.f32 %v1996, %v2883
      %v2899 = vadd.f32 %v1999, %v2886
      %v2900 = vadd.f32 %v2001, %v2888
      %v2901 = vadd.f32 %v2004, %v2891
      %v2902 = vadd.f32 %v2006, %v2893
      %v2903 = vpack.c.bf16 %v2895, %v2895
      %v2904 = vpack.c.bf16 %v2896, %v2896
      %v2905 = vpack.c.bf16 %v2897, %v2897
      %v2906 = vpack.c.bf16 %v2898, %v2898
      %v2907 = vpack.c.bf16 %v2899, %v2899
      %v2908 = vpack.c.bf16 %v2900, %v2900
      %v2909 = vpack.c.bf16 %v2901, %v2901
      %v2910 = vpack.c.bf16 %v2902, %v2902
      %2911 = vst [vmem:[%s208] sm:$0xf] %v2903
      %2912 = vst [vmem:[%s208 + $0x4] sm:$0xf] %v2904
      %2913 = vst [vmem:[%s208 + $0x8] sm:$0xf] %v2905
      %2914 = vst [vmem:[%s208 + $0xc] sm:$0xf] %v2906
      %2915 = vst [vmem:[%s208 + $0x10] sm:$0xf] %v2907
      %2916 = vst [vmem:[%s208 + $0x14] sm:$0xf] %v2908
      %2917 = vst [vmem:[%s208 + $0x18] sm:$0xf] %v2909
      %2918 = vst [vmem:[%s208 + $0x1c] sm:$0xf] %v2910
      %v2919 = vadd.f32 %v2895, %v2896
      %v2920 = vadd.f32 %v2919, %v2897
      %v2921 = vadd.f32 %v2920, %v2898
      %v2922 = vadd.f32 %v2921, %v2899
      %v2923 = vadd.f32 %v2922, %v2900
      %v2924 = vadd.f32 %v2923, %v2901
      %v2925 = vadd.f32 %v2924, %v2902
      %v2926 = vrot.slane %v2925, 4
      %v2927 = vadd.f32 %v2925, %v2926
      %v2928 = vrot.slane %v2927, 2
      %v2929 = vadd.f32 %v2927, %v2928
      %v2930 = vrot.slane %v2929, 1
      %v2931 = vadd.f32 %v2929, %v2930
      %2932 = vst [vmem:[%s216] sm:$0x1] %v2931
      %v2933 = vmul.f32 %v2895, %v2895
      %v2934 = vmul.f32 %v2896, %v2896
      %v2935 = vmul.f32 %v2897, %v2897
      %v2936 = vmul.f32 %v2898, %v2898
      %v2937 = vmul.f32 %v2899, %v2899
      %v2938 = vmul.f32 %v2900, %v2900
      %v2939 = vmul.f32 %v2901, %v2901
      %v2940 = vmul.f32 %v2902, %v2902
      %v2941 = vadd.f32 %v2933, %v2934
      %v2942 = vadd.f32 %v2941, %v2935
      %v2943 = vadd.f32 %v2942, %v2936
      %v2944 = vadd.f32 %v2943, %v2937
      %v2945 = vadd.f32 %v2944, %v2938
      %v2946 = vadd.f32 %v2945, %v2939
      %v2947 = vadd.f32 %v2946, %v2940
      %v2948 = vrot.slane %v2947, 4
      %v2949 = vadd.f32 %v2947, %v2948
      %v2950 = vrot.slane %v2949, 2
      %v2951 = vadd.f32 %v2949, %v2950
      %v2952 = vrot.slane %v2951, 1
      %v2953 = vadd.f32 %v2951, %v2952
      %2954 = vst [vmem:[%s216 + $0x1] sm:$0x1] %v2953
      %s2955 = smul.u32 %s19, 8
      %s2956 = sadd.s32 %s2955, %s20
      %p2957 = scmp.lt.s32.totalorder %s2956, 15
      %s2958 = scalar_select %p2957, %s2956, 15
      %s2959 = smul.addr %s2958, 8
      %s2960 = smul.addr %s2959, 4
      %s2961 = scalar_lea.vmem %s2, %s2960
      %s2962 = smul.u32 %s19, 8
      %s2963 = sadd.s32 %s2962, %s20
      %p2964 = scmp.lt.s32.totalorder %s2963, 15
      %s2965 = scalar_select %p2964, %s2963, 15
      %s2966 = smul.addr %s2965, 2
      %s2967 = scalar_lea.vmem %s3, %s2966
      // Predicated region
      $region29: #{basic_block3d_pallas.6} parent=27 // pred_check
        %p2968 = pneg %p96
      $region30: #{basic_block3d_pallas.6} parent=27 // pred_check_branch
        %2970 = sbr.rel (%p2968) target = $region32
      $region31: #{basic_block3d_pallas.6} parent=27 // pred_region
        %s2971 = smul.u32 %s19, 8
        %s2972 = sadd.s32 %s2971, %s20
      $region32: #{basic_block3d_pallas.6} parent=27 // pred_fallthru
        _
      // Predicated region
      $region33: #{basic_block3d_pallas.6} parent=27 // pred_check
        %p2973 = pneg %p126
      $region34: #{basic_block3d_pallas.6} parent=27 // pred_check_branch
        %2975 = sbr.rel (%p2973) target = $region36
      $region35: #{basic_block3d_pallas.6} parent=27 // pred_region
        %s2976 = smul.u32 %s19, 8
        %s2977 = sadd.s32 %s2976, %s20
      $region36: #{basic_block3d_pallas.6} parent=27 // pred_fallthru
        _
    $region28: #{basic_block3d_pallas.6} parent=5 // pred_fallthru
      _
    %p2978 = scmp.le.s32.totalorder 2, %s10
    // Predicated region
    $region37: #{basic_block3d_pallas.6} parent=5 // pred_check
      %p2979 = pneg %p2978
    $region38: #{basic_block3d_pallas.6} parent=5 // pred_check_branch
      %2981 = sbr.rel (%p2979) target = $region40
    $region39: #{basic_block3d_pallas.6} parent=5 // pred_region
      %s2982 = ssub.s32 %s10, 2
      // Predicated region
      $region41: #{basic_block3d_pallas.6} parent=39 // pred_check
        %p2983 = pneg %p102
      $region42: #{basic_block3d_pallas.6} parent=39 // pred_check_branch
        %2985 = sbr.rel (%p2983) target = $region44
      $region43: #{basic_block3d_pallas.6} parent=39 // pred_region
        %s2986 = smul.u32 %s21, 8
        %s2987 = sadd.s32 %s2986, %s22
        %p2988 = scmp.lt.s32.totalorder %s2987, 15
        %s2989 = scalar_select %p2988, %s2987, 15
        %s2990 = smul.addr %s2989, 8
        %s2991 = smul.addr %s2990, 4
        %s2992 = scalar_lea.vmem %s2, %s2991
      $region44: #{basic_block3d_pallas.6} parent=39 // pred_fallthru
        _
      // Predicated region
      $region45: #{basic_block3d_pallas.6} parent=39 // pred_check
        %p2993 = pneg %p132
      $region46: #{basic_block3d_pallas.6} parent=39 // pred_check_branch
        %2995 = sbr.rel (%p2993) target = $region48
      $region47: #{basic_block3d_pallas.6} parent=39 // pred_region
        %s2996 = smul.u32 %s21, 8
        %s2997 = sadd.s32 %s2996, %s22
        %p2998 = scmp.lt.s32.totalorder %s2997, 15
        %s2999 = scalar_select %p2998, %s2997, 15
        %s3000 = smul.addr %s2999, 2
        %s3001 = scalar_lea.vmem %s3, %s3000
      $region48: #{basic_block3d_pallas.6} parent=39 // pred_fallthru
        _
    $region40: #{basic_block3d_pallas.6} parent=5 // pred_fallthru
      _
  $region6: #{basic_block3d_pallas.6} parent=0 // loop_footer
    %s14 = sadd.s32 1, %s10
  $region7: #{basic_block3d_pallas.6} parent=0 // loop_footer_branch
    %9 = sbr.rel target = $region3
  $region8: #{basic_block3d_pallas.6} parent=0 // loop_exit
    _

// kernel: basic_block3d_pallas.11
$region0: #{basic_block3d_pallas.11}
  #allocation0 [shape = 'u32[]', space=smem, size = 0x4, offset = 0x4, fixed_abs, tag = 'smem constant byte address 0x4 - core index']
  #allocation1 [shape = 'u32[72,128]{1,0:T(1,128)}', space=vmem, size = 0x9000, scoped, tag = 'internal scratch']
  %s0 = inlined_call_operand.vmem [shape: bf16[16,64,128], index: 0, kind: input, shape index: {}]
  %s1 = inlined_call_operand.vmem [shape: f32[1,1,128], index: 1, kind: input, shape index: {}]
  %s2 = inlined_call_operand.vmem [shape: f32[1,1,128], index: 2, kind: input, shape index: {}]
  %s3 = inlined_call_operand.vmem [shape: bf16[16,64,128], index: 3, kind: input, shape index: {}]
  %s4 = inlined_call_operand.vmem [shape: f32[16,64,128], index: 4, kind: output, shape index: {}]
  %s5 = sld [smem:[#allocation0]]
  $region49: #{basic_block3d_pallas.11} parent=0
    _
  %s7 = ssub.s32 1, %s5
  %s8 = scalar_select 0, %s7, %s5
  loop: start=0, step=1, limit=4
  $region2: #{basic_block3d_pallas.11} parent=0 // loop_pre_header
    _
  $region3: #{basic_block3d_pallas.11} parent=0 // loop_header
    %s10 = sphi 0, %s14
    %p11 = scmp.ge.s32.totalorder %s10, 4
    %s20 = sphi 0, %s22
    %s23 = sphi 0, %s20
    %s24 = sphi 0, %s23
    %s40 = sphi 0, %s24
    %s44 = sphi 0, %s44
    %s46 = sphi 0, %s44
    %s47 = sphi 0, %s46
    %s61 = sphi 0, %s47
    %s65 = sphi 0, %s65
    %s67 = sphi 0, %s65
    %s68 = sphi 0, %s67
    %s82 = sphi 0, %s68
    %s88 = sphi 0, %s90
    %s91 = sphi 0, %s88
    %s92 = sphi 0, %s91
    %s108 = sphi 0, %s92
    %s114 = sphi 0, %s116
    %s117 = sphi 0, %s114
    %s118 = sphi 0, %s117
    %s134 = sphi 0, %s118
  $region4: #{basic_block3d_pallas.11} parent=0 // loop_header_branch
    %13 = sbr.rel (%p11) target = $region8
  $region5: #{basic_block3d_pallas.11} parent=0 // loop_body
    %s15 = ssub.s32 %s10, 1
    %s16 = ssub.s32 %s10, 2
    %s17 = sadd.s32 %s10, 1
    %s18 = ssub.s32 %s10, %s17
    %p19 = scmp.eq.s32.totalorder %s18, 0
    %s21 = sadd.s32 %s20, 1
    %s22 = scalar_select %p19, %s20, %s21
    %p25 = pneg %p19
    %p26 = scmp.eq.s32.totalorder %s10, 1
    %p27 = por %p25, %p26
    %p28 = scmp.ne.s32.totalorder %s20, %s23
    %p29 = scmp.eq.s32.totalorder %s10, 0
    %p30 = por %p28, %p29
    %p31 = scmp.ne.s32.totalorder %s20, %s23
    %p32 = scmp.eq.s32.totalorder %s15, 1
    %p33 = por %p31, %p32
    %p34 = scmp.ne.s32.totalorder %s23, %s24
    %p35 = scmp.eq.s32.totalorder %s15, 0
    %p36 = por %p34, %p35
    %p37 = scmp.ne.s32.totalorder %s23, %s24
    %p38 = scmp.eq.s32.totalorder %s16, 1
    %p39 = por %p37, %p38
    %p41 = scmp.ne.s32.totalorder %s24, %s40
    %p42 = scmp.eq.s32.totalorder %s16, 0
    %p43 = por %p41, %p42
    %s45 = sadd.s32 %s44, 1
    %p48 = scmp.eq.s32.totalorder %s10, 1
    %p49 = scmp.ne.s32.totalorder %s44, %s46
    %p50 = scmp.eq.s32.totalorder %s10, 0
    %p51 = por %p49, %p50
    %p52 = scmp.ne.s32.totalorder %s44, %s46
    %p53 = scmp.eq.s32.totalorder %s15, 1
    %p54 = por %p52, %p53
    %p55 = scmp.ne.s32.totalorder %s46, %s47
    %p56 = scmp.eq.s32.totalorder %s15, 0
    %p57 = por %p55, %p56
    %p58 = scmp.ne.s32.totalorder %s46, %s47
    %p59 = scmp.eq.s32.totalorder %s16, 1
    %p60 = por %p58, %p59
    %p62 = scmp.ne.s32.totalorder %s47, %s61
    %p63 = scmp.eq.s32.totalorder %s16, 0
    %p64 = por %p62, %p63
    %s66 = sadd.s32 %s65, 1
    %p69 = scmp.eq.s32.totalorder %s10, 1
    %p70 = scmp.ne.s32.totalorder %s65, %s67
    %p71 = scmp.eq.s32.totalorder %s10, 0
    %p72 = por %p70, %p71
    %p73 = scmp.ne.s32.totalorder %s65, %s67
    %p74 = scmp.eq.s32.totalorder %s15, 1
    %p75 = por %p73, %p74
    %p76 = scmp.ne.s32.totalorder %s67, %s68
    %p77 = scmp.eq.s32.totalorder %s15, 0
    %p78 = por %p76, %p77
    %p79 = scmp.ne.s32.totalorder %s67, %s68
    %p80 = scmp.eq.s32.totalorder %s16, 1
    %p81 = por %p79, %p80
    %p83 = scmp.ne.s32.totalorder %s68, %s82
    %p84 = scmp.eq.s32.totalorder %s16, 0
    %p85 = por %p83, %p84
    %s86 = ssub.s32 %s10, %s17
    %p87 = scmp.eq.s32.totalorder %s86, 0
    %s89 = sadd.s32 %s88, 1
    %s90 = scalar_select %p87, %s88, %s89
    %p93 = pneg %p87
    %p94 = scmp.eq.s32.totalorder %s10, 1
    %p95 = por %p93, %p94
    %p96 = scmp.ne.s32.totalorder %s88, %s91
    %p97 = scmp.eq.s32.totalorder %s10, 0
    %p98 = por %p96, %p97
    %p99 = scmp.ne.s32.totalorder %s88, %s91
    %p100 = scmp.eq.s32.totalorder %s15, 1
    %p101 = por %p99, %p100
    %p102 = scmp.ne.s32.totalorder %s91, %s92
    %p103 = scmp.eq.s32.totalorder %s15, 0
    %p104 = por %p102, %p103
    %p105 = scmp.ne.s32.totalorder %s91, %s92
    %p106 = scmp.eq.s32.totalorder %s16, 1
    %p107 = por %p105, %p106
    %p109 = scmp.ne.s32.totalorder %s92, %s108
    %p110 = scmp.eq.s32.totalorder %s16, 0
    %p111 = por %p109, %p110
    %s112 = ssub.s32 %s10, %s17
    %p113 = scmp.eq.s32.totalorder %s112, 0
    %s115 = sadd.s32 %s114, 1
    %s116 = scalar_select %p113, %s114, %s115
    %p119 = pneg %p113
    %p120 = scmp.eq.s32.totalorder %s10, 1
    %p121 = por %p119, %p120
    %p122 = scmp.ne.s32.totalorder %s114, %s117
    %p123 = scmp.eq.s32.totalorder %s10, 0
    %p124 = por %p122, %p123
    %p125 = scmp.ne.s32.totalorder %s114, %s117
    %p126 = scmp.eq.s32.totalorder %s15, 1
    %p127 = por %p125, %p126
    %p128 = scmp.ne.s32.totalorder %s117, %s118
    %p129 = scmp.eq.s32.totalorder %s15, 0
    %p130 = por %p128, %p129
    %p131 = scmp.ne.s32.totalorder %s117, %s118
    %p132 = scmp.eq.s32.totalorder %s16, 1
    %p133 = por %p131, %p132
    %p135 = scmp.ne.s32.totalorder %s118, %s134
    %p136 = scmp.eq.s32.totalorder %s16, 0
    %p137 = por %p135, %p136
    %p138 = scmp.le.s32.totalorder 1, %s10
    %p139 = scmp.lt.s32.totalorder %s10, 3
    %p140 = pnand %p138, %p139
    %p141 = pneg %p140
    // Predicated region
    $region9: #{basic_block3d_pallas.11} parent=5 // pred_check
      _
    $region10: #{basic_block3d_pallas.11} parent=5 // pred_check_branch
      %143 = sbr.rel (%p140) target = $region12
    $region11: #{basic_block3d_pallas.11} parent=5 // pred_region
      %s144 = ssub.s32 %s10, 1
      // Predicated region
      $region13: #{basic_block3d_pallas.11} parent=11 // pred_check
        %p145 = pneg %p57
      $region14: #{basic_block3d_pallas.11} parent=11 // pred_check_branch
        %147 = sbr.rel (%p145) target = $region16
      $region15: #{basic_block3d_pallas.11} parent=11 // pred_region
        _
      $region16: #{basic_block3d_pallas.11} parent=11 // pred_fallthru
        _
      // Predicated region
      $region17: #{basic_block3d_pallas.11} parent=11 // pred_check
        %p148 = pneg %p78
      $region18: #{basic_block3d_pallas.11} parent=11 // pred_check_branch
        %150 = sbr.rel (%p148) target = $region20
      $region19: #{basic_block3d_pallas.11} parent=11 // pred_region
        _
      $region20: #{basic_block3d_pallas.11} parent=11 // pred_fallthru
        _
    $region12: #{basic_block3d_pallas.11} parent=5 // pred_fallthru
      _
    %p151 = scmp.lt.s32.totalorder %s10, 2
    // Predicated region
    $region21: #{basic_block3d_pallas.11} parent=5 // pred_check
      %p152 = pneg %p151
    $region22: #{basic_block3d_pallas.11} parent=5 // pred_check_branch
      %154 = sbr.rel (%p152) target = $region24
    $region23: #{basic_block3d_pallas.11} parent=5 // pred_region
      // Predicated region
      $region25: #{basic_block3d_pallas.11} parent=23 // pred_check
        %p155 = pneg %p30
      $region26: #{basic_block3d_pallas.11} parent=23 // pred_check_branch
        %157 = sbr.rel (%p155) target = $region28
      $region27: #{basic_block3d_pallas.11} parent=23 // pred_region
        %s158 = smul.u32 8, %s10
        %p159 = scmp.lt.s32.totalorder %s158, 15
        %s160 = scalar_select %p159, %s158, 15
        %s161 = smul.addr %s160, 8
        %s162 = smul.addr %s161, 4
        %s163 = scalar_lea.vmem %s0, %s162
        %s164 = smul.u32 8, %s10
      $region28: #{basic_block3d_pallas.11} parent=23 // pred_fallthru
        _
      // Predicated region
      $region29: #{basic_block3d_pallas.11} parent=23 // pred_check
        %p165 = pneg %p98
      $region30: #{basic_block3d_pallas.11} parent=23 // pred_check_branch
        %167 = sbr.rel (%p165) target = $region32
      $region31: #{basic_block3d_pallas.11} parent=23 // pred_region
        %s168 = smul.u32 8, %s10
        %p169 = scmp.lt.s32.totalorder %s168, 15
        %s170 = scalar_select %p169, %s168, 15
        %s171 = smul.addr %s170, 8
        %s172 = smul.addr %s171, 4
        %s173 = scalar_lea.vmem %s3, %s172
        %s174 = smul.u32 8, %s10
      $region32: #{basic_block3d_pallas.11} parent=23 // pred_fallthru
        _
    $region24: #{basic_block3d_pallas.11} parent=5 // pred_fallthru
      _
    %p175 = scmp.le.s32.totalorder 1, %s10
    %p176 = scmp.lt.s32.totalorder %s10, 3
    %p177 = pnand %p175, %p176
    %p178 = pneg %p177
    // Predicated region
    $region33: #{basic_block3d_pallas.11} parent=5 // pred_check
      _
    $region34: #{basic_block3d_pallas.11} parent=5 // pred_check_branch
      %180 = sbr.rel (%p177) target = $region36
    $region35: #{basic_block3d_pallas.11} parent=5 // pred_region
      %s181 = ssub.s32 %s10, 1
      %s182 = smul.u32 8, %s15
      %p183 = scmp.lt.s32.totalorder %s182, 15
      %s184 = scalar_select %p183, %s182, 15
      %s185 = smul.addr %s184, 8
      %s186 = smul.addr %s185, 4
      %s187 = scalar_lea.vmem %s0, %s186
      %p188 = pneg %p36
      %p189 = pneg %p33
      %p190 = pneg %p57
      %p191 = pneg %p54
      %p192 = pneg %p78
      %p193 = pneg %p75
      %s194 = smul.u32 8, %s15
      %p195 = scmp.lt.s32.totalorder %s194, 15
      %s196 = scalar_select %p195, %s194, 15
      %s197 = smul.addr %s196, 8
      %s198 = smul.addr %s197, 4
      %s199 = scalar_lea.vmem %s3, %s198
      %p200 = pneg %p104
      %p201 = pneg %p101
      %p202 = pneg %p130
      %p203 = pneg %p127
      %s204 = smul.u32 8, %s15
      %p205 = scmp.lt.s32.totalorder %s204, 15
      %s206 = scalar_select %p205, %s204, 15
      %s207 = smul.addr %s206, 8
      %s208 = smul.addr %s207, 8
      %s209 = scalar_lea.vmem %s4, %s208
      %s210 = smul.u32 8, %s15
      %p211 = scmp.lt.s32.totalorder %s210, 15
      %s212 = scalar_select %p211, %s210, 15
      %s213 = smul.addr %s212, 8
      %s214 = smul.addr %s213, 4
      %s215 = scalar_lea.vmem %s0, %s214
      %s216 = smul.u32 8, %s15
      %s217 = smul.u32 8, %s15
      %p218 = scmp.lt.s32.totalorder %s217, 15
      %s219 = scalar_select %p218, %s217, 15
      %s220 = smul.addr %s219, 8
      %s221 = smul.addr %s220, 4
      %s222 = scalar_lea.vmem %s3, %s221
      %s223 = smul.u32 8, %s15
      %s224 = smul.u32 8, %s15
      %p225 = scmp.lt.s32.totalorder %s224, 15
      %s226 = scalar_select %p225, %s224, 15
      %s227 = smul.addr %s226, 8
      %s228 = smul.addr %s227, 8
      %s229 = scalar_lea.vmem %s4, %s228
      %s230 = smul.u32 8, %s15
      %v231 = vld [vmem:[%s215] sm:$0xf]
      %v232 = vld [vmem:[%s215 + $0x4] sm:$0xf]
      %v233 = vld [vmem:[%s215 + $0x8] sm:$0xf]
      %v234 = vld [vmem:[%s215 + $0xc] sm:$0xf]
      %v235 = vld [vmem:[%s215 + $0x10] sm:$0xf]
      %v236 = vld [vmem:[%s215 + $0x14] sm:$0xf]
      %v237 = vld [vmem:[%s215 + $0x18] sm:$0xf]
      %v238 = vld [vmem:[%s215 + $0x1c] sm:$0xf]
      %v239 = vld [vmem:[%s215 + $0x20] sm:$0xf]
      %v240 = vld [vmem:[%s215 + $0x24] sm:$0xf]
      %v241 = vld [vmem:[%s215 + $0x28] sm:$0xf]
      %v242 = vld [vmem:[%s215 + $0x2c] sm:$0xf]
      %v243 = vld [vmem:[%s215 + $0x30] sm:$0xf]
      %v244 = vld [vmem:[%s215 + $0x34] sm:$0xf]
      %v245 = vld [vmem:[%s215 + $0x38] sm:$0xf]
      %v246 = vld [vmem:[%s215 + $0x3c] sm:$0xf]
      %v247 = vld [vmem:[%s215 + $0x40] sm:$0xf]
      %v248 = vld [vmem:[%s215 + $0x44] sm:$0xf]
      %v249 = vld [vmem:[%s215 + $0x48] sm:$0xf]
      %v250 = vld [vmem:[%s215 + $0x4c] sm:$0xf]
      %v251 = vld [vmem:[%s215 + $0x50] sm:$0xf]
      %v252 = vld [vmem:[%s215 + $0x54] sm:$0xf]
      %v253 = vld [vmem:[%s215 + $0x58] sm:$0xf]
      %v254 = vld [vmem:[%s215 + $0x5c] sm:$0xf]
      %v255 = vld [vmem:[%s215 + $0x60] sm:$0xf]
      %v256 = vld [vmem:[%s215 + $0x64] sm:$0xf]
      %v257 = vld [vmem:[%s215 + $0x68] sm:$0xf]
      %v258 = vld [vmem:[%s215 + $0x6c] sm:$0xf]
      %v259 = vld [vmem:[%s215 + $0x70] sm:$0xf]
      %v260 = vld [vmem:[%s215 + $0x74] sm:$0xf]
      %v261 = vld [vmem:[%s215 + $0x78] sm:$0xf]
      %v262 = vld [vmem:[%s215 + $0x7c] sm:$0xf]
      %v263 = vld [vmem:[%s215 + $0x80] sm:$0xf]
      %v264 = vld [vmem:[%s215 + $0x84] sm:$0xf]
      %v265 = vld [vmem:[%s215 + $0x88] sm:$0xf]
      %v266 = vld [vmem:[%s215 + $0x8c] sm:$0xf]
      %v267 = vld [vmem:[%s215 + $0x90] sm:$0xf]
      %v268 = vld [vmem:[%s215 + $0x94] sm:$0xf]
      %v269 = vld [vmem:[%s215 + $0x98] sm:$0xf]
      %v270 = vld [vmem:[%s215 + $0x9c] sm:$0xf]
      %v271 = vld [vmem:[%s215 + $0xa0] sm:$0xf]
      %v272 = vld [vmem:[%s215 + $0xa4] sm:$0xf]
      %v273 = vld [vmem:[%s215 + $0xa8] sm:$0xf]
      %v274 = vld [vmem:[%s215 + $0xac] sm:$0xf]
      %v275 = vld [vmem:[%s215 + $0xb0] sm:$0xf]
      %v276 = vld [vmem:[%s215 + $0xb4] sm:$0xf]
      %v277 = vld [vmem:[%s215 + $0xb8] sm:$0xf]
      %v278 = vld [vmem:[%s215 + $0xbc] sm:$0xf]
      %v279 = vld [vmem:[%s215 + $0xc0] sm:$0xf]
      %v280 = vld [vmem:[%s215 + $0xc4] sm:$0xf]
      %v281 = vld [vmem:[%s215 + $0xc8] sm:$0xf]
      %v282 = vld [vmem:[%s215 + $0xcc] sm:$0xf]
      %v283 = vld [vmem:[%s215 + $0xd0] sm:$0xf]
      %v284 = vld [vmem:[%s215 + $0xd4] sm:$0xf]
      %v285 = vld [vmem:[%s215 + $0xd8] sm:$0xf]
      %v286 = vld [vmem:[%s215 + $0xdc] sm:$0xf]
      %v287 = vld [vmem:[%s215 + $0xe0] sm:$0xf]
      %v288 = vld [vmem:[%s215 + $0xe4] sm:$0xf]
      %v289 = vld [vmem:[%s215 + $0xe8] sm:$0xf]
      %v290 = vld [vmem:[%s215 + $0xec] sm:$0xf]
      %v291 = vld [vmem:[%s215 + $0xf0] sm:$0xf]
      %v292 = vld [vmem:[%s215 + $0xf4] sm:$0xf]
      %v293 = vld [vmem:[%s215 + $0xf8] sm:$0xf]
      %v294 = vld [vmem:[%s215 + $0xfc] sm:$0xf]
      %v295 = vunpack.c.l.bf16 %v231
      %v296 = vunpack.c.l.bf16 %v232
      %v297 = vunpack.c.l.bf16 %v233
      %v298 = vunpack.c.l.bf16 %v234
      %v299 = vunpack.c.l.bf16 %v235
      %v300 = vunpack.c.l.bf16 %v236
      %v301 = vunpack.c.l.bf16 %v237
      %v302 = vunpack.c.l.bf16 %v238
      %v303 = vunpack.c.l.bf16 %v239
      %v304 = vunpack.c.l.bf16 %v240
      %v305 = vunpack.c.l.bf16 %v241
      %v306 = vunpack.c.l.bf16 %v242
      %v307 = vunpack.c.l.bf16 %v243
      %v308 = vunpack.c.l.bf16 %v244
      %v309 = vunpack.c.l.bf16 %v245
      %v310 = vunpack.c.l.bf16 %v246
      %v311 = vunpack.c.l.bf16 %v247
      %v312 = vunpack.c.l.bf16 %v248
      %v313 = vunpack.c.l.bf16 %v249
      %v314 = vunpack.c.l.bf16 %v250
      %v315 = vunpack.c.l.bf16 %v251
      %v316 = vunpack.c.l.bf16 %v252
      %v317 = vunpack.c.l.bf16 %v253
      %v318 = vunpack.c.l.bf16 %v254
      %v319 = vunpack.c.l.bf16 %v255
      %v320 = vunpack.c.l.bf16 %v256
      %v321 = vunpack.c.l.bf16 %v257
      %v322 = vunpack.c.l.bf16 %v258
      %v323 = vunpack.c.l.bf16 %v259
      %v324 = vunpack.c.l.bf16 %v260
      %v325 = vunpack.c.l.bf16 %v261
      %v326 = vunpack.c.l.bf16 %v262
      %v327 = vunpack.c.l.bf16 %v263
      %v328 = vunpack.c.l.bf16 %v264
      %v329 = vunpack.c.l.bf16 %v265
      %v330 = vunpack.c.l.bf16 %v266
      %v331 = vunpack.c.l.bf16 %v267
      %v332 = vunpack.c.l.bf16 %v268
      %v333 = vunpack.c.l.bf16 %v269
      %v334 = vunpack.c.l.bf16 %v270
      %v335 = vunpack.c.l.bf16 %v271
      %v336 = vunpack.c.l.bf16 %v272
      %v337 = vunpack.c.l.bf16 %v273
      %v338 = vunpack.c.l.bf16 %v274
      %v339 = vunpack.c.l.bf16 %v275
      %v340 = vunpack.c.l.bf16 %v276
      %v341 = vunpack.c.l.bf16 %v277
      %v342 = vunpack.c.l.bf16 %v278
      %v343 = vunpack.c.l.bf16 %v279
      %v344 = vunpack.c.l.bf16 %v280
      %v345 = vunpack.c.l.bf16 %v281
      %v346 = vunpack.c.l.bf16 %v282
      %v347 = vunpack.c.l.bf16 %v283
      %v348 = vunpack.c.l.bf16 %v284
      %v349 = vunpack.c.l.bf16 %v285
      %v350 = vunpack.c.l.bf16 %v286
      %v351 = vunpack.c.l.bf16 %v287
      %v352 = vunpack.c.l.bf16 %v288
      %v353 = vunpack.c.l.bf16 %v289
      %v354 = vunpack.c.l.bf16 %v290
      %v355 = vunpack.c.l.bf16 %v291
      %v356 = vunpack.c.l.bf16 %v292
      %v357 = vunpack.c.l.bf16 %v293
      %v358 = vunpack.c.l.bf16 %v294
      %v359 = vld [vmem:[%s1] sm:$0x1]
      %v361 = vperm.slane %v359, 0
      %v363 = vmul.f32 %v295, %v361
      %v364 = vmul.f32 %v296, %v361
      %v365 = vmul.f32 %v297, %v361
      %v366 = vmul.f32 %v298, %v361
      %v367 = vmul.f32 %v299, %v361
      %v368 = vmul.f32 %v300, %v361
      %v369 = vmul.f32 %v301, %v361
      %v370 = vmul.f32 %v302, %v361
      %v371 = vmul.f32 %v303, %v361
      %v372 = vmul.f32 %v304, %v361
      %v373 = vmul.f32 %v305, %v361
      %v374 = vmul.f32 %v306, %v361
      %v375 = vmul.f32 %v307, %v361
      %v376 = vmul.f32 %v308, %v361
      %v377 = vmul.f32 %v309, %v361
      %v378 = vmul.f32 %v310, %v361
      %v379 = vmul.f32 %v311, %v361
      %v380 = vmul.f32 %v312, %v361
      %v381 = vmul.f32 %v313, %v361
      %v382 = vmul.f32 %v314, %v361
      %v383 = vmul.f32 %v315, %v361
      %v384 = vmul.f32 %v316, %v361
      %v385 = vmul.f32 %v317, %v361
      %v386 = vmul.f32 %v318, %v361
      %v387 = vmul.f32 %v319, %v361
      %v388 = vmul.f32 %v320, %v361
      %v389 = vmul.f32 %v321, %v361
      %v390 = vmul.f32 %v322, %v361
      %v391 = vmul.f32 %v323, %v361
      %v392 = vmul.f32 %v324, %v361
      %v393 = vmul.f32 %v325, %v361
      %v394 = vmul.f32 %v326, %v361
      %v395 = vmul.f32 %v327, %v361
      %v396 = vmul.f32 %v328, %v361
      %v397 = vmul.f32 %v329, %v361
      %v398 = vmul.f32 %v330, %v361
      %v399 = vmul.f32 %v331, %v361
      %v400 = vmul.f32 %v332, %v361
      %v401 = vmul.f32 %v333, %v361
      %v402 = vmul.f32 %v334, %v361
      %v403 = vmul.f32 %v335, %v361
      %v404 = vmul.f32 %v336, %v361
      %v405 = vmul.f32 %v337, %v361
      %v406 = vmul.f32 %v338, %v361
      %v407 = vmul.f32 %v339, %v361
      %v408 = vmul.f32 %v340, %v361
      %v409 = vmul.f32 %v341, %v361
      %v410 = vmul.f32 %v342, %v361
      %v411 = vmul.f32 %v343, %v361
      %v412 = vmul.f32 %v344, %v361
      %v413 = vmul.f32 %v345, %v361
      %v414 = vmul.f32 %v346, %v361
      %v415 = vmul.f32 %v347, %v361
      %v416 = vmul.f32 %v348, %v361
      %v417 = vmul.f32 %v349, %v361
      %v418 = vmul.f32 %v350, %v361
      %v419 = vmul.f32 %v351, %v361
      %v420 = vmul.f32 %v352, %v361
      %v421 = vmul.f32 %v353, %v361
      %v422 = vmul.f32 %v354, %v361
      %v423 = vmul.f32 %v355, %v361
      %v424 = vmul.f32 %v356, %v361
      %v425 = vmul.f32 %v357, %v361
      %v426 = vmul.f32 %v358, %v361
      %v427 = vld [vmem:[%s2] sm:$0x1]
      %v429 = vperm.slane %v427, 0
      %v431 = vadd.f32 %v363, %v429
      %v432 = vadd.f32 %v364, %v429
      %v433 = vadd.f32 %v365, %v429
      %v434 = vadd.f32 %v366, %v429
      %v435 = vadd.f32 %v367, %v429
      %v436 = vadd.f32 %v368, %v429
      %v437 = vadd.f32 %v369, %v429
      %v438 = vadd.f32 %v370, %v429
      %v439 = vadd.f32 %v371, %v429
      %v440 = vadd.f32 %v372, %v429
      %v441 = vadd.f32 %v373, %v429
      %v442 = vadd.f32 %v374, %v429
      %v443 = vadd.f32 %v375, %v429
      %v444 = vadd.f32 %v376, %v429
      %v445 = vadd.f32 %v377, %v429
      %v446 = vadd.f32 %v378, %v429
      %v447 = vadd.f32 %v379, %v429
      %v448 = vadd.f32 %v380, %v429
      %v449 = vadd.f32 %v381, %v429
      %v450 = vadd.f32 %v382, %v429
      %v451 = vadd.f32 %v383, %v429
      %v452 = vadd.f32 %v384, %v429
      %v453 = vadd.f32 %v385, %v429
      %v454 = vadd.f32 %v386, %v429
      %v455 = vadd.f32 %v387, %v429
      %v456 = vadd.f32 %v388, %v429
      %v457 = vadd.f32 %v389, %v429
      %v458 = vadd.f32 %v390, %v429
      %v459 = vadd.f32 %v391, %v429
      %v460 = vadd.f32 %v392, %v429
      %v461 = vadd.f32 %v393, %v429
      %v462 = vadd.f32 %v394, %v429
      %v463 = vadd.f32 %v395, %v429
      %v464 = vadd.f32 %v396, %v429
      %v465 = vadd.f32 %v397, %v429
      %v466 = vadd.f32 %v398, %v429
      %v467 = vadd.f32 %v399, %v429
      %v468 = vadd.f32 %v400, %v429
      %v469 = vadd.f32 %v401, %v429
      %v470 = vadd.f32 %v402, %v429
      %v471 = vadd.f32 %v403, %v429
      %v472 = vadd.f32 %v404, %v429
      %v473 = vadd.f32 %v405, %v429
      %v474 = vadd.f32 %v406, %v429
      %v475 = vadd.f32 %v407, %v429
      %v476 = vadd.f32 %v408, %v429
      %v477 = vadd.f32 %v409, %v429
      %v478 = vadd.f32 %v410, %v429
      %v479 = vadd.f32 %v411, %v429
      %v480 = vadd.f32 %v412, %v429
      %v481 = vadd.f32 %v413, %v429
      %v482 = vadd.f32 %v414, %v429
      %v483 = vadd.f32 %v415, %v429
      %v484 = vadd.f32 %v416, %v429
      %v485 = vadd.f32 %v417, %v429
      %v486 = vadd.f32 %v418, %v429
      %v487 = vadd.f32 %v419, %v429
      %v488 = vadd.f32 %v420, %v429
      %v489 = vadd.f32 %v421, %v429
      %v490 = vadd.f32 %v422, %v429
      %v491 = vadd.f32 %v423, %v429
      %v492 = vadd.f32 %v424, %v429
      %v493 = vadd.f32 %v425, %v429
      %v494 = vadd.f32 %v426, %v429
      %v495 = vld [vmem:[%s222] sm:$0xf]
      %v496 = vld [vmem:[%s222 + $0x4] sm:$0xf]
      %v497 = vld [vmem:[%s222 + $0x8] sm:$0xf]
      %v498 = vld [vmem:[%s222 + $0xc] sm:$0xf]
      %v499 = vld [vmem:[%s222 + $0x10] sm:$0xf]
      %v500 = vld [vmem:[%s222 + $0x14] sm:$0xf]
      %v501 = vld [vmem:[%s222 + $0x18] sm:$0xf]
      %v502 = vld [vmem:[%s222 + $0x1c] sm:$0xf]
      %v503 = vld [vmem:[%s222 + $0x20] sm:$0xf]
      %v504 = vld [vmem:[%s222 + $0x24] sm:$0xf]
      %v505 = vld [vmem:[%s222 + $0x28] sm:$0xf]
      %v506 = vld [vmem:[%s222 + $0x2c] sm:$0xf]
      %v507 = vld [vmem:[%s222 + $0x30] sm:$0xf]
      %v508 = vld [vmem:[%s222 + $0x34] sm:$0xf]
      %v509 = vld [vmem:[%s222 + $0x38] sm:$0xf]
      %v510 = vld [vmem:[%s222 + $0x3c] sm:$0xf]
      %v511 = vld [vmem:[%s222 + $0x40] sm:$0xf]
      %v512 = vld [vmem:[%s222 + $0x44] sm:$0xf]
      %v513 = vld [vmem:[%s222 + $0x48] sm:$0xf]
      %v514 = vld [vmem:[%s222 + $0x4c] sm:$0xf]
      %v515 = vld [vmem:[%s222 + $0x50] sm:$0xf]
      %v516 = vld [vmem:[%s222 + $0x54] sm:$0xf]
      %v517 = vld [vmem:[%s222 + $0x58] sm:$0xf]
      %v518 = vld [vmem:[%s222 + $0x5c] sm:$0xf]
      %v519 = vld [vmem:[%s222 + $0x60] sm:$0xf]
      %v520 = vld [vmem:[%s222 + $0x64] sm:$0xf]
      %v521 = vld [vmem:[%s222 + $0x68] sm:$0xf]
      %v522 = vld [vmem:[%s222 + $0x6c] sm:$0xf]
      %v523 = vld [vmem:[%s222 + $0x70] sm:$0xf]
      %v524 = vld [vmem:[%s222 + $0x74] sm:$0xf]
      %v525 = vld [vmem:[%s222 + $0x78] sm:$0xf]
      %v526 = vld [vmem:[%s222 + $0x7c] sm:$0xf]
      %v527 = vld [vmem:[%s222 + $0x80] sm:$0xf]
      %v528 = vld [vmem:[%s222 + $0x84] sm:$0xf]
      %v529 = vld [vmem:[%s222 + $0x88] sm:$0xf]
      %v530 = vld [vmem:[%s222 + $0x8c] sm:$0xf]
      %v531 = vld [vmem:[%s222 + $0x90] sm:$0xf]
      %v532 = vld [vmem:[%s222 + $0x94] sm:$0xf]
      %v533 = vld [vmem:[%s222 + $0x98] sm:$0xf]
      %v534 = vld [vmem:[%s222 + $0x9c] sm:$0xf]
      %v535 = vld [vmem:[%s222 + $0xa0] sm:$0xf]
      %v536 = vld [vmem:[%s222 + $0xa4] sm:$0xf]
      %v537 = vld [vmem:[%s222 + $0xa8] sm:$0xf]
      %v538 = vld [vmem:[%s222 + $0xac] sm:$0xf]
      %v539 = vld [vmem:[%s222 + $0xb0] sm:$0xf]
      %v540 = vld [vmem:[%s222 + $0xb4] sm:$0xf]
      %v541 = vld [vmem:[%s222 + $0xb8] sm:$0xf]
      %v542 = vld [vmem:[%s222 + $0xbc] sm:$0xf]
      %v543 = vld [vmem:[%s222 + $0xc0] sm:$0xf]
      %v544 = vld [vmem:[%s222 + $0xc4] sm:$0xf]
      %v545 = vld [vmem:[%s222 + $0xc8] sm:$0xf]
      %v546 = vld [vmem:[%s222 + $0xcc] sm:$0xf]
      %v547 = vld [vmem:[%s222 + $0xd0] sm:$0xf]
      %v548 = vld [vmem:[%s222 + $0xd4] sm:$0xf]
      %v549 = vld [vmem:[%s222 + $0xd8] sm:$0xf]
      %v550 = vld [vmem:[%s222 + $0xdc] sm:$0xf]
      %v551 = vld [vmem:[%s222 + $0xe0] sm:$0xf]
      %v552 = vld [vmem:[%s222 + $0xe4] sm:$0xf]
      %v553 = vld [vmem:[%s222 + $0xe8] sm:$0xf]
      %v554 = vld [vmem:[%s222 + $0xec] sm:$0xf]
      %v555 = vld [vmem:[%s222 + $0xf0] sm:$0xf]
      %v556 = vld [vmem:[%s222 + $0xf4] sm:$0xf]
      %v557 = vld [vmem:[%s222 + $0xf8] sm:$0xf]
      %v558 = vld [vmem:[%s222 + $0xfc] sm:$0xf]
      %v559 = vunpack.c.l.bf16 %v495
      %v560 = vunpack.c.l.bf16 %v496
      %v561 = vunpack.c.l.bf16 %v497
      %v562 = vunpack.c.l.bf16 %v498
      %v563 = vunpack.c.l.bf16 %v499
      %v564 = vunpack.c.l.bf16 %v500
      %v565 = vunpack.c.l.bf16 %v501
      %v566 = vunpack.c.l.bf16 %v502
      %v567 = vunpack.c.l.bf16 %v503
      %v568 = vunpack.c.l.bf16 %v504
      %v569 = vunpack.c.l.bf16 %v505
      %v570 = vunpack.c.l.bf16 %v506
      %v571 = vunpack.c.l.bf16 %v507
      %v572 = vunpack.c.l.bf16 %v508
      %v573 = vunpack.c.l.bf16 %v509
      %v574 = vunpack.c.l.bf16 %v510
      %v575 = vunpack.c.l.bf16 %v511
      %v576 = vunpack.c.l.bf16 %v512
      %v577 = vunpack.c.l.bf16 %v513
      %v578 = vunpack.c.l.bf16 %v514
      %v579 = vunpack.c.l.bf16 %v515
      %v580 = vunpack.c.l.bf16 %v516
      %v581 = vunpack.c.l.bf16 %v517
      %v582 = vunpack.c.l.bf16 %v518
      %v583 = vunpack.c.l.bf16 %v519
      %v584 = vunpack.c.l.bf16 %v520
      %v585 = vunpack.c.l.bf16 %v521
      %v586 = vunpack.c.l.bf16 %v522
      %v587 = vunpack.c.l.bf16 %v523
      %v588 = vunpack.c.l.bf16 %v524
      %v589 = vunpack.c.l.bf16 %v525
      %v590 = vunpack.c.l.bf16 %v526
      %v591 = vunpack.c.l.bf16 %v527
      %v592 = vunpack.c.l.bf16 %v528
      %v593 = vunpack.c.l.bf16 %v529
      %v594 = vunpack.c.l.bf16 %v530
      %v595 = vunpack.c.l.bf16 %v531
      %v596 = vunpack.c.l.bf16 %v532
      %v597 = vunpack.c.l.bf16 %v533
      %v598 = vunpack.c.l.bf16 %v534
      %v599 = vunpack.c.l.bf16 %v535
      %v600 = vunpack.c.l.bf16 %v536
      %v601 = vunpack.c.l.bf16 %v537
      %v602 = vunpack.c.l.bf16 %v538
      %v603 = vunpack.c.l.bf16 %v539
      %v604 = vunpack.c.l.bf16 %v540
      %v605 = vunpack.c.l.bf16 %v541
      %v606 = vunpack.c.l.bf16 %v542
      %v607 = vunpack.c.l.bf16 %v543
      %v608 = vunpack.c.l.bf16 %v544
      %v609 = vunpack.c.l.bf16 %v545
      %v610 = vunpack.c.l.bf16 %v546
      %v611 = vunpack.c.l.bf16 %v547
      %v612 = vunpack.c.l.bf16 %v548
      %v613 = vunpack.c.l.bf16 %v549
      %v614 = vunpack.c.l.bf16 %v550
      %v615 = vunpack.c.l.bf16 %v551
      %v616 = vunpack.c.l.bf16 %v552
      %v617 = vunpack.c.l.bf16 %v553
      %v618 = vunpack.c.l.bf16 %v554
      %v619 = vunpack.c.l.bf16 %v555
      %v620 = vunpack.c.l.bf16 %v556
      %v621 = vunpack.c.l.bf16 %v557
      %v622 = vunpack.c.l.bf16 %v558
      %v623 = vadd.f32 %v431, %v559
      %v624 = vadd.f32 %v432, %v560
      %v625 = vadd.f32 %v433, %v561
      %v626 = vadd.f32 %v434, %v562
      %v627 = vadd.f32 %v435, %v563
      %v628 = vadd.f32 %v436, %v564
      %v629 = vadd.f32 %v437, %v565
      %v630 = vadd.f32 %v438, %v566
      %v631 = vadd.f32 %v439, %v567
      %v632 = vadd.f32 %v440, %v568
      %v633 = vadd.f32 %v441, %v569
      %v634 = vadd.f32 %v442, %v570
      %v635 = vadd.f32 %v443, %v571
      %v636 = vadd.f32 %v444, %v572
      %v637 = vadd.f32 %v445, %v573
      %v638 = vadd.f32 %v446, %v574
      %v639 = vadd.f32 %v447, %v575
      %v640 = vadd.f32 %v448, %v576
      %v641 = vadd.f32 %v449, %v577
      %v642 = vadd.f32 %v450, %v578
      %v643 = vadd.f32 %v451, %v579
      %v644 = vadd.f32 %v452, %v580
      %v645 = vadd.f32 %v453, %v581
      %v646 = vadd.f32 %v454, %v582
      %v647 = vadd.f32 %v455, %v583
      %v648 = vadd.f32 %v456, %v584
      %v649 = vadd.f32 %v457, %v585
      %v650 = vadd.f32 %v458, %v586
      %v651 = vadd.f32 %v459, %v587
      %v652 = vadd.f32 %v460, %v588
      %v653 = vadd.f32 %v461, %v589
      %v654 = vadd.f32 %v462, %v590
      %v655 = vadd.f32 %v463, %v591
      %v656 = vadd.f32 %v464, %v592
      %v657 = vadd.f32 %v465, %v593
      %v658 = vadd.f32 %v466, %v594
      %v659 = vadd.f32 %v467, %v595
      %v660 = vadd.f32 %v468, %v596
      %v661 = vadd.f32 %v469, %v597
      %v662 = vadd.f32 %v470, %v598
      %v663 = vadd.f32 %v471, %v599
      %v664 = vadd.f32 %v472, %v600
      %v665 = vadd.f32 %v473, %v601
      %v666 = vadd.f32 %v474, %v602
      %v667 = vadd.f32 %v475, %v603
      %v668 = vadd.f32 %v476, %v604
      %v669 = vadd.f32 %v477, %v605
      %v670 = vadd.f32 %v478, %v606
      %v671 = vadd.f32 %v479, %v607
      %v672 = vadd.f32 %v480, %v608
      %v673 = vadd.f32 %v481, %v609
      %v674 = vadd.f32 %v482, %v610
      %v675 = vadd.f32 %v483, %v611
      %v676 = vadd.f32 %v484, %v612
      %v677 = vadd.f32 %v485, %v613
      %v678 = vadd.f32 %v486, %v614
      %v679 = vadd.f32 %v487, %v615
      %v680 = vadd.f32 %v488, %v616
      %v681 = vadd.f32 %v489, %v617
      %v682 = vadd.f32 %v490, %v618
      %v683 = vadd.f32 %v491, %v619
      %v684 = vadd.f32 %v492, %v620
      %v685 = vadd.f32 %v493, %v621
      %v686 = vadd.f32 %v494, %v622
      %v687 = vmax.f32 %v623, 0.0
      %v688 = vmax.f32 %v624, 0.0
      %v689 = vmax.f32 %v625, 0.0
      %v690 = vmax.f32 %v626, 0.0
      %v691 = vmax.f32 %v627, 0.0
      %v692 = vmax.f32 %v628, 0.0
      %v693 = vmax.f32 %v629, 0.0
      %v694 = vmax.f32 %v630, 0.0
      %v695 = vmax.f32 %v631, 0.0
      %v696 = vmax.f32 %v632, 0.0
      %v697 = vmax.f32 %v633, 0.0
      %v698 = vmax.f32 %v634, 0.0
      %v699 = vmax.f32 %v635, 0.0
      %v700 = vmax.f32 %v636, 0.0
      %v701 = vmax.f32 %v637, 0.0
      %v702 = vmax.f32 %v638, 0.0
      %v703 = vmax.f32 %v639, 0.0
      %v704 = vmax.f32 %v640, 0.0
      %v705 = vmax.f32 %v641, 0.0
      %v706 = vmax.f32 %v642, 0.0
      %v707 = vmax.f32 %v643, 0.0
      %v708 = vmax.f32 %v644, 0.0
      %v709 = vmax.f32 %v645, 0.0
      %v710 = vmax.f32 %v646, 0.0
      %v711 = vmax.f32 %v647, 0.0
      %v712 = vmax.f32 %v648, 0.0
      %v713 = vmax.f32 %v649, 0.0
      %v714 = vmax.f32 %v650, 0.0
      %v715 = vmax.f32 %v651, 0.0
      %v716 = vmax.f32 %v652, 0.0
      %v717 = vmax.f32 %v653, 0.0
      %v718 = vmax.f32 %v654, 0.0
      %v719 = vmax.f32 %v655, 0.0
      %v720 = vmax.f32 %v656, 0.0
      %v721 = vmax.f32 %v657, 0.0
      %v722 = vmax.f32 %v658, 0.0
      %v723 = vmax.f32 %v659, 0.0
      %v724 = vmax.f32 %v660, 0.0
      %v725 = vmax.f32 %v661, 0.0
      %v726 = vmax.f32 %v662, 0.0
      %v727 = vmax.f32 %v663, 0.0
      %v728 = vmax.f32 %v664, 0.0
      %v729 = vmax.f32 %v665, 0.0
      %v730 = vmax.f32 %v666, 0.0
      %v731 = vmax.f32 %v667, 0.0
      %v732 = vmax.f32 %v668, 0.0
      %v733 = vmax.f32 %v669, 0.0
      %v734 = vmax.f32 %v670, 0.0
      %v735 = vmax.f32 %v671, 0.0
      %v736 = vmax.f32 %v672, 0.0
      %v737 = vmax.f32 %v673, 0.0
      %v738 = vmax.f32 %v674, 0.0
      %v739 = vmax.f32 %v675, 0.0
      %v740 = vmax.f32 %v676, 0.0
      %v741 = vmax.f32 %v677, 0.0
      %v742 = vmax.f32 %v678, 0.0
      %v743 = vmax.f32 %v679, 0.0
      %v744 = vmax.f32 %v680, 0.0
      %v745 = vmax.f32 %v681, 0.0
      %v746 = vmax.f32 %v682, 0.0
      %v747 = vmax.f32 %v683, 0.0
      %v748 = vmax.f32 %v684, 0.0
      %v749 = vmax.f32 %v685, 0.0
      %v750 = vmax.f32 %v686, 0.0
      %751 = vst [vmem:[%s229] sm:$0xff] %v687
      %752 = vst [vmem:[%s229 + $0x8] sm:$0xff] %v688
      %753 = vst [vmem:[%s229 + $0x10] sm:$0xff] %v689
      %754 = vst [vmem:[%s229 + $0x18] sm:$0xff] %v690
      %755 = vst [vmem:[%s229 + $0x20] sm:$0xff] %v691
      %756 = vst [vmem:[%s229 + $0x28] sm:$0xff] %v692
      %757 = vst [vmem:[%s229 + $0x30] sm:$0xff] %v693
      %758 = vst [vmem:[%s229 + $0x38] sm:$0xff] %v694
      %759 = vst [vmem:[%s229 + $0x40] sm:$0xff] %v695
      %760 = vst [vmem:[%s229 + $0x48] sm:$0xff] %v696
      %761 = vst [vmem:[%s229 + $0x50] sm:$0xff] %v697
      %762 = vst [vmem:[%s229 + $0x58] sm:$0xff] %v698
      %763 = vst [vmem:[%s229 + $0x60] sm:$0xff] %v699
      %764 = vst [vmem:[%s229 + $0x68] sm:$0xff] %v700
      %765 = vst [vmem:[%s229 + $0x70] sm:$0xff] %v701
      %766 = vst [vmem:[%s229 + $0x78] sm:$0xff] %v702
      %767 = vst [vmem:[%s229 + $0x80] sm:$0xff] %v703
      %768 = vst [vmem:[%s229 + $0x88] sm:$0xff] %v704
      %769 = vst [vmem:[%s229 + $0x90] sm:$0xff] %v705
      %770 = vst [vmem:[%s229 + $0x98] sm:$0xff] %v706
      %771 = vst [vmem:[%s229 + $0xa0] sm:$0xff] %v707
      %772 = vst [vmem:[%s229 + $0xa8] sm:$0xff] %v708
      %773 = vst [vmem:[%s229 + $0xb0] sm:$0xff] %v709
      %774 = vst [vmem:[%s229 + $0xb8] sm:$0xff] %v710
      %775 = vst [vmem:[%s229 + $0xc0] sm:$0xff] %v711
      %776 = vst [vmem:[%s229 + $0xc8] sm:$0xff] %v712
      %777 = vst [vmem:[%s229 + $0xd0] sm:$0xff] %v713
      %778 = vst [vmem:[%s229 + $0xd8] sm:$0xff] %v714
      %779 = vst [vmem:[%s229 + $0xe0] sm:$0xff] %v715
      %780 = vst [vmem:[%s229 + $0xe8] sm:$0xff] %v716
      %781 = vst [vmem:[%s229 + $0xf0] sm:$0xff] %v717
      %782 = vst [vmem:[%s229 + $0xf8] sm:$0xff] %v718
      %783 = vst [vmem:[%s229 + $0x100] sm:$0xff] %v719
      %784 = vst [vmem:[%s229 + $0x108] sm:$0xff] %v720
      %785 = vst [vmem:[%s229 + $0x110] sm:$0xff] %v721
      %786 = vst [vmem:[%s229 + $0x118] sm:$0xff] %v722
      %787 = vst [vmem:[%s229 + $0x120] sm:$0xff] %v723
      %788 = vst [vmem:[%s229 + $0x128] sm:$0xff] %v724
      %789 = vst [vmem:[%s229 + $0x130] sm:$0xff] %v725
      %790 = vst [vmem:[%s229 + $0x138] sm:$0xff] %v726
      %791 = vst [vmem:[%s229 + $0x140] sm:$0xff] %v727
      %792 = vst [vmem:[%s229 + $0x148] sm:$0xff] %v728
      %793 = vst [vmem:[%s229 + $0x150] sm:$0xff] %v729
      %794 = vst [vmem:[%s229 + $0x158] sm:$0xff] %v730
      %795 = vst [vmem:[%s229 + $0x160] sm:$0xff] %v731
      %796 = vst [vmem:[%s229 + $0x168] sm:$0xff] %v732
      %797 = vst [vmem:[%s229 + $0x170] sm:$0xff] %v733
      %798 = vst [vmem:[%s229 + $0x178] sm:$0xff] %v734
      %799 = vst [vmem:[%s229 + $0x180] sm:$0xff] %v735
      %800 = vst [vmem:[%s229 + $0x188] sm:$0xff] %v736
      %801 = vst [vmem:[%s229 + $0x190] sm:$0xff] %v737
      %802 = vst [vmem:[%s229 + $0x198] sm:$0xff] %v738
      %803 = vst [vmem:[%s229 + $0x1a0] sm:$0xff] %v739
      %804 = vst [vmem:[%s229 + $0x1a8] sm:$0xff] %v740
      %805 = vst [vmem:[%s229 + $0x1b0] sm:$0xff] %v741
      %806 = vst [vmem:[%s229 + $0x1b8] sm:$0xff] %v742
      %807 = vst [vmem:[%s229 + $0x1c0] sm:$0xff] %v743
      %808 = vst [vmem:[%s229 + $0x1c8] sm:$0xff] %v744
      %809 = vst [vmem:[%s229 + $0x1d0] sm:$0xff] %v745
      %810 = vst [vmem:[%s229 + $0x1d8] sm:$0xff] %v746
      %811 = vst [vmem:[%s229 + $0x1e0] sm:$0xff] %v747
      %812 = vst [vmem:[%s229 + $0x1e8] sm:$0xff] %v748
      %813 = vst [vmem:[%s229 + $0x1f0] sm:$0xff] %v749
      %814 = vst [vmem:[%s229 + $0x1f8] sm:$0xff] %v750
      %s815 = smul.u32 8, %s15
      %p816 = scmp.lt.s32.totalorder %s815, 15
      %s817 = scalar_select %p816, %s815, 15
      %s818 = smul.addr %s817, 8
      %s819 = smul.addr %s818, 8
      %s820 = scalar_lea.vmem %s4, %s819
      // Predicated region
      $region37: #{basic_block3d_pallas.11} parent=35 // pred_check
        %p821 = pneg %p127
      $region38: #{basic_block3d_pallas.11} parent=35 // pred_check_branch
        %823 = sbr.rel (%p821) target = $region40
      $region39: #{basic_block3d_pallas.11} parent=35 // pred_region
        %s824 = smul.u32 8, %s15
      $region40: #{basic_block3d_pallas.11} parent=35 // pred_fallthru
        _
    $region36: #{basic_block3d_pallas.11} parent=5 // pred_fallthru
      _
    %p825 = scmp.le.s32.totalorder 2, %s10
    // Predicated region
    $region41: #{basic_block3d_pallas.11} parent=5 // pred_check
      %p826 = pneg %p825
    $region42: #{basic_block3d_pallas.11} parent=5 // pred_check_branch
      %828 = sbr.rel (%p826) target = $region44
    $region43: #{basic_block3d_pallas.11} parent=5 // pred_region
      %s829 = ssub.s32 %s10, 2
      // Predicated region
      $region45: #{basic_block3d_pallas.11} parent=43 // pred_check
        %p830 = pneg %p133
      $region46: #{basic_block3d_pallas.11} parent=43 // pred_check_branch
        %832 = sbr.rel (%p830) target = $region48
      $region47: #{basic_block3d_pallas.11} parent=43 // pred_region
        %s833 = smul.u32 8, %s16
        %p834 = scmp.lt.s32.totalorder %s833, 15
        %s835 = scalar_select %p834, %s833, 15
        %s836 = smul.addr %s835, 8
        %s837 = smul.addr %s836, 8
        %s838 = scalar_lea.vmem %s4, %s837
      $region48: #{basic_block3d_pallas.11} parent=43 // pred_fallthru
        _
    $region44: #{basic_block3d_pallas.11} parent=5 // pred_fallthru
      _
  $region6: #{basic_block3d_pallas.11} parent=0 // loop_footer
    %s14 = sadd.s32 1, %s10
  $region7: #{basic_block3d_pallas.11} parent=0 // loop_footer_branch
    %9 = sbr.rel target = $region3
  $region8: #{basic_block3d_pallas.11} parent=0 // loop_exit
    _

// kernel: basic_block3d_pallas.10
$region0: #{basic_block3d_pallas.10}
  #allocation0 [shape = 'u32[]', space=smem, size = 0x4, offset = 0x4, fixed_abs, tag = 'smem constant byte address 0x4 - core index']
  #allocation1 [shape = 'u32[72,128]{1,0:T(1,128)}', space=vmem, size = 0x9000, scoped, tag = 'internal scratch']
  %s0 = inlined_call_operand.vmem [shape: bf16[20,10,10,8], index: 0, kind: input, shape index: {}]
  %s1 = inlined_call_operand.vmem [shape: bf16[3,72,128], index: 1, kind: input, shape index: {}]
  %s2 = inlined_call_operand.vmem [shape: bf16[16,64,128], index: 2, kind: output, shape index: {0}]
  %s3 = inlined_call_operand.vmem [shape: f32[16,2,128], index: 3, kind: output, shape index: {1}]
  %4 = xla_tuple %s2, %s3
  %s5 = sld [smem:[#allocation0]]
  $region49: #{basic_block3d_pallas.10} parent=0
    _
  %s7 = ssub.s32 1, %s5
  %s8 = scalar_select 0, %s7, %s5
  loop: start=0, step=1, limit=18
  $region2: #{basic_block3d_pallas.10} parent=0 // loop_pre_header
    _
  $region3: #{basic_block3d_pallas.10} parent=0 // loop_header
    %s10 = sphi 0, %s14
    %p11 = scmp.ge.s32.totalorder %s10, 18
    %s17 = sphi 0, %s29
    %s18 = sphi 0, %s25
    %s19 = sphi 0, %s17
    %s20 = sphi 0, %s18
    %s21 = sphi 0, %s19
    %s22 = sphi 0, %s20
    %s32 = sphi 0, %s34
    %s35 = sphi 0, %s32
    %s36 = sphi 0, %s35
    %s52 = sphi 0, %s36
    %s56 = sphi 0, %s56
    %s58 = sphi 0, %s56
    %s59 = sphi 0, %s58
    %s73 = sphi 0, %s59
    %s83 = sphi 0, %s85
    %s86 = sphi 0, %s83
    %s87 = sphi 0, %s86
    %s103 = sphi 0, %s87
    %s113 = sphi 0, %s115
    %s116 = sphi 0, %s113
    %s117 = sphi 0, %s116
    %s133 = sphi 0, %s117
  $region4: #{basic_block3d_pallas.10} parent=0 // loop_header_branch
    %13 = sbr.rel (%p11) target = $region8
  $region5: #{basic_block3d_pallas.10} parent=0 // loop_body
    %s15 = ssub.s32 %s10, 1
    %s16 = ssub.s32 %s10, 2
    %s23 = sadd.s32 1, %s18
    %p24 = scmp.ge.s32.totalorder %s23, 8
    %s25 = scalar_select %p24, 0, %s23
    %s26 = sadd.s32 1, %s17
    %s27 = scalar_select %p24, %s26, %s17
    %p28 = scmp.ge.s32.totalorder %s27, 2
    %s29 = scalar_select %p28, 0, %s27
    %s30 = ssub.s32 %s17, %s29
    %p31 = scmp.eq.s32.totalorder %s30, 0
    %s33 = sadd.s32 %s32, 1
    %s34 = scalar_select %p31, %s32, %s33
    %p37 = pneg %p31
    %p38 = scmp.eq.s32.totalorder %s10, 15
    %p39 = por %p37, %p38
    %p40 = scmp.ne.s32.totalorder %s32, %s35
    %p41 = scmp.eq.s32.totalorder %s10, 0
    %p42 = por %p40, %p41
    %p43 = scmp.ne.s32.totalorder %s32, %s35
    %p44 = scmp.eq.s32.totalorder %s15, 15
    %p45 = por %p43, %p44
    %p46 = scmp.ne.s32.totalorder %s35, %s36
    %p47 = scmp.eq.s32.totalorder %s15, 0
    %p48 = por %p46, %p47
    %p49 = scmp.ne.s32.totalorder %s35, %s36
    %p50 = scmp.eq.s32.totalorder %s16, 15
    %p51 = por %p49, %p50
    %p53 = scmp.ne.s32.totalorder %s36, %s52
    %p54 = scmp.eq.s32.totalorder %s16, 0
    %p55 = por %p53, %p54
    %s57 = sadd.s32 %s56, 1
    %p60 = scmp.eq.s32.totalorder %s10, 15
    %p61 = scmp.ne.s32.totalorder %s56, %s58
    %p62 = scmp.eq.s32.totalorder %s10, 0
    %p63 = por %p61, %p62
    %p64 = scmp.ne.s32.totalorder %s56, %s58
    %p65 = scmp.eq.s32.totalorder %s15, 15
    %p66 = por %p64, %p65
    %p67 = scmp.ne.s32.totalorder %s58, %s59
    %p68 = scmp.eq.s32.totalorder %s15, 0
    %p69 = por %p67, %p68
    %p70 = scmp.ne.s32.totalorder %s58, %s59
    %p71 = scmp.eq.s32.totalorder %s16, 15
    %p72 = por %p70, %p71
    %p74 = scmp.ne.s32.totalorder %s59, %s73
    %p75 = scmp.eq.s32.totalorder %s16, 0
    %p76 = por %p74, %p75
    %s77 = smul.u32 %s17, 8
    %s78 = sadd.s32 %s77, %s18
    %s79 = smul.u32 %s29, 8
    %s80 = sadd.s32 %s79, %s25
    %s81 = ssub.s32 %s78, %s80
    %p82 = scmp.eq.s32.totalorder %s81, 0
    %s84 = sadd.s32 %s83, 1
    %s85 = scalar_select %p82, %s83, %s84
    %p88 = pneg %p82
    %p89 = scmp.eq.s32.totalorder %s10, 15
    %p90 = por %p88, %p89
    %p91 = scmp.ne.s32.totalorder %s83, %s86
    %p92 = scmp.eq.s32.totalorder %s10, 0
    %p93 = por %p91, %p92
    %p94 = scmp.ne.s32.totalorder %s83, %s86
    %p95 = scmp.eq.s32.totalorder %s15, 15
    %p96 = por %p94, %p95
    %p97 = scmp.ne.s32.totalorder %s86, %s87
    %p98 = scmp.eq.s32.totalorder %s15, 0
    %p99 = por %p97, %p98
    %p100 = scmp.ne.s32.totalorder %s86, %s87
    %p101 = scmp.eq.s32.totalorder %s16, 15
    %p102 = por %p100, %p101
    %p104 = scmp.ne.s32.totalorder %s87, %s103
    %p105 = scmp.eq.s32.totalorder %s16, 0
    %p106 = por %p104, %p105
    %s107 = smul.u32 %s17, 8
    %s108 = sadd.s32 %s107, %s18
    %s109 = smul.u32 %s29, 8
    %s110 = sadd.s32 %s109, %s25
    %s111 = ssub.s32 %s108, %s110
    %p112 = scmp.eq.s32.totalorder %s111, 0
    %s114 = sadd.s32 %s113, 1
    %s115 = scalar_select %p112, %s113, %s114
    %p118 = pneg %p112
    %p119 = scmp.eq.s32.totalorder %s10, 15
    %p120 = por %p118, %p119
    %p121 = scmp.ne.s32.totalorder %s113, %s116
    %p122 = scmp.eq.s32.totalorder %s10, 0
    %p123 = por %p121, %p122
    %p124 = scmp.ne.s32.totalorder %s113, %s116
    %p125 = scmp.eq.s32.totalorder %s15, 15
    %p126 = por %p124, %p125
    %p127 = scmp.ne.s32.totalorder %s116, %s117
    %p128 = scmp.eq.s32.totalorder %s15, 0
    %p129 = por %p127, %p128
    %p130 = scmp.ne.s32.totalorder %s116, %s117
    %p131 = scmp.eq.s32.totalorder %s16, 15
    %p132 = por %p130, %p131
    %p134 = scmp.ne.s32.totalorder %s117, %s133
    %p135 = scmp.eq.s32.totalorder %s16, 0
    %p136 = por %p134, %p135
    %p137 = scmp.le.s32.totalorder 1, %s10
    %p138 = scmp.lt.s32.totalorder %s10, 17
    %p139 = pnand %p137, %p138
    %p140 = pneg %p139
    // Predicated region
    $region9: #{basic_block3d_pallas.10} parent=5 // pred_check
      _
    $region10: #{basic_block3d_pallas.10} parent=5 // pred_check_branch
      %142 = sbr.rel (%p139) target = $region12
    $region11: #{basic_block3d_pallas.10} parent=5 // pred_region
      %s143 = ssub.s32 %s10, 1
      // Predicated region
      $region13: #{basic_block3d_pallas.10} parent=11 // pred_check
        %p144 = pneg %p69
      $region14: #{basic_block3d_pallas.10} parent=11 // pred_check_branch
        %146 = sbr.rel (%p144) target = $region16
      $region15: #{basic_block3d_pallas.10} parent=11 // pred_region
        _
      $region16: #{basic_block3d_pallas.10} parent=11 // pred_fallthru
        _
    $region12: #{basic_block3d_pallas.10} parent=5 // pred_fallthru
      _
    %p147 = scmp.lt.s32.totalorder %s10, 16
    // Predicated region
    $region17: #{basic_block3d_pallas.10} parent=5 // pred_check
      %p148 = pneg %p147
    $region18: #{basic_block3d_pallas.10} parent=5 // pred_check_branch
      %150 = sbr.rel (%p148) target = $region20
    $region19: #{basic_block3d_pallas.10} parent=5 // pred_region
      // Predicated region
      $region21: #{basic_block3d_pallas.10} parent=19 // pred_check
        %p151 = pneg %p42
      $region22: #{basic_block3d_pallas.10} parent=19 // pred_check_branch
        %153 = sbr.rel (%p151) target = $region24
      $region23: #{basic_block3d_pallas.10} parent=19 // pred_region
        %s154 = smul.u32 10, %s17
        %p155 = scmp.lt.s32.totalorder %s154, 19
        %s156 = scalar_select %p155, %s154, 19
        %s157 = smul.addr %s156, 20
        %s158 = smul.addr %s157, 4
        %s159 = scalar_lea.vmem %s0, %s158
        %s160 = smul.u32 10, %s17
      $region24: #{basic_block3d_pallas.10} parent=19 // pred_fallthru
        _
    $region20: #{basic_block3d_pallas.10} parent=5 // pred_fallthru
      _
    %p161 = scmp.le.s32.totalorder 1, %s10
    %p162 = scmp.lt.s32.totalorder %s10, 17
    %p163 = pnand %p161, %p162
    %p164 = pneg %p163
    // Predicated region
    $region25: #{basic_block3d_pallas.10} parent=5 // pred_check
      _
    $region26: #{basic_block3d_pallas.10} parent=5 // pred_check_branch
      %166 = sbr.rel (%p163) target = $region28
    $region27: #{basic_block3d_pallas.10} parent=5 // pred_region
      %s167 = ssub.s32 %s10, 1
      %s168 = smul.u32 10, %s19
      %p169 = scmp.lt.s32.totalorder %s168, 19
      %s170 = scalar_select %p169, %s168, 19
      %s171 = smul.addr %s170, 20
      %s172 = smul.addr %s171, 4
      %s173 = scalar_lea.vmem %s0, %s172
      %p174 = pneg %p48
      %p175 = pneg %p45
      %p176 = pneg %p69
      %p177 = pneg %p66
      %p178 = pneg %p99
      %p179 = pneg %p96
      %s180 = smul.u32 %s19, 8
      %s181 = sadd.s32 %s180, %s20
      %p182 = scmp.lt.s32.totalorder %s181, 15
      %s183 = scalar_select %p182, %s181, 15
      %s184 = smul.addr %s183, 8
      %s185 = smul.addr %s184, 4
      %s186 = scalar_lea.vmem %s2, %s185
      %p187 = pneg %p129
      %p188 = pneg %p126
      %s189 = smul.u32 %s19, 8
      %s190 = sadd.s32 %s189, %s20
      %p191 = scmp.lt.s32.totalorder %s190, 15
      %s192 = scalar_select %p191, %s190, 15
      %s193 = smul.addr %s192, 2
      %s194 = scalar_lea.vmem %s3, %s193
      %s195 = smul.u32 10, %s19
      %p196 = scmp.lt.s32.totalorder %s195, 19
      %s197 = scalar_select %p196, %s195, 19
      %s198 = smul.addr %s197, 20
      %s199 = smul.addr %s198, 4
      %s200 = scalar_lea.vmem %s0, %s199
      %s201 = smul.u32 10, %s19
      %s202 = smul.u32 %s19, 8
      %s203 = sadd.s32 %s202, %s20
      %p204 = scmp.lt.s32.totalorder %s203, 15
      %s205 = scalar_select %p204, %s203, 15
      %s206 = smul.addr %s205, 8
      %s207 = smul.addr %s206, 4
      %s208 = scalar_lea.vmem %s2, %s207
      %s209 = smul.u32 %s19, 8
      %s210 = sadd.s32 %s209, %s20
      %s211 = smul.u32 %s19, 8
      %s212 = sadd.s32 %s211, %s20
      %p213 = scmp.lt.s32.totalorder %s212, 15
      %s214 = scalar_select %p213, %s212, 15
      %s215 = smul.addr %s214, 2
      %s216 = scalar_lea.vmem %s3, %s215
      %s217 = smul.u32 %s19, 8
      %s218 = sadd.s32 %s217, %s20
      %s220 = smul.u32 %s20, 20
      %s221 = smul.addr %s220, 4
      %s222 = scalar_lea.vmem %s200, %s221
      %v223 = vld [vmem:[%s222] sm:$0xf]
      %v224 = vld [vmem:[%s222 + $0x8] sm:$0xf]
      %v225 = vld [vmem:[%s222 + $0x10] sm:$0xf]
      %v226 = vld [vmem:[%s222 + $0x18] sm:$0xf]
      %v227 = vld [vmem:[%s222 + $0x20] sm:$0xf]
      %v228 = vld [vmem:[%s222 + $0x28] sm:$0xf]
      %v229 = vld [vmem:[%s222 + $0x30] sm:$0xf]
      %v230 = vld [vmem:[%s222 + $0x38] sm:$0xf]
      %v231 = vld [vmem:[%s222 + $0x4] sm:$0x1]
      %v232 = vld [vmem:[%s222 + $0xc] sm:$0x1]
      %v233 = vld [vmem:[%s222 + $0x14] sm:$0x1]
      %v234 = vld [vmem:[%s222 + $0x1c] sm:$0x1]
      %v235 = vld [vmem:[%s222 + $0x24] sm:$0x1]
      %v236 = vld [vmem:[%s222 + $0x2c] sm:$0x1]
      %v237 = vld [vmem:[%s222 + $0x34] sm:$0x1]
      %v238 = vld [vmem:[%s222 + $0x3c] sm:$0x1]
      %vm239 = vsmask.f32 3328
      %vm240 = vsmask.f32 7440
      %vm241 = vmor %vm239, %vm240
      %v243 = vshrl.u32 %v223, 16
      %v245 = vrot.slane %v243, 4
      %v246 = vshll.u32 %v223, 16
      %v248 = vrot.slane %v246, 5
      %v249 = vor.u32 %v245, %v248
      %v250 = vrot.slane %v249, 4
      %v252 = vshll.u32 %v231, 16
      %v254 = vrot.slane %v252, 5
      %v255 = vsel %vm241, %v250, %v254
      %v257 = vshrl.u32 %v224, 16
      %v259 = vrot.slane %v257, 4
      %v260 = vshll.u32 %v224, 16
      %v262 = vrot.slane %v260, 5
      %v263 = vor.u32 %v259, %v262
      %v264 = vrot.slane %v263, 4
      %v266 = vshll.u32 %v232, 16
      %v268 = vrot.slane %v266, 5
      %v269 = vsel %vm241, %v264, %v268
      %v271 = vshrl.u32 %v225, 16
      %v273 = vrot.slane %v271, 4
      %v274 = vshll.u32 %v225, 16
      %v276 = vrot.slane %v274, 5
      %v277 = vor.u32 %v273, %v276
      %v278 = vrot.slane %v277, 4
      %v280 = vshll.u32 %v233, 16
      %v282 = vrot.slane %v280, 5
      %v283 = vsel %vm241, %v278, %v282
      %v285 = vshrl.u32 %v226, 16
      %v287 = vrot.slane %v285, 4
      %v288 = vshll.u32 %v226, 16
      %v290 = vrot.slane %v288, 5
      %v291 = vor.u32 %v287, %v290
      %v292 = vrot.slane %v291, 4
      %v294 = vshll.u32 %v234, 16
      %v296 = vrot.slane %v294, 5
      %v297 = vsel %vm241, %v292, %v296
      %v299 = vshrl.u32 %v227, 16
      %v301 = vrot.slane %v299, 4
      %v302 = vshll.u32 %v227, 16
      %v304 = vrot.slane %v302, 5
      %v305 = vor.u32 %v301, %v304
      %v306 = vrot.slane %v305, 4
      %v308 = vshll.u32 %v235, 16
      %v310 = vrot.slane %v308, 5
      %v311 = vsel %vm241, %v306, %v310
      %v313 = vshrl.u32 %v228, 16
      %v315 = vrot.slane %v313, 4
      %v316 = vshll.u32 %v228, 16
      %v318 = vrot.slane %v316, 5
      %v319 = vor.u32 %v315, %v318
      %v320 = vrot.slane %v319, 4
      %v322 = vshll.u32 %v236, 16
      %v324 = vrot.slane %v322, 5
      %v325 = vsel %vm241, %v320, %v324
      %v327 = vshrl.u32 %v229, 16
      %v329 = vrot.slane %v327, 4
      %v330 = vshll.u32 %v229, 16
      %v332 = vrot.slane %v330, 5
      %v333 = vor.u32 %v329, %v332
      %v334 = vrot.slane %v333, 4
      %v336 = vshll.u32 %v237, 16
      %v338 = vrot.slane %v336, 5
      %v339 = vsel %vm241, %v334, %v338
      %v341 = vshrl.u32 %v230, 16
      %v343 = vrot.slane %v341, 4
      %v344 = vshll.u32 %v230, 16
      %v346 = vrot.slane %v344, 5
      %v347 = vor.u32 %v343, %v346
      %v348 = vrot.slane %v347, 4
      %v350 = vshll.u32 %v238, 16
      %v352 = vrot.slane %v350, 5
      %v353 = vsel %vm241, %v348, %v352
      %v354 = vld [vmem:[%s222] sm:$0xe]
      %v355 = vld [vmem:[%s222 + $0x8] sm:$0xe]
      %v356 = vld [vmem:[%s222 + $0x10] sm:$0xe]
      %v357 = vld [vmem:[%s222 + $0x18] sm:$0xe]
      %v358 = vld [vmem:[%s222 + $0x20] sm:$0xe]
      %v359 = vld [vmem:[%s222 + $0x28] sm:$0xe]
      %v360 = vld [vmem:[%s222 + $0x30] sm:$0xe]
      %v361 = vld [vmem:[%s222 + $0x38] sm:$0xe]
      %vm378 = vcmask 1042432
      %vm379 = vcmask 1046532
      %vm380 = vmor %vm378, %vm379
      %v381 = vrot.slane %v354, 5
      %v382 = vrot.slane %v381, 4
      %v383 = vrot.slane %v231, 5
      %v384 = vsel %vm380, %v382, %v383
      %v385 = vrot.slane %v355, 5
      %v386 = vrot.slane %v385, 4
      %v387 = vrot.slane %v232, 5
      %v388 = vsel %vm380, %v386, %v387
      %v389 = vrot.slane %v356, 5
      %v390 = vrot.slane %v389, 4
      %v391 = vrot.slane %v233, 5
      %v392 = vsel %vm380, %v390, %v391
      %v393 = vrot.slane %v357, 5
      %v394 = vrot.slane %v393, 4
      %v395 = vrot.slane %v234, 5
      %v396 = vsel %vm380, %v394, %v395
      %v397 = vrot.slane %v358, 5
      %v398 = vrot.slane %v397, 4
      %v399 = vrot.slane %v235, 5
      %v400 = vsel %vm380, %v398, %v399
      %v401 = vrot.slane %v359, 5
      %v402 = vrot.slane %v401, 4
      %v403 = vrot.slane %v236, 5
      %v404 = vsel %vm380, %v402, %v403
      %v405 = vrot.slane %v360, 5
      %v406 = vrot.slane %v405, 4
      %v407 = vrot.slane %v237, 5
      %v408 = vsel %vm380, %v406, %v407
      %v409 = vrot.slane %v361, 5
      %v410 = vrot.slane %v409, 4
      %v411 = vrot.slane %v238, 5
      %v412 = vsel %vm380, %v410, %v411
      %s413 = sadd.s32 2, %s220
      %s414 = smul.addr %s413, 4
      %s415 = scalar_lea.vmem %s200, %s414
      %v416 = vld [vmem:[%s415] sm:$0xf]
      %v417 = vld [vmem:[%s415 + $0x8] sm:$0xf]
      %v418 = vld [vmem:[%s415 + $0x10] sm:$0xf]
      %v419 = vld [vmem:[%s415 + $0x18] sm:$0xf]
      %v420 = vld [vmem:[%s415 + $0x20] sm:$0xf]
      %v421 = vld [vmem:[%s415 + $0x28] sm:$0xf]
      %v422 = vld [vmem:[%s415 + $0x30] sm:$0xf]
      %v423 = vld [vmem:[%s415 + $0x38] sm:$0xf]
      %v424 = vld [vmem:[%s415 + $0x4] sm:$0x1]
      %v425 = vld [vmem:[%s415 + $0xc] sm:$0x1]
      %v426 = vld [vmem:[%s415 + $0x14] sm:$0x1]
      %v427 = vld [vmem:[%s415 + $0x1c] sm:$0x1]
      %v428 = vld [vmem:[%s415 + $0x24] sm:$0x1]
      %v429 = vld [vmem:[%s415 + $0x2c] sm:$0x1]
      %v430 = vld [vmem:[%s415 + $0x34] sm:$0x1]
      %v431 = vld [vmem:[%s415 + $0x3c] sm:$0x1]
      %v433 = vshrl.u32 %v416, 16
      %v435 = vrot.slane %v433, 4
      %v436 = vshll.u32 %v416, 16
      %v438 = vrot.slane %v436, 5
      %v439 = vor.u32 %v435, %v438
      %v440 = vrot.slane %v439, 4
      %v442 = vshll.u32 %v424, 16
      %v444 = vrot.slane %v442, 5
      %v445 = vsel %vm241, %v440, %v444
      %v447 = vshrl.u32 %v417, 16
      %v449 = vrot.slane %v447, 4
      %v450 = vshll.u32 %v417, 16
      %v452 = vrot.slane %v450, 5
      %v453 = vor.u32 %v449, %v452
      %v454 = vrot.slane %v453, 4
      %v456 = vshll.u32 %v425, 16
      %v458 = vrot.slane %v456, 5
      %v459 = vsel %vm241, %v454, %v458
      %v461 = vshrl.u32 %v418, 16
      %v463 = vrot.slane %v461, 4
      %v464 = vshll.u32 %v418, 16
      %v466 = vrot.slane %v464, 5
      %v467 = vor.u32 %v463, %v466
      %v468 = vrot.slane %v467, 4
      %v470 = vshll.u32 %v426, 16
      %v472 = vrot.slane %v470, 5
      %v473 = vsel %vm241, %v468, %v472
      %v475 = vshrl.u32 %v419, 16
      %v477 = vrot.slane %v475, 4
      %v478 = vshll.u32 %v419, 16
      %v480 = vrot.slane %v478, 5
      %v481 = vor.u32 %v477, %v480
      %v482 = vrot.slane %v481, 4
      %v484 = vshll.u32 %v427, 16
      %v486 = vrot.slane %v484, 5
      %v487 = vsel %vm241, %v482, %v486
      %v489 = vshrl.u32 %v420, 16
      %v491 = vrot.slane %v489, 4
      %v492 = vshll.u32 %v420, 16
      %v494 = vrot.slane %v492, 5
      %v495 = vor.u32 %v491, %v494
      %v496 = vrot.slane %v495, 4
      %v498 = vshll.u32 %v428, 16
      %v500 = vrot.slane %v498, 5
      %v501 = vsel %vm241, %v496, %v500
      %v503 = vshrl.u32 %v421, 16
      %v505 = vrot.slane %v503, 4
      %v506 = vshll.u32 %v421, 16
      %v508 = vrot.slane %v506, 5
      %v509 = vor.u32 %v505, %v508
      %v510 = vrot.slane %v509, 4
      %v512 = vshll.u32 %v429, 16
      %v514 = vrot.slane %v512, 5
      %v515 = vsel %vm241, %v510, %v514
      %v517 = vshrl.u32 %v422, 16
      %v519 = vrot.slane %v517, 4
      %v520 = vshll.u32 %v422, 16
      %v522 = vrot.slane %v520, 5
      %v523 = vor.u32 %v519, %v522
      %v524 = vrot.slane %v523, 4
      %v526 = vshll.u32 %v430, 16
      %v528 = vrot.slane %v526, 5
      %v529 = vsel %vm241, %v524, %v528
      %v531 = vshrl.u32 %v423, 16
      %v533 = vrot.slane %v531, 4
      %v534 = vshll.u32 %v423, 16
      %v536 = vrot.slane %v534, 5
      %v537 = vor.u32 %v533, %v536
      %v538 = vrot.slane %v537, 4
      %v540 = vshll.u32 %v431, 16
      %v542 = vrot.slane %v540, 5
      %v543 = vsel %vm241, %v538, %v542
      %v544 = vld [vmem:[%s415] sm:$0xe]
      %v545 = vld [vmem:[%s415 + $0x8] sm:$0xe]
      %v546 = vld [vmem:[%s415 + $0x10] sm:$0xe]
      %v547 = vld [vmem:[%s415 + $0x18] sm:$0xe]
      %v548 = vld [vmem:[%s415 + $0x20] sm:$0xe]
      %v549 = vld [vmem:[%s415 + $0x28] sm:$0xe]
      %v550 = vld [vmem:[%s415 + $0x30] sm:$0xe]
      %v551 = vld [vmem:[%s415 + $0x38] sm:$0xe]
      %v568 = vrot.slane %v544, 5
      %v569 = vrot.slane %v568, 4
      %v570 = vrot.slane %v424, 5
      %v571 = vsel %vm380, %v569, %v570
      %v572 = vrot.slane %v545, 5
      %v573 = vrot.slane %v572, 4
      %v574 = vrot.slane %v425, 5
      %v575 = vsel %vm380, %v573, %v574
      %v576 = vrot.slane %v546, 5
      %v577 = vrot.slane %v576, 4
      %v578 = vrot.slane %v426, 5
      %v579 = vsel %vm380, %v577, %v578
      %v580 = vrot.slane %v547, 5
      %v581 = vrot.slane %v580, 4
      %v582 = vrot.slane %v427, 5
      %v583 = vsel %vm380, %v581, %v582
      %v584 = vrot.slane %v548, 5
      %v585 = vrot.slane %v584, 4
      %v586 = vrot.slane %v428, 5
      %v587 = vsel %vm380, %v585, %v586
      %v588 = vrot.slane %v549, 5
      %v589 = vrot.slane %v588, 4
      %v590 = vrot.slane %v429, 5
      %v591 = vsel %vm380, %v589, %v590
      %v592 = vrot.slane %v550, 5
      %v593 = vrot.slane %v592, 4
      %v594 = vrot.slane %v430, 5
      %v595 = vsel %vm380, %v593, %v594
      %v596 = vrot.slane %v551, 5
      %v597 = vrot.slane %v596, 4
      %v598 = vrot.slane %v431, 5
      %v599 = vsel %vm380, %v597, %v598
      %s600 = sadd.s32 4, %s220
      %s601 = smul.addr %s600, 4
      %s602 = scalar_lea.vmem %s200, %s601
      %v603 = vld [vmem:[%s602] sm:$0xf]
      %v604 = vld [vmem:[%s602 + $0x8] sm:$0xf]
      %v605 = vld [vmem:[%s602 + $0x10] sm:$0xf]
      %v606 = vld [vmem:[%s602 + $0x18] sm:$0xf]
      %v607 = vld [vmem:[%s602 + $0x20] sm:$0xf]
      %v608 = vld [vmem:[%s602 + $0x28] sm:$0xf]
      %v609 = vld [vmem:[%s602 + $0x30] sm:$0xf]
      %v610 = vld [vmem:[%s602 + $0x38] sm:$0xf]
      %v611 = vld [vmem:[%s602 + $0x4] sm:$0x1]
      %v612 = vld [vmem:[%s602 + $0xc] sm:$0x1]
      %v613 = vld [vmem:[%s602 + $0x14] sm:$0x1]
      %v614 = vld [vmem:[%s602 + $0x1c] sm:$0x1]
      %v615 = vld [vmem:[%s602 + $0x24] sm:$0x1]
      %v616 = vld [vmem:[%s602 + $0x2c] sm:$0x1]
      %v617 = vld [vmem:[%s602 + $0x34] sm:$0x1]
      %v618 = vld [vmem:[%s602 + $0x3c] sm:$0x1]
      %v620 = vshrl.u32 %v603, 16
      %v622 = vrot.slane %v620, 4
      %v623 = vshll.u32 %v603, 16
      %v625 = vrot.slane %v623, 5
      %v626 = vor.u32 %v622, %v625
      %v627 = vrot.slane %v626, 4
      %v629 = vshll.u32 %v611, 16
      %v631 = vrot.slane %v629, 5
      %v632 = vsel %vm241, %v627, %v631
      %v634 = vshrl.u32 %v604, 16
      %v636 = vrot.slane %v634, 4
      %v637 = vshll.u32 %v604, 16
      %v639 = vrot.slane %v637, 5
      %v640 = vor.u32 %v636, %v639
      %v641 = vrot.slane %v640, 4
      %v643 = vshll.u32 %v612, 16
      %v645 = vrot.slane %v643, 5
      %v646 = vsel %vm241, %v641, %v645
      %v648 = vshrl.u32 %v605, 16
      %v650 = vrot.slane %v648, 4
      %v651 = vshll.u32 %v605, 16
      %v653 = vrot.slane %v651, 5
      %v654 = vor.u32 %v650, %v653
      %v655 = vrot.slane %v654, 4
      %v657 = vshll.u32 %v613, 16
      %v659 = vrot.slane %v657, 5
      %v660 = vsel %vm241, %v655, %v659
      %v662 = vshrl.u32 %v606, 16
      %v664 = vrot.slane %v662, 4
      %v665 = vshll.u32 %v606, 16
      %v667 = vrot.slane %v665, 5
      %v668 = vor.u32 %v664, %v667
      %v669 = vrot.slane %v668, 4
      %v671 = vshll.u32 %v614, 16
      %v673 = vrot.slane %v671, 5
      %v674 = vsel %vm241, %v669, %v673
      %v676 = vshrl.u32 %v607, 16
      %v678 = vrot.slane %v676, 4
      %v679 = vshll.u32 %v607, 16
      %v681 = vrot.slane %v679, 5
      %v682 = vor.u32 %v678, %v681
      %v683 = vrot.slane %v682, 4
      %v685 = vshll.u32 %v615, 16
      %v687 = vrot.slane %v685, 5
      %v688 = vsel %vm241, %v683, %v687
      %v690 = vshrl.u32 %v608, 16
      %v692 = vrot.slane %v690, 4
      %v693 = vshll.u32 %v608, 16
      %v695 = vrot.slane %v693, 5
      %v696 = vor.u32 %v692, %v695
      %v697 = vrot.slane %v696, 4
      %v699 = vshll.u32 %v616, 16
      %v701 = vrot.slane %v699, 5
      %v702 = vsel %vm241, %v697, %v701
      %v704 = vshrl.u32 %v609, 16
      %v706 = vrot.slane %v704, 4
      %v707 = vshll.u32 %v609, 16
      %v709 = vrot.slane %v707, 5
      %v710 = vor.u32 %v706, %v709
      %v711 = vrot.slane %v710, 4
      %v713 = vshll.u32 %v617, 16
      %v715 = vrot.slane %v713, 5
      %v716 = vsel %vm241, %v711, %v715
      %v718 = vshrl.u32 %v610, 16
      %v720 = vrot.slane %v718, 4
      %v721 = vshll.u32 %v610, 16
      %v723 = vrot.slane %v721, 5
      %v724 = vor.u32 %v720, %v723
      %v725 = vrot.slane %v724, 4
      %v727 = vshll.u32 %v618, 16
      %v729 = vrot.slane %v727, 5
      %v730 = vsel %vm241, %v725, %v729
      %v731 = vld [vmem:[%s602] sm:$0xe]
      %v732 = vld [vmem:[%s602 + $0x8] sm:$0xe]
      %v733 = vld [vmem:[%s602 + $0x10] sm:$0xe]
      %v734 = vld [vmem:[%s602 + $0x18] sm:$0xe]
      %v735 = vld [vmem:[%s602 + $0x20] sm:$0xe]
      %v736 = vld [vmem:[%s602 + $0x28] sm:$0xe]
      %v737 = vld [vmem:[%s602 + $0x30] sm:$0xe]
      %v738 = vld [vmem:[%s602 + $0x38] sm:$0xe]
      %v755 = vrot.slane %v731, 5
      %v756 = vrot.slane %v755, 4
      %v757 = vrot.slane %v611, 5
      %v758 = vsel %vm380, %v756, %v757
      %v759 = vrot.slane %v732, 5
      %v760 = vrot.slane %v759, 4
      %v761 = vrot.slane %v612, 5
      %v762 = vsel %vm380, %v760, %v761
      %v763 = vrot.slane %v733, 5
      %v764 = vrot.slane %v763, 4
      %v765 = vrot.slane %v613, 5
      %v766 = vsel %vm380, %v764, %v765
      %v767 = vrot.slane %v734, 5
      %v768 = vrot.slane %v767, 4
      %v769 = vrot.slane %v614, 5
      %v770 = vsel %vm380, %v768, %v769
      %v771 = vrot.slane %v735, 5
      %v772 = vrot.slane %v771, 4
      %v773 = vrot.slane %v615, 5
      %v774 = vsel %vm380, %v772, %v773
      %v775 = vrot.slane %v736, 5
      %v776 = vrot.slane %v775, 4
      %v777 = vrot.slane %v616, 5
      %v778 = vsel %vm380, %v776, %v777
      %v779 = vrot.slane %v737, 5
      %v780 = vrot.slane %v779, 4
      %v781 = vrot.slane %v617, 5
      %v782 = vsel %vm380, %v780, %v781
      %v783 = vrot.slane %v738, 5
      %v784 = vrot.slane %v783, 4
      %v785 = vrot.slane %v618, 5
      %v786 = vsel %vm380, %v784, %v785
      %v795 = vunpack.c.l.b16 %v223
      %v796 = vunpack.c.l.b16 %v224
      %v797 = vunpack.c.l.b16 %v225
      %v798 = vunpack.c.l.b16 %v226
      %v799 = vunpack.c.l.b16 %v227
      %v800 = vunpack.c.l.b16 %v228
      %v801 = vunpack.c.l.b16 %v229
      %v802 = vunpack.c.l.b16 %v230
      %v803 = vpack.c.b16 %v796, %v795
      %v804 = vpack.c.b16 %v798, %v797
      %v805 = vpack.c.b16 %v800, %v799
      %v806 = vpack.c.b16 %v802, %v801
      %v807 = vunpack.c.l.b16 %v255
      %v808 = vunpack.c.l.b16 %v269
      %v809 = vunpack.c.l.b16 %v283
      %v810 = vunpack.c.l.b16 %v297
      %v811 = vunpack.c.l.b16 %v311
      %v812 = vunpack.c.l.b16 %v325
      %v813 = vunpack.c.l.b16 %v339
      %v814 = vunpack.c.l.b16 %v353
      %v815 = vpack.c.b16 %v808, %v807
      %v816 = vpack.c.b16 %v810, %v809
      %v817 = vpack.c.b16 %v812, %v811
      %v818 = vpack.c.b16 %v814, %v813
      %819 = vrot.lane.b32.xlu0 %v815, 8
      %v820 = vpop.permute.xlu0 %819
      %821 = vrot.lane.b32.xlu0 %v816, 8
      %v822 = vpop.permute.xlu0 %821
      %823 = vrot.lane.b32.xlu0 %v817, 8
      %v824 = vpop.permute.xlu0 %823
      %825 = vrot.lane.b32.xlu0 %v818, 8
      %v826 = vpop.permute.xlu0 %825
      %v827 = vunpack.c.l.b16 %v384
      %v828 = vunpack.c.l.b16 %v388
      %v829 = vunpack.c.l.b16 %v392
      %v830 = vunpack.c.l.b16 %v396
      %v831 = vunpack.c.l.b16 %v400
      %v832 = vunpack.c.l.b16 %v404
      %v833 = vunpack.c.l.b16 %v408
      %v834 = vunpack.c.l.b16 %v412
      %v835 = vpack.c.b16 %v828, %v827
      %v836 = vpack.c.b16 %v830, %v829
      %v837 = vpack.c.b16 %v832, %v831
      %v838 = vpack.c.b16 %v834, %v833
      %839 = vrot.lane.b32.xlu0 %v835, 16
      %v840 = vpop.permute.xlu0 %839
      %841 = vrot.lane.b32.xlu0 %v836, 16
      %v842 = vpop.permute.xlu0 %841
      %843 = vrot.lane.b32.xlu0 %v837, 16
      %v844 = vpop.permute.xlu0 %843
      %845 = vrot.lane.b32.xlu0 %v838, 16
      %v846 = vpop.permute.xlu0 %845
      %v855 = vunpack.c.l.b16 %v416
      %v856 = vunpack.c.l.b16 %v417
      %v857 = vunpack.c.l.b16 %v418
      %v858 = vunpack.c.l.b16 %v419
      %v859 = vunpack.c.l.b16 %v420
      %v860 = vunpack.c.l.b16 %v421
      %v861 = vunpack.c.l.b16 %v422
      %v862 = vunpack.c.l.b16 %v423
      %v863 = vpack.c.b16 %v856, %v855
      %v864 = vpack.c.b16 %v858, %v857
      %v865 = vpack.c.b16 %v860, %v859
      %v866 = vpack.c.b16 %v862, %v861
      %867 = vrot.lane.b32.xlu0 %v863, 24
      %v868 = vpop.permute.xlu0 %867
      %869 = vrot.lane.b32.xlu0 %v864, 24
      %v870 = vpop.permute.xlu0 %869
      %871 = vrot.lane.b32.xlu0 %v865, 24
      %v872 = vpop.permute.xlu0 %871
      %873 = vrot.lane.b32.xlu0 %v866, 24
      %v874 = vpop.permute.xlu0 %873
      %v875 = vunpack.c.l.b16 %v445
      %v876 = vunpack.c.l.b16 %v459
      %v877 = vunpack.c.l.b16 %v473
      %v878 = vunpack.c.l.b16 %v487
      %v879 = vunpack.c.l.b16 %v501
      %v880 = vunpack.c.l.b16 %v515
      %v881 = vunpack.c.l.b16 %v529
      %v882 = vunpack.c.l.b16 %v543
      %v883 = vpack.c.b16 %v876, %v875
      %v884 = vpack.c.b16 %v878, %v877
      %v885 = vpack.c.b16 %v880, %v879
      %v886 = vpack.c.b16 %v882, %v881
      %887 = vrot.lane.b32.xlu0 %v883, 32
      %v888 = vpop.permute.xlu0 %887
      %889 = vrot.lane.b32.xlu0 %v884, 32
      %v890 = vpop.permute.xlu0 %889
      %891 = vrot.lane.b32.xlu0 %v885, 32
      %v892 = vpop.permute.xlu0 %891
      %893 = vrot.lane.b32.xlu0 %v886, 32
      %v894 = vpop.permute.xlu0 %893
      %v895 = vunpack.c.l.b16 %v571
      %v896 = vunpack.c.l.b16 %v575
      %v897 = vunpack.c.l.b16 %v579
      %v898 = vunpack.c.l.b16 %v583
      %v899 = vunpack.c.l.b16 %v587
      %v900 = vunpack.c.l.b16 %v591
      %v901 = vunpack.c.l.b16 %v595
      %v902 = vunpack.c.l.b16 %v599
      %v903 = vpack.c.b16 %v896, %v895
      %v904 = vpack.c.b16 %v898, %v897
      %v905 = vpack.c.b16 %v900, %v899
      %v906 = vpack.c.b16 %v902, %v901
      %907 = vrot.lane.b32.xlu0 %v903, 40
      %v908 = vpop.permute.xlu0 %907
      %909 = vrot.lane.b32.xlu0 %v904, 40
      %v910 = vpop.permute.xlu0 %909
      %911 = vrot.lane.b32.xlu0 %v905, 40
      %v912 = vpop.permute.xlu0 %911
      %913 = vrot.lane.b32.xlu0 %v906, 40
      %v914 = vpop.permute.xlu0 %913
      %v923 = vunpack.c.l.b16 %v603
      %v924 = vunpack.c.l.b16 %v604
      %v925 = vunpack.c.l.b16 %v605
      %v926 = vunpack.c.l.b16 %v606
      %v927 = vunpack.c.l.b16 %v607
      %v928 = vunpack.c.l.b16 %v608
      %v929 = vunpack.c.l.b16 %v609
      %v930 = vunpack.c.l.b16 %v610
      %v931 = vpack.c.b16 %v924, %v923
      %v932 = vpack.c.b16 %v926, %v925
      %v933 = vpack.c.b16 %v928, %v927
      %v934 = vpack.c.b16 %v930, %v929
      %935 = vrot.lane.b32.xlu0 %v931, 48
      %v936 = vpop.permute.xlu0 %935
      %937 = vrot.lane.b32.xlu0 %v932, 48
      %v938 = vpop.permute.xlu0 %937
      %939 = vrot.lane.b32.xlu0 %v933, 48
      %v940 = vpop.permute.xlu0 %939
      %941 = vrot.lane.b32.xlu0 %v934, 48
      %v942 = vpop.permute.xlu0 %941
      %v943 = vunpack.c.l.b16 %v632
      %v944 = vunpack.c.l.b16 %v646
      %v945 = vunpack.c.l.b16 %v660
      %v946 = vunpack.c.l.b16 %v674
      %v947 = vunpack.c.l.b16 %v688
      %v948 = vunpack.c.l.b16 %v702
      %v949 = vunpack.c.l.b16 %v716
      %v950 = vunpack.c.l.b16 %v730
      %v951 = vpack.c.b16 %v944, %v943
      %v952 = vpack.c.b16 %v946, %v945
      %v953 = vpack.c.b16 %v948, %v947
      %v954 = vpack.c.b16 %v950, %v949
      %955 = vrot.lane.b32.xlu0 %v951, 56
      %v956 = vpop.permute.xlu0 %955
      %957 = vrot.lane.b32.xlu0 %v952, 56
      %v958 = vpop.permute.xlu0 %957
      %959 = vrot.lane.b32.xlu0 %v953, 56
      %v960 = vpop.permute.xlu0 %959
      %961 = vrot.lane.b32.xlu0 %v954, 56
      %v962 = vpop.permute.xlu0 %961
      %v963 = vunpack.c.l.b16 %v758
      %v964 = vunpack.c.l.b16 %v762
      %v965 = vunpack.c.l.b16 %v766
      %v966 = vunpack.c.l.b16 %v770
      %v967 = vunpack.c.l.b16 %v774
      %v968 = vunpack.c.l.b16 %v778
      %v969 = vunpack.c.l.b16 %v782
      %v970 = vunpack.c.l.b16 %v786
      %v971 = vpack.c.b16 %v964, %v963
      %v972 = vpack.c.b16 %v966, %v965
      %v973 = vpack.c.b16 %v968, %v967
      %v974 = vpack.c.b16 %v970, %v969
      %975 = vrot.lane.b32.xlu0 %v971, 64
      %v976 = vpop.permute.xlu0 %975
      %977 = vrot.lane.b32.xlu0 %v972, 64
      %v978 = vpop.permute.xlu0 %977
      %979 = vrot.lane.b32.xlu0 %v973, 64
      %v980 = vpop.permute.xlu0 %979
      %981 = vrot.lane.b32.xlu0 %v974, 64
      %v982 = vpop.permute.xlu0 %981
      %vm983 = vcmask 64512
      %v986 = vsel %vm983, %v803, %v820
      %v989 = vsel %vm983, %v804, %v822
      %v992 = vsel %vm983, %v805, %v824
      %v995 = vsel %vm983, %v806, %v826
      %vm996 = vcmask 130048
      %v998 = vsel %vm996, %v986, %v840
      %v1000 = vsel %vm996, %v989, %v842
      %v1002 = vsel %vm996, %v992, %v844
      %v1004 = vsel %vm996, %v995, %v846
      %vm1005 = vcmask 195584
      %v1007 = vsel %vm1005, %v998, %v868
      %v1009 = vsel %vm1005, %v1000, %v870
      %v1011 = vsel %vm1005, %v1002, %v872
      %v1013 = vsel %vm1005, %v1004, %v874
      %vm1014 = vcmask 261120
      %v1016 = vsel %vm1014, %v1007, %v888
      %v1018 = vsel %vm1014, %v1009, %v890
      %v1020 = vsel %vm1014, %v1011, %v892
      %v1022 = vsel %vm1014, %v1013, %v894
      %vm1023 = vcmask 326656
      %v1025 = vsel %vm1023, %v1016, %v908
      %v1027 = vsel %vm1023, %v1018, %v910
      %v1029 = vsel %vm1023, %v1020, %v912
      %v1031 = vsel %vm1023, %v1022, %v914
      %vm1032 = vcmask 392192
      %v1034 = vsel %vm1032, %v1025, %v936
      %v1036 = vsel %vm1032, %v1027, %v938
      %v1038 = vsel %vm1032, %v1029, %v940
      %v1040 = vsel %vm1032, %v1031, %v942
      %vm1041 = vcmask 457728
      %v1043 = vsel %vm1041, %v1034, %v956
      %v1045 = vsel %vm1041, %v1036, %v958
      %v1047 = vsel %vm1041, %v1038, %v960
      %v1049 = vsel %vm1041, %v1040, %v962
      %vm1050 = vcmask 523264
      %v1052 = vsel %vm1050, %v1043, %v976
      %v1054 = vsel %vm1050, %v1045, %v978
      %v1056 = vsel %vm1050, %v1047, %v980
      %v1058 = vsel %vm1050, %v1049, %v982
      %v1059 = vld [vmem:[%s1] sm:$0xf]
      %v1060 = vld [vmem:[%s1 + $0x4] sm:$0xf]
      %v1061 = vld [vmem:[%s1 + $0x8] sm:$0xf]
      %v1062 = vld [vmem:[%s1 + $0xc] sm:$0xf]
      %v1063 = vld [vmem:[%s1 + $0x10] sm:$0xf]
      %v1064 = vld [vmem:[%s1 + $0x14] sm:$0xf]
      %v1065 = vld [vmem:[%s1 + $0x18] sm:$0xf]
      %v1066 = vld [vmem:[%s1 + $0x1c] sm:$0xf]
      %v1067 = vld [vmem:[%s1 + $0x20] sm:$0xf]
      %s1068 = sadd.s32 %s20, 1
      %s1069 = smul.u32 %s1068, 20
      %s1070 = smul.addr %s1069, 4
      %s1071 = scalar_lea.vmem %s200, %s1070
      %v1072 = vld [vmem:[%s1071] sm:$0xf]
      %v1073 = vld [vmem:[%s1071 + $0x8] sm:$0xf]
      %v1074 = vld [vmem:[%s1071 + $0x10] sm:$0xf]
      %v1075 = vld [vmem:[%s1071 + $0x18] sm:$0xf]
      %v1076 = vld [vmem:[%s1071 + $0x20] sm:$0xf]
      %v1077 = vld [vmem:[%s1071 + $0x28] sm:$0xf]
      %v1078 = vld [vmem:[%s1071 + $0x30] sm:$0xf]
      %v1079 = vld [vmem:[%s1071 + $0x38] sm:$0xf]
      %v1080 = vld [vmem:[%s1071 + $0x4] sm:$0x1]
      %v1081 = vld [vmem:[%s1071 + $0xc] sm:$0x1]
      %v1082 = vld [vmem:[%s1071 + $0x14] sm:$0x1]
      %v1083 = vld [vmem:[%s1071 + $0x1c] sm:$0x1]
      %v1084 = vld [vmem:[%s1071 + $0x24] sm:$0x1]
      %v1085 = vld [vmem:[%s1071 + $0x2c] sm:$0x1]
      %v1086 = vld [vmem:[%s1071 + $0x34] sm:$0x1]
      %v1087 = vld [vmem:[%s1071 + $0x3c] sm:$0x1]
      %v1089 = vshrl.u32 %v1072, 16
      %v1091 = vrot.slane %v1089, 4
      %v1092 = vshll.u32 %v1072, 16
      %v1094 = vrot.slane %v1092, 5
      %v1095 = vor.u32 %v1091, %v1094
      %v1096 = vrot.slane %v1095, 4
      %v1098 = vshll.u32 %v1080, 16
      %v1100 = vrot.slane %v1098, 5
      %v1101 = vsel %vm241, %v1096, %v1100
      %v1103 = vshrl.u32 %v1073, 16
      %v1105 = vrot.slane %v1103, 4
      %v1106 = vshll.u32 %v1073, 16
      %v1108 = vrot.slane %v1106, 5
      %v1109 = vor.u32 %v1105, %v1108
      %v1110 = vrot.slane %v1109, 4
      %v1112 = vshll.u32 %v1081, 16
      %v1114 = vrot.slane %v1112, 5
      %v1115 = vsel %vm241, %v1110, %v1114
      %v1117 = vshrl.u32 %v1074, 16
      %v1119 = vrot.slane %v1117, 4
      %v1120 = vshll.u32 %v1074, 16
      %v1122 = vrot.slane %v1120, 5
      %v1123 = vor.u32 %v1119, %v1122
      %v1124 = vrot.slane %v1123, 4
      %v1126 = vshll.u32 %v1082, 16
      %v1128 = vrot.slane %v1126, 5
      %v1129 = vsel %vm241, %v1124, %v1128
      %v1131 = vshrl.u32 %v1075, 16
      %v1133 = vrot.slane %v1131, 4
      %v1134 = vshll.u32 %v1075, 16
      %v1136 = vrot.slane %v1134, 5
      %v1137 = vor.u32 %v1133, %v1136
      %v1138 = vrot.slane %v1137, 4
      %v1140 = vshll.u32 %v1083, 16
      %v1142 = vrot.slane %v1140, 5
      %v1143 = vsel %vm241, %v1138, %v1142
      %v1145 = vshrl.u32 %v1076, 16
      %v1147 = vrot.slane %v1145, 4
      %v1148 = vshll.u32 %v1076, 16
      %v1150 = vrot.slane %v1148, 5
      %v1151 = vor.u32 %v1147, %v1150
      %v1152 = vrot.slane %v1151, 4
      %v1154 = vshll.u32 %v1084, 16
      %v1156 = vrot.slane %v1154, 5
      %v1157 = vsel %vm241, %v1152, %v1156
      %v1159 = vshrl.u32 %v1077, 16
      %v1161 = vrot.slane %v1159, 4
      %v1162 = vshll.u32 %v1077, 16
      %v1164 = vrot.slane %v1162, 5
      %v1165 = vor.u32 %v1161, %v1164
      %v1166 = vrot.slane %v1165, 4
      %v1168 = vshll.u32 %v1085, 16
      %v1170 = vrot.slane %v1168, 5
      %v1171 = vsel %vm241, %v1166, %v1170
      %v1173 = vshrl.u32 %v1078, 16
      %v1175 = vrot.slane %v1173, 4
      %v1176 = vshll.u32 %v1078, 16
      %v1178 = vrot.slane %v1176, 5
      %v1179 = vor.u32 %v1175, %v1178
      %v1180 = vrot.slane %v1179, 4
      %v1182 = vshll.u32 %v1086, 16
      %v1184 = vrot.slane %v1182, 5
      %v1185 = vsel %vm241, %v1180, %v1184
      %v1187 = vshrl.u32 %v1079, 16
      %v1189 = vrot.slane %v1187, 4
      %v1190 = vshll.u32 %v1079, 16
      %v1192 = vrot.slane %v1190, 5
      %v1193 = vor.u32 %v1189, %v1192
      %v1194 = vrot.slane %v1193, 4
      %v1196 = vshll.u32 %v1087, 16
      %v1198 = vrot.slane %v1196, 5
      %v1199 = vsel %vm241, %v1194, %v1198
      %v1200 = vld [vmem:[%s1071] sm:$0xe]
      %v1201 = vld [vmem:[%s1071 + $0x8] sm:$0xe]
      %v1202 = vld [vmem:[%s1071 + $0x10] sm:$0xe]
      %v1203 = vld [vmem:[%s1071 + $0x18] sm:$0xe]
      %v1204 = vld [vmem:[%s1071 + $0x20] sm:$0xe]
      %v1205 = vld [vmem:[%s1071 + $0x28] sm:$0xe]
      %v1206 = vld [vmem:[%s1071 + $0x30] sm:$0xe]
      %v1207 = vld [vmem:[%s1071 + $0x38] sm:$0xe]
      %v1224 = vrot.slane %v1200, 5
      %v1225 = vrot.slane %v1224, 4
      %v1226 = vrot.slane %v1080, 5
      %v1227 = vsel %vm380, %v1225, %v1226
      %v1228 = vrot.slane %v1201, 5
      %v1229 = vrot.slane %v1228, 4
      %v1230 = vrot.slane %v1081, 5
      %v1231 = vsel %vm380, %v1229, %v1230
      %v1232 = vrot.slane %v1202, 5
      %v1233 = vrot.slane %v1232, 4
      %v1234 = vrot.slane %v1082, 5
      %v1235 = vsel %vm380, %v1233, %v1234
      %v1236 = vrot.slane %v1203, 5
      %v1237 = vrot.slane %v1236, 4
      %v1238 = vrot.slane %v1083, 5
      %v1239 = vsel %vm380, %v1237, %v1238
      %v1240 = vrot.slane %v1204, 5
      %v1241 = vrot.slane %v1240, 4
      %v1242 = vrot.slane %v1084, 5
      %v1243 = vsel %vm380, %v1241, %v1242
      %v1244 = vrot.slane %v1205, 5
      %v1245 = vrot.slane %v1244, 4
      %v1246 = vrot.slane %v1085, 5
      %v1247 = vsel %vm380, %v1245, %v1246
      %v1248 = vrot.slane %v1206, 5
      %v1249 = vrot.slane %v1248, 4
      %v1250 = vrot.slane %v1086, 5
      %v1251 = vsel %vm380, %v1249, %v1250
      %v1252 = vrot.slane %v1207, 5
      %v1253 = vrot.slane %v1252, 4
      %v1254 = vrot.slane %v1087, 5
      %v1255 = vsel %vm380, %v1253, %v1254
      %s1256 = sadd.s32 2, %s1069
      %s1257 = smul.addr %s1256, 4
      %s1258 = scalar_lea.vmem %s200, %s1257
      %v1259 = vld [vmem:[%s1258] sm:$0xf]
      %v1260 = vld [vmem:[%s1258 + $0x8] sm:$0xf]
      %v1261 = vld [vmem:[%s1258 + $0x10] sm:$0xf]
      %v1262 = vld [vmem:[%s1258 + $0x18] sm:$0xf]
      %v1263 = vld [vmem:[%s1258 + $0x20] sm:$0xf]
      %v1264 = vld [vmem:[%s1258 + $0x28] sm:$0xf]
      %v1265 = vld [vmem:[%s1258 + $0x30] sm:$0xf]
      %v1266 = vld [vmem:[%s1258 + $0x38] sm:$0xf]
      %v1267 = vld [vmem:[%s1258 + $0x4] sm:$0x1]
      %v1268 = vld [vmem:[%s1258 + $0xc] sm:$0x1]
      %v1269 = vld [vmem:[%s1258 + $0x14] sm:$0x1]
      %v1270 = vld [vmem:[%s1258 + $0x1c] sm:$0x1]
      %v1271 = vld [vmem:[%s1258 + $0x24] sm:$0x1]
      %v1272 = vld [vmem:[%s1258 + $0x2c] sm:$0x1]
      %v1273 = vld [vmem:[%s1258 + $0x34] sm:$0x1]
      %v1274 = vld [vmem:[%s1258 + $0x3c] sm:$0x1]
      %v1276 = vshrl.u32 %v1259, 16
      %v1278 = vrot.slane %v1276, 4
      %v1279 = vshll.u32 %v1259, 16
      %v1281 = vrot.slane %v1279, 5
      %v1282 = vor.u32 %v1278, %v1281
      %v1283 = vrot.slane %v1282, 4
      %v1285 = vshll.u32 %v1267, 16
      %v1287 = vrot.slane %v1285, 5
      %v1288 = vsel %vm241, %v1283, %v1287
      %v1290 = vshrl.u32 %v1260, 16
      %v1292 = vrot.slane %v1290, 4
      %v1293 = vshll.u32 %v1260, 16
      %v1295 = vrot.slane %v1293, 5
      %v1296 = vor.u32 %v1292, %v1295
      %v1297 = vrot.slane %v1296, 4
      %v1299 = vshll.u32 %v1268, 16
      %v1301 = vrot.slane %v1299, 5
      %v1302 = vsel %vm241, %v1297, %v1301
      %v1304 = vshrl.u32 %v1261, 16
      %v1306 = vrot.slane %v1304, 4
      %v1307 = vshll.u32 %v1261, 16
      %v1309 = vrot.slane %v1307, 5
      %v1310 = vor.u32 %v1306, %v1309
      %v1311 = vrot.slane %v1310, 4
      %v1313 = vshll.u32 %v1269, 16
      %v1315 = vrot.slane %v1313, 5
      %v1316 = vsel %vm241, %v1311, %v1315
      %v1318 = vshrl.u32 %v1262, 16
      %v1320 = vrot.slane %v1318, 4
      %v1321 = vshll.u32 %v1262, 16
      %v1323 = vrot.slane %v1321, 5
      %v1324 = vor.u32 %v1320, %v1323
      %v1325 = vrot.slane %v1324, 4
      %v1327 = vshll.u32 %v1270, 16
      %v1329 = vrot.slane %v1327, 5
      %v1330 = vsel %vm241, %v1325, %v1329
      %v1332 = vshrl.u32 %v1263, 16
      %v1334 = vrot.slane %v1332, 4
      %v1335 = vshll.u32 %v1263, 16
      %v1337 = vrot.slane %v1335, 5
      %v1338 = vor.u32 %v1334, %v1337
      %v1339 = vrot.slane %v1338, 4
      %v1341 = vshll.u32 %v1271, 16
      %v1343 = vrot.slane %v1341, 5
      %v1344 = vsel %vm241, %v1339, %v1343
      %v1346 = vshrl.u32 %v1264, 16
      %v1348 = vrot.slane %v1346, 4
      %v1349 = vshll.u32 %v1264, 16
      %v1351 = vrot.slane %v1349, 5
      %v1352 = vor.u32 %v1348, %v1351
      %v1353 = vrot.slane %v1352, 4
      %v1355 = vshll.u32 %v1272, 16
      %v1357 = vrot.slane %v1355, 5
      %v1358 = vsel %vm241, %v1353, %v1357
      %v1360 = vshrl.u32 %v1265, 16
      %v1362 = vrot.slane %v1360, 4
      %v1363 = vshll.u32 %v1265, 16
      %v1365 = vrot.slane %v1363, 5
      %v1366 = vor.u32 %v1362, %v1365
      %v1367 = vrot.slane %v1366, 4
      %v1369 = vshll.u32 %v1273, 16
      %v1371 = vrot.slane %v1369, 5
      %v1372 = vsel %vm241, %v1367, %v1371
      %v1374 = vshrl.u32 %v1266, 16
      %v1376 = vrot.slane %v1374, 4
      %v1377 = vshll.u32 %v1266, 16
      %v1379 = vrot.slane %v1377, 5
      %v1380 = vor.u32 %v1376, %v1379
      %v1381 = vrot.slane %v1380, 4
      %v1383 = vshll.u32 %v1274, 16
      %v1385 = vrot.slane %v1383, 5
      %v1386 = vsel %vm241, %v1381, %v1385
      %v1387 = vld [vmem:[%s1258] sm:$0xe]
      %v1388 = vld [vmem:[%s1258 + $0x8] sm:$0xe]
      %v1389 = vld [vmem:[%s1258 + $0x10] sm:$0xe]
      %v1390 = vld [vmem:[%s1258 + $0x18] sm:$0xe]
      %v1391 = vld [vmem:[%s1258 + $0x20] sm:$0xe]
      %v1392 = vld [vmem:[%s1258 + $0x28] sm:$0xe]
      %v1393 = vld [vmem:[%s1258 + $0x30] sm:$0xe]
      %v1394 = vld [vmem:[%s1258 + $0x38] sm:$0xe]
      %v1411 = vrot.slane %v1387, 5
      %v1412 = vrot.slane %v1411, 4
      %v1413 = vrot.slane %v1267, 5
      %v1414 = vsel %vm380, %v1412, %v1413
      %v1415 = vrot.slane %v1388, 5
      %v1416 = vrot.slane %v1415, 4
      %v1417 = vrot.slane %v1268, 5
      %v1418 = vsel %vm380, %v1416, %v1417
      %v1419 = vrot.slane %v1389, 5
      %v1420 = vrot.slane %v1419, 4
      %v1421 = vrot.slane %v1269, 5
      %v1422 = vsel %vm380, %v1420, %v1421
      %v1423 = vrot.slane %v1390, 5
      %v1424 = vrot.slane %v1423, 4
      %v1425 = vrot.slane %v1270, 5
      %v1426 = vsel %vm380, %v1424, %v1425
      %v1427 = vrot.slane %v1391, 5
      %v1428 = vrot.slane %v1427, 4
      %v1429 = vrot.slane %v1271, 5
      %v1430 = vsel %vm380, %v1428, %v1429
      %v1431 = vrot.slane %v1392, 5
      %v1432 = vrot.slane %v1431, 4
      %v1433 = vrot.slane %v1272, 5
      %v1434 = vsel %vm380, %v1432, %v1433
      %v1435 = vrot.slane %v1393, 5
      %v1436 = vrot.slane %v1435, 4
      %v1437 = vrot.slane %v1273, 5
      %v1438 = vsel %vm380, %v1436, %v1437
      %v1439 = vrot.slane %v1394, 5
      %v1440 = vrot.slane %v1439, 4
      %v1441 = vrot.slane %v1274, 5
      %v1442 = vsel %vm380, %v1440, %v1441
      %s1443 = sadd.s32 4, %s1069
      %s1444 = smul.addr %s1443, 4
      %s1445 = scalar_lea.vmem %s200, %s1444
      %v1446 = vld [vmem:[%s1445] sm:$0xf]
      %v1447 = vld [vmem:[%s1445 + $0x8] sm:$0xf]
      %v1448 = vld [vmem:[%s1445 + $0x10] sm:$0xf]
      %v1449 = vld [vmem:[%s1445 + $0x18] sm:$0xf]
      %v1450 = vld [vmem:[%s1445 + $0x20] sm:$0xf]
      %v1451 = vld [vmem:[%s1445 + $0x28] sm:$0xf]
      %v1452 = vld [vmem:[%s1445 + $0x30] sm:$0xf]
      %v1453 = vld [vmem:[%s1445 + $0x38] sm:$0xf]
      %v1454 = vld [vmem:[%s1445 + $0x4] sm:$0x1]
      %v1455 = vld [vmem:[%s1445 + $0xc] sm:$0x1]
      %v1456 = vld [vmem:[%s1445 + $0x14] sm:$0x1]
      %v1457 = vld [vmem:[%s1445 + $0x1c] sm:$0x1]
      %v1458 = vld [vmem:[%s1445 + $0x24] sm:$0x1]
      %v1459 = vld [vmem:[%s1445 + $0x2c] sm:$0x1]
      %v1460 = vld [vmem:[%s1445 + $0x34] sm:$0x1]
      %v1461 = vld [vmem:[%s1445 + $0x3c] sm:$0x1]
      %v1463 = vshrl.u32 %v1446, 16
      %v1465 = vrot.slane %v1463, 4
      %v1466 = vshll.u32 %v1446, 16
      %v1468 = vrot.slane %v1466, 5
      %v1469 = vor.u32 %v1465, %v1468
      %v1470 = vrot.slane %v1469, 4
      %v1472 = vshll.u32 %v1454, 16
      %v1474 = vrot.slane %v1472, 5
      %v1475 = vsel %vm241, %v1470, %v1474
      %v1477 = vshrl.u32 %v1447, 16
      %v1479 = vrot.slane %v1477, 4
      %v1480 = vshll.u32 %v1447, 16
      %v1482 = vrot.slane %v1480, 5
      %v1483 = vor.u32 %v1479, %v1482
      %v1484 = vrot.slane %v1483, 4
      %v1486 = vshll.u32 %v1455, 16
      %v1488 = vrot.slane %v1486, 5
      %v1489 = vsel %vm241, %v1484, %v1488
      %v1491 = vshrl.u32 %v1448, 16
      %v1493 = vrot.slane %v1491, 4
      %v1494 = vshll.u32 %v1448, 16
      %v1496 = vrot.slane %v1494, 5
      %v1497 = vor.u32 %v1493, %v1496
      %v1498 = vrot.slane %v1497, 4
      %v1500 = vshll.u32 %v1456, 16
      %v1502 = vrot.slane %v1500, 5
      %v1503 = vsel %vm241, %v1498, %v1502
      %v1505 = vshrl.u32 %v1449, 16
      %v1507 = vrot.slane %v1505, 4
      %v1508 = vshll.u32 %v1449, 16
      %v1510 = vrot.slane %v1508, 5
      %v1511 = vor.u32 %v1507, %v1510
      %v1512 = vrot.slane %v1511, 4
      %v1514 = vshll.u32 %v1457, 16
      %v1516 = vrot.slane %v1514, 5
      %v1517 = vsel %vm241, %v1512, %v1516
      %v1519 = vshrl.u32 %v1450, 16
      %v1521 = vrot.slane %v1519, 4
      %v1522 = vshll.u32 %v1450, 16
      %v1524 = vrot.slane %v1522, 5
      %v1525 = vor.u32 %v1521, %v1524
      %v1526 = vrot.slane %v1525, 4
      %v1528 = vshll.u32 %v1458, 16
      %v1530 = vrot.slane %v1528, 5
      %v1531 = vsel %vm241, %v1526, %v1530
      %v1533 = vshrl.u32 %v1451, 16
      %v1535 = vrot.slane %v1533, 4
      %v1536 = vshll.u32 %v1451, 16
      %v1538 = vrot.slane %v1536, 5
      %v1539 = vor.u32 %v1535, %v1538
      %v1540 = vrot.slane %v1539, 4
      %v1542 = vshll.u32 %v1459, 16
      %v1544 = vrot.slane %v1542, 5
      %v1545 = vsel %vm241, %v1540, %v1544
      %v1547 = vshrl.u32 %v1452, 16
      %v1549 = vrot.slane %v1547, 4
      %v1550 = vshll.u32 %v1452, 16
      %v1552 = vrot.slane %v1550, 5
      %v1553 = vor.u32 %v1549, %v1552
      %v1554 = vrot.slane %v1553, 4
      %v1556 = vshll.u32 %v1460, 16
      %v1558 = vrot.slane %v1556, 5
      %v1559 = vsel %vm241, %v1554, %v1558
      %v1561 = vshrl.u32 %v1453, 16
      %v1563 = vrot.slane %v1561, 4
      %v1564 = vshll.u32 %v1453, 16
      %v1566 = vrot.slane %v1564, 5
      %v1567 = vor.u32 %v1563, %v1566
      %v1568 = vrot.slane %v1567, 4
      %v1570 = vshll.u32 %v1461, 16
      %v1572 = vrot.slane %v1570, 5
      %v1573 = vsel %vm241, %v1568, %v1572
      %v1574 = vld [vmem:[%s1445] sm:$0xe]
      %v1575 = vld [vmem:[%s1445 + $0x8] sm:$0xe]
      %v1576 = vld [vmem:[%s1445 + $0x10] sm:$0xe]
      %v1577 = vld [vmem:[%s1445 + $0x18] sm:$0xe]
      %v1578 = vld [vmem:[%s1445 + $0x20] sm:$0xe]
      %v1579 = vld [vmem:[%s1445 + $0x28] sm:$0xe]
      %v1580 = vld [vmem:[%s1445 + $0x30] sm:$0xe]
      %v1581 = vld [vmem:[%s1445 + $0x38] sm:$0xe]
      %v1598 = vrot.slane %v1574, 5
      %v1599 = vrot.slane %v1598, 4
      %v1600 = vrot.slane %v1454, 5
      %v1601 = vsel %vm380, %v1599, %v1600
      %v1602 = vrot.slane %v1575, 5
      %v1603 = vrot.slane %v1602, 4
      %v1604 = vrot.slane %v1455, 5
      %v1605 = vsel %vm380, %v1603, %v1604
      %v1606 = vrot.slane %v1576, 5
      %v1607 = vrot.slane %v1606, 4
      %v1608 = vrot.slane %v1456, 5
      %v1609 = vsel %vm380, %v1607, %v1608
      %v1610 = vrot.slane %v1577, 5
      %v1611 = vrot.slane %v1610, 4
      %v1612 = vrot.slane %v1457, 5
      %v1613 = vsel %vm380, %v1611, %v1612
      %v1614 = vrot.slane %v1578, 5
      %v1615 = vrot.slane %v1614, 4
      %v1616 = vrot.slane %v1458, 5
      %v1617 = vsel %vm380, %v1615, %v1616
      %v1618 = vrot.slane %v1579, 5
      %v1619 = vrot.slane %v1618, 4
      %v1620 = vrot.slane %v1459, 5
      %v1621 = vsel %vm380, %v1619, %v1620
      %v1622 = vrot.slane %v1580, 5
      %v1623 = vrot.slane %v1622, 4
      %v1624 = vrot.slane %v1460, 5
      %v1625 = vsel %vm380, %v1623, %v1624
      %v1626 = vrot.slane %v1581, 5
      %v1627 = vrot.slane %v1626, 4
      %v1628 = vrot.slane %v1461, 5
      %v1629 = vsel %vm380, %v1627, %v1628
      %v1638 = vunpack.c.l.b16 %v1072
      %v1639 = vunpack.c.l.b16 %v1073
      %v1640 = vunpack.c.l.b16 %v1074
      %v1641 = vunpack.c.l.b16 %v1075
      %v1642 = vunpack.c.l.b16 %v1076
      %v1643 = vunpack.c.l.b16 %v1077
      %v1644 = vunpack.c.l.b16 %v1078
      %v1645 = vunpack.c.l.b16 %v1079
      %v1646 = vpack.c.b16 %v1639, %v1638
      %v1647 = vpack.c.b16 %v1641, %v1640
      %v1648 = vpack.c.b16 %v1643, %v1642
      %v1649 = vpack.c.b16 %v1645, %v1644
      %v1650 = vunpack.c.l.b16 %v1101
      %v1651 = vunpack.c.l.b16 %v1115
      %v1652 = vunpack.c.l.b16 %v1129
      %v1653 = vunpack.c.l.b16 %v1143
      %v1654 = vunpack.c.l.b16 %v1157
      %v1655 = vunpack.c.l.b16 %v1171
      %v1656 = vunpack.c.l.b16 %v1185
      %v1657 = vunpack.c.l.b16 %v1199
      %v1658 = vpack.c.b16 %v1651, %v1650
      %v1659 = vpack.c.b16 %v1653, %v1652
      %v1660 = vpack.c.b16 %v1655, %v1654
      %v1661 = vpack.c.b16 %v1657, %v1656
      %1662 = vrot.lane.b32.xlu0 %v1658, 8
      %v1663 = vpop.permute.xlu0 %1662
      %1664 = vrot.lane.b32.xlu0 %v1659, 8
      %v1665 = vpop.permute.xlu0 %1664
      %1666 = vrot.lane.b32.xlu0 %v1660, 8
      %v1667 = vpop.permute.xlu0 %1666
      %1668 = vrot.lane.b32.xlu0 %v1661, 8
      %v1669 = vpop.permute.xlu0 %1668
      %v1670 = vunpack.c.l.b16 %v1227
      %v1671 = vunpack.c.l.b16 %v1231
      %v1672 = vunpack.c.l.b16 %v1235
      %v1673 = vunpack.c.l.b16 %v1239
      %v1674 = vunpack.c.l.b16 %v1243
      %v1675 = vunpack.c.l.b16 %v1247
      %v1676 = vunpack.c.l.b16 %v1251
      %v1677 = vunpack.c.l.b16 %v1255
      %v1678 = vpack.c.b16 %v1671, %v1670
      %v1679 = vpack.c.b16 %v1673, %v1672
      %v1680 = vpack.c.b16 %v1675, %v1674
      %v1681 = vpack.c.b16 %v1677, %v1676
      %1682 = vrot.lane.b32.xlu0 %v1678, 16
      %v1683 = vpop.permute.xlu0 %1682
      %1684 = vrot.lane.b32.xlu0 %v1679, 16
      %v1685 = vpop.permute.xlu0 %1684
      %1686 = vrot.lane.b32.xlu0 %v1680, 16
      %v1687 = vpop.permute.xlu0 %1686
      %1688 = vrot.lane.b32.xlu0 %v1681, 16
      %v1689 = vpop.permute.xlu0 %1688
      %v1698 = vunpack.c.l.b16 %v1259
      %v1699 = vunpack.c.l.b16 %v1260
      %v1700 = vunpack.c.l.b16 %v1261
      %v1701 = vunpack.c.l.b16 %v1262
      %v1702 = vunpack.c.l.b16 %v1263
      %v1703 = vunpack.c.l.b16 %v1264
      %v1704 = vunpack.c.l.b16 %v1265
      %v1705 = vunpack.c.l.b16 %v1266
      %v1706 = vpack.c.b16 %v1699, %v1698
      %v1707 = vpack.c.b16 %v1701, %v1700
      %v1708 = vpack.c.b16 %v1703, %v1702
      %v1709 = vpack.c.b16 %v1705, %v1704
      %1710 = vrot.lane.b32.xlu0 %v1706, 24
      %v1711 = vpop.permute.xlu0 %1710
      %1712 = vrot.lane.b32.xlu0 %v1707, 24
      %v1713 = vpop.permute.xlu0 %1712
      %1714 = vrot.lane.b32.xlu0 %v1708, 24
      %v1715 = vpop.permute.xlu0 %1714
      %1716 = vrot.lane.b32.xlu0 %v1709, 24
      %v1717 = vpop.permute.xlu0 %1716
      %v1718 = vunpack.c.l.b16 %v1288
      %v1719 = vunpack.c.l.b16 %v1302
      %v1720 = vunpack.c.l.b16 %v1316
      %v1721 = vunpack.c.l.b16 %v1330
      %v1722 = vunpack.c.l.b16 %v1344
      %v1723 = vunpack.c.l.b16 %v1358
      %v1724 = vunpack.c.l.b16 %v1372
      %v1725 = vunpack.c.l.b16 %v1386
      %v1726 = vpack.c.b16 %v1719, %v1718
      %v1727 = vpack.c.b16 %v1721, %v1720
      %v1728 = vpack.c.b16 %v1723, %v1722
      %v1729 = vpack.c.b16 %v1725, %v1724
      %1730 = vrot.lane.b32.xlu0 %v1726, 32
      %v1731 = vpop.permute.xlu0 %1730
      %1732 = vrot.lane.b32.xlu0 %v1727, 32
      %v1733 = vpop.permute.xlu0 %1732
      %1734 = vrot.lane.b32.xlu0 %v1728, 32
      %v1735 = vpop.permute.xlu0 %1734
      %1736 = vrot.lane.b32.xlu0 %v1729, 32
      %v1737 = vpop.permute.xlu0 %1736
      %v1738 = vunpack.c.l.b16 %v1414
      %v1739 = vunpack.c.l.b16 %v1418
      %v1740 = vunpack.c.l.b16 %v1422
      %v1741 = vunpack.c.l.b16 %v1426
      %v1742 = vunpack.c.l.b16 %v1430
      %v1743 = vunpack.c.l.b16 %v1434
      %v1744 = vunpack.c.l.b16 %v1438
      %v1745 = vunpack.c.l.b16 %v1442
      %v1746 = vpack.c.b16 %v1739, %v1738
      %v1747 = vpack.c.b16 %v1741, %v1740
      %v1748 = vpack.c.b16 %v1743, %v1742
      %v1749 = vpack.c.b16 %v1745, %v1744
      %1750 = vrot.lane.b32.xlu0 %v1746, 40
      %v1751 = vpop.permute.xlu0 %1750
      %1752 = vrot.lane.b32.xlu0 %v1747, 40
      %v1753 = vpop.permute.xlu0 %1752
      %1754 = vrot.lane.b32.xlu0 %v1748, 40
      %v1755 = vpop.permute.xlu0 %1754
      %1756 = vrot.lane.b32.xlu0 %v1749, 40
      %v1757 = vpop.permute.xlu0 %1756
      %v1766 = vunpack.c.l.b16 %v1446
      %v1767 = vunpack.c.l.b16 %v1447
      %v1768 = vunpack.c.l.b16 %v1448
      %v1769 = vunpack.c.l.b16 %v1449
      %v1770 = vunpack.c.l.b16 %v1450
      %v1771 = vunpack.c.l.b16 %v1451
      %v1772 = vunpack.c.l.b16 %v1452
      %v1773 = vunpack.c.l.b16 %v1453
      %v1774 = vpack.c.b16 %v1767, %v1766
      %v1775 = vpack.c.b16 %v1769, %v1768
      %v1776 = vpack.c.b16 %v1771, %v1770
      %v1777 = vpack.c.b16 %v1773, %v1772
      %1778 = vrot.lane.b32.xlu0 %v1774, 48
      %v1779 = vpop.permute.xlu0 %1778
      %1780 = vrot.lane.b32.xlu0 %v1775, 48
      %v1781 = vpop.permute.xlu0 %1780
      %1782 = vrot.lane.b32.xlu0 %v1776, 48
      %v1783 = vpop.permute.xlu0 %1782
      %1784 = vrot.lane.b32.xlu0 %v1777, 48
      %v1785 = vpop.permute.xlu0 %1784
      %v1786 = vunpack.c.l.b16 %v1475
      %v1787 = vunpack.c.l.b16 %v1489
      %v1788 = vunpack.c.l.b16 %v1503
      %v1789 = vunpack.c.l.b16 %v1517
      %v1790 = vunpack.c.l.b16 %v1531
      %v1791 = vunpack.c.l.b16 %v1545
      %v1792 = vunpack.c.l.b16 %v1559
      %v1793 = vunpack.c.l.b16 %v1573
      %v1794 = vpack.c.b16 %v1787, %v1786
      %v1795 = vpack.c.b16 %v1789, %v1788
      %v1796 = vpack.c.b16 %v1791, %v1790
      %v1797 = vpack.c.b16 %v1793, %v1792
      %1798 = vrot.lane.b32.xlu0 %v1794, 56
      %v1799 = vpop.permute.xlu0 %1798
      %1800 = vrot.lane.b32.xlu0 %v1795, 56
      %v1801 = vpop.permute.xlu0 %1800
      %1802 = vrot.lane.b32.xlu0 %v1796, 56
      %v1803 = vpop.permute.xlu0 %1802
      %1804 = vrot.lane.b32.xlu0 %v1797, 56
      %v1805 = vpop.permute.xlu0 %1804
      %v1806 = vunpack.c.l.b16 %v1601
      %v1807 = vunpack.c.l.b16 %v1605
      %v1808 = vunpack.c.l.b16 %v1609
      %v1809 = vunpack.c.l.b16 %v1613
      %v1810 = vunpack.c.l.b16 %v1617
      %v1811 = vunpack.c.l.b16 %v1621
      %v1812 = vunpack.c.l.b16 %v1625
      %v1813 = vunpack.c.l.b16 %v1629
      %v1814 = vpack.c.b16 %v1807, %v1806
      %v1815 = vpack.c.b16 %v1809, %v1808
      %v1816 = vpack.c.b16 %v1811, %v1810
      %v1817 = vpack.c.b16 %v1813, %v1812
      %1818 = vrot.lane.b32.xlu0 %v1814, 64
      %v1819 = vpop.permute.xlu0 %1818
      %1820 = vrot.lane.b32.xlu0 %v1815, 64
      %v1821 = vpop.permute.xlu0 %1820
      %1822 = vrot.lane.b32.xlu0 %v1816, 64
      %v1823 = vpop.permute.xlu0 %1822
      %1824 = vrot.lane.b32.xlu0 %v1817, 64
      %v1825 = vpop.permute.xlu0 %1824
      %v1828 = vsel %vm983, %v1646, %v1663
      %v1831 = vsel %vm983, %v1647, %v1665
      %v1834 = vsel %vm983, %v1648, %v1667
      %v1837 = vsel %vm983, %v1649, %v1669
      %v1839 = vsel %vm996, %v1828, %v1683
      %v1841 = vsel %vm996, %v1831, %v1685
      %v1843 = vsel %vm996, %v1834, %v1687
      %v1845 = vsel %vm996, %v1837, %v1689
      %v1847 = vsel %vm1005, %v1839, %v1711
      %v1849 = vsel %vm1005, %v1841, %v1713
      %v1851 = vsel %vm1005, %v1843, %v1715
      %v1853 = vsel %vm1005, %v1845, %v1717
      %v1855 = vsel %vm1014, %v1847, %v1731
      %v1857 = vsel %vm1014, %v1849, %v1733
      %v1859 = vsel %vm1014, %v1851, %v1735
      %v1861 = vsel %vm1014, %v1853, %v1737
      %v1863 = vsel %vm1023, %v1855, %v1751
      %v1865 = vsel %vm1023, %v1857, %v1753
      %v1867 = vsel %vm1023, %v1859, %v1755
      %v1869 = vsel %vm1023, %v1861, %v1757
      %v1871 = vsel %vm1032, %v1863, %v1779
      %v1873 = vsel %vm1032, %v1865, %v1781
      %v1875 = vsel %vm1032, %v1867, %v1783
      %v1877 = vsel %vm1032, %v1869, %v1785
      %v1879 = vsel %vm1041, %v1871, %v1799
      %v1881 = vsel %vm1041, %v1873, %v1801
      %v1883 = vsel %vm1041, %v1875, %v1803
      %v1885 = vsel %vm1041, %v1877, %v1805
      %v1887 = vsel %vm1050, %v1879, %v1819
      %v1889 = vsel %vm1050, %v1881, %v1821
      %v1891 = vsel %vm1050, %v1883, %v1823
      %v1893 = vsel %vm1050, %v1885, %v1825
      %s1894 = scalar_lea.vmem %s1, 36
      %v1895 = vld [vmem:[%s1894] sm:$0xf]
      %v1896 = vld [vmem:[%s1894 + $0x4] sm:$0xf]
      %v1897 = vld [vmem:[%s1894 + $0x8] sm:$0xf]
      %v1898 = vld [vmem:[%s1894 + $0xc] sm:$0xf]
      %v1899 = vld [vmem:[%s1894 + $0x10] sm:$0xf]
      %v1900 = vld [vmem:[%s1894 + $0x14] sm:$0xf]
      %v1901 = vld [vmem:[%s1894 + $0x18] sm:$0xf]
      %v1902 = vld [vmem:[%s1894 + $0x1c] sm:$0xf]
      %v1903 = vld [vmem:[%s1894 + $0x20] sm:$0xf]
      %v1913 = vunpack.c.l.b16 %v1895
      %v1914 = vunpack.c.l.b16 %v1896
      %v1915 = vunpack.c.l.b16 %v1897
      %v1916 = vunpack.c.l.b16 %v1898
      %v1917 = vunpack.c.l.b16 %v1899
      %v1918 = vunpack.c.l.b16 %v1900
      %v1919 = vunpack.c.l.b16 %v1901
      %v1920 = vunpack.c.l.b16 %v1902
      %v1921 = vunpack.c.l.b16 %v1903
      %v1922 = vpack.c.b16 %v1914, %v1913
      %v1923 = vpack.c.b16 %v1916, %v1915
      %v1924 = vpack.c.b16 %v1918, %v1917
      %v1925 = vpack.c.b16 %v1920, %v1919
      %v1926 = vpack.c.b16 %v1921, %v1921
      %vm1931 = vcmask 588800
      %v1932 = vsel %vm1931, %v1887, 0
      %v1934 = vsel %vm1931, %v1889, 0
      %v1936 = vsel %vm1931, %v1891, 0
      %v1938 = vsel %vm1931, %v1893, 0
      %vm1940 = vcmask 1043456
      %v1942 = vsel %vm1940, %v1926, 0
      %1944 = vmatpush.bf16.msra.mxu0 0
      %1945 = vmatpush.bf16.msra.mxu0 0
      %1946 = vmatpush.bf16.msra.mxu0 0
      %1947 = vmatpush.bf16.msra.mxu0 %v1942
      %1948 = vmatpush.bf16.msra.mxu0 %v1925
      %1949 = vmatpush.bf16.msra.mxu0 %v1924
      %1950 = vmatpush.bf16.msra.mxu0 %v1923
      %1951 = vmatpush.bf16.msra.mxu0 %v1922
      %1952 = vmatmul.bf16.gmra.mxu0 %v1932
      %v1953 = vpop.f32.mrf.mxu0
      %v1954 = vadd.f32 0.0, %v1953
      %v1955 = vpop.f32.mrf.mxu0
      %v1956 = vadd.f32 0.0, %v1955
      %1957 = vmatmul.bf16.gmra.mxu0 %v1934
      %v1958 = vpop.f32.mrf.mxu0
      %v1959 = vadd.f32 0.0, %v1958
      %v1960 = vpop.f32.mrf.mxu0
      %v1961 = vadd.f32 0.0, %v1960
      %1962 = vmatmul.bf16.gmra.mxu0 %v1936
      %v1963 = vpop.f32.mrf.mxu0
      %v1964 = vadd.f32 0.0, %v1963
      %v1965 = vpop.f32.mrf.mxu0
      %v1966 = vadd.f32 0.0, %v1965
      %1967 = vmatmul.bf16.gmra.mxu0 %v1938
      %v1968 = vpop.f32.mrf.mxu0
      %v1969 = vadd.f32 0.0, %v1968
      %v1970 = vpop.f32.mrf.mxu0
      %v1971 = vadd.f32 0.0, %v1970
      %1972 = vdwg.mxu0
      %v1982 = vunpack.c.l.b16 %v1059
      %v1983 = vunpack.c.l.b16 %v1060
      %v1984 = vunpack.c.l.b16 %v1061
      %v1985 = vunpack.c.l.b16 %v1062
      %v1986 = vunpack.c.l.b16 %v1063
      %v1987 = vunpack.c.l.b16 %v1064
      %v1988 = vunpack.c.l.b16 %v1065
      %v1989 = vunpack.c.l.b16 %v1066
      %v1990 = vunpack.c.l.b16 %v1067
      %v1991 = vpack.c.b16 %v1983, %v1982
      %v1992 = vpack.c.b16 %v1985, %v1984
      %v1993 = vpack.c.b16 %v1987, %v1986
      %v1994 = vpack.c.b16 %v1989, %v1988
      %v1995 = vpack.c.b16 %v1990, %v1990
      %v2000 = vsel %vm1931, %v1052, 0
      %v2002 = vsel %vm1931, %v1054, 0
      %v2004 = vsel %vm1931, %v1056, 0
      %v2006 = vsel %vm1931, %v1058, 0
      %v2009 = vsel %vm1940, %v1995, 0
      %2011 = vmatpush.bf16.msra.mxu0 0
      %2012 = vmatpush.bf16.msra.mxu0 0
      %2013 = vmatpush.bf16.msra.mxu0 0
      %2014 = vmatpush.bf16.msra.mxu0 %v2009
      %2015 = vmatpush.bf16.msra.mxu0 %v1994
      %2016 = vmatpush.bf16.msra.mxu0 %v1993
      %2017 = vmatpush.bf16.msra.mxu0 %v1992
      %2018 = vmatpush.bf16.msra.mxu0 %v1991
      %2019 = vmatmul.bf16.gmra.mxu0 %v2000
      %v2020 = vpop.f32.mrf.mxu0
      %v2021 = vadd.f32 %v1954, %v2020
      %v2022 = vpop.f32.mrf.mxu0
      %v2023 = vadd.f32 %v1956, %v2022
      %2024 = vmatmul.bf16.gmra.mxu0 %v2002
      %v2025 = vpop.f32.mrf.mxu0
      %v2026 = vadd.f32 %v1959, %v2025
      %v2027 = vpop.f32.mrf.mxu0
      %v2028 = vadd.f32 %v1961, %v2027
      %2029 = vmatmul.bf16.gmra.mxu0 %v2004
      %v2030 = vpop.f32.mrf.mxu0
      %v2031 = vadd.f32 %v1964, %v2030
      %v2032 = vpop.f32.mrf.mxu0
      %v2033 = vadd.f32 %v1966, %v2032
      %2034 = vmatmul.bf16.gmra.mxu0 %v2006
      %v2035 = vpop.f32.mrf.mxu0
      %v2036 = vadd.f32 %v1969, %v2035
      %v2037 = vpop.f32.mrf.mxu0
      %v2038 = vadd.f32 %v1971, %v2037
      %2039 = vdwg.mxu0
      %s2040 = sadd.s32 %s20, 2
      %s2041 = smul.u32 %s2040, 20
      %s2042 = smul.addr %s2041, 4
      %s2043 = scalar_lea.vmem %s200, %s2042
      %v2044 = vld [vmem:[%s2043] sm:$0xf]
      %v2045 = vld [vmem:[%s2043 + $0x8] sm:$0xf]
      %v2046 = vld [vmem:[%s2043 + $0x10] sm:$0xf]
      %v2047 = vld [vmem:[%s2043 + $0x18] sm:$0xf]
      %v2048 = vld [vmem:[%s2043 + $0x20] sm:$0xf]
      %v2049 = vld [vmem:[%s2043 + $0x28] sm:$0xf]
      %v2050 = vld [vmem:[%s2043 + $0x30] sm:$0xf]
      %v2051 = vld [vmem:[%s2043 + $0x38] sm:$0xf]
      %v2052 = vld [vmem:[%s2043 + $0x4] sm:$0x1]
      %v2053 = vld [vmem:[%s2043 + $0xc] sm:$0x1]
      %v2054 = vld [vmem:[%s2043 + $0x14] sm:$0x1]
      %v2055 = vld [vmem:[%s2043 + $0x1c] sm:$0x1]
      %v2056 = vld [vmem:[%s2043 + $0x24] sm:$0x1]
      %v2057 = vld [vmem:[%s2043 + $0x2c] sm:$0x1]
      %v2058 = vld [vmem:[%s2043 + $0x34] sm:$0x1]
      %v2059 = vld [vmem:[%s2043 + $0x3c] sm:$0x1]
      %v2061 = vshrl.u32 %v2044, 16
      %v2063 = vrot.slane %v2061, 4
      %v2064 = vshll.u32 %v2044, 16
      %v2066 = vrot.slane %v2064, 5
      %v2067 = vor.u32 %v2063, %v2066
      %v2068 = vrot.slane %v2067, 4
      %v2070 = vshll.u32 %v2052, 16
      %v2072 = vrot.slane %v2070, 5
      %v2073 = vsel %vm241, %v2068, %v2072
      %v2075 = vshrl.u32 %v2045, 16
      %v2077 = vrot.slane %v2075, 4
      %v2078 = vshll.u32 %v2045, 16
      %v2080 = vrot.slane %v2078, 5
      %v2081 = vor.u32 %v2077, %v2080
      %v2082 = vrot.slane %v2081, 4
      %v2084 = vshll.u32 %v2053, 16
      %v2086 = vrot.slane %v2084, 5
      %v2087 = vsel %vm241, %v2082, %v2086
      %v2089 = vshrl.u32 %v2046, 16
      %v2091 = vrot.slane %v2089, 4
      %v2092 = vshll.u32 %v2046, 16
      %v2094 = vrot.slane %v2092, 5
      %v2095 = vor.u32 %v2091, %v2094
      %v2096 = vrot.slane %v2095, 4
      %v2098 = vshll.u32 %v2054, 16
      %v2100 = vrot.slane %v2098, 5
      %v2101 = vsel %vm241, %v2096, %v2100
      %v2103 = vshrl.u32 %v2047, 16
      %v2105 = vrot.slane %v2103, 4
      %v2106 = vshll.u32 %v2047, 16
      %v2108 = vrot.slane %v2106, 5
      %v2109 = vor.u32 %v2105, %v2108
      %v2110 = vrot.slane %v2109, 4
      %v2112 = vshll.u32 %v2055, 16
      %v2114 = vrot.slane %v2112, 5
      %v2115 = vsel %vm241, %v2110, %v2114
      %v2117 = vshrl.u32 %v2048, 16
      %v2119 = vrot.slane %v2117, 4
      %v2120 = vshll.u32 %v2048, 16
      %v2122 = vrot.slane %v2120, 5
      %v2123 = vor.u32 %v2119, %v2122
      %v2124 = vrot.slane %v2123, 4
      %v2126 = vshll.u32 %v2056, 16
      %v2128 = vrot.slane %v2126, 5
      %v2129 = vsel %vm241, %v2124, %v2128
      %v2131 = vshrl.u32 %v2049, 16
      %v2133 = vrot.slane %v2131, 4
      %v2134 = vshll.u32 %v2049, 16
      %v2136 = vrot.slane %v2134, 5
      %v2137 = vor.u32 %v2133, %v2136
      %v2138 = vrot.slane %v2137, 4
      %v2140 = vshll.u32 %v2057, 16
      %v2142 = vrot.slane %v2140, 5
      %v2143 = vsel %vm241, %v2138, %v2142
      %v2145 = vshrl.u32 %v2050, 16
      %v2147 = vrot.slane %v2145, 4
      %v2148 = vshll.u32 %v2050, 16
      %v2150 = vrot.slane %v2148, 5
      %v2151 = vor.u32 %v2147, %v2150
      %v2152 = vrot.slane %v2151, 4
      %v2154 = vshll.u32 %v2058, 16
      %v2156 = vrot.slane %v2154, 5
      %v2157 = vsel %vm241, %v2152, %v2156
      %v2159 = vshrl.u32 %v2051, 16
      %v2161 = vrot.slane %v2159, 4
      %v2162 = vshll.u32 %v2051, 16
      %v2164 = vrot.slane %v2162, 5
      %v2165 = vor.u32 %v2161, %v2164
      %v2166 = vrot.slane %v2165, 4
      %v2168 = vshll.u32 %v2059, 16
      %v2170 = vrot.slane %v2168, 5
      %v2171 = vsel %vm241, %v2166, %v2170
      %v2172 = vld [vmem:[%s2043] sm:$0xe]
      %v2173 = vld [vmem:[%s2043 + $0x8] sm:$0xe]
      %v2174 = vld [vmem:[%s2043 + $0x10] sm:$0xe]
      %v2175 = vld [vmem:[%s2043 + $0x18] sm:$0xe]
      %v2176 = vld [vmem:[%s2043 + $0x20] sm:$0xe]
      %v2177 = vld [vmem:[%s2043 + $0x28] sm:$0xe]
      %v2178 = vld [vmem:[%s2043 + $0x30] sm:$0xe]
      %v2179 = vld [vmem:[%s2043 + $0x38] sm:$0xe]
      %v2196 = vrot.slane %v2172, 5
      %v2197 = vrot.slane %v2196, 4
      %v2198 = vrot.slane %v2052, 5
      %v2199 = vsel %vm380, %v2197, %v2198
      %v2200 = vrot.slane %v2173, 5
      %v2201 = vrot.slane %v2200, 4
      %v2202 = vrot.slane %v2053, 5
      %v2203 = vsel %vm380, %v2201, %v2202
      %v2204 = vrot.slane %v2174, 5
      %v2205 = vrot.slane %v2204, 4
      %v2206 = vrot.slane %v2054, 5
      %v2207 = vsel %vm380, %v2205, %v2206
      %v2208 = vrot.slane %v2175, 5
      %v2209 = vrot.slane %v2208, 4
      %v2210 = vrot.slane %v2055, 5
      %v2211 = vsel %vm380, %v2209, %v2210
      %v2212 = vrot.slane %v2176, 5
      %v2213 = vrot.slane %v2212, 4
      %v2214 = vrot.slane %v2056, 5
      %v2215 = vsel %vm380, %v2213, %v2214
      %v2216 = vrot.slane %v2177, 5
      %v2217 = vrot.slane %v2216, 4
      %v2218 = vrot.slane %v2057, 5
      %v2219 = vsel %vm380, %v2217, %v2218
      %v2220 = vrot.slane %v2178, 5
      %v2221 = vrot.slane %v2220, 4
      %v2222 = vrot.slane %v2058, 5
      %v2223 = vsel %vm380, %v2221, %v2222
      %v2224 = vrot.slane %v2179, 5
      %v2225 = vrot.slane %v2224, 4
      %v2226 = vrot.slane %v2059, 5
      %v2227 = vsel %vm380, %v2225, %v2226
      %s2228 = sadd.s32 2, %s2041
      %s2229 = smul.addr %s2228, 4
      %s2230 = scalar_lea.vmem %s200, %s2229
      %v2231 = vld [vmem:[%s2230] sm:$0xf]
      %v2232 = vld [vmem:[%s2230 + $0x8] sm:$0xf]
      %v2233 = vld [vmem:[%s2230 + $0x10] sm:$0xf]
      %v2234 = vld [vmem:[%s2230 + $0x18] sm:$0xf]
      %v2235 = vld [vmem:[%s2230 + $0x20] sm:$0xf]
      %v2236 = vld [vmem:[%s2230 + $0x28] sm:$0xf]
      %v2237 = vld [vmem:[%s2230 + $0x30] sm:$0xf]
      %v2238 = vld [vmem:[%s2230 + $0x38] sm:$0xf]
      %v2239 = vld [vmem:[%s2230 + $0x4] sm:$0x1]
      %v2240 = vld [vmem:[%s2230 + $0xc] sm:$0x1]
      %v2241 = vld [vmem:[%s2230 + $0x14] sm:$0x1]
      %v2242 = vld [vmem:[%s2230 + $0x1c] sm:$0x1]
      %v2243 = vld [vmem:[%s2230 + $0x24] sm:$0x1]
      %v2244 = vld [vmem:[%s2230 + $0x2c] sm:$0x1]
      %v2245 = vld [vmem:[%s2230 + $0x34] sm:$0x1]
      %v2246 = vld [vmem:[%s2230 + $0x3c] sm:$0x1]
      %v2248 = vshrl.u32 %v2231, 16
      %v2250 = vrot.slane %v2248, 4
      %v2251 = vshll.u32 %v2231, 16
      %v2253 = vrot.slane %v2251, 5
      %v2254 = vor.u32 %v2250, %v2253
      %v2255 = vrot.slane %v2254, 4
      %v2257 = vshll.u32 %v2239, 16
      %v2259 = vrot.slane %v2257, 5
      %v2260 = vsel %vm241, %v2255, %v2259
      %v2262 = vshrl.u32 %v2232, 16
      %v2264 = vrot.slane %v2262, 4
      %v2265 = vshll.u32 %v2232, 16
      %v2267 = vrot.slane %v2265, 5
      %v2268 = vor.u32 %v2264, %v2267
      %v2269 = vrot.slane %v2268, 4
      %v2271 = vshll.u32 %v2240, 16
      %v2273 = vrot.slane %v2271, 5
      %v2274 = vsel %vm241, %v2269, %v2273
      %v2276 = vshrl.u32 %v2233, 16
      %v2278 = vrot.slane %v2276, 4
      %v2279 = vshll.u32 %v2233, 16
      %v2281 = vrot.slane %v2279, 5
      %v2282 = vor.u32 %v2278, %v2281
      %v2283 = vrot.slane %v2282, 4
      %v2285 = vshll.u32 %v2241, 16
      %v2287 = vrot.slane %v2285, 5
      %v2288 = vsel %vm241, %v2283, %v2287
      %v2290 = vshrl.u32 %v2234, 16
      %v2292 = vrot.slane %v2290, 4
      %v2293 = vshll.u32 %v2234, 16
      %v2295 = vrot.slane %v2293, 5
      %v2296 = vor.u32 %v2292, %v2295
      %v2297 = vrot.slane %v2296, 4
      %v2299 = vshll.u32 %v2242, 16
      %v2301 = vrot.slane %v2299, 5
      %v2302 = vsel %vm241, %v2297, %v2301
      %v2304 = vshrl.u32 %v2235, 16
      %v2306 = vrot.slane %v2304, 4
      %v2307 = vshll.u32 %v2235, 16
      %v2309 = vrot.slane %v2307, 5
      %v2310 = vor.u32 %v2306, %v2309
      %v2311 = vrot.slane %v2310, 4
      %v2313 = vshll.u32 %v2243, 16
      %v2315 = vrot.slane %v2313, 5
      %v2316 = vsel %vm241, %v2311, %v2315
      %v2318 = vshrl.u32 %v2236, 16
      %v2320 = vrot.slane %v2318, 4
      %v2321 = vshll.u32 %v2236, 16
      %v2323 = vrot.slane %v2321, 5
      %v2324 = vor.u32 %v2320, %v2323
      %v2325 = vrot.slane %v2324, 4
      %v2327 = vshll.u32 %v2244, 16
      %v2329 = vrot.slane %v2327, 5
      %v2330 = vsel %vm241, %v2325, %v2329
      %v2332 = vshrl.u32 %v2237, 16
      %v2334 = vrot.slane %v2332, 4
      %v2335 = vshll.u32 %v2237, 16
      %v2337 = vrot.slane %v2335, 5
      %v2338 = vor.u32 %v2334, %v2337
      %v2339 = vrot.slane %v2338, 4
      %v2341 = vshll.u32 %v2245, 16
      %v2343 = vrot.slane %v2341, 5
      %v2344 = vsel %vm241, %v2339, %v2343
      %v2346 = vshrl.u32 %v2238, 16
      %v2348 = vrot.slane %v2346, 4
      %v2349 = vshll.u32 %v2238, 16
      %v2351 = vrot.slane %v2349, 5
      %v2352 = vor.u32 %v2348, %v2351
      %v2353 = vrot.slane %v2352, 4
      %v2355 = vshll.u32 %v2246, 16
      %v2357 = vrot.slane %v2355, 5
      %v2358 = vsel %vm241, %v2353, %v2357
      %v2359 = vld [vmem:[%s2230] sm:$0xe]
      %v2360 = vld [vmem:[%s2230 + $0x8] sm:$0xe]
      %v2361 = vld [vmem:[%s2230 + $0x10] sm:$0xe]
      %v2362 = vld [vmem:[%s2230 + $0x18] sm:$0xe]
      %v2363 = vld [vmem:[%s2230 + $0x20] sm:$0xe]
      %v2364 = vld [vmem:[%s2230 + $0x28] sm:$0xe]
      %v2365 = vld [vmem:[%s2230 + $0x30] sm:$0xe]
      %v2366 = vld [vmem:[%s2230 + $0x38] sm:$0xe]
      %v2383 = vrot.slane %v2359, 5
      %v2384 = vrot.slane %v2383, 4
      %v2385 = vrot.slane %v2239, 5
      %v2386 = vsel %vm380, %v2384, %v2385
      %v2387 = vrot.slane %v2360, 5
      %v2388 = vrot.slane %v2387, 4
      %v2389 = vrot.slane %v2240, 5
      %v2390 = vsel %vm380, %v2388, %v2389
      %v2391 = vrot.slane %v2361, 5
      %v2392 = vrot.slane %v2391, 4
      %v2393 = vrot.slane %v2241, 5
      %v2394 = vsel %vm380, %v2392, %v2393
      %v2395 = vrot.slane %v2362, 5
      %v2396 = vrot.slane %v2395, 4
      %v2397 = vrot.slane %v2242, 5
      %v2398 = vsel %vm380, %v2396, %v2397
      %v2399 = vrot.slane %v2363, 5
      %v2400 = vrot.slane %v2399, 4
      %v2401 = vrot.slane %v2243, 5
      %v2402 = vsel %vm380, %v2400, %v2401
      %v2403 = vrot.slane %v2364, 5
      %v2404 = vrot.slane %v2403, 4
      %v2405 = vrot.slane %v2244, 5
      %v2406 = vsel %vm380, %v2404, %v2405
      %v2407 = vrot.slane %v2365, 5
      %v2408 = vrot.slane %v2407, 4
      %v2409 = vrot.slane %v2245, 5
      %v2410 = vsel %vm380, %v2408, %v2409
      %v2411 = vrot.slane %v2366, 5
      %v2412 = vrot.slane %v2411, 4
      %v2413 = vrot.slane %v2246, 5
      %v2414 = vsel %vm380, %v2412, %v2413
      %s2415 = sadd.s32 4, %s2041
      %s2416 = smul.addr %s2415, 4
      %s2417 = scalar_lea.vmem %s200, %s2416
      %v2418 = vld [vmem:[%s2417] sm:$0xf]
      %v2419 = vld [vmem:[%s2417 + $0x8] sm:$0xf]
      %v2420 = vld [vmem:[%s2417 + $0x10] sm:$0xf]
      %v2421 = vld [vmem:[%s2417 + $0x18] sm:$0xf]
      %v2422 = vld [vmem:[%s2417 + $0x20] sm:$0xf]
      %v2423 = vld [vmem:[%s2417 + $0x28] sm:$0xf]
      %v2424 = vld [vmem:[%s2417 + $0x30] sm:$0xf]
      %v2425 = vld [vmem:[%s2417 + $0x38] sm:$0xf]
      %v2426 = vld [vmem:[%s2417 + $0x4] sm:$0x1]
      %v2427 = vld [vmem:[%s2417 + $0xc] sm:$0x1]
      %v2428 = vld [vmem:[%s2417 + $0x14] sm:$0x1]
      %v2429 = vld [vmem:[%s2417 + $0x1c] sm:$0x1]
      %v2430 = vld [vmem:[%s2417 + $0x24] sm:$0x1]
      %v2431 = vld [vmem:[%s2417 + $0x2c] sm:$0x1]
      %v2432 = vld [vmem:[%s2417 + $0x34] sm:$0x1]
      %v2433 = vld [vmem:[%s2417 + $0x3c] sm:$0x1]
      %v2435 = vshrl.u32 %v2418, 16
      %v2437 = vrot.slane %v2435, 4
      %v2438 = vshll.u32 %v2418, 16
      %v2440 = vrot.slane %v2438, 5
      %v2441 = vor.u32 %v2437, %v2440
      %v2442 = vrot.slane %v2441, 4
      %v2444 = vshll.u32 %v2426, 16
      %v2446 = vrot.slane %v2444, 5
      %v2447 = vsel %vm241, %v2442, %v2446
      %v2449 = vshrl.u32 %v2419, 16
      %v2451 = vrot.slane %v2449, 4
      %v2452 = vshll.u32 %v2419, 16
      %v2454 = vrot.slane %v2452, 5
      %v2455 = vor.u32 %v2451, %v2454
      %v2456 = vrot.slane %v2455, 4
      %v2458 = vshll.u32 %v2427, 16
      %v2460 = vrot.slane %v2458, 5
      %v2461 = vsel %vm241, %v2456, %v2460
      %v2463 = vshrl.u32 %v2420, 16
      %v2465 = vrot.slane %v2463, 4
      %v2466 = vshll.u32 %v2420, 16
      %v2468 = vrot.slane %v2466, 5
      %v2469 = vor.u32 %v2465, %v2468
      %v2470 = vrot.slane %v2469, 4
      %v2472 = vshll.u32 %v2428, 16
      %v2474 = vrot.slane %v2472, 5
      %v2475 = vsel %vm241, %v2470, %v2474
      %v2477 = vshrl.u32 %v2421, 16
      %v2479 = vrot.slane %v2477, 4
      %v2480 = vshll.u32 %v2421, 16
      %v2482 = vrot.slane %v2480, 5
      %v2483 = vor.u32 %v2479, %v2482
      %v2484 = vrot.slane %v2483, 4
      %v2486 = vshll.u32 %v2429, 16
      %v2488 = vrot.slane %v2486, 5
      %v2489 = vsel %vm241, %v2484, %v2488
      %v2491 = vshrl.u32 %v2422, 16
      %v2493 = vrot.slane %v2491, 4
      %v2494 = vshll.u32 %v2422, 16
      %v2496 = vrot.slane %v2494, 5
      %v2497 = vor.u32 %v2493, %v2496
      %v2498 = vrot.slane %v2497, 4
      %v2500 = vshll.u32 %v2430, 16
      %v2502 = vrot.slane %v2500, 5
      %v2503 = vsel %vm241, %v2498, %v2502
      %v2505 = vshrl.u32 %v2423, 16
      %v2507 = vrot.slane %v2505, 4
      %v2508 = vshll.u32 %v2423, 16
      %v2510 = vrot.slane %v2508, 5
      %v2511 = vor.u32 %v2507, %v2510
      %v2512 = vrot.slane %v2511, 4
      %v2514 = vshll.u32 %v2431, 16
      %v2516 = vrot.slane %v2514, 5
      %v2517 = vsel %vm241, %v2512, %v2516
      %v2519 = vshrl.u32 %v2424, 16
      %v2521 = vrot.slane %v2519, 4
      %v2522 = vshll.u32 %v2424, 16
      %v2524 = vrot.slane %v2522, 5
      %v2525 = vor.u32 %v2521, %v2524
      %v2526 = vrot.slane %v2525, 4
      %v2528 = vshll.u32 %v2432, 16
      %v2530 = vrot.slane %v2528, 5
      %v2531 = vsel %vm241, %v2526, %v2530
      %v2533 = vshrl.u32 %v2425, 16
      %v2535 = vrot.slane %v2533, 4
      %v2536 = vshll.u32 %v2425, 16
      %v2538 = vrot.slane %v2536, 5
      %v2539 = vor.u32 %v2535, %v2538
      %v2540 = vrot.slane %v2539, 4
      %v2542 = vshll.u32 %v2433, 16
      %v2544 = vrot.slane %v2542, 5
      %v2545 = vsel %vm241, %v2540, %v2544
      %v2546 = vld [vmem:[%s2417] sm:$0xe]
      %v2547 = vld [vmem:[%s2417 + $0x8] sm:$0xe]
      %v2548 = vld [vmem:[%s2417 + $0x10] sm:$0xe]
      %v2549 = vld [vmem:[%s2417 + $0x18] sm:$0xe]
      %v2550 = vld [vmem:[%s2417 + $0x20] sm:$0xe]
      %v2551 = vld [vmem:[%s2417 + $0x28] sm:$0xe]
      %v2552 = vld [vmem:[%s2417 + $0x30] sm:$0xe]
      %v2553 = vld [vmem:[%s2417 + $0x38] sm:$0xe]
      %v2570 = vrot.slane %v2546, 5
      %v2571 = vrot.slane %v2570, 4
      %v2572 = vrot.slane %v2426, 5
      %v2573 = vsel %vm380, %v2571, %v2572
      %v2574 = vrot.slane %v2547, 5
      %v2575 = vrot.slane %v2574, 4
      %v2576 = vrot.slane %v2427, 5
      %v2577 = vsel %vm380, %v2575, %v2576
      %v2578 = vrot.slane %v2548, 5
      %v2579 = vrot.slane %v2578, 4
      %v2580 = vrot.slane %v2428, 5
      %v2581 = vsel %vm380, %v2579, %v2580
      %v2582 = vrot.slane %v2549, 5
      %v2583 = vrot.slane %v2582, 4
      %v2584 = vrot.slane %v2429, 5
      %v2585 = vsel %vm380, %v2583, %v2584
      %v2586 = vrot.slane %v2550, 5
      %v2587 = vrot.slane %v2586, 4
      %v2588 = vrot.slane %v2430, 5
      %v2589 = vsel %vm380, %v2587, %v2588
      %v2590 = vrot.slane %v2551, 5
      %v2591 = vrot.slane %v2590, 4
      %v2592 = vrot.slane %v2431, 5
      %v2593 = vsel %vm380, %v2591, %v2592
      %v2594 = vrot.slane %v2552, 5
      %v2595 = vrot.slane %v2594, 4
      %v2596 = vrot.slane %v2432, 5
      %v2597 = vsel %vm380, %v2595, %v2596
      %v2598 = vrot.slane %v2553, 5
      %v2599 = vrot.slane %v2598, 4
      %v2600 = vrot.slane %v2433, 5
      %v2601 = vsel %vm380, %v2599, %v2600
      %v2610 = vunpack.c.l.b16 %v2044
      %v2611 = vunpack.c.l.b16 %v2045
      %v2612 = vunpack.c.l.b16 %v2046
      %v2613 = vunpack.c.l.b16 %v2047
      %v2614 = vunpack.c.l.b16 %v2048
      %v2615 = vunpack.c.l.b16 %v2049
      %v2616 = vunpack.c.l.b16 %v2050
      %v2617 = vunpack.c.l.b16 %v2051
      %v2618 = vpack.c.b16 %v2611, %v2610
      %v2619 = vpack.c.b16 %v2613, %v2612
      %v2620 = vpack.c.b16 %v2615, %v2614
      %v2621 = vpack.c.b16 %v2617, %v2616
      %v2622 = vunpack.c.l.b16 %v2073
      %v2623 = vunpack.c.l.b16 %v2087
      %v2624 = vunpack.c.l.b16 %v2101
      %v2625 = vunpack.c.l.b16 %v2115
      %v2626 = vunpack.c.l.b16 %v2129
      %v2627 = vunpack.c.l.b16 %v2143
      %v2628 = vunpack.c.l.b16 %v2157
      %v2629 = vunpack.c.l.b16 %v2171
      %v2630 = vpack.c.b16 %v2623, %v2622
      %v2631 = vpack.c.b16 %v2625, %v2624
      %v2632 = vpack.c.b16 %v2627, %v2626
      %v2633 = vpack.c.b16 %v2629, %v2628
      %2634 = vrot.lane.b32.xlu0 %v2630, 8
      %v2635 = vpop.permute.xlu0 %2634
      %2636 = vrot.lane.b32.xlu0 %v2631, 8
      %v2637 = vpop.permute.xlu0 %2636
      %2638 = vrot.lane.b32.xlu0 %v2632, 8
      %v2639 = vpop.permute.xlu0 %2638
      %2640 = vrot.lane.b32.xlu0 %v2633, 8
      %v2641 = vpop.permute.xlu0 %2640
      %v2642 = vunpack.c.l.b16 %v2199
      %v2643 = vunpack.c.l.b16 %v2203
      %v2644 = vunpack.c.l.b16 %v2207
      %v2645 = vunpack.c.l.b16 %v2211
      %v2646 = vunpack.c.l.b16 %v2215
      %v2647 = vunpack.c.l.b16 %v2219
      %v2648 = vunpack.c.l.b16 %v2223
      %v2649 = vunpack.c.l.b16 %v2227
      %v2650 = vpack.c.b16 %v2643, %v2642
      %v2651 = vpack.c.b16 %v2645, %v2644
      %v2652 = vpack.c.b16 %v2647, %v2646
      %v2653 = vpack.c.b16 %v2649, %v2648
      %2654 = vrot.lane.b32.xlu0 %v2650, 16
      %v2655 = vpop.permute.xlu0 %2654
      %2656 = vrot.lane.b32.xlu0 %v2651, 16
      %v2657 = vpop.permute.xlu0 %2656
      %2658 = vrot.lane.b32.xlu0 %v2652, 16
      %v2659 = vpop.permute.xlu0 %2658
      %2660 = vrot.lane.b32.xlu0 %v2653, 16
      %v2661 = vpop.permute.xlu0 %2660
      %v2670 = vunpack.c.l.b16 %v2231
      %v2671 = vunpack.c.l.b16 %v2232
      %v2672 = vunpack.c.l.b16 %v2233
      %v2673 = vunpack.c.l.b16 %v2234
      %v2674 = vunpack.c.l.b16 %v2235
      %v2675 = vunpack.c.l.b16 %v2236
      %v2676 = vunpack.c.l.b16 %v2237
      %v2677 = vunpack.c.l.b16 %v2238
      %v2678 = vpack.c.b16 %v2671, %v2670
      %v2679 = vpack.c.b16 %v2673, %v2672
      %v2680 = vpack.c.b16 %v2675, %v2674
      %v2681 = vpack.c.b16 %v2677, %v2676
      %2682 = vrot.lane.b32.xlu0 %v2678, 24
      %v2683 = vpop.permute.xlu0 %2682
      %2684 = vrot.lane.b32.xlu0 %v2679, 24
      %v2685 = vpop.permute.xlu0 %2684
      %2686 = vrot.lane.b32.xlu0 %v2680, 24
      %v2687 = vpop.permute.xlu0 %2686
      %2688 = vrot.lane.b32.xlu0 %v2681, 24
      %v2689 = vpop.permute.xlu0 %2688
      %v2690 = vunpack.c.l.b16 %v2260
      %v2691 = vunpack.c.l.b16 %v2274
      %v2692 = vunpack.c.l.b16 %v2288
      %v2693 = vunpack.c.l.b16 %v2302
      %v2694 = vunpack.c.l.b16 %v2316
      %v2695 = vunpack.c.l.b16 %v2330
      %v2696 = vunpack.c.l.b16 %v2344
      %v2697 = vunpack.c.l.b16 %v2358
      %v2698 = vpack.c.b16 %v2691, %v2690
      %v2699 = vpack.c.b16 %v2693, %v2692
      %v2700 = vpack.c.b16 %v2695, %v2694
      %v2701 = vpack.c.b16 %v2697, %v2696
      %2702 = vrot.lane.b32.xlu0 %v2698, 32
      %v2703 = vpop.permute.xlu0 %2702
      %2704 = vrot.lane.b32.xlu0 %v2699, 32
      %v2705 = vpop.permute.xlu0 %2704
      %2706 = vrot.lane.b32.xlu0 %v2700, 32
      %v2707 = vpop.permute.xlu0 %2706
      %2708 = vrot.lane.b32.xlu0 %v2701, 32
      %v2709 = vpop.permute.xlu0 %2708
      %v2710 = vunpack.c.l.b16 %v2386
      %v2711 = vunpack.c.l.b16 %v2390
      %v2712 = vunpack.c.l.b16 %v2394
      %v2713 = vunpack.c.l.b16 %v2398
      %v2714 = vunpack.c.l.b16 %v2402
      %v2715 = vunpack.c.l.b16 %v2406
      %v2716 = vunpack.c.l.b16 %v2410
      %v2717 = vunpack.c.l.b16 %v2414
      %v2718 = vpack.c.b16 %v2711, %v2710
      %v2719 = vpack.c.b16 %v2713, %v2712
      %v2720 = vpack.c.b16 %v2715, %v2714
      %v2721 = vpack.c.b16 %v2717, %v2716
      %2722 = vrot.lane.b32.xlu0 %v2718, 40
      %v2723 = vpop.permute.xlu0 %2722
      %2724 = vrot.lane.b32.xlu0 %v2719, 40
      %v2725 = vpop.permute.xlu0 %2724
      %2726 = vrot.lane.b32.xlu0 %v2720, 40
      %v2727 = vpop.permute.xlu0 %2726
      %2728 = vrot.lane.b32.xlu0 %v2721, 40
      %v2729 = vpop.permute.xlu0 %2728
      %v2738 = vunpack.c.l.b16 %v2418
      %v2739 = vunpack.c.l.b16 %v2419
      %v2740 = vunpack.c.l.b16 %v2420
      %v2741 = vunpack.c.l.b16 %v2421
      %v2742 = vunpack.c.l.b16 %v2422
      %v2743 = vunpack.c.l.b16 %v2423
      %v2744 = vunpack.c.l.b16 %v2424
      %v2745 = vunpack.c.l.b16 %v2425
      %v2746 = vpack.c.b16 %v2739, %v2738
      %v2747 = vpack.c.b16 %v2741, %v2740
      %v2748 = vpack.c.b16 %v2743, %v2742
      %v2749 = vpack.c.b16 %v2745, %v2744
      %2750 = vrot.lane.b32.xlu0 %v2746, 48
      %v2751 = vpop.permute.xlu0 %2750
      %2752 = vrot.lane.b32.xlu0 %v2747, 48
      %v2753 = vpop.permute.xlu0 %2752
      %2754 = vrot.lane.b32.xlu0 %v2748, 48
      %v2755 = vpop.permute.xlu0 %2754
      %2756 = vrot.lane.b32.xlu0 %v2749, 48
      %v2757 = vpop.permute.xlu0 %2756
      %v2758 = vunpack.c.l.b16 %v2447
      %v2759 = vunpack.c.l.b16 %v2461
      %v2760 = vunpack.c.l.b16 %v2475
      %v2761 = vunpack.c.l.b16 %v2489
      %v2762 = vunpack.c.l.b16 %v2503
      %v2763 = vunpack.c.l.b16 %v2517
      %v2764 = vunpack.c.l.b16 %v2531
      %v2765 = vunpack.c.l.b16 %v2545
      %v2766 = vpack.c.b16 %v2759, %v2758
      %v2767 = vpack.c.b16 %v2761, %v2760
      %v2768 = vpack.c.b16 %v2763, %v2762
      %v2769 = vpack.c.b16 %v2765, %v2764
      %2770 = vrot.lane.b32.xlu0 %v2766, 56
      %v2771 = vpop.permute.xlu0 %2770
      %2772 = vrot.lane.b32.xlu0 %v2767, 56
      %v2773 = vpop.permute.xlu0 %2772
      %2774 = vrot.lane.b32.xlu0 %v2768, 56
      %v2775 = vpop.permute.xlu0 %2774
      %2776 = vrot.lane.b32.xlu0 %v2769, 56
      %v2777 = vpop.permute.xlu0 %2776
      %v2778 = vunpack.c.l.b16 %v2573
      %v2779 = vunpack.c.l.b16 %v2577
      %v2780 = vunpack.c.l.b16 %v2581
      %v2781 = vunpack.c.l.b16 %v2585
      %v2782 = vunpack.c.l.b16 %v2589
      %v2783 = vunpack.c.l.b16 %v2593
      %v2784 = vunpack.c.l.b16 %v2597
      %v2785 = vunpack.c.l.b16 %v2601
      %v2786 = vpack.c.b16 %v2779, %v2778
      %v2787 = vpack.c.b16 %v2781, %v2780
      %v2788 = vpack.c.b16 %v2783, %v2782
      %v2789 = vpack.c.b16 %v2785, %v2784
      %2790 = vrot.lane.b32.xlu0 %v2786, 64
      %v2791 = vpop.permute.xlu0 %2790
      %2792 = vrot.lane.b32.xlu0 %v2787, 64
      %v2793 = vpop.permute.xlu0 %2792
      %2794 = vrot.lane.b32.xlu0 %v2788, 64
      %v2795 = vpop.permute.xlu0 %2794
      %2796 = vrot.lane.b32.xlu0 %v2789, 64
      %v2797 = vpop.permute.xlu0 %2796
      %v2800 = vsel %vm983, %v2618, %v2635
      %v2803 = vsel %vm983, %v2619, %v2637
      %v2806 = vsel %vm983, %v2620, %v2639
      %v2809 = vsel %vm983, %v2621, %v2641
      %v2811 = vsel %vm996, %v2800, %v2655
      %v2813 = vsel %vm996, %v2803, %v2657
      %v2815 = vsel %vm996, %v2806, %v2659
      %v2817 = vsel %vm996, %v2809, %v2661
      %v2819 = vsel %vm1005, %v2811, %v2683
      %v2821 = vsel %vm1005, %v2813, %v2685
      %v2823 = vsel %vm1005, %v2815, %v2687
      %v2825 = vsel %vm1005, %v2817, %v2689
      %v2827 = vsel %vm1014, %v2819, %v2703
      %v2829 = vsel %vm1014, %v2821, %v2705
      %v2831 = vsel %vm1014, %v2823, %v2707
      %v2833 = vsel %vm1014, %v2825, %v2709
      %v2835 = vsel %vm1023, %v2827, %v2723
      %v2837 = vsel %vm1023, %v2829, %v2725
      %v2839 = vsel %vm1023, %v2831, %v2727
      %v2841 = vsel %vm1023, %v2833, %v2729
      %v2843 = vsel %vm1032, %v2835, %v2751
      %v2845 = vsel %vm1032, %v2837, %v2753
      %v2847 = vsel %vm1032, %v2839, %v2755
      %v2849 = vsel %vm1032, %v2841, %v2757
      %v2851 = vsel %vm1041, %v2843, %v2771
      %v2853 = vsel %vm1041, %v2845, %v2773
      %v2855 = vsel %vm1041, %v2847, %v2775
      %v2857 = vsel %vm1041, %v2849, %v2777
      %v2859 = vsel %vm1050, %v2851, %v2791
      %v2861 = vsel %vm1050, %v2853, %v2793
      %v2863 = vsel %vm1050, %v2855, %v2795
      %v2865 = vsel %vm1050, %v2857, %v2797
      %s2866 = scalar_lea.vmem %s1, 72
      %v2867 = vld [vmem:[%s2866] sm:$0xf]
      %v2868 = vld [vmem:[%s2866 + $0x4] sm:$0xf]
      %v2869 = vld [vmem:[%s2866 + $0x8] sm:$0xf]
      %v2870 = vld [vmem:[%s2866 + $0xc] sm:$0xf]
      %v2871 = vld [vmem:[%s2866 + $0x10] sm:$0xf]
      %v2872 = vld [vmem:[%s2866 + $0x14] sm:$0xf]
      %v2873 = vld [vmem:[%s2866 + $0x18] sm:$0xf]
      %v2874 = vld [vmem:[%s2866 + $0x1c] sm:$0xf]
      %v2875 = vld [vmem:[%s2866 + $0x20] sm:$0xf]
      %v2885 = vunpack.c.l.b16 %v2867
      %v2886 = vunpack.c.l.b16 %v2868
      %v2887 = vunpack.c.l.b16 %v2869
      %v2888 = vunpack.c.l.b16 %v2870
      %v2889 = vunpack.c.l.b16 %v2871
      %v2890 = vunpack.c.l.b16 %v2872
      %v2891 = vunpack.c.l.b16 %v2873
      %v2892 = vunpack.c.l.b16 %v2874
      %v2893 = vunpack.c.l.b16 %v2875
      %v2894 = vpack.c.b16 %v2886, %v2885
      %v2895 = vpack.c.b16 %v2888, %v2887
      %v2896 = vpack.c.b16 %v2890, %v2889
      %v2897 = vpack.c.b16 %v2892, %v2891
      %v2898 = vpack.c.b16 %v2893, %v2893
      %v2903 = vsel %vm1931, %v2859, 0
      %v2905 = vsel %vm1931, %v2861, 0
      %v2907 = vsel %vm1931, %v2863, 0
      %v2909 = vsel %vm1931, %v2865, 0
      %v2912 = vsel %vm1940, %v2898, 0
      %2914 = vmatpush.bf16.msra.mxu0 0
      %2915 = vmatpush.bf16.msra.mxu0 0
      %2916 = vmatpush.bf16.msra.mxu0 0
      %2917 = vmatpush.bf16.msra.mxu0 %v2912
      %2918 = vmatpush.bf16.msra.mxu0 %v2897
      %2919 = vmatpush.bf16.msra.mxu0 %v2896
      %2920 = vmatpush.bf16.msra.mxu0 %v2895
      %2921 = vmatpush.bf16.msra.mxu0 %v2894
      %2922 = vmatmul.bf16.gmra.mxu0 %v2903
      %v2923 = vpop.f32.mrf.mxu0
      %v2924 = vadd.f32 0.0, %v2923
      %v2925 = vpop.f32.mrf.mxu0
      %v2926 = vadd.f32 0.0, %v2925
      %2927 = vmatmul.bf16.gmra.mxu0 %v2905
      %v2928 = vpop.f32.mrf.mxu0
      %v2929 = vadd.f32 0.0, %v2928
      %v2930 = vpop.f32.mrf.mxu0
      %v2931 = vadd.f32 0.0, %v2930
      %2932 = vmatmul.bf16.gmra.mxu0 %v2907
      %v2933 = vpop.f32.mrf.mxu0
      %v2934 = vadd.f32 0.0, %v2933
      %v2935 = vpop.f32.mrf.mxu0
      %v2936 = vadd.f32 0.0, %v2935
      %2937 = vmatmul.bf16.gmra.mxu0 %v2909
      %v2938 = vpop.f32.mrf.mxu0
      %v2939 = vadd.f32 0.0, %v2938
      %v2940 = vpop.f32.mrf.mxu0
      %v2941 = vadd.f32 0.0, %v2940
      %2942 = vdwg.mxu0
      %v2943 = vadd.f32 %v2021, %v2924
      %v2944 = vadd.f32 %v2023, %v2926
      %v2945 = vadd.f32 %v2026, %v2929
      %v2946 = vadd.f32 %v2028, %v2931
      %v2947 = vadd.f32 %v2031, %v2934
      %v2948 = vadd.f32 %v2033, %v2936
      %v2949 = vadd.f32 %v2036, %v2939
      %v2950 = vadd.f32 %v2038, %v2941
      %v2951 = vpack.c.bf16 %v2943, %v2943
      %v2952 = vpack.c.bf16 %v2944, %v2944
      %v2953 = vpack.c.bf16 %v2945, %v2945
      %v2954 = vpack.c.bf16 %v2946, %v2946
      %v2955 = vpack.c.bf16 %v2947, %v2947
      %v2956 = vpack.c.bf16 %v2948, %v2948
      %v2957 = vpack.c.bf16 %v2949, %v2949
      %v2958 = vpack.c.bf16 %v2950, %v2950
      %2959 = vst [vmem:[%s208] sm:$0xf] %v2951
      %2960 = vst [vmem:[%s208 + $0x4] sm:$0xf] %v2952
      %2961 = vst [vmem:[%s208 + $0x8] sm:$0xf] %v2953
      %2962 = vst [vmem:[%s208 + $0xc] sm:$0xf] %v2954
      %2963 = vst [vmem:[%s208 + $0x10] sm:$0xf] %v2955
      %2964 = vst [vmem:[%s208 + $0x14] sm:$0xf] %v2956
      %2965 = vst [vmem:[%s208 + $0x18] sm:$0xf] %v2957
      %2966 = vst [vmem:[%s208 + $0x1c] sm:$0xf] %v2958
      %v2967 = vadd.f32 %v2943, %v2944
      %v2968 = vadd.f32 %v2967, %v2945
      %v2969 = vadd.f32 %v2968, %v2946
      %v2970 = vadd.f32 %v2969, %v2947
      %v2971 = vadd.f32 %v2970, %v2948
      %v2972 = vadd.f32 %v2971, %v2949
      %v2973 = vadd.f32 %v2972, %v2950
      %v2974 = vrot.slane %v2973, 4
      %v2975 = vadd.f32 %v2973, %v2974
      %v2976 = vrot.slane %v2975, 2
      %v2977 = vadd.f32 %v2975, %v2976
      %v2978 = vrot.slane %v2977, 1
      %v2979 = vadd.f32 %v2977, %v2978
      %2980 = vst [vmem:[%s216] sm:$0x1] %v2979
      %v2981 = vmul.f32 %v2943, %v2943
      %v2982 = vmul.f32 %v2944, %v2944
      %v2983 = vmul.f32 %v2945, %v2945
      %v2984 = vmul.f32 %v2946, %v2946
      %v2985 = vmul.f32 %v2947, %v2947
      %v2986 = vmul.f32 %v2948, %v2948
      %v2987 = vmul.f32 %v2949, %v2949
      %v2988 = vmul.f32 %v2950, %v2950
      %v2989 = vadd.f32 %v2981, %v2982
      %v2990 = vadd.f32 %v2989, %v2983
      %v2991 = vadd.f32 %v2990, %v2984
      %v2992 = vadd.f32 %v2991, %v2985
      %v2993 = vadd.f32 %v2992, %v2986
      %v2994 = vadd.f32 %v2993, %v2987
      %v2995 = vadd.f32 %v2994, %v2988
      %v2996 = vrot.slane %v2995, 4
      %v2997 = vadd.f32 %v2995, %v2996
      %v2998 = vrot.slane %v2997, 2
      %v2999 = vadd.f32 %v2997, %v2998
      %v3000 = vrot.slane %v2999, 1
      %v3001 = vadd.f32 %v2999, %v3000
      %3002 = vst [vmem:[%s216 + $0x1] sm:$0x1] %v3001
      %s3003 = smul.u32 %s19, 8
      %s3004 = sadd.s32 %s3003, %s20
      %p3005 = scmp.lt.s32.totalorder %s3004, 15
      %s3006 = scalar_select %p3005, %s3004, 15
      %s3007 = smul.addr %s3006, 8
      %s3008 = smul.addr %s3007, 4
      %s3009 = scalar_lea.vmem %s2, %s3008
      %s3010 = smul.u32 %s19, 8
      %s3011 = sadd.s32 %s3010, %s20
      %p3012 = scmp.lt.s32.totalorder %s3011, 15
      %s3013 = scalar_select %p3012, %s3011, 15
      %s3014 = smul.addr %s3013, 2
      %s3015 = scalar_lea.vmem %s3, %s3014
      // Predicated region
      $region29: #{basic_block3d_pallas.10} parent=27 // pred_check
        %p3016 = pneg %p96
      $region30: #{basic_block3d_pallas.10} parent=27 // pred_check_branch
        %3018 = sbr.rel (%p3016) target = $region32
      $region31: #{basic_block3d_pallas.10} parent=27 // pred_region
        %s3019 = smul.u32 %s19, 8
        %s3020 = sadd.s32 %s3019, %s20
      $region32: #{basic_block3d_pallas.10} parent=27 // pred_fallthru
        _
      // Predicated region
      $region33: #{basic_block3d_pallas.10} parent=27 // pred_check
        %p3021 = pneg %p126
      $region34: #{basic_block3d_pallas.10} parent=27 // pred_check_branch
        %3023 = sbr.rel (%p3021) target = $region36
      $region35: #{basic_block3d_pallas.10} parent=27 // pred_region
        %s3024 = smul.u32 %s19, 8
        %s3025 = sadd.s32 %s3024, %s20
      $region36: #{basic_block3d_pallas.10} parent=27 // pred_fallthru
        _
    $region28: #{basic_block3d_pallas.10} parent=5 // pred_fallthru
      _
    %p3026 = scmp.le.s32.totalorder 2, %s10
    // Predicated region
    $region37: #{basic_block3d_pallas.10} parent=5 // pred_check
      %p3027 = pneg %p3026
    $region38: #{basic_block3d_pallas.10} parent=5 // pred_check_branch
      %3029 = sbr.rel (%p3027) target = $region40
    $region39: #{basic_block3d_pallas.10} parent=5 // pred_region
      %s3030 = ssub.s32 %s10, 2
      // Predicated region
      $region41: #{basic_block3d_pallas.10} parent=39 // pred_check
        %p3031 = pneg %p102
      $region42: #{basic_block3d_pallas.10} parent=39 // pred_check_branch
        %3033 = sbr.rel (%p3031) target = $region44
      $region43: #{basic_block3d_pallas.10} parent=39 // pred_region
        %s3034 = smul.u32 %s21, 8
        %s3035 = sadd.s32 %s3034, %s22
        %p3036 = scmp.lt.s32.totalorder %s3035, 15
        %s3037 = scalar_select %p3036, %s3035, 15
        %s3038 = smul.addr %s3037, 8
        %s3039 = smul.addr %s3038, 4
        %s3040 = scalar_lea.vmem %s2, %s3039
      $region44: #{basic_block3d_pallas.10} parent=39 // pred_fallthru
        _
      // Predicated region
      $region45: #{basic_block3d_pallas.10} parent=39 // pred_check
        %p3041 = pneg %p132
      $region46: #{basic_block3d_pallas.10} parent=39 // pred_check_branch
        %3043 = sbr.rel (%p3041) target = $region48
      $region47: #{basic_block3d_pallas.10} parent=39 // pred_region
        %s3044 = smul.u32 %s21, 8
        %s3045 = sadd.s32 %s3044, %s22
        %p3046 = scmp.lt.s32.totalorder %s3045, 15
        %s3047 = scalar_select %p3046, %s3045, 15
        %s3048 = smul.addr %s3047, 2
        %s3049 = scalar_lea.vmem %s3, %s3048
      $region48: #{basic_block3d_pallas.10} parent=39 // pred_fallthru
        _
    $region40: #{basic_block3d_pallas.10} parent=5 // pred_fallthru
      _
  $region6: #{basic_block3d_pallas.10} parent=0 // loop_footer
    %s14 = sadd.s32 1, %s10
  $region7: #{basic_block3d_pallas.10} parent=0 // loop_footer_branch
    %9 = sbr.rel target = $region3
  $region8: #{basic_block3d_pallas.10} parent=0 // loop_exit
    _

</llo_original>
